<compile_context>
chip_gen: v7x
topology: tpu7x:2x2x1
jax: 0.10.0
libtpu: 0.0.40
codegen_flags: <defaults>
</compile_context>

<pallas_src>
import jax
import jax.numpy as jnp
from jax.experimental import pallas as pl
from jax.experimental.pallas import tpu as pltpu

ALPHA = 1.0
GAMMA = 2  # hard-coded as an explicit square in the kernel body

LANE_WIDTH = 512                         # lane width for the flat fallback path
MIN_LANE_COLS = 128                      # minimum trailing width for the native path
TARGET_BLOCK_BYTES = 4 * 1024 * 1024     # ~4 MiB per-operand block (v6e/v7x sweet spot)
MAX_SINGLE_BLOCK_BYTES = 6 * 1024 * 1024 # guard for pathologically wide rows
SMALL_INPUT_BYTES = 1 << 20              # below this, fused XLA wins over a kernel launch
VMEM_CEILING_BYTES = 56 * 1024 * 1024    # stay under v7x's 64 MiB physical VMEM per TC


def _focal_loss_kernel(x_ref, t_ref, o_ref):
    x = x_ref[...].astype(jnp.float32)
    t = t_ref[...].astype(jnp.float32)
    # Numerically-stable BCE-with-logits (== torch BCEWithLogitsLoss, reduction='none'):
    #   max(x, 0) - x*t + log1p(exp(-|x|))
    bce = jnp.maximum(x, 0.0) - x * t + jnp.log1p(jnp.exp(-jnp.abs(x)))
    pt = jnp.exp(-bce)
    u = 1.0 - pt
    o_ref[...] = ((ALPHA * u * u) * bce).astype(o_ref.dtype)  # explicit square: no pow


def _focal_loss_xla(inputs, targets):
    """Fused-XLA reference / small-input fast path (same math as the kernel)."""
    x = inputs.astype(jnp.float32)
    t = targets.astype(jnp.float32)
    bce = jnp.maximum(x, 0.0) - x * t + jnp.log1p(jnp.exp(-jnp.abs(x)))
    pt = jnp.exp(-bce)
    u = 1.0 - pt
    return (ALPHA * u * u * bce).astype(inputs.dtype)


def _sublane_multiple(dtype):
    # f32 -> 8, bf16 -> 16, int8/fp8 -> 32 (sub-32-bit dtypes pack along sublanes)
    itemsize = jnp.dtype(dtype).itemsize
    return max(8, 32 // itemsize)


def _round_up(x, m):
    return ((x + m - 1) // m) * m


def _run_tiled(x2, t2, rows, cols, dtype):
    """Tile a 2-D (rows, cols) slab along rows and run the elementwise kernel."""
    sub = _sublane_multiple(dtype)
    itemsize = jnp.dtype(dtype).itemsize
    bytes_per_row = cols * itemsize

    # ~TARGET_BLOCK_BYTES per operand, multiple of the sublane packing granule.
    max_block_rows = max(sub, (TARGET_BLOCK_BYTES // bytes_per_row) // sub * sub)
    # Cap at ~half the rows so anything bigger than one block gets >=2 grid steps
    # (lets the "parallel" axis shard across both v7x TensorCores).
    half_rows = _round_up(max(pl.cdiv(rows, 2), 1), sub)
    block_rows = max(sub, min(max_block_rows, half_rows))

    grid = (pl.cdiv(rows, block_rows),)  # partial last block handled by Pallas
    block_bytes = block_rows * bytes_per_row
    # 3 operands x 2 pipeline buffers + headroom. Explicit limit keeps 4 MiB
    # blocks compiling on v5e (16 MiB default scoped VMEM) while staying well
    # under v7x's 64 MiB physical VMEM.
    vmem_bytes = min(max(6 * block_bytes + (8 << 20), 16 << 20), VMEM_CEILING_BYTES)

    return pl.pallas_call(
        _focal_loss_kernel,
        out_shape=jax.ShapeDtypeStruct((rows, cols), dtype),
        grid_spec=pl.GridSpec(
            grid=grid,
            in_specs=[
                pl.BlockSpec((block_rows, cols), lambda i: (i, 0)),
                pl.BlockSpec((block_rows, cols), lambda i: (i, 0)),
            ],
            out_specs=pl.BlockSpec((block_rows, cols), lambda i: (i, 0)),
        ),
        compiler_params=pltpu.CompilerParams(
            dimension_semantics=("parallel",),  # megacore-shard rows on v7x
            vmem_limit_bytes=vmem_bytes,
        ),
    )(x2, t2)


def focal_loss(inputs, targets):
    """Elementwise focal loss (reduce=False); returns array of same shape/dtype."""
    assert inputs.shape == targets.shape, "inputs/targets shape mismatch"
    orig_shape = inputs.shape
    dtype = inputs.dtype
    itemsize = jnp.dtype(dtype).itemsize
    n = inputs.size

    if n == 0:
        return jnp.zeros(orig_shape, dtype)

    # Small-input fast path: one fused XLA elementwise beats kernel launch +
    # layout plumbing below ~1 MiB.
    if n * itemsize < SMALL_INPUT_BYTES:
        return _focal_loss_xla(inputs, targets)

    sub = _sublane_multiple(dtype)

    # --- Native 2-D path: greedily collapse trailing dims until lane-dense. ---
    shape = orig_shape
    split = len(shape)
    cols = 1
    while split > 0 and cols < MIN_LANE_COLS:
        split -= 1
        cols *= int(shape[split])

    use_native = (
        split > 0
        and cols >= MIN_LANE_COLS
        and sub * cols * itemsize <= MAX_SINGLE_BLOCK_BYTES  # one granule block must fit
    )
    if use_native:
        rows = n // cols
        x2 = inputs.reshape(rows, cols)    # collapses dims only: no copy
        t2 = targets.reshape(rows, cols)
        out = _run_tiled(x2, t2, rows, cols, dtype)
        return out.reshape(orig_shape)

    # --- Flat fallback: prefer a copy-free reshape to a lane-dense slab. ---
    for c in (512, 256, 128):
        if n % c == 0:
            rows = n // c
            x2 = inputs.reshape(rows, c)
            t2 = targets.reshape(rows, c)
            out = _run_tiled(x2, t2, rows, c, dtype)
            return out.reshape(orig_shape)

    # Last resort (rare): pad the flat slab only up to one full lane row — never
    # to a block multiple; Pallas handles the partial last block.
    c = LANE_WIDTH
    rows = pl.cdiv(n, c)
    padded_n = rows * c
    x2 = jnp.pad(inputs.reshape(-1), (0, padded_n - n)).reshape(rows, c)
    t2 = jnp.pad(targets.reshape(-1), (0, padded_n - n)).reshape(rows, c)
    out = _run_tiled(x2, t2, rows, c, dtype)
    return out.reshape(-1)[:n].reshape(orig_shape)


if __name__ == "__main__":
    key = jax.random.PRNGKey(0)
    ks = jax.random.split(key, 10)

    # 1) Small BCE-head shape -> fused-XLA fast path.
    x1 = jax.random.normal(ks[0], (16, 256), dtype=jnp.float32)
    t1 = jax.random.bernoulli(ks[1], 0.5, (16, 256)).astype(jnp.float32)
    o1 = jax.block_until_ready(focal_loss(x1, t1))
    assert o1.shape == x1.shape
    assert jnp.allclose(o1, _focal_loss_xla(x1, t1), atol=1e-5, rtol=1e-5)

    # 2) Non-128-multiple trailing dim -> native 2-D Pallas path, 2-step parallel grid.
    x2 = jax.random.normal(ks[2], (1024, 600), dtype=jnp.float32)
    t2 = jax.random.bernoulli(ks[3], 0.5, (1024, 600)).astype(jnp.float32)
    o2 = jax.block_until_ready(focal_loss(x2, t2))
    assert jnp.allclose(o2, _focal_loss_xla(x2, t2), atol=1e-5, rtol=1e-5)

    # 3) Odd rows AND cols (partial last block, masked lanes) -> still native, no pads.
    x3 = jax.random.normal(ks[4], (801, 333), dtype=jnp.float32)
    t3 = jax.random.bernoulli(ks[5], 0.5, (801, 333)).astype(jnp.float32)
    o3 = jax.block_until_ready(focal_loss(x3, t3))
    assert jnp.allclose(o3, _focal_loss_xla(x3, t3), atol=1e-5, rtol=1e-5)

    # 4) bf16 in/out (halves HBM traffic), 3-D shape exercising trailing-dim collapse.
    x4 = jax.random.normal(ks[6], (2048, 200, 3), dtype=jnp.bfloat16)
    t4 = jax.random.bernoulli(ks[7], 0.5, (2048, 200, 3)).astype(jnp.bfloat16)
    o4 = jax.block_until_ready(focal_loss(x4, t4))
    assert jnp.allclose(o4.astype(jnp.float32),
                        _focal_loss_xla(x4, t4).astype(jnp.float32),
                        atol=2e-2, rtol=2e-2)

    # 5) Awkward 1-D size -> minimal-pad fallback path (pads 31 elems, partial block).
    x5 = jax.random.normal(ks[8], (300001,), dtype=jnp.float32)
    t5 = jax.random.bernoulli(ks[9], 0.5, (300001,)).astype(jnp.float32)
    o5 = jax.block_until_ready(focal_loss(x5, t5))
    assert jnp.allclose(o5, _focal_loss_xla(x5, t5), atol=1e-5, rtol=1e-5)

    print("KERNEL_OK")
</pallas_src>

<mosaic_0001>
module attributes {stable_mosaic.version = 11 : i64} {
  func.func @_focal_loss_kernel(%arg0: i32, %arg1: memref<512x600xf32, #tpu.memory_space<vmem>>, %arg2: memref<512x600xf32, #tpu.memory_space<vmem>>, %arg3: memref<512x600xf32, #tpu.memory_space<vmem>>) attributes {dimension_semantics = [#tpu.dimension_semantics<parallel>], iteration_bounds = array<i64: 2>, scalar_prefetch = 0 : i64, scratch_operands = 0 : i64, tpu.core_type = #tpu.core_type<tc>, window_params = [{transform_indices = @transform_0, window_bounds = array<i64: 512, 600>}, {transform_indices = @transform_1, window_bounds = array<i64: 512, 600>}, {transform_indices = @transform_2, window_bounds = array<i64: 512, 600>}]} {
    %c0 = arith.constant 0 : index
    %c0_0 = arith.constant 0 : index
    %0 = vector.load %arg1[%c0, %c0_0] : memref<512x600xf32, #tpu.memory_space<vmem>>, vector<512x600xf32>
    %c0_1 = arith.constant 0 : index
    %c0_2 = arith.constant 0 : index
    %1 = vector.load %arg2[%c0_1, %c0_2] : memref<512x600xf32, #tpu.memory_space<vmem>>, vector<512x600xf32>
    %cst = arith.constant 0.000000e+00 : f32
    %2 = vector.broadcast %cst : f32 to vector<512x600xf32>
    %3 = arith.maximumf %0, %2 : vector<512x600xf32>
    %4 = arith.mulf %0, %1 : vector<512x600xf32>
    %5 = arith.subf %3, %4 : vector<512x600xf32>
    %6 = math.absf %0 : vector<512x600xf32>
    %cst_3 = arith.constant 0.000000e+00 : f32
    %7 = vector.broadcast %cst_3 : f32 to vector<512x600xf32>
    %8 = arith.subf %7, %6 : vector<512x600xf32>
    %9 = math.exp %8 : vector<512x600xf32>
    %10 = math.log1p %9 : vector<512x600xf32>
    %11 = arith.addf %5, %10 : vector<512x600xf32>
    %cst_4 = arith.constant 0.000000e+00 : f32
    %12 = vector.broadcast %cst_4 : f32 to vector<512x600xf32>
    %13 = arith.subf %12, %11 : vector<512x600xf32>
    %14 = math.exp %13 : vector<512x600xf32>
    %cst_5 = arith.constant 1.000000e+00 : f32
    %15 = vector.broadcast %cst_5 : f32 to vector<512x600xf32>
    %16 = arith.subf %15, %14 : vector<512x600xf32>
    %cst_6 = arith.constant 1.000000e+00 : f32
    %17 = vector.broadcast %cst_6 : f32 to vector<512x600xf32>
    %18 = arith.mulf %17, %16 : vector<512x600xf32>
    %19 = arith.mulf %18, %16 : vector<512x600xf32>
    %20 = arith.mulf %19, %11 : vector<512x600xf32>
    %c0_7 = arith.constant 0 : index
    %c0_8 = arith.constant 0 : index
    %21 = vector.load %arg3[%c0_7, %c0_8] : memref<512x600xf32, #tpu.memory_space<vmem>>, vector<512x600xf32>
    tpu.vector_store %arg3[%c0_7, %c0_8], %20 {strides = array<i32>} : memref<512x600xf32, #tpu.memory_space<vmem>>, vector<512x600xf32>,
    return
  }
  func.func @transform_0(%arg0: i32) -> (i32, i32) {
    %c0_i32 = arith.constant 0 : i32
    %c0_i32_0 = arith.constant 0 : i32
    return %arg0, %c0_i32 : i32, i32
  }
  func.func @transform_1(%arg0: i32) -> (i32, i32) {
    %c0_i32 = arith.constant 0 : i32
    %c0_i32_0 = arith.constant 0 : i32
    return %arg0, %c0_i32 : i32, i32
  }
  func.func @transform_2(%arg0: i32) -> (i32, i32) {
    %c0_i32 = arith.constant 0 : i32
    %c0_i32_0 = arith.constant 0 : i32
    return %arg0, %c0_i32 : i32, i32
  }
}

</mosaic_0001>

<llo_original>
// kernel: tpu_custom_call.1
$region0: #{tpu_custom_call.1}
  #allocation0 [shape = 'u32[]', space=smem, size = 0x4, offset = 0x4, fixed_abs, tag = 'smem constant byte address 0x4 - core index']
  #allocation1 [shape = 'u32[144,128]{1,0:T(1,128)}', space=vmem, size = 0x12000, scoped, tag = 'internal scratch']
  %s0 = inlined_call_operand.vmem [shape: f32[1024,600], index: 0, kind: input, shape index: {}]
  %s1 = inlined_call_operand.vmem [shape: f32[1024,600], index: 1, kind: input, shape index: {}]
  %s2 = inlined_call_operand.vmem [shape: f32[1024,600], index: 2, kind: output, shape index: {}]
  %s3 = sld [smem:[#allocation0]]
  $region41: #{tpu_custom_call.1} parent=0
    _
  %s5 = ssub.s32 1, %s3
  %s6 = scalar_select 0, %s5, %s3
  loop: start=0, step=1, limit=4
  $region2: #{tpu_custom_call.1} parent=0 // loop_pre_header
    _
  $region3: #{tpu_custom_call.1} parent=0 // loop_header
    %s8 = sphi 0, %s12
    %p9 = scmp.ge.s32.totalorder %s8, 4
    %s18 = sphi 0, %s20
    %s21 = sphi 0, %s18
    %s22 = sphi 0, %s21
    %s38 = sphi 0, %s22
    %s44 = sphi 0, %s46
    %s47 = sphi 0, %s44
    %s48 = sphi 0, %s47
    %s64 = sphi 0, %s48
    %s70 = sphi 0, %s72
    %s73 = sphi 0, %s70
    %s74 = sphi 0, %s73
    %s90 = sphi 0, %s74
  $region4: #{tpu_custom_call.1} parent=0 // loop_header_branch
    %11 = sbr.rel (%p9) target = $region8
  $region5: #{tpu_custom_call.1} parent=0 // loop_body
    %s13 = ssub.s32 %s8, 1
    %s14 = ssub.s32 %s8, 2
    %s15 = sadd.s32 %s8, 1
    %s16 = ssub.s32 %s8, %s15
    %p17 = scmp.eq.s32.totalorder %s16, 0
    %s19 = sadd.s32 %s18, 1
    %s20 = scalar_select %p17, %s18, %s19
    %p23 = pneg %p17
    %p24 = scmp.eq.s32.totalorder %s8, 1
    %p25 = por %p23, %p24
    %p26 = scmp.ne.s32.totalorder %s18, %s21
    %p27 = scmp.eq.s32.totalorder %s8, 0
    %p28 = por %p26, %p27
    %p29 = scmp.ne.s32.totalorder %s18, %s21
    %p30 = scmp.eq.s32.totalorder %s13, 1
    %p31 = por %p29, %p30
    %p32 = scmp.ne.s32.totalorder %s21, %s22
    %p33 = scmp.eq.s32.totalorder %s13, 0
    %p34 = por %p32, %p33
    %p35 = scmp.ne.s32.totalorder %s21, %s22
    %p36 = scmp.eq.s32.totalorder %s14, 1
    %p37 = por %p35, %p36
    %p39 = scmp.ne.s32.totalorder %s22, %s38
    %p40 = scmp.eq.s32.totalorder %s14, 0
    %p41 = por %p39, %p40
    %s42 = ssub.s32 %s8, %s15
    %p43 = scmp.eq.s32.totalorder %s42, 0
    %s45 = sadd.s32 %s44, 1
    %s46 = scalar_select %p43, %s44, %s45
    %p49 = pneg %p43
    %p50 = scmp.eq.s32.totalorder %s8, 1
    %p51 = por %p49, %p50
    %p52 = scmp.ne.s32.totalorder %s44, %s47
    %p53 = scmp.eq.s32.totalorder %s8, 0
    %p54 = por %p52, %p53
    %p55 = scmp.ne.s32.totalorder %s44, %s47
    %p56 = scmp.eq.s32.totalorder %s13, 1
    %p57 = por %p55, %p56
    %p58 = scmp.ne.s32.totalorder %s47, %s48
    %p59 = scmp.eq.s32.totalorder %s13, 0
    %p60 = por %p58, %p59
    %p61 = scmp.ne.s32.totalorder %s47, %s48
    %p62 = scmp.eq.s32.totalorder %s14, 1
    %p63 = por %p61, %p62
    %p65 = scmp.ne.s32.totalorder %s48, %s64
    %p66 = scmp.eq.s32.totalorder %s14, 0
    %p67 = por %p65, %p66
    %s68 = ssub.s32 %s8, %s15
    %p69 = scmp.eq.s32.totalorder %s68, 0
    %s71 = sadd.s32 %s70, 1
    %s72 = scalar_select %p69, %s70, %s71
    %p75 = pneg %p69
    %p76 = scmp.eq.s32.totalorder %s8, 1
    %p77 = por %p75, %p76
    %p78 = scmp.ne.s32.totalorder %s70, %s73
    %p79 = scmp.eq.s32.totalorder %s8, 0
    %p80 = por %p78, %p79
    %p81 = scmp.ne.s32.totalorder %s70, %s73
    %p82 = scmp.eq.s32.totalorder %s13, 1
    %p83 = por %p81, %p82
    %p84 = scmp.ne.s32.totalorder %s73, %s74
    %p85 = scmp.eq.s32.totalorder %s13, 0
    %p86 = por %p84, %p85
    %p87 = scmp.ne.s32.totalorder %s73, %s74
    %p88 = scmp.eq.s32.totalorder %s14, 1
    %p89 = por %p87, %p88
    %p91 = scmp.ne.s32.totalorder %s74, %s90
    %p92 = scmp.eq.s32.totalorder %s14, 0
    %p93 = por %p91, %p92
    %p94 = scmp.le.s32.totalorder 1, %s8
    %p95 = scmp.lt.s32.totalorder %s8, 3
    %p96 = pnand %p94, %p95
    %p97 = pneg %p96
    // Predicated region
    $region9: #{tpu_custom_call.1} parent=5 // pred_check
      _
    $region10: #{tpu_custom_call.1} parent=5 // pred_check_branch
      %99 = sbr.rel (%p96) target = $region12
    $region11: #{tpu_custom_call.1} parent=5 // pred_region
      %s100 = ssub.s32 %s8, 1
    $region12: #{tpu_custom_call.1} parent=5 // pred_fallthru
      _
    %p101 = scmp.lt.s32.totalorder %s8, 2
    // Predicated region
    $region13: #{tpu_custom_call.1} parent=5 // pred_check
      %p102 = pneg %p101
    $region14: #{tpu_custom_call.1} parent=5 // pred_check_branch
      %104 = sbr.rel (%p102) target = $region16
    $region15: #{tpu_custom_call.1} parent=5 // pred_region
      // Predicated region
      $region17: #{tpu_custom_call.1} parent=15 // pred_check
        %p105 = pneg %p28
      $region18: #{tpu_custom_call.1} parent=15 // pred_check_branch
        %107 = sbr.rel (%p105) target = $region20
      $region19: #{tpu_custom_call.1} parent=15 // pred_region
        %s108 = smul.u32 64, %s8
        %p109 = scmp.lt.s32.totalorder %s108, 127
        %s110 = scalar_select %p109, %s108, 127
        %s111 = smul.addr %s110, 5
        %s112 = smul.addr %s111, 8
        %s113 = scalar_lea.vmem %s0, %s112
        %s114 = smul.u32 64, %s8
      $region20: #{tpu_custom_call.1} parent=15 // pred_fallthru
        _
      // Predicated region
      $region21: #{tpu_custom_call.1} parent=15 // pred_check
        %p115 = pneg %p54
      $region22: #{tpu_custom_call.1} parent=15 // pred_check_branch
        %117 = sbr.rel (%p115) target = $region24
      $region23: #{tpu_custom_call.1} parent=15 // pred_region
        %s118 = smul.u32 64, %s8
        %p119 = scmp.lt.s32.totalorder %s118, 127
        %s120 = scalar_select %p119, %s118, 127
        %s121 = smul.addr %s120, 5
        %s122 = smul.addr %s121, 8
        %s123 = scalar_lea.vmem %s1, %s122
        %s124 = smul.u32 64, %s8
      $region24: #{tpu_custom_call.1} parent=15 // pred_fallthru
        _
    $region16: #{tpu_custom_call.1} parent=5 // pred_fallthru
      _
    %p125 = scmp.le.s32.totalorder 1, %s8
    %p126 = scmp.lt.s32.totalorder %s8, 3
    %p127 = pnand %p125, %p126
    %p128 = pneg %p127
    // Predicated region
    $region25: #{tpu_custom_call.1} parent=5 // pred_check
      _
    $region26: #{tpu_custom_call.1} parent=5 // pred_check_branch
      %130 = sbr.rel (%p127) target = $region28
    $region27: #{tpu_custom_call.1} parent=5 // pred_region
      %s131 = ssub.s32 %s8, 1
      %s132 = smul.u32 64, %s13
      %p133 = scmp.lt.s32.totalorder %s132, 127
      %s134 = scalar_select %p133, %s132, 127
      %s135 = smul.addr %s134, 5
      %s136 = smul.addr %s135, 8
      %s137 = scalar_lea.vmem %s0, %s136
      %p138 = pneg %p34
      %p139 = pneg %p31
      %s140 = smul.u32 64, %s13
      %p141 = scmp.lt.s32.totalorder %s140, 127
      %s142 = scalar_select %p141, %s140, 127
      %s143 = smul.addr %s142, 5
      %s144 = smul.addr %s143, 8
      %s145 = scalar_lea.vmem %s1, %s144
      %p146 = pneg %p60
      %p147 = pneg %p57
      %p148 = pneg %p86
      %p149 = pneg %p83
      %s150 = smul.u32 64, %s13
      %p151 = scmp.lt.s32.totalorder %s150, 127
      %s152 = scalar_select %p151, %s150, 127
      %s153 = smul.addr %s152, 5
      %s154 = smul.addr %s153, 8
      %s155 = scalar_lea.vmem %s2, %s154
      %s156 = smul.u32 64, %s13
      %p157 = scmp.lt.s32.totalorder %s156, 127
      %s158 = scalar_select %p157, %s156, 127
      %s159 = smul.addr %s158, 5
      %s160 = smul.addr %s159, 8
      %s161 = scalar_lea.vmem %s0, %s160
      %s162 = smul.u32 64, %s13
      %s163 = smul.u32 64, %s13
      %p164 = scmp.lt.s32.totalorder %s163, 127
      %s165 = scalar_select %p164, %s163, 127
      %s166 = smul.addr %s165, 5
      %s167 = smul.addr %s166, 8
      %s168 = scalar_lea.vmem %s1, %s167
      %s169 = smul.u32 64, %s13
      %s170 = smul.u32 64, %s13
      %p171 = scmp.lt.s32.totalorder %s170, 127
      %s172 = scalar_select %p171, %s170, 127
      %s173 = smul.addr %s172, 5
      %s174 = smul.addr %s173, 8
      %s175 = scalar_lea.vmem %s2, %s174
      %s176 = smul.u32 64, %s13
      %v177 = vld [vmem:[%s161] sm:$0xff]
      %v178 = vld [vmem:[%s161 + $0x8] sm:$0xff]
      %v179 = vld [vmem:[%s161 + $0x10] sm:$0xff]
      %v180 = vld [vmem:[%s161 + $0x18] sm:$0xff]
      %v181 = vld [vmem:[%s161 + $0x20] sm:$0xff]
      %v182 = vld [vmem:[%s161 + $0x28] sm:$0xff]
      %v183 = vld [vmem:[%s161 + $0x30] sm:$0xff]
      %v184 = vld [vmem:[%s161 + $0x38] sm:$0xff]
      %v185 = vld [vmem:[%s161 + $0x40] sm:$0xff]
      %v186 = vld [vmem:[%s161 + $0x48] sm:$0xff]
      %v187 = vld [vmem:[%s161 + $0x50] sm:$0xff]
      %v188 = vld [vmem:[%s161 + $0x58] sm:$0xff]
      %v189 = vld [vmem:[%s161 + $0x60] sm:$0xff]
      %v190 = vld [vmem:[%s161 + $0x68] sm:$0xff]
      %v191 = vld [vmem:[%s161 + $0x70] sm:$0xff]
      %v192 = vld [vmem:[%s161 + $0x78] sm:$0xff]
      %v193 = vld [vmem:[%s161 + $0x80] sm:$0xff]
      %v194 = vld [vmem:[%s161 + $0x88] sm:$0xff]
      %v195 = vld [vmem:[%s161 + $0x90] sm:$0xff]
      %v196 = vld [vmem:[%s161 + $0x98] sm:$0xff]
      %v197 = vld [vmem:[%s161 + $0xa0] sm:$0xff]
      %v198 = vld [vmem:[%s161 + $0xa8] sm:$0xff]
      %v199 = vld [vmem:[%s161 + $0xb0] sm:$0xff]
      %v200 = vld [vmem:[%s161 + $0xb8] sm:$0xff]
      %v201 = vld [vmem:[%s161 + $0xc0] sm:$0xff]
      %v202 = vld [vmem:[%s161 + $0xc8] sm:$0xff]
      %v203 = vld [vmem:[%s161 + $0xd0] sm:$0xff]
      %v204 = vld [vmem:[%s161 + $0xd8] sm:$0xff]
      %v205 = vld [vmem:[%s161 + $0xe0] sm:$0xff]
      %v206 = vld [vmem:[%s161 + $0xe8] sm:$0xff]
      %v207 = vld [vmem:[%s161 + $0xf0] sm:$0xff]
      %v208 = vld [vmem:[%s161 + $0xf8] sm:$0xff]
      %v209 = vld [vmem:[%s161 + $0x100] sm:$0xff]
      %v210 = vld [vmem:[%s161 + $0x108] sm:$0xff]
      %v211 = vld [vmem:[%s161 + $0x110] sm:$0xff]
      %v212 = vld [vmem:[%s161 + $0x118] sm:$0xff]
      %v213 = vld [vmem:[%s161 + $0x120] sm:$0xff]
      %v214 = vld [vmem:[%s161 + $0x128] sm:$0xff]
      %v215 = vld [vmem:[%s161 + $0x130] sm:$0xff]
      %v216 = vld [vmem:[%s161 + $0x138] sm:$0xff]
      %v217 = vld [vmem:[%s161 + $0x140] sm:$0xff]
      %v218 = vld [vmem:[%s161 + $0x148] sm:$0xff]
      %v219 = vld [vmem:[%s161 + $0x150] sm:$0xff]
      %v220 = vld [vmem:[%s161 + $0x158] sm:$0xff]
      %v221 = vld [vmem:[%s161 + $0x160] sm:$0xff]
      %v222 = vld [vmem:[%s161 + $0x168] sm:$0xff]
      %v223 = vld [vmem:[%s161 + $0x170] sm:$0xff]
      %v224 = vld [vmem:[%s161 + $0x178] sm:$0xff]
      %v225 = vld [vmem:[%s161 + $0x180] sm:$0xff]
      %v226 = vld [vmem:[%s161 + $0x188] sm:$0xff]
      %v227 = vld [vmem:[%s161 + $0x190] sm:$0xff]
      %v228 = vld [vmem:[%s161 + $0x198] sm:$0xff]
      %v229 = vld [vmem:[%s161 + $0x1a0] sm:$0xff]
      %v230 = vld [vmem:[%s161 + $0x1a8] sm:$0xff]
      %v231 = vld [vmem:[%s161 + $0x1b0] sm:$0xff]
      %v232 = vld [vmem:[%s161 + $0x1b8] sm:$0xff]
      %v233 = vld [vmem:[%s161 + $0x1c0] sm:$0xff]
      %v234 = vld [vmem:[%s161 + $0x1c8] sm:$0xff]
      %v235 = vld [vmem:[%s161 + $0x1d0] sm:$0xff]
      %v236 = vld [vmem:[%s161 + $0x1d8] sm:$0xff]
      %v237 = vld [vmem:[%s161 + $0x1e0] sm:$0xff]
      %v238 = vld [vmem:[%s161 + $0x1e8] sm:$0xff]
      %v239 = vld [vmem:[%s161 + $0x1f0] sm:$0xff]
      %v240 = vld [vmem:[%s161 + $0x1f8] sm:$0xff]
      %v241 = vld [vmem:[%s161 + $0x200] sm:$0xff]
      %v242 = vld [vmem:[%s161 + $0x208] sm:$0xff]
      %v243 = vld [vmem:[%s161 + $0x210] sm:$0xff]
      %v244 = vld [vmem:[%s161 + $0x218] sm:$0xff]
      %v245 = vld [vmem:[%s161 + $0x220] sm:$0xff]
      %v246 = vld [vmem:[%s161 + $0x228] sm:$0xff]
      %v247 = vld [vmem:[%s161 + $0x230] sm:$0xff]
      %v248 = vld [vmem:[%s161 + $0x238] sm:$0xff]
      %v249 = vld [vmem:[%s161 + $0x240] sm:$0xff]
      %v250 = vld [vmem:[%s161 + $0x248] sm:$0xff]
      %v251 = vld [vmem:[%s161 + $0x250] sm:$0xff]
      %v252 = vld [vmem:[%s161 + $0x258] sm:$0xff]
      %v253 = vld [vmem:[%s161 + $0x260] sm:$0xff]
      %v254 = vld [vmem:[%s161 + $0x268] sm:$0xff]
      %v255 = vld [vmem:[%s161 + $0x270] sm:$0xff]
      %v256 = vld [vmem:[%s161 + $0x278] sm:$0xff]
      %v257 = vld [vmem:[%s161 + $0x280] sm:$0xff]
      %v258 = vld [vmem:[%s161 + $0x288] sm:$0xff]
      %v259 = vld [vmem:[%s161 + $0x290] sm:$0xff]
      %v260 = vld [vmem:[%s161 + $0x298] sm:$0xff]
      %v261 = vld [vmem:[%s161 + $0x2a0] sm:$0xff]
      %v262 = vld [vmem:[%s161 + $0x2a8] sm:$0xff]
      %v263 = vld [vmem:[%s161 + $0x2b0] sm:$0xff]
      %v264 = vld [vmem:[%s161 + $0x2b8] sm:$0xff]
      %v265 = vld [vmem:[%s161 + $0x2c0] sm:$0xff]
      %v266 = vld [vmem:[%s161 + $0x2c8] sm:$0xff]
      %v267 = vld [vmem:[%s161 + $0x2d0] sm:$0xff]
      %v268 = vld [vmem:[%s161 + $0x2d8] sm:$0xff]
      %v269 = vld [vmem:[%s161 + $0x2e0] sm:$0xff]
      %v270 = vld [vmem:[%s161 + $0x2e8] sm:$0xff]
      %v271 = vld [vmem:[%s161 + $0x2f0] sm:$0xff]
      %v272 = vld [vmem:[%s161 + $0x2f8] sm:$0xff]
      %v273 = vld [vmem:[%s161 + $0x300] sm:$0xff]
      %v274 = vld [vmem:[%s161 + $0x308] sm:$0xff]
      %v275 = vld [vmem:[%s161 + $0x310] sm:$0xff]
      %v276 = vld [vmem:[%s161 + $0x318] sm:$0xff]
      %v277 = vld [vmem:[%s161 + $0x320] sm:$0xff]
      %v278 = vld [vmem:[%s161 + $0x328] sm:$0xff]
      %v279 = vld [vmem:[%s161 + $0x330] sm:$0xff]
      %v280 = vld [vmem:[%s161 + $0x338] sm:$0xff]
      %v281 = vld [vmem:[%s161 + $0x340] sm:$0xff]
      %v282 = vld [vmem:[%s161 + $0x348] sm:$0xff]
      %v283 = vld [vmem:[%s161 + $0x350] sm:$0xff]
      %v284 = vld [vmem:[%s161 + $0x358] sm:$0xff]
      %v285 = vld [vmem:[%s161 + $0x360] sm:$0xff]
      %v286 = vld [vmem:[%s161 + $0x368] sm:$0xff]
      %v287 = vld [vmem:[%s161 + $0x370] sm:$0xff]
      %v288 = vld [vmem:[%s161 + $0x378] sm:$0xff]
      %v289 = vld [vmem:[%s161 + $0x380] sm:$0xff]
      %v290 = vld [vmem:[%s161 + $0x388] sm:$0xff]
      %v291 = vld [vmem:[%s161 + $0x390] sm:$0xff]
      %v292 = vld [vmem:[%s161 + $0x398] sm:$0xff]
      %v293 = vld [vmem:[%s161 + $0x3a0] sm:$0xff]
      %v294 = vld [vmem:[%s161 + $0x3a8] sm:$0xff]
      %v295 = vld [vmem:[%s161 + $0x3b0] sm:$0xff]
      %v296 = vld [vmem:[%s161 + $0x3b8] sm:$0xff]
      %v297 = vld [vmem:[%s161 + $0x3c0] sm:$0xff]
      %v298 = vld [vmem:[%s161 + $0x3c8] sm:$0xff]
      %v299 = vld [vmem:[%s161 + $0x3d0] sm:$0xff]
      %v300 = vld [vmem:[%s161 + $0x3d8] sm:$0xff]
      %v301 = vld [vmem:[%s161 + $0x3e0] sm:$0xff]
      %v302 = vld [vmem:[%s161 + $0x3e8] sm:$0xff]
      %v303 = vld [vmem:[%s161 + $0x3f0] sm:$0xff]
      %v304 = vld [vmem:[%s161 + $0x3f8] sm:$0xff]
      %v305 = vld [vmem:[%s161 + $0x400] sm:$0xff]
      %v306 = vld [vmem:[%s161 + $0x408] sm:$0xff]
      %v307 = vld [vmem:[%s161 + $0x410] sm:$0xff]
      %v308 = vld [vmem:[%s161 + $0x418] sm:$0xff]
      %v309 = vld [vmem:[%s161 + $0x420] sm:$0xff]
      %v310 = vld [vmem:[%s161 + $0x428] sm:$0xff]
      %v311 = vld [vmem:[%s161 + $0x430] sm:$0xff]
      %v312 = vld [vmem:[%s161 + $0x438] sm:$0xff]
      %v313 = vld [vmem:[%s161 + $0x440] sm:$0xff]
      %v314 = vld [vmem:[%s161 + $0x448] sm:$0xff]
      %v315 = vld [vmem:[%s161 + $0x450] sm:$0xff]
      %v316 = vld [vmem:[%s161 + $0x458] sm:$0xff]
      %v317 = vld [vmem:[%s161 + $0x460] sm:$0xff]
      %v318 = vld [vmem:[%s161 + $0x468] sm:$0xff]
      %v319 = vld [vmem:[%s161 + $0x470] sm:$0xff]
      %v320 = vld [vmem:[%s161 + $0x478] sm:$0xff]
      %v321 = vld [vmem:[%s161 + $0x480] sm:$0xff]
      %v322 = vld [vmem:[%s161 + $0x488] sm:$0xff]
      %v323 = vld [vmem:[%s161 + $0x490] sm:$0xff]
      %v324 = vld [vmem:[%s161 + $0x498] sm:$0xff]
      %v325 = vld [vmem:[%s161 + $0x4a0] sm:$0xff]
      %v326 = vld [vmem:[%s161 + $0x4a8] sm:$0xff]
      %v327 = vld [vmem:[%s161 + $0x4b0] sm:$0xff]
      %v328 = vld [vmem:[%s161 + $0x4b8] sm:$0xff]
      %v329 = vld [vmem:[%s161 + $0x4c0] sm:$0xff]
      %v330 = vld [vmem:[%s161 + $0x4c8] sm:$0xff]
      %v331 = vld [vmem:[%s161 + $0x4d0] sm:$0xff]
      %v332 = vld [vmem:[%s161 + $0x4d8] sm:$0xff]
      %v333 = vld [vmem:[%s161 + $0x4e0] sm:$0xff]
      %v334 = vld [vmem:[%s161 + $0x4e8] sm:$0xff]
      %v335 = vld [vmem:[%s161 + $0x4f0] sm:$0xff]
      %v336 = vld [vmem:[%s161 + $0x4f8] sm:$0xff]
      %v337 = vld [vmem:[%s161 + $0x500] sm:$0xff]
      %v338 = vld [vmem:[%s161 + $0x508] sm:$0xff]
      %v339 = vld [vmem:[%s161 + $0x510] sm:$0xff]
      %v340 = vld [vmem:[%s161 + $0x518] sm:$0xff]
      %v341 = vld [vmem:[%s161 + $0x520] sm:$0xff]
      %v342 = vld [vmem:[%s161 + $0x528] sm:$0xff]
      %v343 = vld [vmem:[%s161 + $0x530] sm:$0xff]
      %v344 = vld [vmem:[%s161 + $0x538] sm:$0xff]
      %v345 = vld [vmem:[%s161 + $0x540] sm:$0xff]
      %v346 = vld [vmem:[%s161 + $0x548] sm:$0xff]
      %v347 = vld [vmem:[%s161 + $0x550] sm:$0xff]
      %v348 = vld [vmem:[%s161 + $0x558] sm:$0xff]
      %v349 = vld [vmem:[%s161 + $0x560] sm:$0xff]
      %v350 = vld [vmem:[%s161 + $0x568] sm:$0xff]
      %v351 = vld [vmem:[%s161 + $0x570] sm:$0xff]
      %v352 = vld [vmem:[%s161 + $0x578] sm:$0xff]
      %v353 = vld [vmem:[%s161 + $0x580] sm:$0xff]
      %v354 = vld [vmem:[%s161 + $0x588] sm:$0xff]
      %v355 = vld [vmem:[%s161 + $0x590] sm:$0xff]
      %v356 = vld [vmem:[%s161 + $0x598] sm:$0xff]
      %v357 = vld [vmem:[%s161 + $0x5a0] sm:$0xff]
      %v358 = vld [vmem:[%s161 + $0x5a8] sm:$0xff]
      %v359 = vld [vmem:[%s161 + $0x5b0] sm:$0xff]
      %v360 = vld [vmem:[%s161 + $0x5b8] sm:$0xff]
      %v361 = vld [vmem:[%s161 + $0x5c0] sm:$0xff]
      %v362 = vld [vmem:[%s161 + $0x5c8] sm:$0xff]
      %v363 = vld [vmem:[%s161 + $0x5d0] sm:$0xff]
      %v364 = vld [vmem:[%s161 + $0x5d8] sm:$0xff]
      %v365 = vld [vmem:[%s161 + $0x5e0] sm:$0xff]
      %v366 = vld [vmem:[%s161 + $0x5e8] sm:$0xff]
      %v367 = vld [vmem:[%s161 + $0x5f0] sm:$0xff]
      %v368 = vld [vmem:[%s161 + $0x5f8] sm:$0xff]
      %v369 = vld [vmem:[%s161 + $0x600] sm:$0xff]
      %v370 = vld [vmem:[%s161 + $0x608] sm:$0xff]
      %v371 = vld [vmem:[%s161 + $0x610] sm:$0xff]
      %v372 = vld [vmem:[%s161 + $0x618] sm:$0xff]
      %v373 = vld [vmem:[%s161 + $0x620] sm:$0xff]
      %v374 = vld [vmem:[%s161 + $0x628] sm:$0xff]
      %v375 = vld [vmem:[%s161 + $0x630] sm:$0xff]
      %v376 = vld [vmem:[%s161 + $0x638] sm:$0xff]
      %v377 = vld [vmem:[%s161 + $0x640] sm:$0xff]
      %v378 = vld [vmem:[%s161 + $0x648] sm:$0xff]
      %v379 = vld [vmem:[%s161 + $0x650] sm:$0xff]
      %v380 = vld [vmem:[%s161 + $0x658] sm:$0xff]
      %v381 = vld [vmem:[%s161 + $0x660] sm:$0xff]
      %v382 = vld [vmem:[%s161 + $0x668] sm:$0xff]
      %v383 = vld [vmem:[%s161 + $0x670] sm:$0xff]
      %v384 = vld [vmem:[%s161 + $0x678] sm:$0xff]
      %v385 = vld [vmem:[%s161 + $0x680] sm:$0xff]
      %v386 = vld [vmem:[%s161 + $0x688] sm:$0xff]
      %v387 = vld [vmem:[%s161 + $0x690] sm:$0xff]
      %v388 = vld [vmem:[%s161 + $0x698] sm:$0xff]
      %v389 = vld [vmem:[%s161 + $0x6a0] sm:$0xff]
      %v390 = vld [vmem:[%s161 + $0x6a8] sm:$0xff]
      %v391 = vld [vmem:[%s161 + $0x6b0] sm:$0xff]
      %v392 = vld [vmem:[%s161 + $0x6b8] sm:$0xff]
      %v393 = vld [vmem:[%s161 + $0x6c0] sm:$0xff]
      %v394 = vld [vmem:[%s161 + $0x6c8] sm:$0xff]
      %v395 = vld [vmem:[%s161 + $0x6d0] sm:$0xff]
      %v396 = vld [vmem:[%s161 + $0x6d8] sm:$0xff]
      %v397 = vld [vmem:[%s161 + $0x6e0] sm:$0xff]
      %v398 = vld [vmem:[%s161 + $0x6e8] sm:$0xff]
      %v399 = vld [vmem:[%s161 + $0x6f0] sm:$0xff]
      %v400 = vld [vmem:[%s161 + $0x6f8] sm:$0xff]
      %v401 = vld [vmem:[%s161 + $0x700] sm:$0xff]
      %v402 = vld [vmem:[%s161 + $0x708] sm:$0xff]
      %v403 = vld [vmem:[%s161 + $0x710] sm:$0xff]
      %v404 = vld [vmem:[%s161 + $0x718] sm:$0xff]
      %v405 = vld [vmem:[%s161 + $0x720] sm:$0xff]
      %v406 = vld [vmem:[%s161 + $0x728] sm:$0xff]
      %v407 = vld [vmem:[%s161 + $0x730] sm:$0xff]
      %v408 = vld [vmem:[%s161 + $0x738] sm:$0xff]
      %v409 = vld [vmem:[%s161 + $0x740] sm:$0xff]
      %v410 = vld [vmem:[%s161 + $0x748] sm:$0xff]
      %v411 = vld [vmem:[%s161 + $0x750] sm:$0xff]
      %v412 = vld [vmem:[%s161 + $0x758] sm:$0xff]
      %v413 = vld [vmem:[%s161 + $0x760] sm:$0xff]
      %v414 = vld [vmem:[%s161 + $0x768] sm:$0xff]
      %v415 = vld [vmem:[%s161 + $0x770] sm:$0xff]
      %v416 = vld [vmem:[%s161 + $0x778] sm:$0xff]
      %v417 = vld [vmem:[%s161 + $0x780] sm:$0xff]
      %v418 = vld [vmem:[%s161 + $0x788] sm:$0xff]
      %v419 = vld [vmem:[%s161 + $0x790] sm:$0xff]
      %v420 = vld [vmem:[%s161 + $0x798] sm:$0xff]
      %v421 = vld [vmem:[%s161 + $0x7a0] sm:$0xff]
      %v422 = vld [vmem:[%s161 + $0x7a8] sm:$0xff]
      %v423 = vld [vmem:[%s161 + $0x7b0] sm:$0xff]
      %v424 = vld [vmem:[%s161 + $0x7b8] sm:$0xff]
      %v425 = vld [vmem:[%s161 + $0x7c0] sm:$0xff]
      %v426 = vld [vmem:[%s161 + $0x7c8] sm:$0xff]
      %v427 = vld [vmem:[%s161 + $0x7d0] sm:$0xff]
      %v428 = vld [vmem:[%s161 + $0x7d8] sm:$0xff]
      %v429 = vld [vmem:[%s161 + $0x7e0] sm:$0xff]
      %v430 = vld [vmem:[%s161 + $0x7e8] sm:$0xff]
      %v431 = vld [vmem:[%s161 + $0x7f0] sm:$0xff]
      %v432 = vld [vmem:[%s161 + $0x7f8] sm:$0xff]
      %v433 = vld [vmem:[%s161 + $0x800] sm:$0xff]
      %v434 = vld [vmem:[%s161 + $0x808] sm:$0xff]
      %v435 = vld [vmem:[%s161 + $0x810] sm:$0xff]
      %v436 = vld [vmem:[%s161 + $0x818] sm:$0xff]
      %v437 = vld [vmem:[%s161 + $0x820] sm:$0xff]
      %v438 = vld [vmem:[%s161 + $0x828] sm:$0xff]
      %v439 = vld [vmem:[%s161 + $0x830] sm:$0xff]
      %v440 = vld [vmem:[%s161 + $0x838] sm:$0xff]
      %v441 = vld [vmem:[%s161 + $0x840] sm:$0xff]
      %v442 = vld [vmem:[%s161 + $0x848] sm:$0xff]
      %v443 = vld [vmem:[%s161 + $0x850] sm:$0xff]
      %v444 = vld [vmem:[%s161 + $0x858] sm:$0xff]
      %v445 = vld [vmem:[%s161 + $0x860] sm:$0xff]
      %v446 = vld [vmem:[%s161 + $0x868] sm:$0xff]
      %v447 = vld [vmem:[%s161 + $0x870] sm:$0xff]
      %v448 = vld [vmem:[%s161 + $0x878] sm:$0xff]
      %v449 = vld [vmem:[%s161 + $0x880] sm:$0xff]
      %v450 = vld [vmem:[%s161 + $0x888] sm:$0xff]
      %v451 = vld [vmem:[%s161 + $0x890] sm:$0xff]
      %v452 = vld [vmem:[%s161 + $0x898] sm:$0xff]
      %v453 = vld [vmem:[%s161 + $0x8a0] sm:$0xff]
      %v454 = vld [vmem:[%s161 + $0x8a8] sm:$0xff]
      %v455 = vld [vmem:[%s161 + $0x8b0] sm:$0xff]
      %v456 = vld [vmem:[%s161 + $0x8b8] sm:$0xff]
      %v457 = vld [vmem:[%s161 + $0x8c0] sm:$0xff]
      %v458 = vld [vmem:[%s161 + $0x8c8] sm:$0xff]
      %v459 = vld [vmem:[%s161 + $0x8d0] sm:$0xff]
      %v460 = vld [vmem:[%s161 + $0x8d8] sm:$0xff]
      %v461 = vld [vmem:[%s161 + $0x8e0] sm:$0xff]
      %v462 = vld [vmem:[%s161 + $0x8e8] sm:$0xff]
      %v463 = vld [vmem:[%s161 + $0x8f0] sm:$0xff]
      %v464 = vld [vmem:[%s161 + $0x8f8] sm:$0xff]
      %v465 = vld [vmem:[%s161 + $0x900] sm:$0xff]
      %v466 = vld [vmem:[%s161 + $0x908] sm:$0xff]
      %v467 = vld [vmem:[%s161 + $0x910] sm:$0xff]
      %v468 = vld [vmem:[%s161 + $0x918] sm:$0xff]
      %v469 = vld [vmem:[%s161 + $0x920] sm:$0xff]
      %v470 = vld [vmem:[%s161 + $0x928] sm:$0xff]
      %v471 = vld [vmem:[%s161 + $0x930] sm:$0xff]
      %v472 = vld [vmem:[%s161 + $0x938] sm:$0xff]
      %v473 = vld [vmem:[%s161 + $0x940] sm:$0xff]
      %v474 = vld [vmem:[%s161 + $0x948] sm:$0xff]
      %v475 = vld [vmem:[%s161 + $0x950] sm:$0xff]
      %v476 = vld [vmem:[%s161 + $0x958] sm:$0xff]
      %v477 = vld [vmem:[%s161 + $0x960] sm:$0xff]
      %v478 = vld [vmem:[%s161 + $0x968] sm:$0xff]
      %v479 = vld [vmem:[%s161 + $0x970] sm:$0xff]
      %v480 = vld [vmem:[%s161 + $0x978] sm:$0xff]
      %v481 = vld [vmem:[%s161 + $0x980] sm:$0xff]
      %v482 = vld [vmem:[%s161 + $0x988] sm:$0xff]
      %v483 = vld [vmem:[%s161 + $0x990] sm:$0xff]
      %v484 = vld [vmem:[%s161 + $0x998] sm:$0xff]
      %v485 = vld [vmem:[%s161 + $0x9a0] sm:$0xff]
      %v486 = vld [vmem:[%s161 + $0x9a8] sm:$0xff]
      %v487 = vld [vmem:[%s161 + $0x9b0] sm:$0xff]
      %v488 = vld [vmem:[%s161 + $0x9b8] sm:$0xff]
      %v489 = vld [vmem:[%s161 + $0x9c0] sm:$0xff]
      %v490 = vld [vmem:[%s161 + $0x9c8] sm:$0xff]
      %v491 = vld [vmem:[%s161 + $0x9d0] sm:$0xff]
      %v492 = vld [vmem:[%s161 + $0x9d8] sm:$0xff]
      %v493 = vld [vmem:[%s161 + $0x9e0] sm:$0xff]
      %v494 = vld [vmem:[%s161 + $0x9e8] sm:$0xff]
      %v495 = vld [vmem:[%s161 + $0x9f0] sm:$0xff]
      %v496 = vld [vmem:[%s161 + $0x9f8] sm:$0xff]
      %v497 = vld [vmem:[%s168] sm:$0xff]
      %v498 = vld [vmem:[%s168 + $0x8] sm:$0xff]
      %v499 = vld [vmem:[%s168 + $0x10] sm:$0xff]
      %v500 = vld [vmem:[%s168 + $0x18] sm:$0xff]
      %v501 = vld [vmem:[%s168 + $0x20] sm:$0xff]
      %v502 = vld [vmem:[%s168 + $0x28] sm:$0xff]
      %v503 = vld [vmem:[%s168 + $0x30] sm:$0xff]
      %v504 = vld [vmem:[%s168 + $0x38] sm:$0xff]
      %v505 = vld [vmem:[%s168 + $0x40] sm:$0xff]
      %v506 = vld [vmem:[%s168 + $0x48] sm:$0xff]
      %v507 = vld [vmem:[%s168 + $0x50] sm:$0xff]
      %v508 = vld [vmem:[%s168 + $0x58] sm:$0xff]
      %v509 = vld [vmem:[%s168 + $0x60] sm:$0xff]
      %v510 = vld [vmem:[%s168 + $0x68] sm:$0xff]
      %v511 = vld [vmem:[%s168 + $0x70] sm:$0xff]
      %v512 = vld [vmem:[%s168 + $0x78] sm:$0xff]
      %v513 = vld [vmem:[%s168 + $0x80] sm:$0xff]
      %v514 = vld [vmem:[%s168 + $0x88] sm:$0xff]
      %v515 = vld [vmem:[%s168 + $0x90] sm:$0xff]
      %v516 = vld [vmem:[%s168 + $0x98] sm:$0xff]
      %v517 = vld [vmem:[%s168 + $0xa0] sm:$0xff]
      %v518 = vld [vmem:[%s168 + $0xa8] sm:$0xff]
      %v519 = vld [vmem:[%s168 + $0xb0] sm:$0xff]
      %v520 = vld [vmem:[%s168 + $0xb8] sm:$0xff]
      %v521 = vld [vmem:[%s168 + $0xc0] sm:$0xff]
      %v522 = vld [vmem:[%s168 + $0xc8] sm:$0xff]
      %v523 = vld [vmem:[%s168 + $0xd0] sm:$0xff]
      %v524 = vld [vmem:[%s168 + $0xd8] sm:$0xff]
      %v525 = vld [vmem:[%s168 + $0xe0] sm:$0xff]
      %v526 = vld [vmem:[%s168 + $0xe8] sm:$0xff]
      %v527 = vld [vmem:[%s168 + $0xf0] sm:$0xff]
      %v528 = vld [vmem:[%s168 + $0xf8] sm:$0xff]
      %v529 = vld [vmem:[%s168 + $0x100] sm:$0xff]
      %v530 = vld [vmem:[%s168 + $0x108] sm:$0xff]
      %v531 = vld [vmem:[%s168 + $0x110] sm:$0xff]
      %v532 = vld [vmem:[%s168 + $0x118] sm:$0xff]
      %v533 = vld [vmem:[%s168 + $0x120] sm:$0xff]
      %v534 = vld [vmem:[%s168 + $0x128] sm:$0xff]
      %v535 = vld [vmem:[%s168 + $0x130] sm:$0xff]
      %v536 = vld [vmem:[%s168 + $0x138] sm:$0xff]
      %v537 = vld [vmem:[%s168 + $0x140] sm:$0xff]
      %v538 = vld [vmem:[%s168 + $0x148] sm:$0xff]
      %v539 = vld [vmem:[%s168 + $0x150] sm:$0xff]
      %v540 = vld [vmem:[%s168 + $0x158] sm:$0xff]
      %v541 = vld [vmem:[%s168 + $0x160] sm:$0xff]
      %v542 = vld [vmem:[%s168 + $0x168] sm:$0xff]
      %v543 = vld [vmem:[%s168 + $0x170] sm:$0xff]
      %v544 = vld [vmem:[%s168 + $0x178] sm:$0xff]
      %v545 = vld [vmem:[%s168 + $0x180] sm:$0xff]
      %v546 = vld [vmem:[%s168 + $0x188] sm:$0xff]
      %v547 = vld [vmem:[%s168 + $0x190] sm:$0xff]
      %v548 = vld [vmem:[%s168 + $0x198] sm:$0xff]
      %v549 = vld [vmem:[%s168 + $0x1a0] sm:$0xff]
      %v550 = vld [vmem:[%s168 + $0x1a8] sm:$0xff]
      %v551 = vld [vmem:[%s168 + $0x1b0] sm:$0xff]
      %v552 = vld [vmem:[%s168 + $0x1b8] sm:$0xff]
      %v553 = vld [vmem:[%s168 + $0x1c0] sm:$0xff]
      %v554 = vld [vmem:[%s168 + $0x1c8] sm:$0xff]
      %v555 = vld [vmem:[%s168 + $0x1d0] sm:$0xff]
      %v556 = vld [vmem:[%s168 + $0x1d8] sm:$0xff]
      %v557 = vld [vmem:[%s168 + $0x1e0] sm:$0xff]
      %v558 = vld [vmem:[%s168 + $0x1e8] sm:$0xff]
      %v559 = vld [vmem:[%s168 + $0x1f0] sm:$0xff]
      %v560 = vld [vmem:[%s168 + $0x1f8] sm:$0xff]
      %v561 = vld [vmem:[%s168 + $0x200] sm:$0xff]
      %v562 = vld [vmem:[%s168 + $0x208] sm:$0xff]
      %v563 = vld [vmem:[%s168 + $0x210] sm:$0xff]
      %v564 = vld [vmem:[%s168 + $0x218] sm:$0xff]
      %v565 = vld [vmem:[%s168 + $0x220] sm:$0xff]
      %v566 = vld [vmem:[%s168 + $0x228] sm:$0xff]
      %v567 = vld [vmem:[%s168 + $0x230] sm:$0xff]
      %v568 = vld [vmem:[%s168 + $0x238] sm:$0xff]
      %v569 = vld [vmem:[%s168 + $0x240] sm:$0xff]
      %v570 = vld [vmem:[%s168 + $0x248] sm:$0xff]
      %v571 = vld [vmem:[%s168 + $0x250] sm:$0xff]
      %v572 = vld [vmem:[%s168 + $0x258] sm:$0xff]
      %v573 = vld [vmem:[%s168 + $0x260] sm:$0xff]
      %v574 = vld [vmem:[%s168 + $0x268] sm:$0xff]
      %v575 = vld [vmem:[%s168 + $0x270] sm:$0xff]
      %v576 = vld [vmem:[%s168 + $0x278] sm:$0xff]
      %v577 = vld [vmem:[%s168 + $0x280] sm:$0xff]
      %v578 = vld [vmem:[%s168 + $0x288] sm:$0xff]
      %v579 = vld [vmem:[%s168 + $0x290] sm:$0xff]
      %v580 = vld [vmem:[%s168 + $0x298] sm:$0xff]
      %v581 = vld [vmem:[%s168 + $0x2a0] sm:$0xff]
      %v582 = vld [vmem:[%s168 + $0x2a8] sm:$0xff]
      %v583 = vld [vmem:[%s168 + $0x2b0] sm:$0xff]
      %v584 = vld [vmem:[%s168 + $0x2b8] sm:$0xff]
      %v585 = vld [vmem:[%s168 + $0x2c0] sm:$0xff]
      %v586 = vld [vmem:[%s168 + $0x2c8] sm:$0xff]
      %v587 = vld [vmem:[%s168 + $0x2d0] sm:$0xff]
      %v588 = vld [vmem:[%s168 + $0x2d8] sm:$0xff]
      %v589 = vld [vmem:[%s168 + $0x2e0] sm:$0xff]
      %v590 = vld [vmem:[%s168 + $0x2e8] sm:$0xff]
      %v591 = vld [vmem:[%s168 + $0x2f0] sm:$0xff]
      %v592 = vld [vmem:[%s168 + $0x2f8] sm:$0xff]
      %v593 = vld [vmem:[%s168 + $0x300] sm:$0xff]
      %v594 = vld [vmem:[%s168 + $0x308] sm:$0xff]
      %v595 = vld [vmem:[%s168 + $0x310] sm:$0xff]
      %v596 = vld [vmem:[%s168 + $0x318] sm:$0xff]
      %v597 = vld [vmem:[%s168 + $0x320] sm:$0xff]
      %v598 = vld [vmem:[%s168 + $0x328] sm:$0xff]
      %v599 = vld [vmem:[%s168 + $0x330] sm:$0xff]
      %v600 = vld [vmem:[%s168 + $0x338] sm:$0xff]
      %v601 = vld [vmem:[%s168 + $0x340] sm:$0xff]
      %v602 = vld [vmem:[%s168 + $0x348] sm:$0xff]
      %v603 = vld [vmem:[%s168 + $0x350] sm:$0xff]
      %v604 = vld [vmem:[%s168 + $0x358] sm:$0xff]
      %v605 = vld [vmem:[%s168 + $0x360] sm:$0xff]
      %v606 = vld [vmem:[%s168 + $0x368] sm:$0xff]
      %v607 = vld [vmem:[%s168 + $0x370] sm:$0xff]
      %v608 = vld [vmem:[%s168 + $0x378] sm:$0xff]
      %v609 = vld [vmem:[%s168 + $0x380] sm:$0xff]
      %v610 = vld [vmem:[%s168 + $0x388] sm:$0xff]
      %v611 = vld [vmem:[%s168 + $0x390] sm:$0xff]
      %v612 = vld [vmem:[%s168 + $0x398] sm:$0xff]
      %v613 = vld [vmem:[%s168 + $0x3a0] sm:$0xff]
      %v614 = vld [vmem:[%s168 + $0x3a8] sm:$0xff]
      %v615 = vld [vmem:[%s168 + $0x3b0] sm:$0xff]
      %v616 = vld [vmem:[%s168 + $0x3b8] sm:$0xff]
      %v617 = vld [vmem:[%s168 + $0x3c0] sm:$0xff]
      %v618 = vld [vmem:[%s168 + $0x3c8] sm:$0xff]
      %v619 = vld [vmem:[%s168 + $0x3d0] sm:$0xff]
      %v620 = vld [vmem:[%s168 + $0x3d8] sm:$0xff]
      %v621 = vld [vmem:[%s168 + $0x3e0] sm:$0xff]
      %v622 = vld [vmem:[%s168 + $0x3e8] sm:$0xff]
      %v623 = vld [vmem:[%s168 + $0x3f0] sm:$0xff]
      %v624 = vld [vmem:[%s168 + $0x3f8] sm:$0xff]
      %v625 = vld [vmem:[%s168 + $0x400] sm:$0xff]
      %v626 = vld [vmem:[%s168 + $0x408] sm:$0xff]
      %v627 = vld [vmem:[%s168 + $0x410] sm:$0xff]
      %v628 = vld [vmem:[%s168 + $0x418] sm:$0xff]
      %v629 = vld [vmem:[%s168 + $0x420] sm:$0xff]
      %v630 = vld [vmem:[%s168 + $0x428] sm:$0xff]
      %v631 = vld [vmem:[%s168 + $0x430] sm:$0xff]
      %v632 = vld [vmem:[%s168 + $0x438] sm:$0xff]
      %v633 = vld [vmem:[%s168 + $0x440] sm:$0xff]
      %v634 = vld [vmem:[%s168 + $0x448] sm:$0xff]
      %v635 = vld [vmem:[%s168 + $0x450] sm:$0xff]
      %v636 = vld [vmem:[%s168 + $0x458] sm:$0xff]
      %v637 = vld [vmem:[%s168 + $0x460] sm:$0xff]
      %v638 = vld [vmem:[%s168 + $0x468] sm:$0xff]
      %v639 = vld [vmem:[%s168 + $0x470] sm:$0xff]
      %v640 = vld [vmem:[%s168 + $0x478] sm:$0xff]
      %v641 = vld [vmem:[%s168 + $0x480] sm:$0xff]
      %v642 = vld [vmem:[%s168 + $0x488] sm:$0xff]
      %v643 = vld [vmem:[%s168 + $0x490] sm:$0xff]
      %v644 = vld [vmem:[%s168 + $0x498] sm:$0xff]
      %v645 = vld [vmem:[%s168 + $0x4a0] sm:$0xff]
      %v646 = vld [vmem:[%s168 + $0x4a8] sm:$0xff]
      %v647 = vld [vmem:[%s168 + $0x4b0] sm:$0xff]
      %v648 = vld [vmem:[%s168 + $0x4b8] sm:$0xff]
      %v649 = vld [vmem:[%s168 + $0x4c0] sm:$0xff]
      %v650 = vld [vmem:[%s168 + $0x4c8] sm:$0xff]
      %v651 = vld [vmem:[%s168 + $0x4d0] sm:$0xff]
      %v652 = vld [vmem:[%s168 + $0x4d8] sm:$0xff]
      %v653 = vld [vmem:[%s168 + $0x4e0] sm:$0xff]
      %v654 = vld [vmem:[%s168 + $0x4e8] sm:$0xff]
      %v655 = vld [vmem:[%s168 + $0x4f0] sm:$0xff]
      %v656 = vld [vmem:[%s168 + $0x4f8] sm:$0xff]
      %v657 = vld [vmem:[%s168 + $0x500] sm:$0xff]
      %v658 = vld [vmem:[%s168 + $0x508] sm:$0xff]
      %v659 = vld [vmem:[%s168 + $0x510] sm:$0xff]
      %v660 = vld [vmem:[%s168 + $0x518] sm:$0xff]
      %v661 = vld [vmem:[%s168 + $0x520] sm:$0xff]
      %v662 = vld [vmem:[%s168 + $0x528] sm:$0xff]
      %v663 = vld [vmem:[%s168 + $0x530] sm:$0xff]
      %v664 = vld [vmem:[%s168 + $0x538] sm:$0xff]
      %v665 = vld [vmem:[%s168 + $0x540] sm:$0xff]
      %v666 = vld [vmem:[%s168 + $0x548] sm:$0xff]
      %v667 = vld [vmem:[%s168 + $0x550] sm:$0xff]
      %v668 = vld [vmem:[%s168 + $0x558] sm:$0xff]
      %v669 = vld [vmem:[%s168 + $0x560] sm:$0xff]
      %v670 = vld [vmem:[%s168 + $0x568] sm:$0xff]
      %v671 = vld [vmem:[%s168 + $0x570] sm:$0xff]
      %v672 = vld [vmem:[%s168 + $0x578] sm:$0xff]
      %v673 = vld [vmem:[%s168 + $0x580] sm:$0xff]
      %v674 = vld [vmem:[%s168 + $0x588] sm:$0xff]
      %v675 = vld [vmem:[%s168 + $0x590] sm:$0xff]
      %v676 = vld [vmem:[%s168 + $0x598] sm:$0xff]
      %v677 = vld [vmem:[%s168 + $0x5a0] sm:$0xff]
      %v678 = vld [vmem:[%s168 + $0x5a8] sm:$0xff]
      %v679 = vld [vmem:[%s168 + $0x5b0] sm:$0xff]
      %v680 = vld [vmem:[%s168 + $0x5b8] sm:$0xff]
      %v681 = vld [vmem:[%s168 + $0x5c0] sm:$0xff]
      %v682 = vld [vmem:[%s168 + $0x5c8] sm:$0xff]
      %v683 = vld [vmem:[%s168 + $0x5d0] sm:$0xff]
      %v684 = vld [vmem:[%s168 + $0x5d8] sm:$0xff]
      %v685 = vld [vmem:[%s168 + $0x5e0] sm:$0xff]
      %v686 = vld [vmem:[%s168 + $0x5e8] sm:$0xff]
      %v687 = vld [vmem:[%s168 + $0x5f0] sm:$0xff]
      %v688 = vld [vmem:[%s168 + $0x5f8] sm:$0xff]
      %v689 = vld [vmem:[%s168 + $0x600] sm:$0xff]
      %v690 = vld [vmem:[%s168 + $0x608] sm:$0xff]
      %v691 = vld [vmem:[%s168 + $0x610] sm:$0xff]
      %v692 = vld [vmem:[%s168 + $0x618] sm:$0xff]
      %v693 = vld [vmem:[%s168 + $0x620] sm:$0xff]
      %v694 = vld [vmem:[%s168 + $0x628] sm:$0xff]
      %v695 = vld [vmem:[%s168 + $0x630] sm:$0xff]
      %v696 = vld [vmem:[%s168 + $0x638] sm:$0xff]
      %v697 = vld [vmem:[%s168 + $0x640] sm:$0xff]
      %v698 = vld [vmem:[%s168 + $0x648] sm:$0xff]
      %v699 = vld [vmem:[%s168 + $0x650] sm:$0xff]
      %v700 = vld [vmem:[%s168 + $0x658] sm:$0xff]
      %v701 = vld [vmem:[%s168 + $0x660] sm:$0xff]
      %v702 = vld [vmem:[%s168 + $0x668] sm:$0xff]
      %v703 = vld [vmem:[%s168 + $0x670] sm:$0xff]
      %v704 = vld [vmem:[%s168 + $0x678] sm:$0xff]
      %v705 = vld [vmem:[%s168 + $0x680] sm:$0xff]
      %v706 = vld [vmem:[%s168 + $0x688] sm:$0xff]
      %v707 = vld [vmem:[%s168 + $0x690] sm:$0xff]
      %v708 = vld [vmem:[%s168 + $0x698] sm:$0xff]
      %v709 = vld [vmem:[%s168 + $0x6a0] sm:$0xff]
      %v710 = vld [vmem:[%s168 + $0x6a8] sm:$0xff]
      %v711 = vld [vmem:[%s168 + $0x6b0] sm:$0xff]
      %v712 = vld [vmem:[%s168 + $0x6b8] sm:$0xff]
      %v713 = vld [vmem:[%s168 + $0x6c0] sm:$0xff]
      %v714 = vld [vmem:[%s168 + $0x6c8] sm:$0xff]
      %v715 = vld [vmem:[%s168 + $0x6d0] sm:$0xff]
      %v716 = vld [vmem:[%s168 + $0x6d8] sm:$0xff]
      %v717 = vld [vmem:[%s168 + $0x6e0] sm:$0xff]
      %v718 = vld [vmem:[%s168 + $0x6e8] sm:$0xff]
      %v719 = vld [vmem:[%s168 + $0x6f0] sm:$0xff]
      %v720 = vld [vmem:[%s168 + $0x6f8] sm:$0xff]
      %v721 = vld [vmem:[%s168 + $0x700] sm:$0xff]
      %v722 = vld [vmem:[%s168 + $0x708] sm:$0xff]
      %v723 = vld [vmem:[%s168 + $0x710] sm:$0xff]
      %v724 = vld [vmem:[%s168 + $0x718] sm:$0xff]
      %v725 = vld [vmem:[%s168 + $0x720] sm:$0xff]
      %v726 = vld [vmem:[%s168 + $0x728] sm:$0xff]
      %v727 = vld [vmem:[%s168 + $0x730] sm:$0xff]
      %v728 = vld [vmem:[%s168 + $0x738] sm:$0xff]
      %v729 = vld [vmem:[%s168 + $0x740] sm:$0xff]
      %v730 = vld [vmem:[%s168 + $0x748] sm:$0xff]
      %v731 = vld [vmem:[%s168 + $0x750] sm:$0xff]
      %v732 = vld [vmem:[%s168 + $0x758] sm:$0xff]
      %v733 = vld [vmem:[%s168 + $0x760] sm:$0xff]
      %v734 = vld [vmem:[%s168 + $0x768] sm:$0xff]
      %v735 = vld [vmem:[%s168 + $0x770] sm:$0xff]
      %v736 = vld [vmem:[%s168 + $0x778] sm:$0xff]
      %v737 = vld [vmem:[%s168 + $0x780] sm:$0xff]
      %v738 = vld [vmem:[%s168 + $0x788] sm:$0xff]
      %v739 = vld [vmem:[%s168 + $0x790] sm:$0xff]
      %v740 = vld [vmem:[%s168 + $0x798] sm:$0xff]
      %v741 = vld [vmem:[%s168 + $0x7a0] sm:$0xff]
      %v742 = vld [vmem:[%s168 + $0x7a8] sm:$0xff]
      %v743 = vld [vmem:[%s168 + $0x7b0] sm:$0xff]
      %v744 = vld [vmem:[%s168 + $0x7b8] sm:$0xff]
      %v745 = vld [vmem:[%s168 + $0x7c0] sm:$0xff]
      %v746 = vld [vmem:[%s168 + $0x7c8] sm:$0xff]
      %v747 = vld [vmem:[%s168 + $0x7d0] sm:$0xff]
      %v748 = vld [vmem:[%s168 + $0x7d8] sm:$0xff]
      %v749 = vld [vmem:[%s168 + $0x7e0] sm:$0xff]
      %v750 = vld [vmem:[%s168 + $0x7e8] sm:$0xff]
      %v751 = vld [vmem:[%s168 + $0x7f0] sm:$0xff]
      %v752 = vld [vmem:[%s168 + $0x7f8] sm:$0xff]
      %v753 = vld [vmem:[%s168 + $0x800] sm:$0xff]
      %v754 = vld [vmem:[%s168 + $0x808] sm:$0xff]
      %v755 = vld [vmem:[%s168 + $0x810] sm:$0xff]
      %v756 = vld [vmem:[%s168 + $0x818] sm:$0xff]
      %v757 = vld [vmem:[%s168 + $0x820] sm:$0xff]
      %v758 = vld [vmem:[%s168 + $0x828] sm:$0xff]
      %v759 = vld [vmem:[%s168 + $0x830] sm:$0xff]
      %v760 = vld [vmem:[%s168 + $0x838] sm:$0xff]
      %v761 = vld [vmem:[%s168 + $0x840] sm:$0xff]
      %v762 = vld [vmem:[%s168 + $0x848] sm:$0xff]
      %v763 = vld [vmem:[%s168 + $0x850] sm:$0xff]
      %v764 = vld [vmem:[%s168 + $0x858] sm:$0xff]
      %v765 = vld [vmem:[%s168 + $0x860] sm:$0xff]
      %v766 = vld [vmem:[%s168 + $0x868] sm:$0xff]
      %v767 = vld [vmem:[%s168 + $0x870] sm:$0xff]
      %v768 = vld [vmem:[%s168 + $0x878] sm:$0xff]
      %v769 = vld [vmem:[%s168 + $0x880] sm:$0xff]
      %v770 = vld [vmem:[%s168 + $0x888] sm:$0xff]
      %v771 = vld [vmem:[%s168 + $0x890] sm:$0xff]
      %v772 = vld [vmem:[%s168 + $0x898] sm:$0xff]
      %v773 = vld [vmem:[%s168 + $0x8a0] sm:$0xff]
      %v774 = vld [vmem:[%s168 + $0x8a8] sm:$0xff]
      %v775 = vld [vmem:[%s168 + $0x8b0] sm:$0xff]
      %v776 = vld [vmem:[%s168 + $0x8b8] sm:$0xff]
      %v777 = vld [vmem:[%s168 + $0x8c0] sm:$0xff]
      %v778 = vld [vmem:[%s168 + $0x8c8] sm:$0xff]
      %v779 = vld [vmem:[%s168 + $0x8d0] sm:$0xff]
      %v780 = vld [vmem:[%s168 + $0x8d8] sm:$0xff]
      %v781 = vld [vmem:[%s168 + $0x8e0] sm:$0xff]
      %v782 = vld [vmem:[%s168 + $0x8e8] sm:$0xff]
      %v783 = vld [vmem:[%s168 + $0x8f0] sm:$0xff]
      %v784 = vld [vmem:[%s168 + $0x8f8] sm:$0xff]
      %v785 = vld [vmem:[%s168 + $0x900] sm:$0xff]
      %v786 = vld [vmem:[%s168 + $0x908] sm:$0xff]
      %v787 = vld [vmem:[%s168 + $0x910] sm:$0xff]
      %v788 = vld [vmem:[%s168 + $0x918] sm:$0xff]
      %v789 = vld [vmem:[%s168 + $0x920] sm:$0xff]
      %v790 = vld [vmem:[%s168 + $0x928] sm:$0xff]
      %v791 = vld [vmem:[%s168 + $0x930] sm:$0xff]
      %v792 = vld [vmem:[%s168 + $0x938] sm:$0xff]
      %v793 = vld [vmem:[%s168 + $0x940] sm:$0xff]
      %v794 = vld [vmem:[%s168 + $0x948] sm:$0xff]
      %v795 = vld [vmem:[%s168 + $0x950] sm:$0xff]
      %v796 = vld [vmem:[%s168 + $0x958] sm:$0xff]
      %v797 = vld [vmem:[%s168 + $0x960] sm:$0xff]
      %v798 = vld [vmem:[%s168 + $0x968] sm:$0xff]
      %v799 = vld [vmem:[%s168 + $0x970] sm:$0xff]
      %v800 = vld [vmem:[%s168 + $0x978] sm:$0xff]
      %v801 = vld [vmem:[%s168 + $0x980] sm:$0xff]
      %v802 = vld [vmem:[%s168 + $0x988] sm:$0xff]
      %v803 = vld [vmem:[%s168 + $0x990] sm:$0xff]
      %v804 = vld [vmem:[%s168 + $0x998] sm:$0xff]
      %v805 = vld [vmem:[%s168 + $0x9a0] sm:$0xff]
      %v806 = vld [vmem:[%s168 + $0x9a8] sm:$0xff]
      %v807 = vld [vmem:[%s168 + $0x9b0] sm:$0xff]
      %v808 = vld [vmem:[%s168 + $0x9b8] sm:$0xff]
      %v809 = vld [vmem:[%s168 + $0x9c0] sm:$0xff]
      %v810 = vld [vmem:[%s168 + $0x9c8] sm:$0xff]
      %v811 = vld [vmem:[%s168 + $0x9d0] sm:$0xff]
      %v812 = vld [vmem:[%s168 + $0x9d8] sm:$0xff]
      %v813 = vld [vmem:[%s168 + $0x9e0] sm:$0xff]
      %v814 = vld [vmem:[%s168 + $0x9e8] sm:$0xff]
      %v815 = vld [vmem:[%s168 + $0x9f0] sm:$0xff]
      %v816 = vld [vmem:[%s168 + $0x9f8] sm:$0xff]
      %v817 = vmax.f32 %v177, 0.0
      %v818 = vmax.f32 %v178, 0.0
      %v819 = vmax.f32 %v179, 0.0
      %v820 = vmax.f32 %v180, 0.0
      %v821 = vmax.f32 %v181, 0.0
      %v822 = vmax.f32 %v182, 0.0
      %v823 = vmax.f32 %v183, 0.0
      %v824 = vmax.f32 %v184, 0.0
      %v825 = vmax.f32 %v185, 0.0
      %v826 = vmax.f32 %v186, 0.0
      %v827 = vmax.f32 %v187, 0.0
      %v828 = vmax.f32 %v188, 0.0
      %v829 = vmax.f32 %v189, 0.0
      %v830 = vmax.f32 %v190, 0.0
      %v831 = vmax.f32 %v191, 0.0
      %v832 = vmax.f32 %v192, 0.0
      %v833 = vmax.f32 %v193, 0.0
      %v834 = vmax.f32 %v194, 0.0
      %v835 = vmax.f32 %v195, 0.0
      %v836 = vmax.f32 %v196, 0.0
      %v837 = vmax.f32 %v197, 0.0
      %v838 = vmax.f32 %v198, 0.0
      %v839 = vmax.f32 %v199, 0.0
      %v840 = vmax.f32 %v200, 0.0
      %v841 = vmax.f32 %v201, 0.0
      %v842 = vmax.f32 %v202, 0.0
      %v843 = vmax.f32 %v203, 0.0
      %v844 = vmax.f32 %v204, 0.0
      %v845 = vmax.f32 %v205, 0.0
      %v846 = vmax.f32 %v206, 0.0
      %v847 = vmax.f32 %v207, 0.0
      %v848 = vmax.f32 %v208, 0.0
      %v849 = vmax.f32 %v209, 0.0
      %v850 = vmax.f32 %v210, 0.0
      %v851 = vmax.f32 %v211, 0.0
      %v852 = vmax.f32 %v212, 0.0
      %v853 = vmax.f32 %v213, 0.0
      %v854 = vmax.f32 %v214, 0.0
      %v855 = vmax.f32 %v215, 0.0
      %v856 = vmax.f32 %v216, 0.0
      %v857 = vmax.f32 %v217, 0.0
      %v858 = vmax.f32 %v218, 0.0
      %v859 = vmax.f32 %v219, 0.0
      %v860 = vmax.f32 %v220, 0.0
      %v861 = vmax.f32 %v221, 0.0
      %v862 = vmax.f32 %v222, 0.0
      %v863 = vmax.f32 %v223, 0.0
      %v864 = vmax.f32 %v224, 0.0
      %v865 = vmax.f32 %v225, 0.0
      %v866 = vmax.f32 %v226, 0.0
      %v867 = vmax.f32 %v227, 0.0
      %v868 = vmax.f32 %v228, 0.0
      %v869 = vmax.f32 %v229, 0.0
      %v870 = vmax.f32 %v230, 0.0
      %v871 = vmax.f32 %v231, 0.0
      %v872 = vmax.f32 %v232, 0.0
      %v873 = vmax.f32 %v233, 0.0
      %v874 = vmax.f32 %v234, 0.0
      %v875 = vmax.f32 %v235, 0.0
      %v876 = vmax.f32 %v236, 0.0
      %v877 = vmax.f32 %v237, 0.0
      %v878 = vmax.f32 %v238, 0.0
      %v879 = vmax.f32 %v239, 0.0
      %v880 = vmax.f32 %v240, 0.0
      %v881 = vmax.f32 %v241, 0.0
      %v882 = vmax.f32 %v242, 0.0
      %v883 = vmax.f32 %v243, 0.0
      %v884 = vmax.f32 %v244, 0.0
      %v885 = vmax.f32 %v245, 0.0
      %v886 = vmax.f32 %v246, 0.0
      %v887 = vmax.f32 %v247, 0.0
      %v888 = vmax.f32 %v248, 0.0
      %v889 = vmax.f32 %v249, 0.0
      %v890 = vmax.f32 %v250, 0.0
      %v891 = vmax.f32 %v251, 0.0
      %v892 = vmax.f32 %v252, 0.0
      %v893 = vmax.f32 %v253, 0.0
      %v894 = vmax.f32 %v254, 0.0
      %v895 = vmax.f32 %v255, 0.0
      %v896 = vmax.f32 %v256, 0.0
      %v897 = vmax.f32 %v257, 0.0
      %v898 = vmax.f32 %v258, 0.0
      %v899 = vmax.f32 %v259, 0.0
      %v900 = vmax.f32 %v260, 0.0
      %v901 = vmax.f32 %v261, 0.0
      %v902 = vmax.f32 %v262, 0.0
      %v903 = vmax.f32 %v263, 0.0
      %v904 = vmax.f32 %v264, 0.0
      %v905 = vmax.f32 %v265, 0.0
      %v906 = vmax.f32 %v266, 0.0
      %v907 = vmax.f32 %v267, 0.0
      %v908 = vmax.f32 %v268, 0.0
      %v909 = vmax.f32 %v269, 0.0
      %v910 = vmax.f32 %v270, 0.0
      %v911 = vmax.f32 %v271, 0.0
      %v912 = vmax.f32 %v272, 0.0
      %v913 = vmax.f32 %v273, 0.0
      %v914 = vmax.f32 %v274, 0.0
      %v915 = vmax.f32 %v275, 0.0
      %v916 = vmax.f32 %v276, 0.0
      %v917 = vmax.f32 %v277, 0.0
      %v918 = vmax.f32 %v278, 0.0
      %v919 = vmax.f32 %v279, 0.0
      %v920 = vmax.f32 %v280, 0.0
      %v921 = vmax.f32 %v281, 0.0
      %v922 = vmax.f32 %v282, 0.0
      %v923 = vmax.f32 %v283, 0.0
      %v924 = vmax.f32 %v284, 0.0
      %v925 = vmax.f32 %v285, 0.0
      %v926 = vmax.f32 %v286, 0.0
      %v927 = vmax.f32 %v287, 0.0
      %v928 = vmax.f32 %v288, 0.0
      %v929 = vmax.f32 %v289, 0.0
      %v930 = vmax.f32 %v290, 0.0
      %v931 = vmax.f32 %v291, 0.0
      %v932 = vmax.f32 %v292, 0.0
      %v933 = vmax.f32 %v293, 0.0
      %v934 = vmax.f32 %v294, 0.0
      %v935 = vmax.f32 %v295, 0.0
      %v936 = vmax.f32 %v296, 0.0
      %v937 = vmax.f32 %v297, 0.0
      %v938 = vmax.f32 %v298, 0.0
      %v939 = vmax.f32 %v299, 0.0
      %v940 = vmax.f32 %v300, 0.0
      %v941 = vmax.f32 %v301, 0.0
      %v942 = vmax.f32 %v302, 0.0
      %v943 = vmax.f32 %v303, 0.0
      %v944 = vmax.f32 %v304, 0.0
      %v945 = vmax.f32 %v305, 0.0
      %v946 = vmax.f32 %v306, 0.0
      %v947 = vmax.f32 %v307, 0.0
      %v948 = vmax.f32 %v308, 0.0
      %v949 = vmax.f32 %v309, 0.0
      %v950 = vmax.f32 %v310, 0.0
      %v951 = vmax.f32 %v311, 0.0
      %v952 = vmax.f32 %v312, 0.0
      %v953 = vmax.f32 %v313, 0.0
      %v954 = vmax.f32 %v314, 0.0
      %v955 = vmax.f32 %v315, 0.0
      %v956 = vmax.f32 %v316, 0.0
      %v957 = vmax.f32 %v317, 0.0
      %v958 = vmax.f32 %v318, 0.0
      %v959 = vmax.f32 %v319, 0.0
      %v960 = vmax.f32 %v320, 0.0
      %v961 = vmax.f32 %v321, 0.0
      %v962 = vmax.f32 %v322, 0.0
      %v963 = vmax.f32 %v323, 0.0
      %v964 = vmax.f32 %v324, 0.0
      %v965 = vmax.f32 %v325, 0.0
      %v966 = vmax.f32 %v326, 0.0
      %v967 = vmax.f32 %v327, 0.0
      %v968 = vmax.f32 %v328, 0.0
      %v969 = vmax.f32 %v329, 0.0
      %v970 = vmax.f32 %v330, 0.0
      %v971 = vmax.f32 %v331, 0.0
      %v972 = vmax.f32 %v332, 0.0
      %v973 = vmax.f32 %v333, 0.0
      %v974 = vmax.f32 %v334, 0.0
      %v975 = vmax.f32 %v335, 0.0
      %v976 = vmax.f32 %v336, 0.0
      %v977 = vmax.f32 %v337, 0.0
      %v978 = vmax.f32 %v338, 0.0
      %v979 = vmax.f32 %v339, 0.0
      %v980 = vmax.f32 %v340, 0.0
      %v981 = vmax.f32 %v341, 0.0
      %v982 = vmax.f32 %v342, 0.0
      %v983 = vmax.f32 %v343, 0.0
      %v984 = vmax.f32 %v344, 0.0
      %v985 = vmax.f32 %v345, 0.0
      %v986 = vmax.f32 %v346, 0.0
      %v987 = vmax.f32 %v347, 0.0
      %v988 = vmax.f32 %v348, 0.0
      %v989 = vmax.f32 %v349, 0.0
      %v990 = vmax.f32 %v350, 0.0
      %v991 = vmax.f32 %v351, 0.0
      %v992 = vmax.f32 %v352, 0.0
      %v993 = vmax.f32 %v353, 0.0
      %v994 = vmax.f32 %v354, 0.0
      %v995 = vmax.f32 %v355, 0.0
      %v996 = vmax.f32 %v356, 0.0
      %v997 = vmax.f32 %v357, 0.0
      %v998 = vmax.f32 %v358, 0.0
      %v999 = vmax.f32 %v359, 0.0
      %v1000 = vmax.f32 %v360, 0.0
      %v1001 = vmax.f32 %v361, 0.0
      %v1002 = vmax.f32 %v362, 0.0
      %v1003 = vmax.f32 %v363, 0.0
      %v1004 = vmax.f32 %v364, 0.0
      %v1005 = vmax.f32 %v365, 0.0
      %v1006 = vmax.f32 %v366, 0.0
      %v1007 = vmax.f32 %v367, 0.0
      %v1008 = vmax.f32 %v368, 0.0
      %v1009 = vmax.f32 %v369, 0.0
      %v1010 = vmax.f32 %v370, 0.0
      %v1011 = vmax.f32 %v371, 0.0
      %v1012 = vmax.f32 %v372, 0.0
      %v1013 = vmax.f32 %v373, 0.0
      %v1014 = vmax.f32 %v374, 0.0
      %v1015 = vmax.f32 %v375, 0.0
      %v1016 = vmax.f32 %v376, 0.0
      %v1017 = vmax.f32 %v377, 0.0
      %v1018 = vmax.f32 %v378, 0.0
      %v1019 = vmax.f32 %v379, 0.0
      %v1020 = vmax.f32 %v380, 0.0
      %v1021 = vmax.f32 %v381, 0.0
      %v1022 = vmax.f32 %v382, 0.0
      %v1023 = vmax.f32 %v383, 0.0
      %v1024 = vmax.f32 %v384, 0.0
      %v1025 = vmax.f32 %v385, 0.0
      %v1026 = vmax.f32 %v386, 0.0
      %v1027 = vmax.f32 %v387, 0.0
      %v1028 = vmax.f32 %v388, 0.0
      %v1029 = vmax.f32 %v389, 0.0
      %v1030 = vmax.f32 %v390, 0.0
      %v1031 = vmax.f32 %v391, 0.0
      %v1032 = vmax.f32 %v392, 0.0
      %v1033 = vmax.f32 %v393, 0.0
      %v1034 = vmax.f32 %v394, 0.0
      %v1035 = vmax.f32 %v395, 0.0
      %v1036 = vmax.f32 %v396, 0.0
      %v1037 = vmax.f32 %v397, 0.0
      %v1038 = vmax.f32 %v398, 0.0
      %v1039 = vmax.f32 %v399, 0.0
      %v1040 = vmax.f32 %v400, 0.0
      %v1041 = vmax.f32 %v401, 0.0
      %v1042 = vmax.f32 %v402, 0.0
      %v1043 = vmax.f32 %v403, 0.0
      %v1044 = vmax.f32 %v404, 0.0
      %v1045 = vmax.f32 %v405, 0.0
      %v1046 = vmax.f32 %v406, 0.0
      %v1047 = vmax.f32 %v407, 0.0
      %v1048 = vmax.f32 %v408, 0.0
      %v1049 = vmax.f32 %v409, 0.0
      %v1050 = vmax.f32 %v410, 0.0
      %v1051 = vmax.f32 %v411, 0.0
      %v1052 = vmax.f32 %v412, 0.0
      %v1053 = vmax.f32 %v413, 0.0
      %v1054 = vmax.f32 %v414, 0.0
      %v1055 = vmax.f32 %v415, 0.0
      %v1056 = vmax.f32 %v416, 0.0
      %v1057 = vmax.f32 %v417, 0.0
      %v1058 = vmax.f32 %v418, 0.0
      %v1059 = vmax.f32 %v419, 0.0
      %v1060 = vmax.f32 %v420, 0.0
      %v1061 = vmax.f32 %v421, 0.0
      %v1062 = vmax.f32 %v422, 0.0
      %v1063 = vmax.f32 %v423, 0.0
      %v1064 = vmax.f32 %v424, 0.0
      %v1065 = vmax.f32 %v425, 0.0
      %v1066 = vmax.f32 %v426, 0.0
      %v1067 = vmax.f32 %v427, 0.0
      %v1068 = vmax.f32 %v428, 0.0
      %v1069 = vmax.f32 %v429, 0.0
      %v1070 = vmax.f32 %v430, 0.0
      %v1071 = vmax.f32 %v431, 0.0
      %v1072 = vmax.f32 %v432, 0.0
      %v1073 = vmax.f32 %v433, 0.0
      %v1074 = vmax.f32 %v434, 0.0
      %v1075 = vmax.f32 %v435, 0.0
      %v1076 = vmax.f32 %v436, 0.0
      %v1077 = vmax.f32 %v437, 0.0
      %v1078 = vmax.f32 %v438, 0.0
      %v1079 = vmax.f32 %v439, 0.0
      %v1080 = vmax.f32 %v440, 0.0
      %v1081 = vmax.f32 %v441, 0.0
      %v1082 = vmax.f32 %v442, 0.0
      %v1083 = vmax.f32 %v443, 0.0
      %v1084 = vmax.f32 %v444, 0.0
      %v1085 = vmax.f32 %v445, 0.0
      %v1086 = vmax.f32 %v446, 0.0
      %v1087 = vmax.f32 %v447, 0.0
      %v1088 = vmax.f32 %v448, 0.0
      %v1089 = vmax.f32 %v449, 0.0
      %v1090 = vmax.f32 %v450, 0.0
      %v1091 = vmax.f32 %v451, 0.0
      %v1092 = vmax.f32 %v452, 0.0
      %v1093 = vmax.f32 %v453, 0.0
      %v1094 = vmax.f32 %v454, 0.0
      %v1095 = vmax.f32 %v455, 0.0
      %v1096 = vmax.f32 %v456, 0.0
      %v1097 = vmax.f32 %v457, 0.0
      %v1098 = vmax.f32 %v458, 0.0
      %v1099 = vmax.f32 %v459, 0.0
      %v1100 = vmax.f32 %v460, 0.0
      %v1101 = vmax.f32 %v461, 0.0
      %v1102 = vmax.f32 %v462, 0.0
      %v1103 = vmax.f32 %v463, 0.0
      %v1104 = vmax.f32 %v464, 0.0
      %v1105 = vmax.f32 %v465, 0.0
      %v1106 = vmax.f32 %v466, 0.0
      %v1107 = vmax.f32 %v467, 0.0
      %v1108 = vmax.f32 %v468, 0.0
      %v1109 = vmax.f32 %v469, 0.0
      %v1110 = vmax.f32 %v470, 0.0
      %v1111 = vmax.f32 %v471, 0.0
      %v1112 = vmax.f32 %v472, 0.0
      %v1113 = vmax.f32 %v473, 0.0
      %v1114 = vmax.f32 %v474, 0.0
      %v1115 = vmax.f32 %v475, 0.0
      %v1116 = vmax.f32 %v476, 0.0
      %v1117 = vmax.f32 %v477, 0.0
      %v1118 = vmax.f32 %v478, 0.0
      %v1119 = vmax.f32 %v479, 0.0
      %v1120 = vmax.f32 %v480, 0.0
      %v1121 = vmax.f32 %v481, 0.0
      %v1122 = vmax.f32 %v482, 0.0
      %v1123 = vmax.f32 %v483, 0.0
      %v1124 = vmax.f32 %v484, 0.0
      %v1125 = vmax.f32 %v485, 0.0
      %v1126 = vmax.f32 %v486, 0.0
      %v1127 = vmax.f32 %v487, 0.0
      %v1128 = vmax.f32 %v488, 0.0
      %v1129 = vmax.f32 %v489, 0.0
      %v1130 = vmax.f32 %v490, 0.0
      %v1131 = vmax.f32 %v491, 0.0
      %v1132 = vmax.f32 %v492, 0.0
      %v1133 = vmax.f32 %v493, 0.0
      %v1134 = vmax.f32 %v494, 0.0
      %v1135 = vmax.f32 %v495, 0.0
      %v1136 = vmax.f32 %v496, 0.0
      %v1137 = vmul.f32 %v177, %v497
      %v1138 = vmul.f32 %v178, %v498
      %v1139 = vmul.f32 %v179, %v499
      %v1140 = vmul.f32 %v180, %v500
      %v1141 = vmul.f32 %v181, %v501
      %v1142 = vmul.f32 %v182, %v502
      %v1143 = vmul.f32 %v183, %v503
      %v1144 = vmul.f32 %v184, %v504
      %v1145 = vmul.f32 %v185, %v505
      %v1146 = vmul.f32 %v186, %v506
      %v1147 = vmul.f32 %v187, %v507
      %v1148 = vmul.f32 %v188, %v508
      %v1149 = vmul.f32 %v189, %v509
      %v1150 = vmul.f32 %v190, %v510
      %v1151 = vmul.f32 %v191, %v511
      %v1152 = vmul.f32 %v192, %v512
      %v1153 = vmul.f32 %v193, %v513
      %v1154 = vmul.f32 %v194, %v514
      %v1155 = vmul.f32 %v195, %v515
      %v1156 = vmul.f32 %v196, %v516
      %v1157 = vmul.f32 %v197, %v517
      %v1158 = vmul.f32 %v198, %v518
      %v1159 = vmul.f32 %v199, %v519
      %v1160 = vmul.f32 %v200, %v520
      %v1161 = vmul.f32 %v201, %v521
      %v1162 = vmul.f32 %v202, %v522
      %v1163 = vmul.f32 %v203, %v523
      %v1164 = vmul.f32 %v204, %v524
      %v1165 = vmul.f32 %v205, %v525
      %v1166 = vmul.f32 %v206, %v526
      %v1167 = vmul.f32 %v207, %v527
      %v1168 = vmul.f32 %v208, %v528
      %v1169 = vmul.f32 %v209, %v529
      %v1170 = vmul.f32 %v210, %v530
      %v1171 = vmul.f32 %v211, %v531
      %v1172 = vmul.f32 %v212, %v532
      %v1173 = vmul.f32 %v213, %v533
      %v1174 = vmul.f32 %v214, %v534
      %v1175 = vmul.f32 %v215, %v535
      %v1176 = vmul.f32 %v216, %v536
      %v1177 = vmul.f32 %v217, %v537
      %v1178 = vmul.f32 %v218, %v538
      %v1179 = vmul.f32 %v219, %v539
      %v1180 = vmul.f32 %v220, %v540
      %v1181 = vmul.f32 %v221, %v541
      %v1182 = vmul.f32 %v222, %v542
      %v1183 = vmul.f32 %v223, %v543
      %v1184 = vmul.f32 %v224, %v544
      %v1185 = vmul.f32 %v225, %v545
      %v1186 = vmul.f32 %v226, %v546
      %v1187 = vmul.f32 %v227, %v547
      %v1188 = vmul.f32 %v228, %v548
      %v1189 = vmul.f32 %v229, %v549
      %v1190 = vmul.f32 %v230, %v550
      %v1191 = vmul.f32 %v231, %v551
      %v1192 = vmul.f32 %v232, %v552
      %v1193 = vmul.f32 %v233, %v553
      %v1194 = vmul.f32 %v234, %v554
      %v1195 = vmul.f32 %v235, %v555
      %v1196 = vmul.f32 %v236, %v556
      %v1197 = vmul.f32 %v237, %v557
      %v1198 = vmul.f32 %v238, %v558
      %v1199 = vmul.f32 %v239, %v559
      %v1200 = vmul.f32 %v240, %v560
      %v1201 = vmul.f32 %v241, %v561
      %v1202 = vmul.f32 %v242, %v562
      %v1203 = vmul.f32 %v243, %v563
      %v1204 = vmul.f32 %v244, %v564
      %v1205 = vmul.f32 %v245, %v565
      %v1206 = vmul.f32 %v246, %v566
      %v1207 = vmul.f32 %v247, %v567
      %v1208 = vmul.f32 %v248, %v568
      %v1209 = vmul.f32 %v249, %v569
      %v1210 = vmul.f32 %v250, %v570
      %v1211 = vmul.f32 %v251, %v571
      %v1212 = vmul.f32 %v252, %v572
      %v1213 = vmul.f32 %v253, %v573
      %v1214 = vmul.f32 %v254, %v574
      %v1215 = vmul.f32 %v255, %v575
      %v1216 = vmul.f32 %v256, %v576
      %v1217 = vmul.f32 %v257, %v577
      %v1218 = vmul.f32 %v258, %v578
      %v1219 = vmul.f32 %v259, %v579
      %v1220 = vmul.f32 %v260, %v580
      %v1221 = vmul.f32 %v261, %v581
      %v1222 = vmul.f32 %v262, %v582
      %v1223 = vmul.f32 %v263, %v583
      %v1224 = vmul.f32 %v264, %v584
      %v1225 = vmul.f32 %v265, %v585
      %v1226 = vmul.f32 %v266, %v586
      %v1227 = vmul.f32 %v267, %v587
      %v1228 = vmul.f32 %v268, %v588
      %v1229 = vmul.f32 %v269, %v589
      %v1230 = vmul.f32 %v270, %v590
      %v1231 = vmul.f32 %v271, %v591
      %v1232 = vmul.f32 %v272, %v592
      %v1233 = vmul.f32 %v273, %v593
      %v1234 = vmul.f32 %v274, %v594
      %v1235 = vmul.f32 %v275, %v595
      %v1236 = vmul.f32 %v276, %v596
      %v1237 = vmul.f32 %v277, %v597
      %v1238 = vmul.f32 %v278, %v598
      %v1239 = vmul.f32 %v279, %v599
      %v1240 = vmul.f32 %v280, %v600
      %v1241 = vmul.f32 %v281, %v601
      %v1242 = vmul.f32 %v282, %v602
      %v1243 = vmul.f32 %v283, %v603
      %v1244 = vmul.f32 %v284, %v604
      %v1245 = vmul.f32 %v285, %v605
      %v1246 = vmul.f32 %v286, %v606
      %v1247 = vmul.f32 %v287, %v607
      %v1248 = vmul.f32 %v288, %v608
      %v1249 = vmul.f32 %v289, %v609
      %v1250 = vmul.f32 %v290, %v610
      %v1251 = vmul.f32 %v291, %v611
      %v1252 = vmul.f32 %v292, %v612
      %v1253 = vmul.f32 %v293, %v613
      %v1254 = vmul.f32 %v294, %v614
      %v1255 = vmul.f32 %v295, %v615
      %v1256 = vmul.f32 %v296, %v616
      %v1257 = vmul.f32 %v297, %v617
      %v1258 = vmul.f32 %v298, %v618
      %v1259 = vmul.f32 %v299, %v619
      %v1260 = vmul.f32 %v300, %v620
      %v1261 = vmul.f32 %v301, %v621
      %v1262 = vmul.f32 %v302, %v622
      %v1263 = vmul.f32 %v303, %v623
      %v1264 = vmul.f32 %v304, %v624
      %v1265 = vmul.f32 %v305, %v625
      %v1266 = vmul.f32 %v306, %v626
      %v1267 = vmul.f32 %v307, %v627
      %v1268 = vmul.f32 %v308, %v628
      %v1269 = vmul.f32 %v309, %v629
      %v1270 = vmul.f32 %v310, %v630
      %v1271 = vmul.f32 %v311, %v631
      %v1272 = vmul.f32 %v312, %v632
      %v1273 = vmul.f32 %v313, %v633
      %v1274 = vmul.f32 %v314, %v634
      %v1275 = vmul.f32 %v315, %v635
      %v1276 = vmul.f32 %v316, %v636
      %v1277 = vmul.f32 %v317, %v637
      %v1278 = vmul.f32 %v318, %v638
      %v1279 = vmul.f32 %v319, %v639
      %v1280 = vmul.f32 %v320, %v640
      %v1281 = vmul.f32 %v321, %v641
      %v1282 = vmul.f32 %v322, %v642
      %v1283 = vmul.f32 %v323, %v643
      %v1284 = vmul.f32 %v324, %v644
      %v1285 = vmul.f32 %v325, %v645
      %v1286 = vmul.f32 %v326, %v646
      %v1287 = vmul.f32 %v327, %v647
      %v1288 = vmul.f32 %v328, %v648
      %v1289 = vmul.f32 %v329, %v649
      %v1290 = vmul.f32 %v330, %v650
      %v1291 = vmul.f32 %v331, %v651
      %v1292 = vmul.f32 %v332, %v652
      %v1293 = vmul.f32 %v333, %v653
      %v1294 = vmul.f32 %v334, %v654
      %v1295 = vmul.f32 %v335, %v655
      %v1296 = vmul.f32 %v336, %v656
      %v1297 = vmul.f32 %v337, %v657
      %v1298 = vmul.f32 %v338, %v658
      %v1299 = vmul.f32 %v339, %v659
      %v1300 = vmul.f32 %v340, %v660
      %v1301 = vmul.f32 %v341, %v661
      %v1302 = vmul.f32 %v342, %v662
      %v1303 = vmul.f32 %v343, %v663
      %v1304 = vmul.f32 %v344, %v664
      %v1305 = vmul.f32 %v345, %v665
      %v1306 = vmul.f32 %v346, %v666
      %v1307 = vmul.f32 %v347, %v667
      %v1308 = vmul.f32 %v348, %v668
      %v1309 = vmul.f32 %v349, %v669
      %v1310 = vmul.f32 %v350, %v670
      %v1311 = vmul.f32 %v351, %v671
      %v1312 = vmul.f32 %v352, %v672
      %v1313 = vmul.f32 %v353, %v673
      %v1314 = vmul.f32 %v354, %v674
      %v1315 = vmul.f32 %v355, %v675
      %v1316 = vmul.f32 %v356, %v676
      %v1317 = vmul.f32 %v357, %v677
      %v1318 = vmul.f32 %v358, %v678
      %v1319 = vmul.f32 %v359, %v679
      %v1320 = vmul.f32 %v360, %v680
      %v1321 = vmul.f32 %v361, %v681
      %v1322 = vmul.f32 %v362, %v682
      %v1323 = vmul.f32 %v363, %v683
      %v1324 = vmul.f32 %v364, %v684
      %v1325 = vmul.f32 %v365, %v685
      %v1326 = vmul.f32 %v366, %v686
      %v1327 = vmul.f32 %v367, %v687
      %v1328 = vmul.f32 %v368, %v688
      %v1329 = vmul.f32 %v369, %v689
      %v1330 = vmul.f32 %v370, %v690
      %v1331 = vmul.f32 %v371, %v691
      %v1332 = vmul.f32 %v372, %v692
      %v1333 = vmul.f32 %v373, %v693
      %v1334 = vmul.f32 %v374, %v694
      %v1335 = vmul.f32 %v375, %v695
      %v1336 = vmul.f32 %v376, %v696
      %v1337 = vmul.f32 %v377, %v697
      %v1338 = vmul.f32 %v378, %v698
      %v1339 = vmul.f32 %v379, %v699
      %v1340 = vmul.f32 %v380, %v700
      %v1341 = vmul.f32 %v381, %v701
      %v1342 = vmul.f32 %v382, %v702
      %v1343 = vmul.f32 %v383, %v703
      %v1344 = vmul.f32 %v384, %v704
      %v1345 = vmul.f32 %v385, %v705
      %v1346 = vmul.f32 %v386, %v706
      %v1347 = vmul.f32 %v387, %v707
      %v1348 = vmul.f32 %v388, %v708
      %v1349 = vmul.f32 %v389, %v709
      %v1350 = vmul.f32 %v390, %v710
      %v1351 = vmul.f32 %v391, %v711
      %v1352 = vmul.f32 %v392, %v712
      %v1353 = vmul.f32 %v393, %v713
      %v1354 = vmul.f32 %v394, %v714
      %v1355 = vmul.f32 %v395, %v715
      %v1356 = vmul.f32 %v396, %v716
      %v1357 = vmul.f32 %v397, %v717
      %v1358 = vmul.f32 %v398, %v718
      %v1359 = vmul.f32 %v399, %v719
      %v1360 = vmul.f32 %v400, %v720
      %v1361 = vmul.f32 %v401, %v721
      %v1362 = vmul.f32 %v402, %v722
      %v1363 = vmul.f32 %v403, %v723
      %v1364 = vmul.f32 %v404, %v724
      %v1365 = vmul.f32 %v405, %v725
      %v1366 = vmul.f32 %v406, %v726
      %v1367 = vmul.f32 %v407, %v727
      %v1368 = vmul.f32 %v408, %v728
      %v1369 = vmul.f32 %v409, %v729
      %v1370 = vmul.f32 %v410, %v730
      %v1371 = vmul.f32 %v411, %v731
      %v1372 = vmul.f32 %v412, %v732
      %v1373 = vmul.f32 %v413, %v733
      %v1374 = vmul.f32 %v414, %v734
      %v1375 = vmul.f32 %v415, %v735
      %v1376 = vmul.f32 %v416, %v736
      %v1377 = vmul.f32 %v417, %v737
      %v1378 = vmul.f32 %v418, %v738
      %v1379 = vmul.f32 %v419, %v739
      %v1380 = vmul.f32 %v420, %v740
      %v1381 = vmul.f32 %v421, %v741
      %v1382 = vmul.f32 %v422, %v742
      %v1383 = vmul.f32 %v423, %v743
      %v1384 = vmul.f32 %v424, %v744
      %v1385 = vmul.f32 %v425, %v745
      %v1386 = vmul.f32 %v426, %v746
      %v1387 = vmul.f32 %v427, %v747
      %v1388 = vmul.f32 %v428, %v748
      %v1389 = vmul.f32 %v429, %v749
      %v1390 = vmul.f32 %v430, %v750
      %v1391 = vmul.f32 %v431, %v751
      %v1392 = vmul.f32 %v432, %v752
      %v1393 = vmul.f32 %v433, %v753
      %v1394 = vmul.f32 %v434, %v754
      %v1395 = vmul.f32 %v435, %v755
      %v1396 = vmul.f32 %v436, %v756
      %v1397 = vmul.f32 %v437, %v757
      %v1398 = vmul.f32 %v438, %v758
      %v1399 = vmul.f32 %v439, %v759
      %v1400 = vmul.f32 %v440, %v760
      %v1401 = vmul.f32 %v441, %v761
      %v1402 = vmul.f32 %v442, %v762
      %v1403 = vmul.f32 %v443, %v763
      %v1404 = vmul.f32 %v444, %v764
      %v1405 = vmul.f32 %v445, %v765
      %v1406 = vmul.f32 %v446, %v766
      %v1407 = vmul.f32 %v447, %v767
      %v1408 = vmul.f32 %v448, %v768
      %v1409 = vmul.f32 %v449, %v769
      %v1410 = vmul.f32 %v450, %v770
      %v1411 = vmul.f32 %v451, %v771
      %v1412 = vmul.f32 %v452, %v772
      %v1413 = vmul.f32 %v453, %v773
      %v1414 = vmul.f32 %v454, %v774
      %v1415 = vmul.f32 %v455, %v775
      %v1416 = vmul.f32 %v456, %v776
      %v1417 = vmul.f32 %v457, %v777
      %v1418 = vmul.f32 %v458, %v778
      %v1419 = vmul.f32 %v459, %v779
      %v1420 = vmul.f32 %v460, %v780
      %v1421 = vmul.f32 %v461, %v781
      %v1422 = vmul.f32 %v462, %v782
      %v1423 = vmul.f32 %v463, %v783
      %v1424 = vmul.f32 %v464, %v784
      %v1425 = vmul.f32 %v465, %v785
      %v1426 = vmul.f32 %v466, %v786
      %v1427 = vmul.f32 %v467, %v787
      %v1428 = vmul.f32 %v468, %v788
      %v1429 = vmul.f32 %v469, %v789
      %v1430 = vmul.f32 %v470, %v790
      %v1431 = vmul.f32 %v471, %v791
      %v1432 = vmul.f32 %v472, %v792
      %v1433 = vmul.f32 %v473, %v793
      %v1434 = vmul.f32 %v474, %v794
      %v1435 = vmul.f32 %v475, %v795
      %v1436 = vmul.f32 %v476, %v796
      %v1437 = vmul.f32 %v477, %v797
      %v1438 = vmul.f32 %v478, %v798
      %v1439 = vmul.f32 %v479, %v799
      %v1440 = vmul.f32 %v480, %v800
      %v1441 = vmul.f32 %v481, %v801
      %v1442 = vmul.f32 %v482, %v802
      %v1443 = vmul.f32 %v483, %v803
      %v1444 = vmul.f32 %v484, %v804
      %v1445 = vmul.f32 %v485, %v805
      %v1446 = vmul.f32 %v486, %v806
      %v1447 = vmul.f32 %v487, %v807
      %v1448 = vmul.f32 %v488, %v808
      %v1449 = vmul.f32 %v489, %v809
      %v1450 = vmul.f32 %v490, %v810
      %v1451 = vmul.f32 %v491, %v811
      %v1452 = vmul.f32 %v492, %v812
      %v1453 = vmul.f32 %v493, %v813
      %v1454 = vmul.f32 %v494, %v814
      %v1455 = vmul.f32 %v495, %v815
      %v1456 = vmul.f32 %v496, %v816
      %v1457 = vsub.f32 %v817, %v1137
      %v1458 = vsub.f32 %v818, %v1138
      %v1459 = vsub.f32 %v819, %v1139
      %v1460 = vsub.f32 %v820, %v1140
      %v1461 = vsub.f32 %v821, %v1141
      %v1462 = vsub.f32 %v822, %v1142
      %v1463 = vsub.f32 %v823, %v1143
      %v1464 = vsub.f32 %v824, %v1144
      %v1465 = vsub.f32 %v825, %v1145
      %v1466 = vsub.f32 %v826, %v1146
      %v1467 = vsub.f32 %v827, %v1147
      %v1468 = vsub.f32 %v828, %v1148
      %v1469 = vsub.f32 %v829, %v1149
      %v1470 = vsub.f32 %v830, %v1150
      %v1471 = vsub.f32 %v831, %v1151
      %v1472 = vsub.f32 %v832, %v1152
      %v1473 = vsub.f32 %v833, %v1153
      %v1474 = vsub.f32 %v834, %v1154
      %v1475 = vsub.f32 %v835, %v1155
      %v1476 = vsub.f32 %v836, %v1156
      %v1477 = vsub.f32 %v837, %v1157
      %v1478 = vsub.f32 %v838, %v1158
      %v1479 = vsub.f32 %v839, %v1159
      %v1480 = vsub.f32 %v840, %v1160
      %v1481 = vsub.f32 %v841, %v1161
      %v1482 = vsub.f32 %v842, %v1162
      %v1483 = vsub.f32 %v843, %v1163
      %v1484 = vsub.f32 %v844, %v1164
      %v1485 = vsub.f32 %v845, %v1165
      %v1486 = vsub.f32 %v846, %v1166
      %v1487 = vsub.f32 %v847, %v1167
      %v1488 = vsub.f32 %v848, %v1168
      %v1489 = vsub.f32 %v849, %v1169
      %v1490 = vsub.f32 %v850, %v1170
      %v1491 = vsub.f32 %v851, %v1171
      %v1492 = vsub.f32 %v852, %v1172
      %v1493 = vsub.f32 %v853, %v1173
      %v1494 = vsub.f32 %v854, %v1174
      %v1495 = vsub.f32 %v855, %v1175
      %v1496 = vsub.f32 %v856, %v1176
      %v1497 = vsub.f32 %v857, %v1177
      %v1498 = vsub.f32 %v858, %v1178
      %v1499 = vsub.f32 %v859, %v1179
      %v1500 = vsub.f32 %v860, %v1180
      %v1501 = vsub.f32 %v861, %v1181
      %v1502 = vsub.f32 %v862, %v1182
      %v1503 = vsub.f32 %v863, %v1183
      %v1504 = vsub.f32 %v864, %v1184
      %v1505 = vsub.f32 %v865, %v1185
      %v1506 = vsub.f32 %v866, %v1186
      %v1507 = vsub.f32 %v867, %v1187
      %v1508 = vsub.f32 %v868, %v1188
      %v1509 = vsub.f32 %v869, %v1189
      %v1510 = vsub.f32 %v870, %v1190
      %v1511 = vsub.f32 %v871, %v1191
      %v1512 = vsub.f32 %v872, %v1192
      %v1513 = vsub.f32 %v873, %v1193
      %v1514 = vsub.f32 %v874, %v1194
      %v1515 = vsub.f32 %v875, %v1195
      %v1516 = vsub.f32 %v876, %v1196
      %v1517 = vsub.f32 %v877, %v1197
      %v1518 = vsub.f32 %v878, %v1198
      %v1519 = vsub.f32 %v879, %v1199
      %v1520 = vsub.f32 %v880, %v1200
      %v1521 = vsub.f32 %v881, %v1201
      %v1522 = vsub.f32 %v882, %v1202
      %v1523 = vsub.f32 %v883, %v1203
      %v1524 = vsub.f32 %v884, %v1204
      %v1525 = vsub.f32 %v885, %v1205
      %v1526 = vsub.f32 %v886, %v1206
      %v1527 = vsub.f32 %v887, %v1207
      %v1528 = vsub.f32 %v888, %v1208
      %v1529 = vsub.f32 %v889, %v1209
      %v1530 = vsub.f32 %v890, %v1210
      %v1531 = vsub.f32 %v891, %v1211
      %v1532 = vsub.f32 %v892, %v1212
      %v1533 = vsub.f32 %v893, %v1213
      %v1534 = vsub.f32 %v894, %v1214
      %v1535 = vsub.f32 %v895, %v1215
      %v1536 = vsub.f32 %v896, %v1216
      %v1537 = vsub.f32 %v897, %v1217
      %v1538 = vsub.f32 %v898, %v1218
      %v1539 = vsub.f32 %v899, %v1219
      %v1540 = vsub.f32 %v900, %v1220
      %v1541 = vsub.f32 %v901, %v1221
      %v1542 = vsub.f32 %v902, %v1222
      %v1543 = vsub.f32 %v903, %v1223
      %v1544 = vsub.f32 %v904, %v1224
      %v1545 = vsub.f32 %v905, %v1225
      %v1546 = vsub.f32 %v906, %v1226
      %v1547 = vsub.f32 %v907, %v1227
      %v1548 = vsub.f32 %v908, %v1228
      %v1549 = vsub.f32 %v909, %v1229
      %v1550 = vsub.f32 %v910, %v1230
      %v1551 = vsub.f32 %v911, %v1231
      %v1552 = vsub.f32 %v912, %v1232
      %v1553 = vsub.f32 %v913, %v1233
      %v1554 = vsub.f32 %v914, %v1234
      %v1555 = vsub.f32 %v915, %v1235
      %v1556 = vsub.f32 %v916, %v1236
      %v1557 = vsub.f32 %v917, %v1237
      %v1558 = vsub.f32 %v918, %v1238
      %v1559 = vsub.f32 %v919, %v1239
      %v1560 = vsub.f32 %v920, %v1240
      %v1561 = vsub.f32 %v921, %v1241
      %v1562 = vsub.f32 %v922, %v1242
      %v1563 = vsub.f32 %v923, %v1243
      %v1564 = vsub.f32 %v924, %v1244
      %v1565 = vsub.f32 %v925, %v1245
      %v1566 = vsub.f32 %v926, %v1246
      %v1567 = vsub.f32 %v927, %v1247
      %v1568 = vsub.f32 %v928, %v1248
      %v1569 = vsub.f32 %v929, %v1249
      %v1570 = vsub.f32 %v930, %v1250
      %v1571 = vsub.f32 %v931, %v1251
      %v1572 = vsub.f32 %v932, %v1252
      %v1573 = vsub.f32 %v933, %v1253
      %v1574 = vsub.f32 %v934, %v1254
      %v1575 = vsub.f32 %v935, %v1255
      %v1576 = vsub.f32 %v936, %v1256
      %v1577 = vsub.f32 %v937, %v1257
      %v1578 = vsub.f32 %v938, %v1258
      %v1579 = vsub.f32 %v939, %v1259
      %v1580 = vsub.f32 %v940, %v1260
      %v1581 = vsub.f32 %v941, %v1261
      %v1582 = vsub.f32 %v942, %v1262
      %v1583 = vsub.f32 %v943, %v1263
      %v1584 = vsub.f32 %v944, %v1264
      %v1585 = vsub.f32 %v945, %v1265
      %v1586 = vsub.f32 %v946, %v1266
      %v1587 = vsub.f32 %v947, %v1267
      %v1588 = vsub.f32 %v948, %v1268
      %v1589 = vsub.f32 %v949, %v1269
      %v1590 = vsub.f32 %v950, %v1270
      %v1591 = vsub.f32 %v951, %v1271
      %v1592 = vsub.f32 %v952, %v1272
      %v1593 = vsub.f32 %v953, %v1273
      %v1594 = vsub.f32 %v954, %v1274
      %v1595 = vsub.f32 %v955, %v1275
      %v1596 = vsub.f32 %v956, %v1276
      %v1597 = vsub.f32 %v957, %v1277
      %v1598 = vsub.f32 %v958, %v1278
      %v1599 = vsub.f32 %v959, %v1279
      %v1600 = vsub.f32 %v960, %v1280
      %v1601 = vsub.f32 %v961, %v1281
      %v1602 = vsub.f32 %v962, %v1282
      %v1603 = vsub.f32 %v963, %v1283
      %v1604 = vsub.f32 %v964, %v1284
      %v1605 = vsub.f32 %v965, %v1285
      %v1606 = vsub.f32 %v966, %v1286
      %v1607 = vsub.f32 %v967, %v1287
      %v1608 = vsub.f32 %v968, %v1288
      %v1609 = vsub.f32 %v969, %v1289
      %v1610 = vsub.f32 %v970, %v1290
      %v1611 = vsub.f32 %v971, %v1291
      %v1612 = vsub.f32 %v972, %v1292
      %v1613 = vsub.f32 %v973, %v1293
      %v1614 = vsub.f32 %v974, %v1294
      %v1615 = vsub.f32 %v975, %v1295
      %v1616 = vsub.f32 %v976, %v1296
      %v1617 = vsub.f32 %v977, %v1297
      %v1618 = vsub.f32 %v978, %v1298
      %v1619 = vsub.f32 %v979, %v1299
      %v1620 = vsub.f32 %v980, %v1300
      %v1621 = vsub.f32 %v981, %v1301
      %v1622 = vsub.f32 %v982, %v1302
      %v1623 = vsub.f32 %v983, %v1303
      %v1624 = vsub.f32 %v984, %v1304
      %v1625 = vsub.f32 %v985, %v1305
      %v1626 = vsub.f32 %v986, %v1306
      %v1627 = vsub.f32 %v987, %v1307
      %v1628 = vsub.f32 %v988, %v1308
      %v1629 = vsub.f32 %v989, %v1309
      %v1630 = vsub.f32 %v990, %v1310
      %v1631 = vsub.f32 %v991, %v1311
      %v1632 = vsub.f32 %v992, %v1312
      %v1633 = vsub.f32 %v993, %v1313
      %v1634 = vsub.f32 %v994, %v1314
      %v1635 = vsub.f32 %v995, %v1315
      %v1636 = vsub.f32 %v996, %v1316
      %v1637 = vsub.f32 %v997, %v1317
      %v1638 = vsub.f32 %v998, %v1318
      %v1639 = vsub.f32 %v999, %v1319
      %v1640 = vsub.f32 %v1000, %v1320
      %v1641 = vsub.f32 %v1001, %v1321
      %v1642 = vsub.f32 %v1002, %v1322
      %v1643 = vsub.f32 %v1003, %v1323
      %v1644 = vsub.f32 %v1004, %v1324
      %v1645 = vsub.f32 %v1005, %v1325
      %v1646 = vsub.f32 %v1006, %v1326
      %v1647 = vsub.f32 %v1007, %v1327
      %v1648 = vsub.f32 %v1008, %v1328
      %v1649 = vsub.f32 %v1009, %v1329
      %v1650 = vsub.f32 %v1010, %v1330
      %v1651 = vsub.f32 %v1011, %v1331
      %v1652 = vsub.f32 %v1012, %v1332
      %v1653 = vsub.f32 %v1013, %v1333
      %v1654 = vsub.f32 %v1014, %v1334
      %v1655 = vsub.f32 %v1015, %v1335
      %v1656 = vsub.f32 %v1016, %v1336
      %v1657 = vsub.f32 %v1017, %v1337
      %v1658 = vsub.f32 %v1018, %v1338
      %v1659 = vsub.f32 %v1019, %v1339
      %v1660 = vsub.f32 %v1020, %v1340
      %v1661 = vsub.f32 %v1021, %v1341
      %v1662 = vsub.f32 %v1022, %v1342
      %v1663 = vsub.f32 %v1023, %v1343
      %v1664 = vsub.f32 %v1024, %v1344
      %v1665 = vsub.f32 %v1025, %v1345
      %v1666 = vsub.f32 %v1026, %v1346
      %v1667 = vsub.f32 %v1027, %v1347
      %v1668 = vsub.f32 %v1028, %v1348
      %v1669 = vsub.f32 %v1029, %v1349
      %v1670 = vsub.f32 %v1030, %v1350
      %v1671 = vsub.f32 %v1031, %v1351
      %v1672 = vsub.f32 %v1032, %v1352
      %v1673 = vsub.f32 %v1033, %v1353
      %v1674 = vsub.f32 %v1034, %v1354
      %v1675 = vsub.f32 %v1035, %v1355
      %v1676 = vsub.f32 %v1036, %v1356
      %v1677 = vsub.f32 %v1037, %v1357
      %v1678 = vsub.f32 %v1038, %v1358
      %v1679 = vsub.f32 %v1039, %v1359
      %v1680 = vsub.f32 %v1040, %v1360
      %v1681 = vsub.f32 %v1041, %v1361
      %v1682 = vsub.f32 %v1042, %v1362
      %v1683 = vsub.f32 %v1043, %v1363
      %v1684 = vsub.f32 %v1044, %v1364
      %v1685 = vsub.f32 %v1045, %v1365
      %v1686 = vsub.f32 %v1046, %v1366
      %v1687 = vsub.f32 %v1047, %v1367
      %v1688 = vsub.f32 %v1048, %v1368
      %v1689 = vsub.f32 %v1049, %v1369
      %v1690 = vsub.f32 %v1050, %v1370
      %v1691 = vsub.f32 %v1051, %v1371
      %v1692 = vsub.f32 %v1052, %v1372
      %v1693 = vsub.f32 %v1053, %v1373
      %v1694 = vsub.f32 %v1054, %v1374
      %v1695 = vsub.f32 %v1055, %v1375
      %v1696 = vsub.f32 %v1056, %v1376
      %v1697 = vsub.f32 %v1057, %v1377
      %v1698 = vsub.f32 %v1058, %v1378
      %v1699 = vsub.f32 %v1059, %v1379
      %v1700 = vsub.f32 %v1060, %v1380
      %v1701 = vsub.f32 %v1061, %v1381
      %v1702 = vsub.f32 %v1062, %v1382
      %v1703 = vsub.f32 %v1063, %v1383
      %v1704 = vsub.f32 %v1064, %v1384
      %v1705 = vsub.f32 %v1065, %v1385
      %v1706 = vsub.f32 %v1066, %v1386
      %v1707 = vsub.f32 %v1067, %v1387
      %v1708 = vsub.f32 %v1068, %v1388
      %v1709 = vsub.f32 %v1069, %v1389
      %v1710 = vsub.f32 %v1070, %v1390
      %v1711 = vsub.f32 %v1071, %v1391
      %v1712 = vsub.f32 %v1072, %v1392
      %v1713 = vsub.f32 %v1073, %v1393
      %v1714 = vsub.f32 %v1074, %v1394
      %v1715 = vsub.f32 %v1075, %v1395
      %v1716 = vsub.f32 %v1076, %v1396
      %v1717 = vsub.f32 %v1077, %v1397
      %v1718 = vsub.f32 %v1078, %v1398
      %v1719 = vsub.f32 %v1079, %v1399
      %v1720 = vsub.f32 %v1080, %v1400
      %v1721 = vsub.f32 %v1081, %v1401
      %v1722 = vsub.f32 %v1082, %v1402
      %v1723 = vsub.f32 %v1083, %v1403
      %v1724 = vsub.f32 %v1084, %v1404
      %v1725 = vsub.f32 %v1085, %v1405
      %v1726 = vsub.f32 %v1086, %v1406
      %v1727 = vsub.f32 %v1087, %v1407
      %v1728 = vsub.f32 %v1088, %v1408
      %v1729 = vsub.f32 %v1089, %v1409
      %v1730 = vsub.f32 %v1090, %v1410
      %v1731 = vsub.f32 %v1091, %v1411
      %v1732 = vsub.f32 %v1092, %v1412
      %v1733 = vsub.f32 %v1093, %v1413
      %v1734 = vsub.f32 %v1094, %v1414
      %v1735 = vsub.f32 %v1095, %v1415
      %v1736 = vsub.f32 %v1096, %v1416
      %v1737 = vsub.f32 %v1097, %v1417
      %v1738 = vsub.f32 %v1098, %v1418
      %v1739 = vsub.f32 %v1099, %v1419
      %v1740 = vsub.f32 %v1100, %v1420
      %v1741 = vsub.f32 %v1101, %v1421
      %v1742 = vsub.f32 %v1102, %v1422
      %v1743 = vsub.f32 %v1103, %v1423
      %v1744 = vsub.f32 %v1104, %v1424
      %v1745 = vsub.f32 %v1105, %v1425
      %v1746 = vsub.f32 %v1106, %v1426
      %v1747 = vsub.f32 %v1107, %v1427
      %v1748 = vsub.f32 %v1108, %v1428
      %v1749 = vsub.f32 %v1109, %v1429
      %v1750 = vsub.f32 %v1110, %v1430
      %v1751 = vsub.f32 %v1111, %v1431
      %v1752 = vsub.f32 %v1112, %v1432
      %v1753 = vsub.f32 %v1113, %v1433
      %v1754 = vsub.f32 %v1114, %v1434
      %v1755 = vsub.f32 %v1115, %v1435
      %v1756 = vsub.f32 %v1116, %v1436
      %v1757 = vsub.f32 %v1117, %v1437
      %v1758 = vsub.f32 %v1118, %v1438
      %v1759 = vsub.f32 %v1119, %v1439
      %v1760 = vsub.f32 %v1120, %v1440
      %v1761 = vsub.f32 %v1121, %v1441
      %v1762 = vsub.f32 %v1122, %v1442
      %v1763 = vsub.f32 %v1123, %v1443
      %v1764 = vsub.f32 %v1124, %v1444
      %v1765 = vsub.f32 %v1125, %v1445
      %v1766 = vsub.f32 %v1126, %v1446
      %v1767 = vsub.f32 %v1127, %v1447
      %v1768 = vsub.f32 %v1128, %v1448
      %v1769 = vsub.f32 %v1129, %v1449
      %v1770 = vsub.f32 %v1130, %v1450
      %v1771 = vsub.f32 %v1131, %v1451
      %v1772 = vsub.f32 %v1132, %v1452
      %v1773 = vsub.f32 %v1133, %v1453
      %v1774 = vsub.f32 %v1134, %v1454
      %v1775 = vsub.f32 %v1135, %v1455
      %v1776 = vsub.f32 %v1136, %v1456
      %v1777 = vand.u32 2147483647, %v177
      %v1778 = vand.u32 2147483647, %v178
      %v1779 = vand.u32 2147483647, %v179
      %v1780 = vand.u32 2147483647, %v180
      %v1781 = vand.u32 2147483647, %v181
      %v1782 = vand.u32 2147483647, %v182
      %v1783 = vand.u32 2147483647, %v183
      %v1784 = vand.u32 2147483647, %v184
      %v1785 = vand.u32 2147483647, %v185
      %v1786 = vand.u32 2147483647, %v186
      %v1787 = vand.u32 2147483647, %v187
      %v1788 = vand.u32 2147483647, %v188
      %v1789 = vand.u32 2147483647, %v189
      %v1790 = vand.u32 2147483647, %v190
      %v1791 = vand.u32 2147483647, %v191
      %v1792 = vand.u32 2147483647, %v192
      %v1793 = vand.u32 2147483647, %v193
      %v1794 = vand.u32 2147483647, %v194
      %v1795 = vand.u32 2147483647, %v195
      %v1796 = vand.u32 2147483647, %v196
      %v1797 = vand.u32 2147483647, %v197
      %v1798 = vand.u32 2147483647, %v198
      %v1799 = vand.u32 2147483647, %v199
      %v1800 = vand.u32 2147483647, %v200
      %v1801 = vand.u32 2147483647, %v201
      %v1802 = vand.u32 2147483647, %v202
      %v1803 = vand.u32 2147483647, %v203
      %v1804 = vand.u32 2147483647, %v204
      %v1805 = vand.u32 2147483647, %v205
      %v1806 = vand.u32 2147483647, %v206
      %v1807 = vand.u32 2147483647, %v207
      %v1808 = vand.u32 2147483647, %v208
      %v1809 = vand.u32 2147483647, %v209
      %v1810 = vand.u32 2147483647, %v210
      %v1811 = vand.u32 2147483647, %v211
      %v1812 = vand.u32 2147483647, %v212
      %v1813 = vand.u32 2147483647, %v213
      %v1814 = vand.u32 2147483647, %v214
      %v1815 = vand.u32 2147483647, %v215
      %v1816 = vand.u32 2147483647, %v216
      %v1817 = vand.u32 2147483647, %v217
      %v1818 = vand.u32 2147483647, %v218
      %v1819 = vand.u32 2147483647, %v219
      %v1820 = vand.u32 2147483647, %v220
      %v1821 = vand.u32 2147483647, %v221
      %v1822 = vand.u32 2147483647, %v222
      %v1823 = vand.u32 2147483647, %v223
      %v1824 = vand.u32 2147483647, %v224
      %v1825 = vand.u32 2147483647, %v225
      %v1826 = vand.u32 2147483647, %v226
      %v1827 = vand.u32 2147483647, %v227
      %v1828 = vand.u32 2147483647, %v228
      %v1829 = vand.u32 2147483647, %v229
      %v1830 = vand.u32 2147483647, %v230
      %v1831 = vand.u32 2147483647, %v231
      %v1832 = vand.u32 2147483647, %v232
      %v1833 = vand.u32 2147483647, %v233
      %v1834 = vand.u32 2147483647, %v234
      %v1835 = vand.u32 2147483647, %v235
      %v1836 = vand.u32 2147483647, %v236
      %v1837 = vand.u32 2147483647, %v237
      %v1838 = vand.u32 2147483647, %v238
      %v1839 = vand.u32 2147483647, %v239
      %v1840 = vand.u32 2147483647, %v240
      %v1841 = vand.u32 2147483647, %v241
      %v1842 = vand.u32 2147483647, %v242
      %v1843 = vand.u32 2147483647, %v243
      %v1844 = vand.u32 2147483647, %v244
      %v1845 = vand.u32 2147483647, %v245
      %v1846 = vand.u32 2147483647, %v246
      %v1847 = vand.u32 2147483647, %v247
      %v1848 = vand.u32 2147483647, %v248
      %v1849 = vand.u32 2147483647, %v249
      %v1850 = vand.u32 2147483647, %v250
      %v1851 = vand.u32 2147483647, %v251
      %v1852 = vand.u32 2147483647, %v252
      %v1853 = vand.u32 2147483647, %v253
      %v1854 = vand.u32 2147483647, %v254
      %v1855 = vand.u32 2147483647, %v255
      %v1856 = vand.u32 2147483647, %v256
      %v1857 = vand.u32 2147483647, %v257
      %v1858 = vand.u32 2147483647, %v258
      %v1859 = vand.u32 2147483647, %v259
      %v1860 = vand.u32 2147483647, %v260
      %v1861 = vand.u32 2147483647, %v261
      %v1862 = vand.u32 2147483647, %v262
      %v1863 = vand.u32 2147483647, %v263
      %v1864 = vand.u32 2147483647, %v264
      %v1865 = vand.u32 2147483647, %v265
      %v1866 = vand.u32 2147483647, %v266
      %v1867 = vand.u32 2147483647, %v267
      %v1868 = vand.u32 2147483647, %v268
      %v1869 = vand.u32 2147483647, %v269
      %v1870 = vand.u32 2147483647, %v270
      %v1871 = vand.u32 2147483647, %v271
      %v1872 = vand.u32 2147483647, %v272
      %v1873 = vand.u32 2147483647, %v273
      %v1874 = vand.u32 2147483647, %v274
      %v1875 = vand.u32 2147483647, %v275
      %v1876 = vand.u32 2147483647, %v276
      %v1877 = vand.u32 2147483647, %v277
      %v1878 = vand.u32 2147483647, %v278
      %v1879 = vand.u32 2147483647, %v279
      %v1880 = vand.u32 2147483647, %v280
      %v1881 = vand.u32 2147483647, %v281
      %v1882 = vand.u32 2147483647, %v282
      %v1883 = vand.u32 2147483647, %v283
      %v1884 = vand.u32 2147483647, %v284
      %v1885 = vand.u32 2147483647, %v285
      %v1886 = vand.u32 2147483647, %v286
      %v1887 = vand.u32 2147483647, %v287
      %v1888 = vand.u32 2147483647, %v288
      %v1889 = vand.u32 2147483647, %v289
      %v1890 = vand.u32 2147483647, %v290
      %v1891 = vand.u32 2147483647, %v291
      %v1892 = vand.u32 2147483647, %v292
      %v1893 = vand.u32 2147483647, %v293
      %v1894 = vand.u32 2147483647, %v294
      %v1895 = vand.u32 2147483647, %v295
      %v1896 = vand.u32 2147483647, %v296
      %v1897 = vand.u32 2147483647, %v297
      %v1898 = vand.u32 2147483647, %v298
      %v1899 = vand.u32 2147483647, %v299
      %v1900 = vand.u32 2147483647, %v300
      %v1901 = vand.u32 2147483647, %v301
      %v1902 = vand.u32 2147483647, %v302
      %v1903 = vand.u32 2147483647, %v303
      %v1904 = vand.u32 2147483647, %v304
      %v1905 = vand.u32 2147483647, %v305
      %v1906 = vand.u32 2147483647, %v306
      %v1907 = vand.u32 2147483647, %v307
      %v1908 = vand.u32 2147483647, %v308
      %v1909 = vand.u32 2147483647, %v309
      %v1910 = vand.u32 2147483647, %v310
      %v1911 = vand.u32 2147483647, %v311
      %v1912 = vand.u32 2147483647, %v312
      %v1913 = vand.u32 2147483647, %v313
      %v1914 = vand.u32 2147483647, %v314
      %v1915 = vand.u32 2147483647, %v315
      %v1916 = vand.u32 2147483647, %v316
      %v1917 = vand.u32 2147483647, %v317
      %v1918 = vand.u32 2147483647, %v318
      %v1919 = vand.u32 2147483647, %v319
      %v1920 = vand.u32 2147483647, %v320
      %v1921 = vand.u32 2147483647, %v321
      %v1922 = vand.u32 2147483647, %v322
      %v1923 = vand.u32 2147483647, %v323
      %v1924 = vand.u32 2147483647, %v324
      %v1925 = vand.u32 2147483647, %v325
      %v1926 = vand.u32 2147483647, %v326
      %v1927 = vand.u32 2147483647, %v327
      %v1928 = vand.u32 2147483647, %v328
      %v1929 = vand.u32 2147483647, %v329
      %v1930 = vand.u32 2147483647, %v330
      %v1931 = vand.u32 2147483647, %v331
      %v1932 = vand.u32 2147483647, %v332
      %v1933 = vand.u32 2147483647, %v333
      %v1934 = vand.u32 2147483647, %v334
      %v1935 = vand.u32 2147483647, %v335
      %v1936 = vand.u32 2147483647, %v336
      %v1937 = vand.u32 2147483647, %v337
      %v1938 = vand.u32 2147483647, %v338
      %v1939 = vand.u32 2147483647, %v339
      %v1940 = vand.u32 2147483647, %v340
      %v1941 = vand.u32 2147483647, %v341
      %v1942 = vand.u32 2147483647, %v342
      %v1943 = vand.u32 2147483647, %v343
      %v1944 = vand.u32 2147483647, %v344
      %v1945 = vand.u32 2147483647, %v345
      %v1946 = vand.u32 2147483647, %v346
      %v1947 = vand.u32 2147483647, %v347
      %v1948 = vand.u32 2147483647, %v348
      %v1949 = vand.u32 2147483647, %v349
      %v1950 = vand.u32 2147483647, %v350
      %v1951 = vand.u32 2147483647, %v351
      %v1952 = vand.u32 2147483647, %v352
      %v1953 = vand.u32 2147483647, %v353
      %v1954 = vand.u32 2147483647, %v354
      %v1955 = vand.u32 2147483647, %v355
      %v1956 = vand.u32 2147483647, %v356
      %v1957 = vand.u32 2147483647, %v357
      %v1958 = vand.u32 2147483647, %v358
      %v1959 = vand.u32 2147483647, %v359
      %v1960 = vand.u32 2147483647, %v360
      %v1961 = vand.u32 2147483647, %v361
      %v1962 = vand.u32 2147483647, %v362
      %v1963 = vand.u32 2147483647, %v363
      %v1964 = vand.u32 2147483647, %v364
      %v1965 = vand.u32 2147483647, %v365
      %v1966 = vand.u32 2147483647, %v366
      %v1967 = vand.u32 2147483647, %v367
      %v1968 = vand.u32 2147483647, %v368
      %v1969 = vand.u32 2147483647, %v369
      %v1970 = vand.u32 2147483647, %v370
      %v1971 = vand.u32 2147483647, %v371
      %v1972 = vand.u32 2147483647, %v372
      %v1973 = vand.u32 2147483647, %v373
      %v1974 = vand.u32 2147483647, %v374
      %v1975 = vand.u32 2147483647, %v375
      %v1976 = vand.u32 2147483647, %v376
      %v1977 = vand.u32 2147483647, %v377
      %v1978 = vand.u32 2147483647, %v378
      %v1979 = vand.u32 2147483647, %v379
      %v1980 = vand.u32 2147483647, %v380
      %v1981 = vand.u32 2147483647, %v381
      %v1982 = vand.u32 2147483647, %v382
      %v1983 = vand.u32 2147483647, %v383
      %v1984 = vand.u32 2147483647, %v384
      %v1985 = vand.u32 2147483647, %v385
      %v1986 = vand.u32 2147483647, %v386
      %v1987 = vand.u32 2147483647, %v387
      %v1988 = vand.u32 2147483647, %v388
      %v1989 = vand.u32 2147483647, %v389
      %v1990 = vand.u32 2147483647, %v390
      %v1991 = vand.u32 2147483647, %v391
      %v1992 = vand.u32 2147483647, %v392
      %v1993 = vand.u32 2147483647, %v393
      %v1994 = vand.u32 2147483647, %v394
      %v1995 = vand.u32 2147483647, %v395
      %v1996 = vand.u32 2147483647, %v396
      %v1997 = vand.u32 2147483647, %v397
      %v1998 = vand.u32 2147483647, %v398
      %v1999 = vand.u32 2147483647, %v399
      %v2000 = vand.u32 2147483647, %v400
      %v2001 = vand.u32 2147483647, %v401
      %v2002 = vand.u32 2147483647, %v402
      %v2003 = vand.u32 2147483647, %v403
      %v2004 = vand.u32 2147483647, %v404
      %v2005 = vand.u32 2147483647, %v405
      %v2006 = vand.u32 2147483647, %v406
      %v2007 = vand.u32 2147483647, %v407
      %v2008 = vand.u32 2147483647, %v408
      %v2009 = vand.u32 2147483647, %v409
      %v2010 = vand.u32 2147483647, %v410
      %v2011 = vand.u32 2147483647, %v411
      %v2012 = vand.u32 2147483647, %v412
      %v2013 = vand.u32 2147483647, %v413
      %v2014 = vand.u32 2147483647, %v414
      %v2015 = vand.u32 2147483647, %v415
      %v2016 = vand.u32 2147483647, %v416
      %v2017 = vand.u32 2147483647, %v417
      %v2018 = vand.u32 2147483647, %v418
      %v2019 = vand.u32 2147483647, %v419
      %v2020 = vand.u32 2147483647, %v420
      %v2021 = vand.u32 2147483647, %v421
      %v2022 = vand.u32 2147483647, %v422
      %v2023 = vand.u32 2147483647, %v423
      %v2024 = vand.u32 2147483647, %v424
      %v2025 = vand.u32 2147483647, %v425
      %v2026 = vand.u32 2147483647, %v426
      %v2027 = vand.u32 2147483647, %v427
      %v2028 = vand.u32 2147483647, %v428
      %v2029 = vand.u32 2147483647, %v429
      %v2030 = vand.u32 2147483647, %v430
      %v2031 = vand.u32 2147483647, %v431
      %v2032 = vand.u32 2147483647, %v432
      %v2033 = vand.u32 2147483647, %v433
      %v2034 = vand.u32 2147483647, %v434
      %v2035 = vand.u32 2147483647, %v435
      %v2036 = vand.u32 2147483647, %v436
      %v2037 = vand.u32 2147483647, %v437
      %v2038 = vand.u32 2147483647, %v438
      %v2039 = vand.u32 2147483647, %v439
      %v2040 = vand.u32 2147483647, %v440
      %v2041 = vand.u32 2147483647, %v441
      %v2042 = vand.u32 2147483647, %v442
      %v2043 = vand.u32 2147483647, %v443
      %v2044 = vand.u32 2147483647, %v444
      %v2045 = vand.u32 2147483647, %v445
      %v2046 = vand.u32 2147483647, %v446
      %v2047 = vand.u32 2147483647, %v447
      %v2048 = vand.u32 2147483647, %v448
      %v2049 = vand.u32 2147483647, %v449
      %v2050 = vand.u32 2147483647, %v450
      %v2051 = vand.u32 2147483647, %v451
      %v2052 = vand.u32 2147483647, %v452
      %v2053 = vand.u32 2147483647, %v453
      %v2054 = vand.u32 2147483647, %v454
      %v2055 = vand.u32 2147483647, %v455
      %v2056 = vand.u32 2147483647, %v456
      %v2057 = vand.u32 2147483647, %v457
      %v2058 = vand.u32 2147483647, %v458
      %v2059 = vand.u32 2147483647, %v459
      %v2060 = vand.u32 2147483647, %v460
      %v2061 = vand.u32 2147483647, %v461
      %v2062 = vand.u32 2147483647, %v462
      %v2063 = vand.u32 2147483647, %v463
      %v2064 = vand.u32 2147483647, %v464
      %v2065 = vand.u32 2147483647, %v465
      %v2066 = vand.u32 2147483647, %v466
      %v2067 = vand.u32 2147483647, %v467
      %v2068 = vand.u32 2147483647, %v468
      %v2069 = vand.u32 2147483647, %v469
      %v2070 = vand.u32 2147483647, %v470
      %v2071 = vand.u32 2147483647, %v471
      %v2072 = vand.u32 2147483647, %v472
      %v2073 = vand.u32 2147483647, %v473
      %v2074 = vand.u32 2147483647, %v474
      %v2075 = vand.u32 2147483647, %v475
      %v2076 = vand.u32 2147483647, %v476
      %v2077 = vand.u32 2147483647, %v477
      %v2078 = vand.u32 2147483647, %v478
      %v2079 = vand.u32 2147483647, %v479
      %v2080 = vand.u32 2147483647, %v480
      %v2081 = vand.u32 2147483647, %v481
      %v2082 = vand.u32 2147483647, %v482
      %v2083 = vand.u32 2147483647, %v483
      %v2084 = vand.u32 2147483647, %v484
      %v2085 = vand.u32 2147483647, %v485
      %v2086 = vand.u32 2147483647, %v486
      %v2087 = vand.u32 2147483647, %v487
      %v2088 = vand.u32 2147483647, %v488
      %v2089 = vand.u32 2147483647, %v489
      %v2090 = vand.u32 2147483647, %v490
      %v2091 = vand.u32 2147483647, %v491
      %v2092 = vand.u32 2147483647, %v492
      %v2093 = vand.u32 2147483647, %v493
      %v2094 = vand.u32 2147483647, %v494
      %v2095 = vand.u32 2147483647, %v495
      %v2096 = vand.u32 2147483647, %v496
      %v2097 = vsub.f32 0.0, %v1777
      %v2098 = vsub.f32 0.0, %v1778
      %v2099 = vsub.f32 0.0, %v1779
      %v2100 = vsub.f32 0.0, %v1780
      %v2101 = vsub.f32 0.0, %v1781
      %v2102 = vsub.f32 0.0, %v1782
      %v2103 = vsub.f32 0.0, %v1783
      %v2104 = vsub.f32 0.0, %v1784
      %v2105 = vsub.f32 0.0, %v1785
      %v2106 = vsub.f32 0.0, %v1786
      %v2107 = vsub.f32 0.0, %v1787
      %v2108 = vsub.f32 0.0, %v1788
      %v2109 = vsub.f32 0.0, %v1789
      %v2110 = vsub.f32 0.0, %v1790
      %v2111 = vsub.f32 0.0, %v1791
      %v2112 = vsub.f32 0.0, %v1792
      %v2113 = vsub.f32 0.0, %v1793
      %v2114 = vsub.f32 0.0, %v1794
      %v2115 = vsub.f32 0.0, %v1795
      %v2116 = vsub.f32 0.0, %v1796
      %v2117 = vsub.f32 0.0, %v1797
      %v2118 = vsub.f32 0.0, %v1798
      %v2119 = vsub.f32 0.0, %v1799
      %v2120 = vsub.f32 0.0, %v1800
      %v2121 = vsub.f32 0.0, %v1801
      %v2122 = vsub.f32 0.0, %v1802
      %v2123 = vsub.f32 0.0, %v1803
      %v2124 = vsub.f32 0.0, %v1804
      %v2125 = vsub.f32 0.0, %v1805
      %v2126 = vsub.f32 0.0, %v1806
      %v2127 = vsub.f32 0.0, %v1807
      %v2128 = vsub.f32 0.0, %v1808
      %v2129 = vsub.f32 0.0, %v1809
      %v2130 = vsub.f32 0.0, %v1810
      %v2131 = vsub.f32 0.0, %v1811
      %v2132 = vsub.f32 0.0, %v1812
      %v2133 = vsub.f32 0.0, %v1813
      %v2134 = vsub.f32 0.0, %v1814
      %v2135 = vsub.f32 0.0, %v1815
      %v2136 = vsub.f32 0.0, %v1816
      %v2137 = vsub.f32 0.0, %v1817
      %v2138 = vsub.f32 0.0, %v1818
      %v2139 = vsub.f32 0.0, %v1819
      %v2140 = vsub.f32 0.0, %v1820
      %v2141 = vsub.f32 0.0, %v1821
      %v2142 = vsub.f32 0.0, %v1822
      %v2143 = vsub.f32 0.0, %v1823
      %v2144 = vsub.f32 0.0, %v1824
      %v2145 = vsub.f32 0.0, %v1825
      %v2146 = vsub.f32 0.0, %v1826
      %v2147 = vsub.f32 0.0, %v1827
      %v2148 = vsub.f32 0.0, %v1828
      %v2149 = vsub.f32 0.0, %v1829
      %v2150 = vsub.f32 0.0, %v1830
      %v2151 = vsub.f32 0.0, %v1831
      %v2152 = vsub.f32 0.0, %v1832
      %v2153 = vsub.f32 0.0, %v1833
      %v2154 = vsub.f32 0.0, %v1834
      %v2155 = vsub.f32 0.0, %v1835
      %v2156 = vsub.f32 0.0, %v1836
      %v2157 = vsub.f32 0.0, %v1837
      %v2158 = vsub.f32 0.0, %v1838
      %v2159 = vsub.f32 0.0, %v1839
      %v2160 = vsub.f32 0.0, %v1840
      %v2161 = vsub.f32 0.0, %v1841
      %v2162 = vsub.f32 0.0, %v1842
      %v2163 = vsub.f32 0.0, %v1843
      %v2164 = vsub.f32 0.0, %v1844
      %v2165 = vsub.f32 0.0, %v1845
      %v2166 = vsub.f32 0.0, %v1846
      %v2167 = vsub.f32 0.0, %v1847
      %v2168 = vsub.f32 0.0, %v1848
      %v2169 = vsub.f32 0.0, %v1849
      %v2170 = vsub.f32 0.0, %v1850
      %v2171 = vsub.f32 0.0, %v1851
      %v2172 = vsub.f32 0.0, %v1852
      %v2173 = vsub.f32 0.0, %v1853
      %v2174 = vsub.f32 0.0, %v1854
      %v2175 = vsub.f32 0.0, %v1855
      %v2176 = vsub.f32 0.0, %v1856
      %v2177 = vsub.f32 0.0, %v1857
      %v2178 = vsub.f32 0.0, %v1858
      %v2179 = vsub.f32 0.0, %v1859
      %v2180 = vsub.f32 0.0, %v1860
      %v2181 = vsub.f32 0.0, %v1861
      %v2182 = vsub.f32 0.0, %v1862
      %v2183 = vsub.f32 0.0, %v1863
      %v2184 = vsub.f32 0.0, %v1864
      %v2185 = vsub.f32 0.0, %v1865
      %v2186 = vsub.f32 0.0, %v1866
      %v2187 = vsub.f32 0.0, %v1867
      %v2188 = vsub.f32 0.0, %v1868
      %v2189 = vsub.f32 0.0, %v1869
      %v2190 = vsub.f32 0.0, %v1870
      %v2191 = vsub.f32 0.0, %v1871
      %v2192 = vsub.f32 0.0, %v1872
      %v2193 = vsub.f32 0.0, %v1873
      %v2194 = vsub.f32 0.0, %v1874
      %v2195 = vsub.f32 0.0, %v1875
      %v2196 = vsub.f32 0.0, %v1876
      %v2197 = vsub.f32 0.0, %v1877
      %v2198 = vsub.f32 0.0, %v1878
      %v2199 = vsub.f32 0.0, %v1879
      %v2200 = vsub.f32 0.0, %v1880
      %v2201 = vsub.f32 0.0, %v1881
      %v2202 = vsub.f32 0.0, %v1882
      %v2203 = vsub.f32 0.0, %v1883
      %v2204 = vsub.f32 0.0, %v1884
      %v2205 = vsub.f32 0.0, %v1885
      %v2206 = vsub.f32 0.0, %v1886
      %v2207 = vsub.f32 0.0, %v1887
      %v2208 = vsub.f32 0.0, %v1888
      %v2209 = vsub.f32 0.0, %v1889
      %v2210 = vsub.f32 0.0, %v1890
      %v2211 = vsub.f32 0.0, %v1891
      %v2212 = vsub.f32 0.0, %v1892
      %v2213 = vsub.f32 0.0, %v1893
      %v2214 = vsub.f32 0.0, %v1894
      %v2215 = vsub.f32 0.0, %v1895
      %v2216 = vsub.f32 0.0, %v1896
      %v2217 = vsub.f32 0.0, %v1897
      %v2218 = vsub.f32 0.0, %v1898
      %v2219 = vsub.f32 0.0, %v1899
      %v2220 = vsub.f32 0.0, %v1900
      %v2221 = vsub.f32 0.0, %v1901
      %v2222 = vsub.f32 0.0, %v1902
      %v2223 = vsub.f32 0.0, %v1903
      %v2224 = vsub.f32 0.0, %v1904
      %v2225 = vsub.f32 0.0, %v1905
      %v2226 = vsub.f32 0.0, %v1906
      %v2227 = vsub.f32 0.0, %v1907
      %v2228 = vsub.f32 0.0, %v1908
      %v2229 = vsub.f32 0.0, %v1909
      %v2230 = vsub.f32 0.0, %v1910
      %v2231 = vsub.f32 0.0, %v1911
      %v2232 = vsub.f32 0.0, %v1912
      %v2233 = vsub.f32 0.0, %v1913
      %v2234 = vsub.f32 0.0, %v1914
      %v2235 = vsub.f32 0.0, %v1915
      %v2236 = vsub.f32 0.0, %v1916
      %v2237 = vsub.f32 0.0, %v1917
      %v2238 = vsub.f32 0.0, %v1918
      %v2239 = vsub.f32 0.0, %v1919
      %v2240 = vsub.f32 0.0, %v1920
      %v2241 = vsub.f32 0.0, %v1921
      %v2242 = vsub.f32 0.0, %v1922
      %v2243 = vsub.f32 0.0, %v1923
      %v2244 = vsub.f32 0.0, %v1924
      %v2245 = vsub.f32 0.0, %v1925
      %v2246 = vsub.f32 0.0, %v1926
      %v2247 = vsub.f32 0.0, %v1927
      %v2248 = vsub.f32 0.0, %v1928
      %v2249 = vsub.f32 0.0, %v1929
      %v2250 = vsub.f32 0.0, %v1930
      %v2251 = vsub.f32 0.0, %v1931
      %v2252 = vsub.f32 0.0, %v1932
      %v2253 = vsub.f32 0.0, %v1933
      %v2254 = vsub.f32 0.0, %v1934
      %v2255 = vsub.f32 0.0, %v1935
      %v2256 = vsub.f32 0.0, %v1936
      %v2257 = vsub.f32 0.0, %v1937
      %v2258 = vsub.f32 0.0, %v1938
      %v2259 = vsub.f32 0.0, %v1939
      %v2260 = vsub.f32 0.0, %v1940
      %v2261 = vsub.f32 0.0, %v1941
      %v2262 = vsub.f32 0.0, %v1942
      %v2263 = vsub.f32 0.0, %v1943
      %v2264 = vsub.f32 0.0, %v1944
      %v2265 = vsub.f32 0.0, %v1945
      %v2266 = vsub.f32 0.0, %v1946
      %v2267 = vsub.f32 0.0, %v1947
      %v2268 = vsub.f32 0.0, %v1948
      %v2269 = vsub.f32 0.0, %v1949
      %v2270 = vsub.f32 0.0, %v1950
      %v2271 = vsub.f32 0.0, %v1951
      %v2272 = vsub.f32 0.0, %v1952
      %v2273 = vsub.f32 0.0, %v1953
      %v2274 = vsub.f32 0.0, %v1954
      %v2275 = vsub.f32 0.0, %v1955
      %v2276 = vsub.f32 0.0, %v1956
      %v2277 = vsub.f32 0.0, %v1957
      %v2278 = vsub.f32 0.0, %v1958
      %v2279 = vsub.f32 0.0, %v1959
      %v2280 = vsub.f32 0.0, %v1960
      %v2281 = vsub.f32 0.0, %v1961
      %v2282 = vsub.f32 0.0, %v1962
      %v2283 = vsub.f32 0.0, %v1963
      %v2284 = vsub.f32 0.0, %v1964
      %v2285 = vsub.f32 0.0, %v1965
      %v2286 = vsub.f32 0.0, %v1966
      %v2287 = vsub.f32 0.0, %v1967
      %v2288 = vsub.f32 0.0, %v1968
      %v2289 = vsub.f32 0.0, %v1969
      %v2290 = vsub.f32 0.0, %v1970
      %v2291 = vsub.f32 0.0, %v1971
      %v2292 = vsub.f32 0.0, %v1972
      %v2293 = vsub.f32 0.0, %v1973
      %v2294 = vsub.f32 0.0, %v1974
      %v2295 = vsub.f32 0.0, %v1975
      %v2296 = vsub.f32 0.0, %v1976
      %v2297 = vsub.f32 0.0, %v1977
      %v2298 = vsub.f32 0.0, %v1978
      %v2299 = vsub.f32 0.0, %v1979
      %v2300 = vsub.f32 0.0, %v1980
      %v2301 = vsub.f32 0.0, %v1981
      %v2302 = vsub.f32 0.0, %v1982
      %v2303 = vsub.f32 0.0, %v1983
      %v2304 = vsub.f32 0.0, %v1984
      %v2305 = vsub.f32 0.0, %v1985
      %v2306 = vsub.f32 0.0, %v1986
      %v2307 = vsub.f32 0.0, %v1987
      %v2308 = vsub.f32 0.0, %v1988
      %v2309 = vsub.f32 0.0, %v1989
      %v2310 = vsub.f32 0.0, %v1990
      %v2311 = vsub.f32 0.0, %v1991
      %v2312 = vsub.f32 0.0, %v1992
      %v2313 = vsub.f32 0.0, %v1993
      %v2314 = vsub.f32 0.0, %v1994
      %v2315 = vsub.f32 0.0, %v1995
      %v2316 = vsub.f32 0.0, %v1996
      %v2317 = vsub.f32 0.0, %v1997
      %v2318 = vsub.f32 0.0, %v1998
      %v2319 = vsub.f32 0.0, %v1999
      %v2320 = vsub.f32 0.0, %v2000
      %v2321 = vsub.f32 0.0, %v2001
      %v2322 = vsub.f32 0.0, %v2002
      %v2323 = vsub.f32 0.0, %v2003
      %v2324 = vsub.f32 0.0, %v2004
      %v2325 = vsub.f32 0.0, %v2005
      %v2326 = vsub.f32 0.0, %v2006
      %v2327 = vsub.f32 0.0, %v2007
      %v2328 = vsub.f32 0.0, %v2008
      %v2329 = vsub.f32 0.0, %v2009
      %v2330 = vsub.f32 0.0, %v2010
      %v2331 = vsub.f32 0.0, %v2011
      %v2332 = vsub.f32 0.0, %v2012
      %v2333 = vsub.f32 0.0, %v2013
      %v2334 = vsub.f32 0.0, %v2014
      %v2335 = vsub.f32 0.0, %v2015
      %v2336 = vsub.f32 0.0, %v2016
      %v2337 = vsub.f32 0.0, %v2017
      %v2338 = vsub.f32 0.0, %v2018
      %v2339 = vsub.f32 0.0, %v2019
      %v2340 = vsub.f32 0.0, %v2020
      %v2341 = vsub.f32 0.0, %v2021
      %v2342 = vsub.f32 0.0, %v2022
      %v2343 = vsub.f32 0.0, %v2023
      %v2344 = vsub.f32 0.0, %v2024
      %v2345 = vsub.f32 0.0, %v2025
      %v2346 = vsub.f32 0.0, %v2026
      %v2347 = vsub.f32 0.0, %v2027
      %v2348 = vsub.f32 0.0, %v2028
      %v2349 = vsub.f32 0.0, %v2029
      %v2350 = vsub.f32 0.0, %v2030
      %v2351 = vsub.f32 0.0, %v2031
      %v2352 = vsub.f32 0.0, %v2032
      %v2353 = vsub.f32 0.0, %v2033
      %v2354 = vsub.f32 0.0, %v2034
      %v2355 = vsub.f32 0.0, %v2035
      %v2356 = vsub.f32 0.0, %v2036
      %v2357 = vsub.f32 0.0, %v2037
      %v2358 = vsub.f32 0.0, %v2038
      %v2359 = vsub.f32 0.0, %v2039
      %v2360 = vsub.f32 0.0, %v2040
      %v2361 = vsub.f32 0.0, %v2041
      %v2362 = vsub.f32 0.0, %v2042
      %v2363 = vsub.f32 0.0, %v2043
      %v2364 = vsub.f32 0.0, %v2044
      %v2365 = vsub.f32 0.0, %v2045
      %v2366 = vsub.f32 0.0, %v2046
      %v2367 = vsub.f32 0.0, %v2047
      %v2368 = vsub.f32 0.0, %v2048
      %v2369 = vsub.f32 0.0, %v2049
      %v2370 = vsub.f32 0.0, %v2050
      %v2371 = vsub.f32 0.0, %v2051
      %v2372 = vsub.f32 0.0, %v2052
      %v2373 = vsub.f32 0.0, %v2053
      %v2374 = vsub.f32 0.0, %v2054
      %v2375 = vsub.f32 0.0, %v2055
      %v2376 = vsub.f32 0.0, %v2056
      %v2377 = vsub.f32 0.0, %v2057
      %v2378 = vsub.f32 0.0, %v2058
      %v2379 = vsub.f32 0.0, %v2059
      %v2380 = vsub.f32 0.0, %v2060
      %v2381 = vsub.f32 0.0, %v2061
      %v2382 = vsub.f32 0.0, %v2062
      %v2383 = vsub.f32 0.0, %v2063
      %v2384 = vsub.f32 0.0, %v2064
      %v2385 = vsub.f32 0.0, %v2065
      %v2386 = vsub.f32 0.0, %v2066
      %v2387 = vsub.f32 0.0, %v2067
      %v2388 = vsub.f32 0.0, %v2068
      %v2389 = vsub.f32 0.0, %v2069
      %v2390 = vsub.f32 0.0, %v2070
      %v2391 = vsub.f32 0.0, %v2071
      %v2392 = vsub.f32 0.0, %v2072
      %v2393 = vsub.f32 0.0, %v2073
      %v2394 = vsub.f32 0.0, %v2074
      %v2395 = vsub.f32 0.0, %v2075
      %v2396 = vsub.f32 0.0, %v2076
      %v2397 = vsub.f32 0.0, %v2077
      %v2398 = vsub.f32 0.0, %v2078
      %v2399 = vsub.f32 0.0, %v2079
      %v2400 = vsub.f32 0.0, %v2080
      %v2401 = vsub.f32 0.0, %v2081
      %v2402 = vsub.f32 0.0, %v2082
      %v2403 = vsub.f32 0.0, %v2083
      %v2404 = vsub.f32 0.0, %v2084
      %v2405 = vsub.f32 0.0, %v2085
      %v2406 = vsub.f32 0.0, %v2086
      %v2407 = vsub.f32 0.0, %v2087
      %v2408 = vsub.f32 0.0, %v2088
      %v2409 = vsub.f32 0.0, %v2089
      %v2410 = vsub.f32 0.0, %v2090
      %v2411 = vsub.f32 0.0, %v2091
      %v2412 = vsub.f32 0.0, %v2092
      %v2413 = vsub.f32 0.0, %v2093
      %v2414 = vsub.f32 0.0, %v2094
      %v2415 = vsub.f32 0.0, %v2095
      %v2416 = vsub.f32 0.0, %v2096
      %v2417 = vmul.f32 %v2097, 1.442695
      %v2418 = vpow.pop %v2417
      %v2419 = vmul.f32 %v2098, 1.442695
      %v2420 = vpow.pop %v2419
      %v2421 = vmul.f32 %v2099, 1.442695
      %v2422 = vpow.pop %v2421
      %v2423 = vmul.f32 %v2100, 1.442695
      %v2424 = vpow.pop %v2423
      %v2425 = vmul.f32 %v2101, 1.442695
      %v2426 = vpow.pop %v2425
      %v2427 = vmul.f32 %v2102, 1.442695
      %v2428 = vpow.pop %v2427
      %v2429 = vmul.f32 %v2103, 1.442695
      %v2430 = vpow.pop %v2429
      %v2431 = vmul.f32 %v2104, 1.442695
      %v2432 = vpow.pop %v2431
      %v2433 = vmul.f32 %v2105, 1.442695
      %v2434 = vpow.pop %v2433
      %v2435 = vmul.f32 %v2106, 1.442695
      %v2436 = vpow.pop %v2435
      %v2437 = vmul.f32 %v2107, 1.442695
      %v2438 = vpow.pop %v2437
      %v2439 = vmul.f32 %v2108, 1.442695
      %v2440 = vpow.pop %v2439
      %v2441 = vmul.f32 %v2109, 1.442695
      %v2442 = vpow.pop %v2441
      %v2443 = vmul.f32 %v2110, 1.442695
      %v2444 = vpow.pop %v2443
      %v2445 = vmul.f32 %v2111, 1.442695
      %v2446 = vpow.pop %v2445
      %v2447 = vmul.f32 %v2112, 1.442695
      %v2448 = vpow.pop %v2447
      %v2449 = vmul.f32 %v2113, 1.442695
      %v2450 = vpow.pop %v2449
      %v2451 = vmul.f32 %v2114, 1.442695
      %v2452 = vpow.pop %v2451
      %v2453 = vmul.f32 %v2115, 1.442695
      %v2454 = vpow.pop %v2453
      %v2455 = vmul.f32 %v2116, 1.442695
      %v2456 = vpow.pop %v2455
      %v2457 = vmul.f32 %v2117, 1.442695
      %v2458 = vpow.pop %v2457
      %v2459 = vmul.f32 %v2118, 1.442695
      %v2460 = vpow.pop %v2459
      %v2461 = vmul.f32 %v2119, 1.442695
      %v2462 = vpow.pop %v2461
      %v2463 = vmul.f32 %v2120, 1.442695
      %v2464 = vpow.pop %v2463
      %v2465 = vmul.f32 %v2121, 1.442695
      %v2466 = vpow.pop %v2465
      %v2467 = vmul.f32 %v2122, 1.442695
      %v2468 = vpow.pop %v2467
      %v2469 = vmul.f32 %v2123, 1.442695
      %v2470 = vpow.pop %v2469
      %v2471 = vmul.f32 %v2124, 1.442695
      %v2472 = vpow.pop %v2471
      %v2473 = vmul.f32 %v2125, 1.442695
      %v2474 = vpow.pop %v2473
      %v2475 = vmul.f32 %v2126, 1.442695
      %v2476 = vpow.pop %v2475
      %v2477 = vmul.f32 %v2127, 1.442695
      %v2478 = vpow.pop %v2477
      %v2479 = vmul.f32 %v2128, 1.442695
      %v2480 = vpow.pop %v2479
      %v2481 = vmul.f32 %v2129, 1.442695
      %v2482 = vpow.pop %v2481
      %v2483 = vmul.f32 %v2130, 1.442695
      %v2484 = vpow.pop %v2483
      %v2485 = vmul.f32 %v2131, 1.442695
      %v2486 = vpow.pop %v2485
      %v2487 = vmul.f32 %v2132, 1.442695
      %v2488 = vpow.pop %v2487
      %v2489 = vmul.f32 %v2133, 1.442695
      %v2490 = vpow.pop %v2489
      %v2491 = vmul.f32 %v2134, 1.442695
      %v2492 = vpow.pop %v2491
      %v2493 = vmul.f32 %v2135, 1.442695
      %v2494 = vpow.pop %v2493
      %v2495 = vmul.f32 %v2136, 1.442695
      %v2496 = vpow.pop %v2495
      %v2497 = vmul.f32 %v2137, 1.442695
      %v2498 = vpow.pop %v2497
      %v2499 = vmul.f32 %v2138, 1.442695
      %v2500 = vpow.pop %v2499
      %v2501 = vmul.f32 %v2139, 1.442695
      %v2502 = vpow.pop %v2501
      %v2503 = vmul.f32 %v2140, 1.442695
      %v2504 = vpow.pop %v2503
      %v2505 = vmul.f32 %v2141, 1.442695
      %v2506 = vpow.pop %v2505
      %v2507 = vmul.f32 %v2142, 1.442695
      %v2508 = vpow.pop %v2507
      %v2509 = vmul.f32 %v2143, 1.442695
      %v2510 = vpow.pop %v2509
      %v2511 = vmul.f32 %v2144, 1.442695
      %v2512 = vpow.pop %v2511
      %v2513 = vmul.f32 %v2145, 1.442695
      %v2514 = vpow.pop %v2513
      %v2515 = vmul.f32 %v2146, 1.442695
      %v2516 = vpow.pop %v2515
      %v2517 = vmul.f32 %v2147, 1.442695
      %v2518 = vpow.pop %v2517
      %v2519 = vmul.f32 %v2148, 1.442695
      %v2520 = vpow.pop %v2519
      %v2521 = vmul.f32 %v2149, 1.442695
      %v2522 = vpow.pop %v2521
      %v2523 = vmul.f32 %v2150, 1.442695
      %v2524 = vpow.pop %v2523
      %v2525 = vmul.f32 %v2151, 1.442695
      %v2526 = vpow.pop %v2525
      %v2527 = vmul.f32 %v2152, 1.442695
      %v2528 = vpow.pop %v2527
      %v2529 = vmul.f32 %v2153, 1.442695
      %v2530 = vpow.pop %v2529
      %v2531 = vmul.f32 %v2154, 1.442695
      %v2532 = vpow.pop %v2531
      %v2533 = vmul.f32 %v2155, 1.442695
      %v2534 = vpow.pop %v2533
      %v2535 = vmul.f32 %v2156, 1.442695
      %v2536 = vpow.pop %v2535
      %v2537 = vmul.f32 %v2157, 1.442695
      %v2538 = vpow.pop %v2537
      %v2539 = vmul.f32 %v2158, 1.442695
      %v2540 = vpow.pop %v2539
      %v2541 = vmul.f32 %v2159, 1.442695
      %v2542 = vpow.pop %v2541
      %v2543 = vmul.f32 %v2160, 1.442695
      %v2544 = vpow.pop %v2543
      %v2545 = vmul.f32 %v2161, 1.442695
      %v2546 = vpow.pop %v2545
      %v2547 = vmul.f32 %v2162, 1.442695
      %v2548 = vpow.pop %v2547
      %v2549 = vmul.f32 %v2163, 1.442695
      %v2550 = vpow.pop %v2549
      %v2551 = vmul.f32 %v2164, 1.442695
      %v2552 = vpow.pop %v2551
      %v2553 = vmul.f32 %v2165, 1.442695
      %v2554 = vpow.pop %v2553
      %v2555 = vmul.f32 %v2166, 1.442695
      %v2556 = vpow.pop %v2555
      %v2557 = vmul.f32 %v2167, 1.442695
      %v2558 = vpow.pop %v2557
      %v2559 = vmul.f32 %v2168, 1.442695
      %v2560 = vpow.pop %v2559
      %v2561 = vmul.f32 %v2169, 1.442695
      %v2562 = vpow.pop %v2561
      %v2563 = vmul.f32 %v2170, 1.442695
      %v2564 = vpow.pop %v2563
      %v2565 = vmul.f32 %v2171, 1.442695
      %v2566 = vpow.pop %v2565
      %v2567 = vmul.f32 %v2172, 1.442695
      %v2568 = vpow.pop %v2567
      %v2569 = vmul.f32 %v2173, 1.442695
      %v2570 = vpow.pop %v2569
      %v2571 = vmul.f32 %v2174, 1.442695
      %v2572 = vpow.pop %v2571
      %v2573 = vmul.f32 %v2175, 1.442695
      %v2574 = vpow.pop %v2573
      %v2575 = vmul.f32 %v2176, 1.442695
      %v2576 = vpow.pop %v2575
      %v2577 = vmul.f32 %v2177, 1.442695
      %v2578 = vpow.pop %v2577
      %v2579 = vmul.f32 %v2178, 1.442695
      %v2580 = vpow.pop %v2579
      %v2581 = vmul.f32 %v2179, 1.442695
      %v2582 = vpow.pop %v2581
      %v2583 = vmul.f32 %v2180, 1.442695
      %v2584 = vpow.pop %v2583
      %v2585 = vmul.f32 %v2181, 1.442695
      %v2586 = vpow.pop %v2585
      %v2587 = vmul.f32 %v2182, 1.442695
      %v2588 = vpow.pop %v2587
      %v2589 = vmul.f32 %v2183, 1.442695
      %v2590 = vpow.pop %v2589
      %v2591 = vmul.f32 %v2184, 1.442695
      %v2592 = vpow.pop %v2591
      %v2593 = vmul.f32 %v2185, 1.442695
      %v2594 = vpow.pop %v2593
      %v2595 = vmul.f32 %v2186, 1.442695
      %v2596 = vpow.pop %v2595
      %v2597 = vmul.f32 %v2187, 1.442695
      %v2598 = vpow.pop %v2597
      %v2599 = vmul.f32 %v2188, 1.442695
      %v2600 = vpow.pop %v2599
      %v2601 = vmul.f32 %v2189, 1.442695
      %v2602 = vpow.pop %v2601
      %v2603 = vmul.f32 %v2190, 1.442695
      %v2604 = vpow.pop %v2603
      %v2605 = vmul.f32 %v2191, 1.442695
      %v2606 = vpow.pop %v2605
      %v2607 = vmul.f32 %v2192, 1.442695
      %v2608 = vpow.pop %v2607
      %v2609 = vmul.f32 %v2193, 1.442695
      %v2610 = vpow.pop %v2609
      %v2611 = vmul.f32 %v2194, 1.442695
      %v2612 = vpow.pop %v2611
      %v2613 = vmul.f32 %v2195, 1.442695
      %v2614 = vpow.pop %v2613
      %v2615 = vmul.f32 %v2196, 1.442695
      %v2616 = vpow.pop %v2615
      %v2617 = vmul.f32 %v2197, 1.442695
      %v2618 = vpow.pop %v2617
      %v2619 = vmul.f32 %v2198, 1.442695
      %v2620 = vpow.pop %v2619
      %v2621 = vmul.f32 %v2199, 1.442695
      %v2622 = vpow.pop %v2621
      %v2623 = vmul.f32 %v2200, 1.442695
      %v2624 = vpow.pop %v2623
      %v2625 = vmul.f32 %v2201, 1.442695
      %v2626 = vpow.pop %v2625
      %v2627 = vmul.f32 %v2202, 1.442695
      %v2628 = vpow.pop %v2627
      %v2629 = vmul.f32 %v2203, 1.442695
      %v2630 = vpow.pop %v2629
      %v2631 = vmul.f32 %v2204, 1.442695
      %v2632 = vpow.pop %v2631
      %v2633 = vmul.f32 %v2205, 1.442695
      %v2634 = vpow.pop %v2633
      %v2635 = vmul.f32 %v2206, 1.442695
      %v2636 = vpow.pop %v2635
      %v2637 = vmul.f32 %v2207, 1.442695
      %v2638 = vpow.pop %v2637
      %v2639 = vmul.f32 %v2208, 1.442695
      %v2640 = vpow.pop %v2639
      %v2641 = vmul.f32 %v2209, 1.442695
      %v2642 = vpow.pop %v2641
      %v2643 = vmul.f32 %v2210, 1.442695
      %v2644 = vpow.pop %v2643
      %v2645 = vmul.f32 %v2211, 1.442695
      %v2646 = vpow.pop %v2645
      %v2647 = vmul.f32 %v2212, 1.442695
      %v2648 = vpow.pop %v2647
      %v2649 = vmul.f32 %v2213, 1.442695
      %v2650 = vpow.pop %v2649
      %v2651 = vmul.f32 %v2214, 1.442695
      %v2652 = vpow.pop %v2651
      %v2653 = vmul.f32 %v2215, 1.442695
      %v2654 = vpow.pop %v2653
      %v2655 = vmul.f32 %v2216, 1.442695
      %v2656 = vpow.pop %v2655
      %v2657 = vmul.f32 %v2217, 1.442695
      %v2658 = vpow.pop %v2657
      %v2659 = vmul.f32 %v2218, 1.442695
      %v2660 = vpow.pop %v2659
      %v2661 = vmul.f32 %v2219, 1.442695
      %v2662 = vpow.pop %v2661
      %v2663 = vmul.f32 %v2220, 1.442695
      %v2664 = vpow.pop %v2663
      %v2665 = vmul.f32 %v2221, 1.442695
      %v2666 = vpow.pop %v2665
      %v2667 = vmul.f32 %v2222, 1.442695
      %v2668 = vpow.pop %v2667
      %v2669 = vmul.f32 %v2223, 1.442695
      %v2670 = vpow.pop %v2669
      %v2671 = vmul.f32 %v2224, 1.442695
      %v2672 = vpow.pop %v2671
      %v2673 = vmul.f32 %v2225, 1.442695
      %v2674 = vpow.pop %v2673
      %v2675 = vmul.f32 %v2226, 1.442695
      %v2676 = vpow.pop %v2675
      %v2677 = vmul.f32 %v2227, 1.442695
      %v2678 = vpow.pop %v2677
      %v2679 = vmul.f32 %v2228, 1.442695
      %v2680 = vpow.pop %v2679
      %v2681 = vmul.f32 %v2229, 1.442695
      %v2682 = vpow.pop %v2681
      %v2683 = vmul.f32 %v2230, 1.442695
      %v2684 = vpow.pop %v2683
      %v2685 = vmul.f32 %v2231, 1.442695
      %v2686 = vpow.pop %v2685
      %v2687 = vmul.f32 %v2232, 1.442695
      %v2688 = vpow.pop %v2687
      %v2689 = vmul.f32 %v2233, 1.442695
      %v2690 = vpow.pop %v2689
      %v2691 = vmul.f32 %v2234, 1.442695
      %v2692 = vpow.pop %v2691
      %v2693 = vmul.f32 %v2235, 1.442695
      %v2694 = vpow.pop %v2693
      %v2695 = vmul.f32 %v2236, 1.442695
      %v2696 = vpow.pop %v2695
      %v2697 = vmul.f32 %v2237, 1.442695
      %v2698 = vpow.pop %v2697
      %v2699 = vmul.f32 %v2238, 1.442695
      %v2700 = vpow.pop %v2699
      %v2701 = vmul.f32 %v2239, 1.442695
      %v2702 = vpow.pop %v2701
      %v2703 = vmul.f32 %v2240, 1.442695
      %v2704 = vpow.pop %v2703
      %v2705 = vmul.f32 %v2241, 1.442695
      %v2706 = vpow.pop %v2705
      %v2707 = vmul.f32 %v2242, 1.442695
      %v2708 = vpow.pop %v2707
      %v2709 = vmul.f32 %v2243, 1.442695
      %v2710 = vpow.pop %v2709
      %v2711 = vmul.f32 %v2244, 1.442695
      %v2712 = vpow.pop %v2711
      %v2713 = vmul.f32 %v2245, 1.442695
      %v2714 = vpow.pop %v2713
      %v2715 = vmul.f32 %v2246, 1.442695
      %v2716 = vpow.pop %v2715
      %v2717 = vmul.f32 %v2247, 1.442695
      %v2718 = vpow.pop %v2717
      %v2719 = vmul.f32 %v2248, 1.442695
      %v2720 = vpow.pop %v2719
      %v2721 = vmul.f32 %v2249, 1.442695
      %v2722 = vpow.pop %v2721
      %v2723 = vmul.f32 %v2250, 1.442695
      %v2724 = vpow.pop %v2723
      %v2725 = vmul.f32 %v2251, 1.442695
      %v2726 = vpow.pop %v2725
      %v2727 = vmul.f32 %v2252, 1.442695
      %v2728 = vpow.pop %v2727
      %v2729 = vmul.f32 %v2253, 1.442695
      %v2730 = vpow.pop %v2729
      %v2731 = vmul.f32 %v2254, 1.442695
      %v2732 = vpow.pop %v2731
      %v2733 = vmul.f32 %v2255, 1.442695
      %v2734 = vpow.pop %v2733
      %v2735 = vmul.f32 %v2256, 1.442695
      %v2736 = vpow.pop %v2735
      %v2737 = vmul.f32 %v2257, 1.442695
      %v2738 = vpow.pop %v2737
      %v2739 = vmul.f32 %v2258, 1.442695
      %v2740 = vpow.pop %v2739
      %v2741 = vmul.f32 %v2259, 1.442695
      %v2742 = vpow.pop %v2741
      %v2743 = vmul.f32 %v2260, 1.442695
      %v2744 = vpow.pop %v2743
      %v2745 = vmul.f32 %v2261, 1.442695
      %v2746 = vpow.pop %v2745
      %v2747 = vmul.f32 %v2262, 1.442695
      %v2748 = vpow.pop %v2747
      %v2749 = vmul.f32 %v2263, 1.442695
      %v2750 = vpow.pop %v2749
      %v2751 = vmul.f32 %v2264, 1.442695
      %v2752 = vpow.pop %v2751
      %v2753 = vmul.f32 %v2265, 1.442695
      %v2754 = vpow.pop %v2753
      %v2755 = vmul.f32 %v2266, 1.442695
      %v2756 = vpow.pop %v2755
      %v2757 = vmul.f32 %v2267, 1.442695
      %v2758 = vpow.pop %v2757
      %v2759 = vmul.f32 %v2268, 1.442695
      %v2760 = vpow.pop %v2759
      %v2761 = vmul.f32 %v2269, 1.442695
      %v2762 = vpow.pop %v2761
      %v2763 = vmul.f32 %v2270, 1.442695
      %v2764 = vpow.pop %v2763
      %v2765 = vmul.f32 %v2271, 1.442695
      %v2766 = vpow.pop %v2765
      %v2767 = vmul.f32 %v2272, 1.442695
      %v2768 = vpow.pop %v2767
      %v2769 = vmul.f32 %v2273, 1.442695
      %v2770 = vpow.pop %v2769
      %v2771 = vmul.f32 %v2274, 1.442695
      %v2772 = vpow.pop %v2771
      %v2773 = vmul.f32 %v2275, 1.442695
      %v2774 = vpow.pop %v2773
      %v2775 = vmul.f32 %v2276, 1.442695
      %v2776 = vpow.pop %v2775
      %v2777 = vmul.f32 %v2277, 1.442695
      %v2778 = vpow.pop %v2777
      %v2779 = vmul.f32 %v2278, 1.442695
      %v2780 = vpow.pop %v2779
      %v2781 = vmul.f32 %v2279, 1.442695
      %v2782 = vpow.pop %v2781
      %v2783 = vmul.f32 %v2280, 1.442695
      %v2784 = vpow.pop %v2783
      %v2785 = vmul.f32 %v2281, 1.442695
      %v2786 = vpow.pop %v2785
      %v2787 = vmul.f32 %v2282, 1.442695
      %v2788 = vpow.pop %v2787
      %v2789 = vmul.f32 %v2283, 1.442695
      %v2790 = vpow.pop %v2789
      %v2791 = vmul.f32 %v2284, 1.442695
      %v2792 = vpow.pop %v2791
      %v2793 = vmul.f32 %v2285, 1.442695
      %v2794 = vpow.pop %v2793
      %v2795 = vmul.f32 %v2286, 1.442695
      %v2796 = vpow.pop %v2795
      %v2797 = vmul.f32 %v2287, 1.442695
      %v2798 = vpow.pop %v2797
      %v2799 = vmul.f32 %v2288, 1.442695
      %v2800 = vpow.pop %v2799
      %v2801 = vmul.f32 %v2289, 1.442695
      %v2802 = vpow.pop %v2801
      %v2803 = vmul.f32 %v2290, 1.442695
      %v2804 = vpow.pop %v2803
      %v2805 = vmul.f32 %v2291, 1.442695
      %v2806 = vpow.pop %v2805
      %v2807 = vmul.f32 %v2292, 1.442695
      %v2808 = vpow.pop %v2807
      %v2809 = vmul.f32 %v2293, 1.442695
      %v2810 = vpow.pop %v2809
      %v2811 = vmul.f32 %v2294, 1.442695
      %v2812 = vpow.pop %v2811
      %v2813 = vmul.f32 %v2295, 1.442695
      %v2814 = vpow.pop %v2813
      %v2815 = vmul.f32 %v2296, 1.442695
      %v2816 = vpow.pop %v2815
      %v2817 = vmul.f32 %v2297, 1.442695
      %v2818 = vpow.pop %v2817
      %v2819 = vmul.f32 %v2298, 1.442695
      %v2820 = vpow.pop %v2819
      %v2821 = vmul.f32 %v2299, 1.442695
      %v2822 = vpow.pop %v2821
      %v2823 = vmul.f32 %v2300, 1.442695
      %v2824 = vpow.pop %v2823
      %v2825 = vmul.f32 %v2301, 1.442695
      %v2826 = vpow.pop %v2825
      %v2827 = vmul.f32 %v2302, 1.442695
      %v2828 = vpow.pop %v2827
      %v2829 = vmul.f32 %v2303, 1.442695
      %v2830 = vpow.pop %v2829
      %v2831 = vmul.f32 %v2304, 1.442695
      %v2832 = vpow.pop %v2831
      %v2833 = vmul.f32 %v2305, 1.442695
      %v2834 = vpow.pop %v2833
      %v2835 = vmul.f32 %v2306, 1.442695
      %v2836 = vpow.pop %v2835
      %v2837 = vmul.f32 %v2307, 1.442695
      %v2838 = vpow.pop %v2837
      %v2839 = vmul.f32 %v2308, 1.442695
      %v2840 = vpow.pop %v2839
      %v2841 = vmul.f32 %v2309, 1.442695
      %v2842 = vpow.pop %v2841
      %v2843 = vmul.f32 %v2310, 1.442695
      %v2844 = vpow.pop %v2843
      %v2845 = vmul.f32 %v2311, 1.442695
      %v2846 = vpow.pop %v2845
      %v2847 = vmul.f32 %v2312, 1.442695
      %v2848 = vpow.pop %v2847
      %v2849 = vmul.f32 %v2313, 1.442695
      %v2850 = vpow.pop %v2849
      %v2851 = vmul.f32 %v2314, 1.442695
      %v2852 = vpow.pop %v2851
      %v2853 = vmul.f32 %v2315, 1.442695
      %v2854 = vpow.pop %v2853
      %v2855 = vmul.f32 %v2316, 1.442695
      %v2856 = vpow.pop %v2855
      %v2857 = vmul.f32 %v2317, 1.442695
      %v2858 = vpow.pop %v2857
      %v2859 = vmul.f32 %v2318, 1.442695
      %v2860 = vpow.pop %v2859
      %v2861 = vmul.f32 %v2319, 1.442695
      %v2862 = vpow.pop %v2861
      %v2863 = vmul.f32 %v2320, 1.442695
      %v2864 = vpow.pop %v2863
      %v2865 = vmul.f32 %v2321, 1.442695
      %v2866 = vpow.pop %v2865
      %v2867 = vmul.f32 %v2322, 1.442695
      %v2868 = vpow.pop %v2867
      %v2869 = vmul.f32 %v2323, 1.442695
      %v2870 = vpow.pop %v2869
      %v2871 = vmul.f32 %v2324, 1.442695
      %v2872 = vpow.pop %v2871
      %v2873 = vmul.f32 %v2325, 1.442695
      %v2874 = vpow.pop %v2873
      %v2875 = vmul.f32 %v2326, 1.442695
      %v2876 = vpow.pop %v2875
      %v2877 = vmul.f32 %v2327, 1.442695
      %v2878 = vpow.pop %v2877
      %v2879 = vmul.f32 %v2328, 1.442695
      %v2880 = vpow.pop %v2879
      %v2881 = vmul.f32 %v2329, 1.442695
      %v2882 = vpow.pop %v2881
      %v2883 = vmul.f32 %v2330, 1.442695
      %v2884 = vpow.pop %v2883
      %v2885 = vmul.f32 %v2331, 1.442695
      %v2886 = vpow.pop %v2885
      %v2887 = vmul.f32 %v2332, 1.442695
      %v2888 = vpow.pop %v2887
      %v2889 = vmul.f32 %v2333, 1.442695
      %v2890 = vpow.pop %v2889
      %v2891 = vmul.f32 %v2334, 1.442695
      %v2892 = vpow.pop %v2891
      %v2893 = vmul.f32 %v2335, 1.442695
      %v2894 = vpow.pop %v2893
      %v2895 = vmul.f32 %v2336, 1.442695
      %v2896 = vpow.pop %v2895
      %v2897 = vmul.f32 %v2337, 1.442695
      %v2898 = vpow.pop %v2897
      %v2899 = vmul.f32 %v2338, 1.442695
      %v2900 = vpow.pop %v2899
      %v2901 = vmul.f32 %v2339, 1.442695
      %v2902 = vpow.pop %v2901
      %v2903 = vmul.f32 %v2340, 1.442695
      %v2904 = vpow.pop %v2903
      %v2905 = vmul.f32 %v2341, 1.442695
      %v2906 = vpow.pop %v2905
      %v2907 = vmul.f32 %v2342, 1.442695
      %v2908 = vpow.pop %v2907
      %v2909 = vmul.f32 %v2343, 1.442695
      %v2910 = vpow.pop %v2909
      %v2911 = vmul.f32 %v2344, 1.442695
      %v2912 = vpow.pop %v2911
      %v2913 = vmul.f32 %v2345, 1.442695
      %v2914 = vpow.pop %v2913
      %v2915 = vmul.f32 %v2346, 1.442695
      %v2916 = vpow.pop %v2915
      %v2917 = vmul.f32 %v2347, 1.442695
      %v2918 = vpow.pop %v2917
      %v2919 = vmul.f32 %v2348, 1.442695
      %v2920 = vpow.pop %v2919
      %v2921 = vmul.f32 %v2349, 1.442695
      %v2922 = vpow.pop %v2921
      %v2923 = vmul.f32 %v2350, 1.442695
      %v2924 = vpow.pop %v2923
      %v2925 = vmul.f32 %v2351, 1.442695
      %v2926 = vpow.pop %v2925
      %v2927 = vmul.f32 %v2352, 1.442695
      %v2928 = vpow.pop %v2927
      %v2929 = vmul.f32 %v2353, 1.442695
      %v2930 = vpow.pop %v2929
      %v2931 = vmul.f32 %v2354, 1.442695
      %v2932 = vpow.pop %v2931
      %v2933 = vmul.f32 %v2355, 1.442695
      %v2934 = vpow.pop %v2933
      %v2935 = vmul.f32 %v2356, 1.442695
      %v2936 = vpow.pop %v2935
      %v2937 = vmul.f32 %v2357, 1.442695
      %v2938 = vpow.pop %v2937
      %v2939 = vmul.f32 %v2358, 1.442695
      %v2940 = vpow.pop %v2939
      %v2941 = vmul.f32 %v2359, 1.442695
      %v2942 = vpow.pop %v2941
      %v2943 = vmul.f32 %v2360, 1.442695
      %v2944 = vpow.pop %v2943
      %v2945 = vmul.f32 %v2361, 1.442695
      %v2946 = vpow.pop %v2945
      %v2947 = vmul.f32 %v2362, 1.442695
      %v2948 = vpow.pop %v2947
      %v2949 = vmul.f32 %v2363, 1.442695
      %v2950 = vpow.pop %v2949
      %v2951 = vmul.f32 %v2364, 1.442695
      %v2952 = vpow.pop %v2951
      %v2953 = vmul.f32 %v2365, 1.442695
      %v2954 = vpow.pop %v2953
      %v2955 = vmul.f32 %v2366, 1.442695
      %v2956 = vpow.pop %v2955
      %v2957 = vmul.f32 %v2367, 1.442695
      %v2958 = vpow.pop %v2957
      %v2959 = vmul.f32 %v2368, 1.442695
      %v2960 = vpow.pop %v2959
      %v2961 = vmul.f32 %v2369, 1.442695
      %v2962 = vpow.pop %v2961
      %v2963 = vmul.f32 %v2370, 1.442695
      %v2964 = vpow.pop %v2963
      %v2965 = vmul.f32 %v2371, 1.442695
      %v2966 = vpow.pop %v2965
      %v2967 = vmul.f32 %v2372, 1.442695
      %v2968 = vpow.pop %v2967
      %v2969 = vmul.f32 %v2373, 1.442695
      %v2970 = vpow.pop %v2969
      %v2971 = vmul.f32 %v2374, 1.442695
      %v2972 = vpow.pop %v2971
      %v2973 = vmul.f32 %v2375, 1.442695
      %v2974 = vpow.pop %v2973
      %v2975 = vmul.f32 %v2376, 1.442695
      %v2976 = vpow.pop %v2975
      %v2977 = vmul.f32 %v2377, 1.442695
      %v2978 = vpow.pop %v2977
      %v2979 = vmul.f32 %v2378, 1.442695
      %v2980 = vpow.pop %v2979
      %v2981 = vmul.f32 %v2379, 1.442695
      %v2982 = vpow.pop %v2981
      %v2983 = vmul.f32 %v2380, 1.442695
      %v2984 = vpow.pop %v2983
      %v2985 = vmul.f32 %v2381, 1.442695
      %v2986 = vpow.pop %v2985
      %v2987 = vmul.f32 %v2382, 1.442695
      %v2988 = vpow.pop %v2987
      %v2989 = vmul.f32 %v2383, 1.442695
      %v2990 = vpow.pop %v2989
      %v2991 = vmul.f32 %v2384, 1.442695
      %v2992 = vpow.pop %v2991
      %v2993 = vmul.f32 %v2385, 1.442695
      %v2994 = vpow.pop %v2993
      %v2995 = vmul.f32 %v2386, 1.442695
      %v2996 = vpow.pop %v2995
      %v2997 = vmul.f32 %v2387, 1.442695
      %v2998 = vpow.pop %v2997
      %v2999 = vmul.f32 %v2388, 1.442695
      %v3000 = vpow.pop %v2999
      %v3001 = vmul.f32 %v2389, 1.442695
      %v3002 = vpow.pop %v3001
      %v3003 = vmul.f32 %v2390, 1.442695
      %v3004 = vpow.pop %v3003
      %v3005 = vmul.f32 %v2391, 1.442695
      %v3006 = vpow.pop %v3005
      %v3007 = vmul.f32 %v2392, 1.442695
      %v3008 = vpow.pop %v3007
      %v3009 = vmul.f32 %v2393, 1.442695
      %v3010 = vpow.pop %v3009
      %v3011 = vmul.f32 %v2394, 1.442695
      %v3012 = vpow.pop %v3011
      %v3013 = vmul.f32 %v2395, 1.442695
      %v3014 = vpow.pop %v3013
      %v3015 = vmul.f32 %v2396, 1.442695
      %v3016 = vpow.pop %v3015
      %v3017 = vmul.f32 %v2397, 1.442695
      %v3018 = vpow.pop %v3017
      %v3019 = vmul.f32 %v2398, 1.442695
      %v3020 = vpow.pop %v3019
      %v3021 = vmul.f32 %v2399, 1.442695
      %v3022 = vpow.pop %v3021
      %v3023 = vmul.f32 %v2400, 1.442695
      %v3024 = vpow.pop %v3023
      %v3025 = vmul.f32 %v2401, 1.442695
      %v3026 = vpow.pop %v3025
      %v3027 = vmul.f32 %v2402, 1.442695
      %v3028 = vpow.pop %v3027
      %v3029 = vmul.f32 %v2403, 1.442695
      %v3030 = vpow.pop %v3029
      %v3031 = vmul.f32 %v2404, 1.442695
      %v3032 = vpow.pop %v3031
      %v3033 = vmul.f32 %v2405, 1.442695
      %v3034 = vpow.pop %v3033
      %v3035 = vmul.f32 %v2406, 1.442695
      %v3036 = vpow.pop %v3035
      %v3037 = vmul.f32 %v2407, 1.442695
      %v3038 = vpow.pop %v3037
      %v3039 = vmul.f32 %v2408, 1.442695
      %v3040 = vpow.pop %v3039
      %v3041 = vmul.f32 %v2409, 1.442695
      %v3042 = vpow.pop %v3041
      %v3043 = vmul.f32 %v2410, 1.442695
      %v3044 = vpow.pop %v3043
      %v3045 = vmul.f32 %v2411, 1.442695
      %v3046 = vpow.pop %v3045
      %v3047 = vmul.f32 %v2412, 1.442695
      %v3048 = vpow.pop %v3047
      %v3049 = vmul.f32 %v2413, 1.442695
      %v3050 = vpow.pop %v3049
      %v3051 = vmul.f32 %v2414, 1.442695
      %v3052 = vpow.pop %v3051
      %v3053 = vmul.f32 %v2415, 1.442695
      %v3054 = vpow.pop %v3053
      %v3055 = vmul.f32 %v2416, 1.442695
      %v3056 = vpow.pop %v3055
      %v3057 = vadd.f32 %v2418, 1.0
      %v3058 = vlog2.pop %v3057
      %v3059 = vmul.f32 %v3058, 0.6931472
      %v3060 = vmul.f32 -0.5, %v2418
      %v3061 = vadd.f32 %v3060, 1.0
      %v3062 = vmul.f32 %v3061, %v2418
      %v3063 = vand.u32 2147483647, %v2418
      %vm3064 = vcmp.lt.f32.partialorder %v3063, 0.0004427343
      %v3065 = vsel %vm3064, %v3062, %v3059
      %v3066 = vadd.f32 %v2420, 1.0
      %v3067 = vlog2.pop %v3066
      %v3068 = vmul.f32 %v3067, 0.6931472
      %v3069 = vmul.f32 -0.5, %v2420
      %v3070 = vadd.f32 %v3069, 1.0
      %v3071 = vmul.f32 %v3070, %v2420
      %v3072 = vand.u32 2147483647, %v2420
      %vm3073 = vcmp.lt.f32.partialorder %v3072, 0.0004427343
      %v3074 = vsel %vm3073, %v3071, %v3068
      %v3075 = vadd.f32 %v2422, 1.0
      %v3076 = vlog2.pop %v3075
      %v3077 = vmul.f32 %v3076, 0.6931472
      %v3078 = vmul.f32 -0.5, %v2422
      %v3079 = vadd.f32 %v3078, 1.0
      %v3080 = vmul.f32 %v3079, %v2422
      %v3081 = vand.u32 2147483647, %v2422
      %vm3082 = vcmp.lt.f32.partialorder %v3081, 0.0004427343
      %v3083 = vsel %vm3082, %v3080, %v3077
      %v3084 = vadd.f32 %v2424, 1.0
      %v3085 = vlog2.pop %v3084
      %v3086 = vmul.f32 %v3085, 0.6931472
      %v3087 = vmul.f32 -0.5, %v2424
      %v3088 = vadd.f32 %v3087, 1.0
      %v3089 = vmul.f32 %v3088, %v2424
      %v3090 = vand.u32 2147483647, %v2424
      %vm3091 = vcmp.lt.f32.partialorder %v3090, 0.0004427343
      %v3092 = vsel %vm3091, %v3089, %v3086
      %v3093 = vadd.f32 %v2426, 1.0
      %v3094 = vlog2.pop %v3093
      %v3095 = vmul.f32 %v3094, 0.6931472
      %v3096 = vmul.f32 -0.5, %v2426
      %v3097 = vadd.f32 %v3096, 1.0
      %v3098 = vmul.f32 %v3097, %v2426
      %v3099 = vand.u32 2147483647, %v2426
      %vm3100 = vcmp.lt.f32.partialorder %v3099, 0.0004427343
      %v3101 = vsel %vm3100, %v3098, %v3095
      %v3102 = vadd.f32 %v2428, 1.0
      %v3103 = vlog2.pop %v3102
      %v3104 = vmul.f32 %v3103, 0.6931472
      %v3105 = vmul.f32 -0.5, %v2428
      %v3106 = vadd.f32 %v3105, 1.0
      %v3107 = vmul.f32 %v3106, %v2428
      %v3108 = vand.u32 2147483647, %v2428
      %vm3109 = vcmp.lt.f32.partialorder %v3108, 0.0004427343
      %v3110 = vsel %vm3109, %v3107, %v3104
      %v3111 = vadd.f32 %v2430, 1.0
      %v3112 = vlog2.pop %v3111
      %v3113 = vmul.f32 %v3112, 0.6931472
      %v3114 = vmul.f32 -0.5, %v2430
      %v3115 = vadd.f32 %v3114, 1.0
      %v3116 = vmul.f32 %v3115, %v2430
      %v3117 = vand.u32 2147483647, %v2430
      %vm3118 = vcmp.lt.f32.partialorder %v3117, 0.0004427343
      %v3119 = vsel %vm3118, %v3116, %v3113
      %v3120 = vadd.f32 %v2432, 1.0
      %v3121 = vlog2.pop %v3120
      %v3122 = vmul.f32 %v3121, 0.6931472
      %v3123 = vmul.f32 -0.5, %v2432
      %v3124 = vadd.f32 %v3123, 1.0
      %v3125 = vmul.f32 %v3124, %v2432
      %v3126 = vand.u32 2147483647, %v2432
      %vm3127 = vcmp.lt.f32.partialorder %v3126, 0.0004427343
      %v3128 = vsel %vm3127, %v3125, %v3122
      %v3129 = vadd.f32 %v2434, 1.0
      %v3130 = vlog2.pop %v3129
      %v3131 = vmul.f32 %v3130, 0.6931472
      %v3132 = vmul.f32 -0.5, %v2434
      %v3133 = vadd.f32 %v3132, 1.0
      %v3134 = vmul.f32 %v3133, %v2434
      %v3135 = vand.u32 2147483647, %v2434
      %vm3136 = vcmp.lt.f32.partialorder %v3135, 0.0004427343
      %v3137 = vsel %vm3136, %v3134, %v3131
      %v3138 = vadd.f32 %v2436, 1.0
      %v3139 = vlog2.pop %v3138
      %v3140 = vmul.f32 %v3139, 0.6931472
      %v3141 = vmul.f32 -0.5, %v2436
      %v3142 = vadd.f32 %v3141, 1.0
      %v3143 = vmul.f32 %v3142, %v2436
      %v3144 = vand.u32 2147483647, %v2436
      %vm3145 = vcmp.lt.f32.partialorder %v3144, 0.0004427343
      %v3146 = vsel %vm3145, %v3143, %v3140
      %v3147 = vadd.f32 %v2438, 1.0
      %v3148 = vlog2.pop %v3147
      %v3149 = vmul.f32 %v3148, 0.6931472
      %v3150 = vmul.f32 -0.5, %v2438
      %v3151 = vadd.f32 %v3150, 1.0
      %v3152 = vmul.f32 %v3151, %v2438
      %v3153 = vand.u32 2147483647, %v2438
      %vm3154 = vcmp.lt.f32.partialorder %v3153, 0.0004427343
      %v3155 = vsel %vm3154, %v3152, %v3149
      %v3156 = vadd.f32 %v2440, 1.0
      %v3157 = vlog2.pop %v3156
      %v3158 = vmul.f32 %v3157, 0.6931472
      %v3159 = vmul.f32 -0.5, %v2440
      %v3160 = vadd.f32 %v3159, 1.0
      %v3161 = vmul.f32 %v3160, %v2440
      %v3162 = vand.u32 2147483647, %v2440
      %vm3163 = vcmp.lt.f32.partialorder %v3162, 0.0004427343
      %v3164 = vsel %vm3163, %v3161, %v3158
      %v3165 = vadd.f32 %v2442, 1.0
      %v3166 = vlog2.pop %v3165
      %v3167 = vmul.f32 %v3166, 0.6931472
      %v3168 = vmul.f32 -0.5, %v2442
      %v3169 = vadd.f32 %v3168, 1.0
      %v3170 = vmul.f32 %v3169, %v2442
      %v3171 = vand.u32 2147483647, %v2442
      %vm3172 = vcmp.lt.f32.partialorder %v3171, 0.0004427343
      %v3173 = vsel %vm3172, %v3170, %v3167
      %v3174 = vadd.f32 %v2444, 1.0
      %v3175 = vlog2.pop %v3174
      %v3176 = vmul.f32 %v3175, 0.6931472
      %v3177 = vmul.f32 -0.5, %v2444
      %v3178 = vadd.f32 %v3177, 1.0
      %v3179 = vmul.f32 %v3178, %v2444
      %v3180 = vand.u32 2147483647, %v2444
      %vm3181 = vcmp.lt.f32.partialorder %v3180, 0.0004427343
      %v3182 = vsel %vm3181, %v3179, %v3176
      %v3183 = vadd.f32 %v2446, 1.0
      %v3184 = vlog2.pop %v3183
      %v3185 = vmul.f32 %v3184, 0.6931472
      %v3186 = vmul.f32 -0.5, %v2446
      %v3187 = vadd.f32 %v3186, 1.0
      %v3188 = vmul.f32 %v3187, %v2446
      %v3189 = vand.u32 2147483647, %v2446
      %vm3190 = vcmp.lt.f32.partialorder %v3189, 0.0004427343
      %v3191 = vsel %vm3190, %v3188, %v3185
      %v3192 = vadd.f32 %v2448, 1.0
      %v3193 = vlog2.pop %v3192
      %v3194 = vmul.f32 %v3193, 0.6931472
      %v3195 = vmul.f32 -0.5, %v2448
      %v3196 = vadd.f32 %v3195, 1.0
      %v3197 = vmul.f32 %v3196, %v2448
      %v3198 = vand.u32 2147483647, %v2448
      %vm3199 = vcmp.lt.f32.partialorder %v3198, 0.0004427343
      %v3200 = vsel %vm3199, %v3197, %v3194
      %v3201 = vadd.f32 %v2450, 1.0
      %v3202 = vlog2.pop %v3201
      %v3203 = vmul.f32 %v3202, 0.6931472
      %v3204 = vmul.f32 -0.5, %v2450
      %v3205 = vadd.f32 %v3204, 1.0
      %v3206 = vmul.f32 %v3205, %v2450
      %v3207 = vand.u32 2147483647, %v2450
      %vm3208 = vcmp.lt.f32.partialorder %v3207, 0.0004427343
      %v3209 = vsel %vm3208, %v3206, %v3203
      %v3210 = vadd.f32 %v2452, 1.0
      %v3211 = vlog2.pop %v3210
      %v3212 = vmul.f32 %v3211, 0.6931472
      %v3213 = vmul.f32 -0.5, %v2452
      %v3214 = vadd.f32 %v3213, 1.0
      %v3215 = vmul.f32 %v3214, %v2452
      %v3216 = vand.u32 2147483647, %v2452
      %vm3217 = vcmp.lt.f32.partialorder %v3216, 0.0004427343
      %v3218 = vsel %vm3217, %v3215, %v3212
      %v3219 = vadd.f32 %v2454, 1.0
      %v3220 = vlog2.pop %v3219
      %v3221 = vmul.f32 %v3220, 0.6931472
      %v3222 = vmul.f32 -0.5, %v2454
      %v3223 = vadd.f32 %v3222, 1.0
      %v3224 = vmul.f32 %v3223, %v2454
      %v3225 = vand.u32 2147483647, %v2454
      %vm3226 = vcmp.lt.f32.partialorder %v3225, 0.0004427343
      %v3227 = vsel %vm3226, %v3224, %v3221
      %v3228 = vadd.f32 %v2456, 1.0
      %v3229 = vlog2.pop %v3228
      %v3230 = vmul.f32 %v3229, 0.6931472
      %v3231 = vmul.f32 -0.5, %v2456
      %v3232 = vadd.f32 %v3231, 1.0
      %v3233 = vmul.f32 %v3232, %v2456
      %v3234 = vand.u32 2147483647, %v2456
      %vm3235 = vcmp.lt.f32.partialorder %v3234, 0.0004427343
      %v3236 = vsel %vm3235, %v3233, %v3230
      %v3237 = vadd.f32 %v2458, 1.0
      %v3238 = vlog2.pop %v3237
      %v3239 = vmul.f32 %v3238, 0.6931472
      %v3240 = vmul.f32 -0.5, %v2458
      %v3241 = vadd.f32 %v3240, 1.0
      %v3242 = vmul.f32 %v3241, %v2458
      %v3243 = vand.u32 2147483647, %v2458
      %vm3244 = vcmp.lt.f32.partialorder %v3243, 0.0004427343
      %v3245 = vsel %vm3244, %v3242, %v3239
      %v3246 = vadd.f32 %v2460, 1.0
      %v3247 = vlog2.pop %v3246
      %v3248 = vmul.f32 %v3247, 0.6931472
      %v3249 = vmul.f32 -0.5, %v2460
      %v3250 = vadd.f32 %v3249, 1.0
      %v3251 = vmul.f32 %v3250, %v2460
      %v3252 = vand.u32 2147483647, %v2460
      %vm3253 = vcmp.lt.f32.partialorder %v3252, 0.0004427343
      %v3254 = vsel %vm3253, %v3251, %v3248
      %v3255 = vadd.f32 %v2462, 1.0
      %v3256 = vlog2.pop %v3255
      %v3257 = vmul.f32 %v3256, 0.6931472
      %v3258 = vmul.f32 -0.5, %v2462
      %v3259 = vadd.f32 %v3258, 1.0
      %v3260 = vmul.f32 %v3259, %v2462
      %v3261 = vand.u32 2147483647, %v2462
      %vm3262 = vcmp.lt.f32.partialorder %v3261, 0.0004427343
      %v3263 = vsel %vm3262, %v3260, %v3257
      %v3264 = vadd.f32 %v2464, 1.0
      %v3265 = vlog2.pop %v3264
      %v3266 = vmul.f32 %v3265, 0.6931472
      %v3267 = vmul.f32 -0.5, %v2464
      %v3268 = vadd.f32 %v3267, 1.0
      %v3269 = vmul.f32 %v3268, %v2464
      %v3270 = vand.u32 2147483647, %v2464
      %vm3271 = vcmp.lt.f32.partialorder %v3270, 0.0004427343
      %v3272 = vsel %vm3271, %v3269, %v3266
      %v3273 = vadd.f32 %v2466, 1.0
      %v3274 = vlog2.pop %v3273
      %v3275 = vmul.f32 %v3274, 0.6931472
      %v3276 = vmul.f32 -0.5, %v2466
      %v3277 = vadd.f32 %v3276, 1.0
      %v3278 = vmul.f32 %v3277, %v2466
      %v3279 = vand.u32 2147483647, %v2466
      %vm3280 = vcmp.lt.f32.partialorder %v3279, 0.0004427343
      %v3281 = vsel %vm3280, %v3278, %v3275
      %v3282 = vadd.f32 %v2468, 1.0
      %v3283 = vlog2.pop %v3282
      %v3284 = vmul.f32 %v3283, 0.6931472
      %v3285 = vmul.f32 -0.5, %v2468
      %v3286 = vadd.f32 %v3285, 1.0
      %v3287 = vmul.f32 %v3286, %v2468
      %v3288 = vand.u32 2147483647, %v2468
      %vm3289 = vcmp.lt.f32.partialorder %v3288, 0.0004427343
      %v3290 = vsel %vm3289, %v3287, %v3284
      %v3291 = vadd.f32 %v2470, 1.0
      %v3292 = vlog2.pop %v3291
      %v3293 = vmul.f32 %v3292, 0.6931472
      %v3294 = vmul.f32 -0.5, %v2470
      %v3295 = vadd.f32 %v3294, 1.0
      %v3296 = vmul.f32 %v3295, %v2470
      %v3297 = vand.u32 2147483647, %v2470
      %vm3298 = vcmp.lt.f32.partialorder %v3297, 0.0004427343
      %v3299 = vsel %vm3298, %v3296, %v3293
      %v3300 = vadd.f32 %v2472, 1.0
      %v3301 = vlog2.pop %v3300
      %v3302 = vmul.f32 %v3301, 0.6931472
      %v3303 = vmul.f32 -0.5, %v2472
      %v3304 = vadd.f32 %v3303, 1.0
      %v3305 = vmul.f32 %v3304, %v2472
      %v3306 = vand.u32 2147483647, %v2472
      %vm3307 = vcmp.lt.f32.partialorder %v3306, 0.0004427343
      %v3308 = vsel %vm3307, %v3305, %v3302
      %v3309 = vadd.f32 %v2474, 1.0
      %v3310 = vlog2.pop %v3309
      %v3311 = vmul.f32 %v3310, 0.6931472
      %v3312 = vmul.f32 -0.5, %v2474
      %v3313 = vadd.f32 %v3312, 1.0
      %v3314 = vmul.f32 %v3313, %v2474
      %v3315 = vand.u32 2147483647, %v2474
      %vm3316 = vcmp.lt.f32.partialorder %v3315, 0.0004427343
      %v3317 = vsel %vm3316, %v3314, %v3311
      %v3318 = vadd.f32 %v2476, 1.0
      %v3319 = vlog2.pop %v3318
      %v3320 = vmul.f32 %v3319, 0.6931472
      %v3321 = vmul.f32 -0.5, %v2476
      %v3322 = vadd.f32 %v3321, 1.0
      %v3323 = vmul.f32 %v3322, %v2476
      %v3324 = vand.u32 2147483647, %v2476
      %vm3325 = vcmp.lt.f32.partialorder %v3324, 0.0004427343
      %v3326 = vsel %vm3325, %v3323, %v3320
      %v3327 = vadd.f32 %v2478, 1.0
      %v3328 = vlog2.pop %v3327
      %v3329 = vmul.f32 %v3328, 0.6931472
      %v3330 = vmul.f32 -0.5, %v2478
      %v3331 = vadd.f32 %v3330, 1.0
      %v3332 = vmul.f32 %v3331, %v2478
      %v3333 = vand.u32 2147483647, %v2478
      %vm3334 = vcmp.lt.f32.partialorder %v3333, 0.0004427343
      %v3335 = vsel %vm3334, %v3332, %v3329
      %v3336 = vadd.f32 %v2480, 1.0
      %v3337 = vlog2.pop %v3336
      %v3338 = vmul.f32 %v3337, 0.6931472
      %v3339 = vmul.f32 -0.5, %v2480
      %v3340 = vadd.f32 %v3339, 1.0
      %v3341 = vmul.f32 %v3340, %v2480
      %v3342 = vand.u32 2147483647, %v2480
      %vm3343 = vcmp.lt.f32.partialorder %v3342, 0.0004427343
      %v3344 = vsel %vm3343, %v3341, %v3338
      %v3345 = vadd.f32 %v2482, 1.0
      %v3346 = vlog2.pop %v3345
      %v3347 = vmul.f32 %v3346, 0.6931472
      %v3348 = vmul.f32 -0.5, %v2482
      %v3349 = vadd.f32 %v3348, 1.0
      %v3350 = vmul.f32 %v3349, %v2482
      %v3351 = vand.u32 2147483647, %v2482
      %vm3352 = vcmp.lt.f32.partialorder %v3351, 0.0004427343
      %v3353 = vsel %vm3352, %v3350, %v3347
      %v3354 = vadd.f32 %v2484, 1.0
      %v3355 = vlog2.pop %v3354
      %v3356 = vmul.f32 %v3355, 0.6931472
      %v3357 = vmul.f32 -0.5, %v2484
      %v3358 = vadd.f32 %v3357, 1.0
      %v3359 = vmul.f32 %v3358, %v2484
      %v3360 = vand.u32 2147483647, %v2484
      %vm3361 = vcmp.lt.f32.partialorder %v3360, 0.0004427343
      %v3362 = vsel %vm3361, %v3359, %v3356
      %v3363 = vadd.f32 %v2486, 1.0
      %v3364 = vlog2.pop %v3363
      %v3365 = vmul.f32 %v3364, 0.6931472
      %v3366 = vmul.f32 -0.5, %v2486
      %v3367 = vadd.f32 %v3366, 1.0
      %v3368 = vmul.f32 %v3367, %v2486
      %v3369 = vand.u32 2147483647, %v2486
      %vm3370 = vcmp.lt.f32.partialorder %v3369, 0.0004427343
      %v3371 = vsel %vm3370, %v3368, %v3365
      %v3372 = vadd.f32 %v2488, 1.0
      %v3373 = vlog2.pop %v3372
      %v3374 = vmul.f32 %v3373, 0.6931472
      %v3375 = vmul.f32 -0.5, %v2488
      %v3376 = vadd.f32 %v3375, 1.0
      %v3377 = vmul.f32 %v3376, %v2488
      %v3378 = vand.u32 2147483647, %v2488
      %vm3379 = vcmp.lt.f32.partialorder %v3378, 0.0004427343
      %v3380 = vsel %vm3379, %v3377, %v3374
      %v3381 = vadd.f32 %v2490, 1.0
      %v3382 = vlog2.pop %v3381
      %v3383 = vmul.f32 %v3382, 0.6931472
      %v3384 = vmul.f32 -0.5, %v2490
      %v3385 = vadd.f32 %v3384, 1.0
      %v3386 = vmul.f32 %v3385, %v2490
      %v3387 = vand.u32 2147483647, %v2490
      %vm3388 = vcmp.lt.f32.partialorder %v3387, 0.0004427343
      %v3389 = vsel %vm3388, %v3386, %v3383
      %v3390 = vadd.f32 %v2492, 1.0
      %v3391 = vlog2.pop %v3390
      %v3392 = vmul.f32 %v3391, 0.6931472
      %v3393 = vmul.f32 -0.5, %v2492
      %v3394 = vadd.f32 %v3393, 1.0
      %v3395 = vmul.f32 %v3394, %v2492
      %v3396 = vand.u32 2147483647, %v2492
      %vm3397 = vcmp.lt.f32.partialorder %v3396, 0.0004427343
      %v3398 = vsel %vm3397, %v3395, %v3392
      %v3399 = vadd.f32 %v2494, 1.0
      %v3400 = vlog2.pop %v3399
      %v3401 = vmul.f32 %v3400, 0.6931472
      %v3402 = vmul.f32 -0.5, %v2494
      %v3403 = vadd.f32 %v3402, 1.0
      %v3404 = vmul.f32 %v3403, %v2494
      %v3405 = vand.u32 2147483647, %v2494
      %vm3406 = vcmp.lt.f32.partialorder %v3405, 0.0004427343
      %v3407 = vsel %vm3406, %v3404, %v3401
      %v3408 = vadd.f32 %v2496, 1.0
      %v3409 = vlog2.pop %v3408
      %v3410 = vmul.f32 %v3409, 0.6931472
      %v3411 = vmul.f32 -0.5, %v2496
      %v3412 = vadd.f32 %v3411, 1.0
      %v3413 = vmul.f32 %v3412, %v2496
      %v3414 = vand.u32 2147483647, %v2496
      %vm3415 = vcmp.lt.f32.partialorder %v3414, 0.0004427343
      %v3416 = vsel %vm3415, %v3413, %v3410
      %v3417 = vadd.f32 %v2498, 1.0
      %v3418 = vlog2.pop %v3417
      %v3419 = vmul.f32 %v3418, 0.6931472
      %v3420 = vmul.f32 -0.5, %v2498
      %v3421 = vadd.f32 %v3420, 1.0
      %v3422 = vmul.f32 %v3421, %v2498
      %v3423 = vand.u32 2147483647, %v2498
      %vm3424 = vcmp.lt.f32.partialorder %v3423, 0.0004427343
      %v3425 = vsel %vm3424, %v3422, %v3419
      %v3426 = vadd.f32 %v2500, 1.0
      %v3427 = vlog2.pop %v3426
      %v3428 = vmul.f32 %v3427, 0.6931472
      %v3429 = vmul.f32 -0.5, %v2500
      %v3430 = vadd.f32 %v3429, 1.0
      %v3431 = vmul.f32 %v3430, %v2500
      %v3432 = vand.u32 2147483647, %v2500
      %vm3433 = vcmp.lt.f32.partialorder %v3432, 0.0004427343
      %v3434 = vsel %vm3433, %v3431, %v3428
      %v3435 = vadd.f32 %v2502, 1.0
      %v3436 = vlog2.pop %v3435
      %v3437 = vmul.f32 %v3436, 0.6931472
      %v3438 = vmul.f32 -0.5, %v2502
      %v3439 = vadd.f32 %v3438, 1.0
      %v3440 = vmul.f32 %v3439, %v2502
      %v3441 = vand.u32 2147483647, %v2502
      %vm3442 = vcmp.lt.f32.partialorder %v3441, 0.0004427343
      %v3443 = vsel %vm3442, %v3440, %v3437
      %v3444 = vadd.f32 %v2504, 1.0
      %v3445 = vlog2.pop %v3444
      %v3446 = vmul.f32 %v3445, 0.6931472
      %v3447 = vmul.f32 -0.5, %v2504
      %v3448 = vadd.f32 %v3447, 1.0
      %v3449 = vmul.f32 %v3448, %v2504
      %v3450 = vand.u32 2147483647, %v2504
      %vm3451 = vcmp.lt.f32.partialorder %v3450, 0.0004427343
      %v3452 = vsel %vm3451, %v3449, %v3446
      %v3453 = vadd.f32 %v2506, 1.0
      %v3454 = vlog2.pop %v3453
      %v3455 = vmul.f32 %v3454, 0.6931472
      %v3456 = vmul.f32 -0.5, %v2506
      %v3457 = vadd.f32 %v3456, 1.0
      %v3458 = vmul.f32 %v3457, %v2506
      %v3459 = vand.u32 2147483647, %v2506
      %vm3460 = vcmp.lt.f32.partialorder %v3459, 0.0004427343
      %v3461 = vsel %vm3460, %v3458, %v3455
      %v3462 = vadd.f32 %v2508, 1.0
      %v3463 = vlog2.pop %v3462
      %v3464 = vmul.f32 %v3463, 0.6931472
      %v3465 = vmul.f32 -0.5, %v2508
      %v3466 = vadd.f32 %v3465, 1.0
      %v3467 = vmul.f32 %v3466, %v2508
      %v3468 = vand.u32 2147483647, %v2508
      %vm3469 = vcmp.lt.f32.partialorder %v3468, 0.0004427343
      %v3470 = vsel %vm3469, %v3467, %v3464
      %v3471 = vadd.f32 %v2510, 1.0
      %v3472 = vlog2.pop %v3471
      %v3473 = vmul.f32 %v3472, 0.6931472
      %v3474 = vmul.f32 -0.5, %v2510
      %v3475 = vadd.f32 %v3474, 1.0
      %v3476 = vmul.f32 %v3475, %v2510
      %v3477 = vand.u32 2147483647, %v2510
      %vm3478 = vcmp.lt.f32.partialorder %v3477, 0.0004427343
      %v3479 = vsel %vm3478, %v3476, %v3473
      %v3480 = vadd.f32 %v2512, 1.0
      %v3481 = vlog2.pop %v3480
      %v3482 = vmul.f32 %v3481, 0.6931472
      %v3483 = vmul.f32 -0.5, %v2512
      %v3484 = vadd.f32 %v3483, 1.0
      %v3485 = vmul.f32 %v3484, %v2512
      %v3486 = vand.u32 2147483647, %v2512
      %vm3487 = vcmp.lt.f32.partialorder %v3486, 0.0004427343
      %v3488 = vsel %vm3487, %v3485, %v3482
      %v3489 = vadd.f32 %v2514, 1.0
      %v3490 = vlog2.pop %v3489
      %v3491 = vmul.f32 %v3490, 0.6931472
      %v3492 = vmul.f32 -0.5, %v2514
      %v3493 = vadd.f32 %v3492, 1.0
      %v3494 = vmul.f32 %v3493, %v2514
      %v3495 = vand.u32 2147483647, %v2514
      %vm3496 = vcmp.lt.f32.partialorder %v3495, 0.0004427343
      %v3497 = vsel %vm3496, %v3494, %v3491
      %v3498 = vadd.f32 %v2516, 1.0
      %v3499 = vlog2.pop %v3498
      %v3500 = vmul.f32 %v3499, 0.6931472
      %v3501 = vmul.f32 -0.5, %v2516
      %v3502 = vadd.f32 %v3501, 1.0
      %v3503 = vmul.f32 %v3502, %v2516
      %v3504 = vand.u32 2147483647, %v2516
      %vm3505 = vcmp.lt.f32.partialorder %v3504, 0.0004427343
      %v3506 = vsel %vm3505, %v3503, %v3500
      %v3507 = vadd.f32 %v2518, 1.0
      %v3508 = vlog2.pop %v3507
      %v3509 = vmul.f32 %v3508, 0.6931472
      %v3510 = vmul.f32 -0.5, %v2518
      %v3511 = vadd.f32 %v3510, 1.0
      %v3512 = vmul.f32 %v3511, %v2518
      %v3513 = vand.u32 2147483647, %v2518
      %vm3514 = vcmp.lt.f32.partialorder %v3513, 0.0004427343
      %v3515 = vsel %vm3514, %v3512, %v3509
      %v3516 = vadd.f32 %v2520, 1.0
      %v3517 = vlog2.pop %v3516
      %v3518 = vmul.f32 %v3517, 0.6931472
      %v3519 = vmul.f32 -0.5, %v2520
      %v3520 = vadd.f32 %v3519, 1.0
      %v3521 = vmul.f32 %v3520, %v2520
      %v3522 = vand.u32 2147483647, %v2520
      %vm3523 = vcmp.lt.f32.partialorder %v3522, 0.0004427343
      %v3524 = vsel %vm3523, %v3521, %v3518
      %v3525 = vadd.f32 %v2522, 1.0
      %v3526 = vlog2.pop %v3525
      %v3527 = vmul.f32 %v3526, 0.6931472
      %v3528 = vmul.f32 -0.5, %v2522
      %v3529 = vadd.f32 %v3528, 1.0
      %v3530 = vmul.f32 %v3529, %v2522
      %v3531 = vand.u32 2147483647, %v2522
      %vm3532 = vcmp.lt.f32.partialorder %v3531, 0.0004427343
      %v3533 = vsel %vm3532, %v3530, %v3527
      %v3534 = vadd.f32 %v2524, 1.0
      %v3535 = vlog2.pop %v3534
      %v3536 = vmul.f32 %v3535, 0.6931472
      %v3537 = vmul.f32 -0.5, %v2524
      %v3538 = vadd.f32 %v3537, 1.0
      %v3539 = vmul.f32 %v3538, %v2524
      %v3540 = vand.u32 2147483647, %v2524
      %vm3541 = vcmp.lt.f32.partialorder %v3540, 0.0004427343
      %v3542 = vsel %vm3541, %v3539, %v3536
      %v3543 = vadd.f32 %v2526, 1.0
      %v3544 = vlog2.pop %v3543
      %v3545 = vmul.f32 %v3544, 0.6931472
      %v3546 = vmul.f32 -0.5, %v2526
      %v3547 = vadd.f32 %v3546, 1.0
      %v3548 = vmul.f32 %v3547, %v2526
      %v3549 = vand.u32 2147483647, %v2526
      %vm3550 = vcmp.lt.f32.partialorder %v3549, 0.0004427343
      %v3551 = vsel %vm3550, %v3548, %v3545
      %v3552 = vadd.f32 %v2528, 1.0
      %v3553 = vlog2.pop %v3552
      %v3554 = vmul.f32 %v3553, 0.6931472
      %v3555 = vmul.f32 -0.5, %v2528
      %v3556 = vadd.f32 %v3555, 1.0
      %v3557 = vmul.f32 %v3556, %v2528
      %v3558 = vand.u32 2147483647, %v2528
      %vm3559 = vcmp.lt.f32.partialorder %v3558, 0.0004427343
      %v3560 = vsel %vm3559, %v3557, %v3554
      %v3561 = vadd.f32 %v2530, 1.0
      %v3562 = vlog2.pop %v3561
      %v3563 = vmul.f32 %v3562, 0.6931472
      %v3564 = vmul.f32 -0.5, %v2530
      %v3565 = vadd.f32 %v3564, 1.0
      %v3566 = vmul.f32 %v3565, %v2530
      %v3567 = vand.u32 2147483647, %v2530
      %vm3568 = vcmp.lt.f32.partialorder %v3567, 0.0004427343
      %v3569 = vsel %vm3568, %v3566, %v3563
      %v3570 = vadd.f32 %v2532, 1.0
      %v3571 = vlog2.pop %v3570
      %v3572 = vmul.f32 %v3571, 0.6931472
      %v3573 = vmul.f32 -0.5, %v2532
      %v3574 = vadd.f32 %v3573, 1.0
      %v3575 = vmul.f32 %v3574, %v2532
      %v3576 = vand.u32 2147483647, %v2532
      %vm3577 = vcmp.lt.f32.partialorder %v3576, 0.0004427343
      %v3578 = vsel %vm3577, %v3575, %v3572
      %v3579 = vadd.f32 %v2534, 1.0
      %v3580 = vlog2.pop %v3579
      %v3581 = vmul.f32 %v3580, 0.6931472
      %v3582 = vmul.f32 -0.5, %v2534
      %v3583 = vadd.f32 %v3582, 1.0
      %v3584 = vmul.f32 %v3583, %v2534
      %v3585 = vand.u32 2147483647, %v2534
      %vm3586 = vcmp.lt.f32.partialorder %v3585, 0.0004427343
      %v3587 = vsel %vm3586, %v3584, %v3581
      %v3588 = vadd.f32 %v2536, 1.0
      %v3589 = vlog2.pop %v3588
      %v3590 = vmul.f32 %v3589, 0.6931472
      %v3591 = vmul.f32 -0.5, %v2536
      %v3592 = vadd.f32 %v3591, 1.0
      %v3593 = vmul.f32 %v3592, %v2536
      %v3594 = vand.u32 2147483647, %v2536
      %vm3595 = vcmp.lt.f32.partialorder %v3594, 0.0004427343
      %v3596 = vsel %vm3595, %v3593, %v3590
      %v3597 = vadd.f32 %v2538, 1.0
      %v3598 = vlog2.pop %v3597
      %v3599 = vmul.f32 %v3598, 0.6931472
      %v3600 = vmul.f32 -0.5, %v2538
      %v3601 = vadd.f32 %v3600, 1.0
      %v3602 = vmul.f32 %v3601, %v2538
      %v3603 = vand.u32 2147483647, %v2538
      %vm3604 = vcmp.lt.f32.partialorder %v3603, 0.0004427343
      %v3605 = vsel %vm3604, %v3602, %v3599
      %v3606 = vadd.f32 %v2540, 1.0
      %v3607 = vlog2.pop %v3606
      %v3608 = vmul.f32 %v3607, 0.6931472
      %v3609 = vmul.f32 -0.5, %v2540
      %v3610 = vadd.f32 %v3609, 1.0
      %v3611 = vmul.f32 %v3610, %v2540
      %v3612 = vand.u32 2147483647, %v2540
      %vm3613 = vcmp.lt.f32.partialorder %v3612, 0.0004427343
      %v3614 = vsel %vm3613, %v3611, %v3608
      %v3615 = vadd.f32 %v2542, 1.0
      %v3616 = vlog2.pop %v3615
      %v3617 = vmul.f32 %v3616, 0.6931472
      %v3618 = vmul.f32 -0.5, %v2542
      %v3619 = vadd.f32 %v3618, 1.0
      %v3620 = vmul.f32 %v3619, %v2542
      %v3621 = vand.u32 2147483647, %v2542
      %vm3622 = vcmp.lt.f32.partialorder %v3621, 0.0004427343
      %v3623 = vsel %vm3622, %v3620, %v3617
      %v3624 = vadd.f32 %v2544, 1.0
      %v3625 = vlog2.pop %v3624
      %v3626 = vmul.f32 %v3625, 0.6931472
      %v3627 = vmul.f32 -0.5, %v2544
      %v3628 = vadd.f32 %v3627, 1.0
      %v3629 = vmul.f32 %v3628, %v2544
      %v3630 = vand.u32 2147483647, %v2544
      %vm3631 = vcmp.lt.f32.partialorder %v3630, 0.0004427343
      %v3632 = vsel %vm3631, %v3629, %v3626
      %v3633 = vadd.f32 %v2546, 1.0
      %v3634 = vlog2.pop %v3633
      %v3635 = vmul.f32 %v3634, 0.6931472
      %v3636 = vmul.f32 -0.5, %v2546
      %v3637 = vadd.f32 %v3636, 1.0
      %v3638 = vmul.f32 %v3637, %v2546
      %v3639 = vand.u32 2147483647, %v2546
      %vm3640 = vcmp.lt.f32.partialorder %v3639, 0.0004427343
      %v3641 = vsel %vm3640, %v3638, %v3635
      %v3642 = vadd.f32 %v2548, 1.0
      %v3643 = vlog2.pop %v3642
      %v3644 = vmul.f32 %v3643, 0.6931472
      %v3645 = vmul.f32 -0.5, %v2548
      %v3646 = vadd.f32 %v3645, 1.0
      %v3647 = vmul.f32 %v3646, %v2548
      %v3648 = vand.u32 2147483647, %v2548
      %vm3649 = vcmp.lt.f32.partialorder %v3648, 0.0004427343
      %v3650 = vsel %vm3649, %v3647, %v3644
      %v3651 = vadd.f32 %v2550, 1.0
      %v3652 = vlog2.pop %v3651
      %v3653 = vmul.f32 %v3652, 0.6931472
      %v3654 = vmul.f32 -0.5, %v2550
      %v3655 = vadd.f32 %v3654, 1.0
      %v3656 = vmul.f32 %v3655, %v2550
      %v3657 = vand.u32 2147483647, %v2550
      %vm3658 = vcmp.lt.f32.partialorder %v3657, 0.0004427343
      %v3659 = vsel %vm3658, %v3656, %v3653
      %v3660 = vadd.f32 %v2552, 1.0
      %v3661 = vlog2.pop %v3660
      %v3662 = vmul.f32 %v3661, 0.6931472
      %v3663 = vmul.f32 -0.5, %v2552
      %v3664 = vadd.f32 %v3663, 1.0
      %v3665 = vmul.f32 %v3664, %v2552
      %v3666 = vand.u32 2147483647, %v2552
      %vm3667 = vcmp.lt.f32.partialorder %v3666, 0.0004427343
      %v3668 = vsel %vm3667, %v3665, %v3662
      %v3669 = vadd.f32 %v2554, 1.0
      %v3670 = vlog2.pop %v3669
      %v3671 = vmul.f32 %v3670, 0.6931472
      %v3672 = vmul.f32 -0.5, %v2554
      %v3673 = vadd.f32 %v3672, 1.0
      %v3674 = vmul.f32 %v3673, %v2554
      %v3675 = vand.u32 2147483647, %v2554
      %vm3676 = vcmp.lt.f32.partialorder %v3675, 0.0004427343
      %v3677 = vsel %vm3676, %v3674, %v3671
      %v3678 = vadd.f32 %v2556, 1.0
      %v3679 = vlog2.pop %v3678
      %v3680 = vmul.f32 %v3679, 0.6931472
      %v3681 = vmul.f32 -0.5, %v2556
      %v3682 = vadd.f32 %v3681, 1.0
      %v3683 = vmul.f32 %v3682, %v2556
      %v3684 = vand.u32 2147483647, %v2556
      %vm3685 = vcmp.lt.f32.partialorder %v3684, 0.0004427343
      %v3686 = vsel %vm3685, %v3683, %v3680
      %v3687 = vadd.f32 %v2558, 1.0
      %v3688 = vlog2.pop %v3687
      %v3689 = vmul.f32 %v3688, 0.6931472
      %v3690 = vmul.f32 -0.5, %v2558
      %v3691 = vadd.f32 %v3690, 1.0
      %v3692 = vmul.f32 %v3691, %v2558
      %v3693 = vand.u32 2147483647, %v2558
      %vm3694 = vcmp.lt.f32.partialorder %v3693, 0.0004427343
      %v3695 = vsel %vm3694, %v3692, %v3689
      %v3696 = vadd.f32 %v2560, 1.0
      %v3697 = vlog2.pop %v3696
      %v3698 = vmul.f32 %v3697, 0.6931472
      %v3699 = vmul.f32 -0.5, %v2560
      %v3700 = vadd.f32 %v3699, 1.0
      %v3701 = vmul.f32 %v3700, %v2560
      %v3702 = vand.u32 2147483647, %v2560
      %vm3703 = vcmp.lt.f32.partialorder %v3702, 0.0004427343
      %v3704 = vsel %vm3703, %v3701, %v3698
      %v3705 = vadd.f32 %v2562, 1.0
      %v3706 = vlog2.pop %v3705
      %v3707 = vmul.f32 %v3706, 0.6931472
      %v3708 = vmul.f32 -0.5, %v2562
      %v3709 = vadd.f32 %v3708, 1.0
      %v3710 = vmul.f32 %v3709, %v2562
      %v3711 = vand.u32 2147483647, %v2562
      %vm3712 = vcmp.lt.f32.partialorder %v3711, 0.0004427343
      %v3713 = vsel %vm3712, %v3710, %v3707
      %v3714 = vadd.f32 %v2564, 1.0
      %v3715 = vlog2.pop %v3714
      %v3716 = vmul.f32 %v3715, 0.6931472
      %v3717 = vmul.f32 -0.5, %v2564
      %v3718 = vadd.f32 %v3717, 1.0
      %v3719 = vmul.f32 %v3718, %v2564
      %v3720 = vand.u32 2147483647, %v2564
      %vm3721 = vcmp.lt.f32.partialorder %v3720, 0.0004427343
      %v3722 = vsel %vm3721, %v3719, %v3716
      %v3723 = vadd.f32 %v2566, 1.0
      %v3724 = vlog2.pop %v3723
      %v3725 = vmul.f32 %v3724, 0.6931472
      %v3726 = vmul.f32 -0.5, %v2566
      %v3727 = vadd.f32 %v3726, 1.0
      %v3728 = vmul.f32 %v3727, %v2566
      %v3729 = vand.u32 2147483647, %v2566
      %vm3730 = vcmp.lt.f32.partialorder %v3729, 0.0004427343
      %v3731 = vsel %vm3730, %v3728, %v3725
      %v3732 = vadd.f32 %v2568, 1.0
      %v3733 = vlog2.pop %v3732
      %v3734 = vmul.f32 %v3733, 0.6931472
      %v3735 = vmul.f32 -0.5, %v2568
      %v3736 = vadd.f32 %v3735, 1.0
      %v3737 = vmul.f32 %v3736, %v2568
      %v3738 = vand.u32 2147483647, %v2568
      %vm3739 = vcmp.lt.f32.partialorder %v3738, 0.0004427343
      %v3740 = vsel %vm3739, %v3737, %v3734
      %v3741 = vadd.f32 %v2570, 1.0
      %v3742 = vlog2.pop %v3741
      %v3743 = vmul.f32 %v3742, 0.6931472
      %v3744 = vmul.f32 -0.5, %v2570
      %v3745 = vadd.f32 %v3744, 1.0
      %v3746 = vmul.f32 %v3745, %v2570
      %v3747 = vand.u32 2147483647, %v2570
      %vm3748 = vcmp.lt.f32.partialorder %v3747, 0.0004427343
      %v3749 = vsel %vm3748, %v3746, %v3743
      %v3750 = vadd.f32 %v2572, 1.0
      %v3751 = vlog2.pop %v3750
      %v3752 = vmul.f32 %v3751, 0.6931472
      %v3753 = vmul.f32 -0.5, %v2572
      %v3754 = vadd.f32 %v3753, 1.0
      %v3755 = vmul.f32 %v3754, %v2572
      %v3756 = vand.u32 2147483647, %v2572
      %vm3757 = vcmp.lt.f32.partialorder %v3756, 0.0004427343
      %v3758 = vsel %vm3757, %v3755, %v3752
      %v3759 = vadd.f32 %v2574, 1.0
      %v3760 = vlog2.pop %v3759
      %v3761 = vmul.f32 %v3760, 0.6931472
      %v3762 = vmul.f32 -0.5, %v2574
      %v3763 = vadd.f32 %v3762, 1.0
      %v3764 = vmul.f32 %v3763, %v2574
      %v3765 = vand.u32 2147483647, %v2574
      %vm3766 = vcmp.lt.f32.partialorder %v3765, 0.0004427343
      %v3767 = vsel %vm3766, %v3764, %v3761
      %v3768 = vadd.f32 %v2576, 1.0
      %v3769 = vlog2.pop %v3768
      %v3770 = vmul.f32 %v3769, 0.6931472
      %v3771 = vmul.f32 -0.5, %v2576
      %v3772 = vadd.f32 %v3771, 1.0
      %v3773 = vmul.f32 %v3772, %v2576
      %v3774 = vand.u32 2147483647, %v2576
      %vm3775 = vcmp.lt.f32.partialorder %v3774, 0.0004427343
      %v3776 = vsel %vm3775, %v3773, %v3770
      %v3777 = vadd.f32 %v2578, 1.0
      %v3778 = vlog2.pop %v3777
      %v3779 = vmul.f32 %v3778, 0.6931472
      %v3780 = vmul.f32 -0.5, %v2578
      %v3781 = vadd.f32 %v3780, 1.0
      %v3782 = vmul.f32 %v3781, %v2578
      %v3783 = vand.u32 2147483647, %v2578
      %vm3784 = vcmp.lt.f32.partialorder %v3783, 0.0004427343
      %v3785 = vsel %vm3784, %v3782, %v3779
      %v3786 = vadd.f32 %v2580, 1.0
      %v3787 = vlog2.pop %v3786
      %v3788 = vmul.f32 %v3787, 0.6931472
      %v3789 = vmul.f32 -0.5, %v2580
      %v3790 = vadd.f32 %v3789, 1.0
      %v3791 = vmul.f32 %v3790, %v2580
      %v3792 = vand.u32 2147483647, %v2580
      %vm3793 = vcmp.lt.f32.partialorder %v3792, 0.0004427343
      %v3794 = vsel %vm3793, %v3791, %v3788
      %v3795 = vadd.f32 %v2582, 1.0
      %v3796 = vlog2.pop %v3795
      %v3797 = vmul.f32 %v3796, 0.6931472
      %v3798 = vmul.f32 -0.5, %v2582
      %v3799 = vadd.f32 %v3798, 1.0
      %v3800 = vmul.f32 %v3799, %v2582
      %v3801 = vand.u32 2147483647, %v2582
      %vm3802 = vcmp.lt.f32.partialorder %v3801, 0.0004427343
      %v3803 = vsel %vm3802, %v3800, %v3797
      %v3804 = vadd.f32 %v2584, 1.0
      %v3805 = vlog2.pop %v3804
      %v3806 = vmul.f32 %v3805, 0.6931472
      %v3807 = vmul.f32 -0.5, %v2584
      %v3808 = vadd.f32 %v3807, 1.0
      %v3809 = vmul.f32 %v3808, %v2584
      %v3810 = vand.u32 2147483647, %v2584
      %vm3811 = vcmp.lt.f32.partialorder %v3810, 0.0004427343
      %v3812 = vsel %vm3811, %v3809, %v3806
      %v3813 = vadd.f32 %v2586, 1.0
      %v3814 = vlog2.pop %v3813
      %v3815 = vmul.f32 %v3814, 0.6931472
      %v3816 = vmul.f32 -0.5, %v2586
      %v3817 = vadd.f32 %v3816, 1.0
      %v3818 = vmul.f32 %v3817, %v2586
      %v3819 = vand.u32 2147483647, %v2586
      %vm3820 = vcmp.lt.f32.partialorder %v3819, 0.0004427343
      %v3821 = vsel %vm3820, %v3818, %v3815
      %v3822 = vadd.f32 %v2588, 1.0
      %v3823 = vlog2.pop %v3822
      %v3824 = vmul.f32 %v3823, 0.6931472
      %v3825 = vmul.f32 -0.5, %v2588
      %v3826 = vadd.f32 %v3825, 1.0
      %v3827 = vmul.f32 %v3826, %v2588
      %v3828 = vand.u32 2147483647, %v2588
      %vm3829 = vcmp.lt.f32.partialorder %v3828, 0.0004427343
      %v3830 = vsel %vm3829, %v3827, %v3824
      %v3831 = vadd.f32 %v2590, 1.0
      %v3832 = vlog2.pop %v3831
      %v3833 = vmul.f32 %v3832, 0.6931472
      %v3834 = vmul.f32 -0.5, %v2590
      %v3835 = vadd.f32 %v3834, 1.0
      %v3836 = vmul.f32 %v3835, %v2590
      %v3837 = vand.u32 2147483647, %v2590
      %vm3838 = vcmp.lt.f32.partialorder %v3837, 0.0004427343
      %v3839 = vsel %vm3838, %v3836, %v3833
      %v3840 = vadd.f32 %v2592, 1.0
      %v3841 = vlog2.pop %v3840
      %v3842 = vmul.f32 %v3841, 0.6931472
      %v3843 = vmul.f32 -0.5, %v2592
      %v3844 = vadd.f32 %v3843, 1.0
      %v3845 = vmul.f32 %v3844, %v2592
      %v3846 = vand.u32 2147483647, %v2592
      %vm3847 = vcmp.lt.f32.partialorder %v3846, 0.0004427343
      %v3848 = vsel %vm3847, %v3845, %v3842
      %v3849 = vadd.f32 %v2594, 1.0
      %v3850 = vlog2.pop %v3849
      %v3851 = vmul.f32 %v3850, 0.6931472
      %v3852 = vmul.f32 -0.5, %v2594
      %v3853 = vadd.f32 %v3852, 1.0
      %v3854 = vmul.f32 %v3853, %v2594
      %v3855 = vand.u32 2147483647, %v2594
      %vm3856 = vcmp.lt.f32.partialorder %v3855, 0.0004427343
      %v3857 = vsel %vm3856, %v3854, %v3851
      %v3858 = vadd.f32 %v2596, 1.0
      %v3859 = vlog2.pop %v3858
      %v3860 = vmul.f32 %v3859, 0.6931472
      %v3861 = vmul.f32 -0.5, %v2596
      %v3862 = vadd.f32 %v3861, 1.0
      %v3863 = vmul.f32 %v3862, %v2596
      %v3864 = vand.u32 2147483647, %v2596
      %vm3865 = vcmp.lt.f32.partialorder %v3864, 0.0004427343
      %v3866 = vsel %vm3865, %v3863, %v3860
      %v3867 = vadd.f32 %v2598, 1.0
      %v3868 = vlog2.pop %v3867
      %v3869 = vmul.f32 %v3868, 0.6931472
      %v3870 = vmul.f32 -0.5, %v2598
      %v3871 = vadd.f32 %v3870, 1.0
      %v3872 = vmul.f32 %v3871, %v2598
      %v3873 = vand.u32 2147483647, %v2598
      %vm3874 = vcmp.lt.f32.partialorder %v3873, 0.0004427343
      %v3875 = vsel %vm3874, %v3872, %v3869
      %v3876 = vadd.f32 %v2600, 1.0
      %v3877 = vlog2.pop %v3876
      %v3878 = vmul.f32 %v3877, 0.6931472
      %v3879 = vmul.f32 -0.5, %v2600
      %v3880 = vadd.f32 %v3879, 1.0
      %v3881 = vmul.f32 %v3880, %v2600
      %v3882 = vand.u32 2147483647, %v2600
      %vm3883 = vcmp.lt.f32.partialorder %v3882, 0.0004427343
      %v3884 = vsel %vm3883, %v3881, %v3878
      %v3885 = vadd.f32 %v2602, 1.0
      %v3886 = vlog2.pop %v3885
      %v3887 = vmul.f32 %v3886, 0.6931472
      %v3888 = vmul.f32 -0.5, %v2602
      %v3889 = vadd.f32 %v3888, 1.0
      %v3890 = vmul.f32 %v3889, %v2602
      %v3891 = vand.u32 2147483647, %v2602
      %vm3892 = vcmp.lt.f32.partialorder %v3891, 0.0004427343
      %v3893 = vsel %vm3892, %v3890, %v3887
      %v3894 = vadd.f32 %v2604, 1.0
      %v3895 = vlog2.pop %v3894
      %v3896 = vmul.f32 %v3895, 0.6931472
      %v3897 = vmul.f32 -0.5, %v2604
      %v3898 = vadd.f32 %v3897, 1.0
      %v3899 = vmul.f32 %v3898, %v2604
      %v3900 = vand.u32 2147483647, %v2604
      %vm3901 = vcmp.lt.f32.partialorder %v3900, 0.0004427343
      %v3902 = vsel %vm3901, %v3899, %v3896
      %v3903 = vadd.f32 %v2606, 1.0
      %v3904 = vlog2.pop %v3903
      %v3905 = vmul.f32 %v3904, 0.6931472
      %v3906 = vmul.f32 -0.5, %v2606
      %v3907 = vadd.f32 %v3906, 1.0
      %v3908 = vmul.f32 %v3907, %v2606
      %v3909 = vand.u32 2147483647, %v2606
      %vm3910 = vcmp.lt.f32.partialorder %v3909, 0.0004427343
      %v3911 = vsel %vm3910, %v3908, %v3905
      %v3912 = vadd.f32 %v2608, 1.0
      %v3913 = vlog2.pop %v3912
      %v3914 = vmul.f32 %v3913, 0.6931472
      %v3915 = vmul.f32 -0.5, %v2608
      %v3916 = vadd.f32 %v3915, 1.0
      %v3917 = vmul.f32 %v3916, %v2608
      %v3918 = vand.u32 2147483647, %v2608
      %vm3919 = vcmp.lt.f32.partialorder %v3918, 0.0004427343
      %v3920 = vsel %vm3919, %v3917, %v3914
      %v3921 = vadd.f32 %v2610, 1.0
      %v3922 = vlog2.pop %v3921
      %v3923 = vmul.f32 %v3922, 0.6931472
      %v3924 = vmul.f32 -0.5, %v2610
      %v3925 = vadd.f32 %v3924, 1.0
      %v3926 = vmul.f32 %v3925, %v2610
      %v3927 = vand.u32 2147483647, %v2610
      %vm3928 = vcmp.lt.f32.partialorder %v3927, 0.0004427343
      %v3929 = vsel %vm3928, %v3926, %v3923
      %v3930 = vadd.f32 %v2612, 1.0
      %v3931 = vlog2.pop %v3930
      %v3932 = vmul.f32 %v3931, 0.6931472
      %v3933 = vmul.f32 -0.5, %v2612
      %v3934 = vadd.f32 %v3933, 1.0
      %v3935 = vmul.f32 %v3934, %v2612
      %v3936 = vand.u32 2147483647, %v2612
      %vm3937 = vcmp.lt.f32.partialorder %v3936, 0.0004427343
      %v3938 = vsel %vm3937, %v3935, %v3932
      %v3939 = vadd.f32 %v2614, 1.0
      %v3940 = vlog2.pop %v3939
      %v3941 = vmul.f32 %v3940, 0.6931472
      %v3942 = vmul.f32 -0.5, %v2614
      %v3943 = vadd.f32 %v3942, 1.0
      %v3944 = vmul.f32 %v3943, %v2614
      %v3945 = vand.u32 2147483647, %v2614
      %vm3946 = vcmp.lt.f32.partialorder %v3945, 0.0004427343
      %v3947 = vsel %vm3946, %v3944, %v3941
      %v3948 = vadd.f32 %v2616, 1.0
      %v3949 = vlog2.pop %v3948
      %v3950 = vmul.f32 %v3949, 0.6931472
      %v3951 = vmul.f32 -0.5, %v2616
      %v3952 = vadd.f32 %v3951, 1.0
      %v3953 = vmul.f32 %v3952, %v2616
      %v3954 = vand.u32 2147483647, %v2616
      %vm3955 = vcmp.lt.f32.partialorder %v3954, 0.0004427343
      %v3956 = vsel %vm3955, %v3953, %v3950
      %v3957 = vadd.f32 %v2618, 1.0
      %v3958 = vlog2.pop %v3957
      %v3959 = vmul.f32 %v3958, 0.6931472
      %v3960 = vmul.f32 -0.5, %v2618
      %v3961 = vadd.f32 %v3960, 1.0
      %v3962 = vmul.f32 %v3961, %v2618
      %v3963 = vand.u32 2147483647, %v2618
      %vm3964 = vcmp.lt.f32.partialorder %v3963, 0.0004427343
      %v3965 = vsel %vm3964, %v3962, %v3959
      %v3966 = vadd.f32 %v2620, 1.0
      %v3967 = vlog2.pop %v3966
      %v3968 = vmul.f32 %v3967, 0.6931472
      %v3969 = vmul.f32 -0.5, %v2620
      %v3970 = vadd.f32 %v3969, 1.0
      %v3971 = vmul.f32 %v3970, %v2620
      %v3972 = vand.u32 2147483647, %v2620
      %vm3973 = vcmp.lt.f32.partialorder %v3972, 0.0004427343
      %v3974 = vsel %vm3973, %v3971, %v3968
      %v3975 = vadd.f32 %v2622, 1.0
      %v3976 = vlog2.pop %v3975
      %v3977 = vmul.f32 %v3976, 0.6931472
      %v3978 = vmul.f32 -0.5, %v2622
      %v3979 = vadd.f32 %v3978, 1.0
      %v3980 = vmul.f32 %v3979, %v2622
      %v3981 = vand.u32 2147483647, %v2622
      %vm3982 = vcmp.lt.f32.partialorder %v3981, 0.0004427343
      %v3983 = vsel %vm3982, %v3980, %v3977
      %v3984 = vadd.f32 %v2624, 1.0
      %v3985 = vlog2.pop %v3984
      %v3986 = vmul.f32 %v3985, 0.6931472
      %v3987 = vmul.f32 -0.5, %v2624
      %v3988 = vadd.f32 %v3987, 1.0
      %v3989 = vmul.f32 %v3988, %v2624
      %v3990 = vand.u32 2147483647, %v2624
      %vm3991 = vcmp.lt.f32.partialorder %v3990, 0.0004427343
      %v3992 = vsel %vm3991, %v3989, %v3986
      %v3993 = vadd.f32 %v2626, 1.0
      %v3994 = vlog2.pop %v3993
      %v3995 = vmul.f32 %v3994, 0.6931472
      %v3996 = vmul.f32 -0.5, %v2626
      %v3997 = vadd.f32 %v3996, 1.0
      %v3998 = vmul.f32 %v3997, %v2626
      %v3999 = vand.u32 2147483647, %v2626
      %vm4000 = vcmp.lt.f32.partialorder %v3999, 0.0004427343
      %v4001 = vsel %vm4000, %v3998, %v3995
      %v4002 = vadd.f32 %v2628, 1.0
      %v4003 = vlog2.pop %v4002
      %v4004 = vmul.f32 %v4003, 0.6931472
      %v4005 = vmul.f32 -0.5, %v2628
      %v4006 = vadd.f32 %v4005, 1.0
      %v4007 = vmul.f32 %v4006, %v2628
      %v4008 = vand.u32 2147483647, %v2628
      %vm4009 = vcmp.lt.f32.partialorder %v4008, 0.0004427343
      %v4010 = vsel %vm4009, %v4007, %v4004
      %v4011 = vadd.f32 %v2630, 1.0
      %v4012 = vlog2.pop %v4011
      %v4013 = vmul.f32 %v4012, 0.6931472
      %v4014 = vmul.f32 -0.5, %v2630
      %v4015 = vadd.f32 %v4014, 1.0
      %v4016 = vmul.f32 %v4015, %v2630
      %v4017 = vand.u32 2147483647, %v2630
      %vm4018 = vcmp.lt.f32.partialorder %v4017, 0.0004427343
      %v4019 = vsel %vm4018, %v4016, %v4013
      %v4020 = vadd.f32 %v2632, 1.0
      %v4021 = vlog2.pop %v4020
      %v4022 = vmul.f32 %v4021, 0.6931472
      %v4023 = vmul.f32 -0.5, %v2632
      %v4024 = vadd.f32 %v4023, 1.0
      %v4025 = vmul.f32 %v4024, %v2632
      %v4026 = vand.u32 2147483647, %v2632
      %vm4027 = vcmp.lt.f32.partialorder %v4026, 0.0004427343
      %v4028 = vsel %vm4027, %v4025, %v4022
      %v4029 = vadd.f32 %v2634, 1.0
      %v4030 = vlog2.pop %v4029
      %v4031 = vmul.f32 %v4030, 0.6931472
      %v4032 = vmul.f32 -0.5, %v2634
      %v4033 = vadd.f32 %v4032, 1.0
      %v4034 = vmul.f32 %v4033, %v2634
      %v4035 = vand.u32 2147483647, %v2634
      %vm4036 = vcmp.lt.f32.partialorder %v4035, 0.0004427343
      %v4037 = vsel %vm4036, %v4034, %v4031
      %v4038 = vadd.f32 %v2636, 1.0
      %v4039 = vlog2.pop %v4038
      %v4040 = vmul.f32 %v4039, 0.6931472
      %v4041 = vmul.f32 -0.5, %v2636
      %v4042 = vadd.f32 %v4041, 1.0
      %v4043 = vmul.f32 %v4042, %v2636
      %v4044 = vand.u32 2147483647, %v2636
      %vm4045 = vcmp.lt.f32.partialorder %v4044, 0.0004427343
      %v4046 = vsel %vm4045, %v4043, %v4040
      %v4047 = vadd.f32 %v2638, 1.0
      %v4048 = vlog2.pop %v4047
      %v4049 = vmul.f32 %v4048, 0.6931472
      %v4050 = vmul.f32 -0.5, %v2638
      %v4051 = vadd.f32 %v4050, 1.0
      %v4052 = vmul.f32 %v4051, %v2638
      %v4053 = vand.u32 2147483647, %v2638
      %vm4054 = vcmp.lt.f32.partialorder %v4053, 0.0004427343
      %v4055 = vsel %vm4054, %v4052, %v4049
      %v4056 = vadd.f32 %v2640, 1.0
      %v4057 = vlog2.pop %v4056
      %v4058 = vmul.f32 %v4057, 0.6931472
      %v4059 = vmul.f32 -0.5, %v2640
      %v4060 = vadd.f32 %v4059, 1.0
      %v4061 = vmul.f32 %v4060, %v2640
      %v4062 = vand.u32 2147483647, %v2640
      %vm4063 = vcmp.lt.f32.partialorder %v4062, 0.0004427343
      %v4064 = vsel %vm4063, %v4061, %v4058
      %v4065 = vadd.f32 %v2642, 1.0
      %v4066 = vlog2.pop %v4065
      %v4067 = vmul.f32 %v4066, 0.6931472
      %v4068 = vmul.f32 -0.5, %v2642
      %v4069 = vadd.f32 %v4068, 1.0
      %v4070 = vmul.f32 %v4069, %v2642
      %v4071 = vand.u32 2147483647, %v2642
      %vm4072 = vcmp.lt.f32.partialorder %v4071, 0.0004427343
      %v4073 = vsel %vm4072, %v4070, %v4067
      %v4074 = vadd.f32 %v2644, 1.0
      %v4075 = vlog2.pop %v4074
      %v4076 = vmul.f32 %v4075, 0.6931472
      %v4077 = vmul.f32 -0.5, %v2644
      %v4078 = vadd.f32 %v4077, 1.0
      %v4079 = vmul.f32 %v4078, %v2644
      %v4080 = vand.u32 2147483647, %v2644
      %vm4081 = vcmp.lt.f32.partialorder %v4080, 0.0004427343
      %v4082 = vsel %vm4081, %v4079, %v4076
      %v4083 = vadd.f32 %v2646, 1.0
      %v4084 = vlog2.pop %v4083
      %v4085 = vmul.f32 %v4084, 0.6931472
      %v4086 = vmul.f32 -0.5, %v2646
      %v4087 = vadd.f32 %v4086, 1.0
      %v4088 = vmul.f32 %v4087, %v2646
      %v4089 = vand.u32 2147483647, %v2646
      %vm4090 = vcmp.lt.f32.partialorder %v4089, 0.0004427343
      %v4091 = vsel %vm4090, %v4088, %v4085
      %v4092 = vadd.f32 %v2648, 1.0
      %v4093 = vlog2.pop %v4092
      %v4094 = vmul.f32 %v4093, 0.6931472
      %v4095 = vmul.f32 -0.5, %v2648
      %v4096 = vadd.f32 %v4095, 1.0
      %v4097 = vmul.f32 %v4096, %v2648
      %v4098 = vand.u32 2147483647, %v2648
      %vm4099 = vcmp.lt.f32.partialorder %v4098, 0.0004427343
      %v4100 = vsel %vm4099, %v4097, %v4094
      %v4101 = vadd.f32 %v2650, 1.0
      %v4102 = vlog2.pop %v4101
      %v4103 = vmul.f32 %v4102, 0.6931472
      %v4104 = vmul.f32 -0.5, %v2650
      %v4105 = vadd.f32 %v4104, 1.0
      %v4106 = vmul.f32 %v4105, %v2650
      %v4107 = vand.u32 2147483647, %v2650
      %vm4108 = vcmp.lt.f32.partialorder %v4107, 0.0004427343
      %v4109 = vsel %vm4108, %v4106, %v4103
      %v4110 = vadd.f32 %v2652, 1.0
      %v4111 = vlog2.pop %v4110
      %v4112 = vmul.f32 %v4111, 0.6931472
      %v4113 = vmul.f32 -0.5, %v2652
      %v4114 = vadd.f32 %v4113, 1.0
      %v4115 = vmul.f32 %v4114, %v2652
      %v4116 = vand.u32 2147483647, %v2652
      %vm4117 = vcmp.lt.f32.partialorder %v4116, 0.0004427343
      %v4118 = vsel %vm4117, %v4115, %v4112
      %v4119 = vadd.f32 %v2654, 1.0
      %v4120 = vlog2.pop %v4119
      %v4121 = vmul.f32 %v4120, 0.6931472
      %v4122 = vmul.f32 -0.5, %v2654
      %v4123 = vadd.f32 %v4122, 1.0
      %v4124 = vmul.f32 %v4123, %v2654
      %v4125 = vand.u32 2147483647, %v2654
      %vm4126 = vcmp.lt.f32.partialorder %v4125, 0.0004427343
      %v4127 = vsel %vm4126, %v4124, %v4121
      %v4128 = vadd.f32 %v2656, 1.0
      %v4129 = vlog2.pop %v4128
      %v4130 = vmul.f32 %v4129, 0.6931472
      %v4131 = vmul.f32 -0.5, %v2656
      %v4132 = vadd.f32 %v4131, 1.0
      %v4133 = vmul.f32 %v4132, %v2656
      %v4134 = vand.u32 2147483647, %v2656
      %vm4135 = vcmp.lt.f32.partialorder %v4134, 0.0004427343
      %v4136 = vsel %vm4135, %v4133, %v4130
      %v4137 = vadd.f32 %v2658, 1.0
      %v4138 = vlog2.pop %v4137
      %v4139 = vmul.f32 %v4138, 0.6931472
      %v4140 = vmul.f32 -0.5, %v2658
      %v4141 = vadd.f32 %v4140, 1.0
      %v4142 = vmul.f32 %v4141, %v2658
      %v4143 = vand.u32 2147483647, %v2658
      %vm4144 = vcmp.lt.f32.partialorder %v4143, 0.0004427343
      %v4145 = vsel %vm4144, %v4142, %v4139
      %v4146 = vadd.f32 %v2660, 1.0
      %v4147 = vlog2.pop %v4146
      %v4148 = vmul.f32 %v4147, 0.6931472
      %v4149 = vmul.f32 -0.5, %v2660
      %v4150 = vadd.f32 %v4149, 1.0
      %v4151 = vmul.f32 %v4150, %v2660
      %v4152 = vand.u32 2147483647, %v2660
      %vm4153 = vcmp.lt.f32.partialorder %v4152, 0.0004427343
      %v4154 = vsel %vm4153, %v4151, %v4148
      %v4155 = vadd.f32 %v2662, 1.0
      %v4156 = vlog2.pop %v4155
      %v4157 = vmul.f32 %v4156, 0.6931472
      %v4158 = vmul.f32 -0.5, %v2662
      %v4159 = vadd.f32 %v4158, 1.0
      %v4160 = vmul.f32 %v4159, %v2662
      %v4161 = vand.u32 2147483647, %v2662
      %vm4162 = vcmp.lt.f32.partialorder %v4161, 0.0004427343
      %v4163 = vsel %vm4162, %v4160, %v4157
      %v4164 = vadd.f32 %v2664, 1.0
      %v4165 = vlog2.pop %v4164
      %v4166 = vmul.f32 %v4165, 0.6931472
      %v4167 = vmul.f32 -0.5, %v2664
      %v4168 = vadd.f32 %v4167, 1.0
      %v4169 = vmul.f32 %v4168, %v2664
      %v4170 = vand.u32 2147483647, %v2664
      %vm4171 = vcmp.lt.f32.partialorder %v4170, 0.0004427343
      %v4172 = vsel %vm4171, %v4169, %v4166
      %v4173 = vadd.f32 %v2666, 1.0
      %v4174 = vlog2.pop %v4173
      %v4175 = vmul.f32 %v4174, 0.6931472
      %v4176 = vmul.f32 -0.5, %v2666
      %v4177 = vadd.f32 %v4176, 1.0
      %v4178 = vmul.f32 %v4177, %v2666
      %v4179 = vand.u32 2147483647, %v2666
      %vm4180 = vcmp.lt.f32.partialorder %v4179, 0.0004427343
      %v4181 = vsel %vm4180, %v4178, %v4175
      %v4182 = vadd.f32 %v2668, 1.0
      %v4183 = vlog2.pop %v4182
      %v4184 = vmul.f32 %v4183, 0.6931472
      %v4185 = vmul.f32 -0.5, %v2668
      %v4186 = vadd.f32 %v4185, 1.0
      %v4187 = vmul.f32 %v4186, %v2668
      %v4188 = vand.u32 2147483647, %v2668
      %vm4189 = vcmp.lt.f32.partialorder %v4188, 0.0004427343
      %v4190 = vsel %vm4189, %v4187, %v4184
      %v4191 = vadd.f32 %v2670, 1.0
      %v4192 = vlog2.pop %v4191
      %v4193 = vmul.f32 %v4192, 0.6931472
      %v4194 = vmul.f32 -0.5, %v2670
      %v4195 = vadd.f32 %v4194, 1.0
      %v4196 = vmul.f32 %v4195, %v2670
      %v4197 = vand.u32 2147483647, %v2670
      %vm4198 = vcmp.lt.f32.partialorder %v4197, 0.0004427343
      %v4199 = vsel %vm4198, %v4196, %v4193
      %v4200 = vadd.f32 %v2672, 1.0
      %v4201 = vlog2.pop %v4200
      %v4202 = vmul.f32 %v4201, 0.6931472
      %v4203 = vmul.f32 -0.5, %v2672
      %v4204 = vadd.f32 %v4203, 1.0
      %v4205 = vmul.f32 %v4204, %v2672
      %v4206 = vand.u32 2147483647, %v2672
      %vm4207 = vcmp.lt.f32.partialorder %v4206, 0.0004427343
      %v4208 = vsel %vm4207, %v4205, %v4202
      %v4209 = vadd.f32 %v2674, 1.0
      %v4210 = vlog2.pop %v4209
      %v4211 = vmul.f32 %v4210, 0.6931472
      %v4212 = vmul.f32 -0.5, %v2674
      %v4213 = vadd.f32 %v4212, 1.0
      %v4214 = vmul.f32 %v4213, %v2674
      %v4215 = vand.u32 2147483647, %v2674
      %vm4216 = vcmp.lt.f32.partialorder %v4215, 0.0004427343
      %v4217 = vsel %vm4216, %v4214, %v4211
      %v4218 = vadd.f32 %v2676, 1.0
      %v4219 = vlog2.pop %v4218
      %v4220 = vmul.f32 %v4219, 0.6931472
      %v4221 = vmul.f32 -0.5, %v2676
      %v4222 = vadd.f32 %v4221, 1.0
      %v4223 = vmul.f32 %v4222, %v2676
      %v4224 = vand.u32 2147483647, %v2676
      %vm4225 = vcmp.lt.f32.partialorder %v4224, 0.0004427343
      %v4226 = vsel %vm4225, %v4223, %v4220
      %v4227 = vadd.f32 %v2678, 1.0
      %v4228 = vlog2.pop %v4227
      %v4229 = vmul.f32 %v4228, 0.6931472
      %v4230 = vmul.f32 -0.5, %v2678
      %v4231 = vadd.f32 %v4230, 1.0
      %v4232 = vmul.f32 %v4231, %v2678
      %v4233 = vand.u32 2147483647, %v2678
      %vm4234 = vcmp.lt.f32.partialorder %v4233, 0.0004427343
      %v4235 = vsel %vm4234, %v4232, %v4229
      %v4236 = vadd.f32 %v2680, 1.0
      %v4237 = vlog2.pop %v4236
      %v4238 = vmul.f32 %v4237, 0.6931472
      %v4239 = vmul.f32 -0.5, %v2680
      %v4240 = vadd.f32 %v4239, 1.0
      %v4241 = vmul.f32 %v4240, %v2680
      %v4242 = vand.u32 2147483647, %v2680
      %vm4243 = vcmp.lt.f32.partialorder %v4242, 0.0004427343
      %v4244 = vsel %vm4243, %v4241, %v4238
      %v4245 = vadd.f32 %v2682, 1.0
      %v4246 = vlog2.pop %v4245
      %v4247 = vmul.f32 %v4246, 0.6931472
      %v4248 = vmul.f32 -0.5, %v2682
      %v4249 = vadd.f32 %v4248, 1.0
      %v4250 = vmul.f32 %v4249, %v2682
      %v4251 = vand.u32 2147483647, %v2682
      %vm4252 = vcmp.lt.f32.partialorder %v4251, 0.0004427343
      %v4253 = vsel %vm4252, %v4250, %v4247
      %v4254 = vadd.f32 %v2684, 1.0
      %v4255 = vlog2.pop %v4254
      %v4256 = vmul.f32 %v4255, 0.6931472
      %v4257 = vmul.f32 -0.5, %v2684
      %v4258 = vadd.f32 %v4257, 1.0
      %v4259 = vmul.f32 %v4258, %v2684
      %v4260 = vand.u32 2147483647, %v2684
      %vm4261 = vcmp.lt.f32.partialorder %v4260, 0.0004427343
      %v4262 = vsel %vm4261, %v4259, %v4256
      %v4263 = vadd.f32 %v2686, 1.0
      %v4264 = vlog2.pop %v4263
      %v4265 = vmul.f32 %v4264, 0.6931472
      %v4266 = vmul.f32 -0.5, %v2686
      %v4267 = vadd.f32 %v4266, 1.0
      %v4268 = vmul.f32 %v4267, %v2686
      %v4269 = vand.u32 2147483647, %v2686
      %vm4270 = vcmp.lt.f32.partialorder %v4269, 0.0004427343
      %v4271 = vsel %vm4270, %v4268, %v4265
      %v4272 = vadd.f32 %v2688, 1.0
      %v4273 = vlog2.pop %v4272
      %v4274 = vmul.f32 %v4273, 0.6931472
      %v4275 = vmul.f32 -0.5, %v2688
      %v4276 = vadd.f32 %v4275, 1.0
      %v4277 = vmul.f32 %v4276, %v2688
      %v4278 = vand.u32 2147483647, %v2688
      %vm4279 = vcmp.lt.f32.partialorder %v4278, 0.0004427343
      %v4280 = vsel %vm4279, %v4277, %v4274
      %v4281 = vadd.f32 %v2690, 1.0
      %v4282 = vlog2.pop %v4281
      %v4283 = vmul.f32 %v4282, 0.6931472
      %v4284 = vmul.f32 -0.5, %v2690
      %v4285 = vadd.f32 %v4284, 1.0
      %v4286 = vmul.f32 %v4285, %v2690
      %v4287 = vand.u32 2147483647, %v2690
      %vm4288 = vcmp.lt.f32.partialorder %v4287, 0.0004427343
      %v4289 = vsel %vm4288, %v4286, %v4283
      %v4290 = vadd.f32 %v2692, 1.0
      %v4291 = vlog2.pop %v4290
      %v4292 = vmul.f32 %v4291, 0.6931472
      %v4293 = vmul.f32 -0.5, %v2692
      %v4294 = vadd.f32 %v4293, 1.0
      %v4295 = vmul.f32 %v4294, %v2692
      %v4296 = vand.u32 2147483647, %v2692
      %vm4297 = vcmp.lt.f32.partialorder %v4296, 0.0004427343
      %v4298 = vsel %vm4297, %v4295, %v4292
      %v4299 = vadd.f32 %v2694, 1.0
      %v4300 = vlog2.pop %v4299
      %v4301 = vmul.f32 %v4300, 0.6931472
      %v4302 = vmul.f32 -0.5, %v2694
      %v4303 = vadd.f32 %v4302, 1.0
      %v4304 = vmul.f32 %v4303, %v2694
      %v4305 = vand.u32 2147483647, %v2694
      %vm4306 = vcmp.lt.f32.partialorder %v4305, 0.0004427343
      %v4307 = vsel %vm4306, %v4304, %v4301
      %v4308 = vadd.f32 %v2696, 1.0
      %v4309 = vlog2.pop %v4308
      %v4310 = vmul.f32 %v4309, 0.6931472
      %v4311 = vmul.f32 -0.5, %v2696
      %v4312 = vadd.f32 %v4311, 1.0
      %v4313 = vmul.f32 %v4312, %v2696
      %v4314 = vand.u32 2147483647, %v2696
      %vm4315 = vcmp.lt.f32.partialorder %v4314, 0.0004427343
      %v4316 = vsel %vm4315, %v4313, %v4310
      %v4317 = vadd.f32 %v2698, 1.0
      %v4318 = vlog2.pop %v4317
      %v4319 = vmul.f32 %v4318, 0.6931472
      %v4320 = vmul.f32 -0.5, %v2698
      %v4321 = vadd.f32 %v4320, 1.0
      %v4322 = vmul.f32 %v4321, %v2698
      %v4323 = vand.u32 2147483647, %v2698
      %vm4324 = vcmp.lt.f32.partialorder %v4323, 0.0004427343
      %v4325 = vsel %vm4324, %v4322, %v4319
      %v4326 = vadd.f32 %v2700, 1.0
      %v4327 = vlog2.pop %v4326
      %v4328 = vmul.f32 %v4327, 0.6931472
      %v4329 = vmul.f32 -0.5, %v2700
      %v4330 = vadd.f32 %v4329, 1.0
      %v4331 = vmul.f32 %v4330, %v2700
      %v4332 = vand.u32 2147483647, %v2700
      %vm4333 = vcmp.lt.f32.partialorder %v4332, 0.0004427343
      %v4334 = vsel %vm4333, %v4331, %v4328
      %v4335 = vadd.f32 %v2702, 1.0
      %v4336 = vlog2.pop %v4335
      %v4337 = vmul.f32 %v4336, 0.6931472
      %v4338 = vmul.f32 -0.5, %v2702
      %v4339 = vadd.f32 %v4338, 1.0
      %v4340 = vmul.f32 %v4339, %v2702
      %v4341 = vand.u32 2147483647, %v2702
      %vm4342 = vcmp.lt.f32.partialorder %v4341, 0.0004427343
      %v4343 = vsel %vm4342, %v4340, %v4337
      %v4344 = vadd.f32 %v2704, 1.0
      %v4345 = vlog2.pop %v4344
      %v4346 = vmul.f32 %v4345, 0.6931472
      %v4347 = vmul.f32 -0.5, %v2704
      %v4348 = vadd.f32 %v4347, 1.0
      %v4349 = vmul.f32 %v4348, %v2704
      %v4350 = vand.u32 2147483647, %v2704
      %vm4351 = vcmp.lt.f32.partialorder %v4350, 0.0004427343
      %v4352 = vsel %vm4351, %v4349, %v4346
      %v4353 = vadd.f32 %v2706, 1.0
      %v4354 = vlog2.pop %v4353
      %v4355 = vmul.f32 %v4354, 0.6931472
      %v4356 = vmul.f32 -0.5, %v2706
      %v4357 = vadd.f32 %v4356, 1.0
      %v4358 = vmul.f32 %v4357, %v2706
      %v4359 = vand.u32 2147483647, %v2706
      %vm4360 = vcmp.lt.f32.partialorder %v4359, 0.0004427343
      %v4361 = vsel %vm4360, %v4358, %v4355
      %v4362 = vadd.f32 %v2708, 1.0
      %v4363 = vlog2.pop %v4362
      %v4364 = vmul.f32 %v4363, 0.6931472
      %v4365 = vmul.f32 -0.5, %v2708
      %v4366 = vadd.f32 %v4365, 1.0
      %v4367 = vmul.f32 %v4366, %v2708
      %v4368 = vand.u32 2147483647, %v2708
      %vm4369 = vcmp.lt.f32.partialorder %v4368, 0.0004427343
      %v4370 = vsel %vm4369, %v4367, %v4364
      %v4371 = vadd.f32 %v2710, 1.0
      %v4372 = vlog2.pop %v4371
      %v4373 = vmul.f32 %v4372, 0.6931472
      %v4374 = vmul.f32 -0.5, %v2710
      %v4375 = vadd.f32 %v4374, 1.0
      %v4376 = vmul.f32 %v4375, %v2710
      %v4377 = vand.u32 2147483647, %v2710
      %vm4378 = vcmp.lt.f32.partialorder %v4377, 0.0004427343
      %v4379 = vsel %vm4378, %v4376, %v4373
      %v4380 = vadd.f32 %v2712, 1.0
      %v4381 = vlog2.pop %v4380
      %v4382 = vmul.f32 %v4381, 0.6931472
      %v4383 = vmul.f32 -0.5, %v2712
      %v4384 = vadd.f32 %v4383, 1.0
      %v4385 = vmul.f32 %v4384, %v2712
      %v4386 = vand.u32 2147483647, %v2712
      %vm4387 = vcmp.lt.f32.partialorder %v4386, 0.0004427343
      %v4388 = vsel %vm4387, %v4385, %v4382
      %v4389 = vadd.f32 %v2714, 1.0
      %v4390 = vlog2.pop %v4389
      %v4391 = vmul.f32 %v4390, 0.6931472
      %v4392 = vmul.f32 -0.5, %v2714
      %v4393 = vadd.f32 %v4392, 1.0
      %v4394 = vmul.f32 %v4393, %v2714
      %v4395 = vand.u32 2147483647, %v2714
      %vm4396 = vcmp.lt.f32.partialorder %v4395, 0.0004427343
      %v4397 = vsel %vm4396, %v4394, %v4391
      %v4398 = vadd.f32 %v2716, 1.0
      %v4399 = vlog2.pop %v4398
      %v4400 = vmul.f32 %v4399, 0.6931472
      %v4401 = vmul.f32 -0.5, %v2716
      %v4402 = vadd.f32 %v4401, 1.0
      %v4403 = vmul.f32 %v4402, %v2716
      %v4404 = vand.u32 2147483647, %v2716
      %vm4405 = vcmp.lt.f32.partialorder %v4404, 0.0004427343
      %v4406 = vsel %vm4405, %v4403, %v4400
      %v4407 = vadd.f32 %v2718, 1.0
      %v4408 = vlog2.pop %v4407
      %v4409 = vmul.f32 %v4408, 0.6931472
      %v4410 = vmul.f32 -0.5, %v2718
      %v4411 = vadd.f32 %v4410, 1.0
      %v4412 = vmul.f32 %v4411, %v2718
      %v4413 = vand.u32 2147483647, %v2718
      %vm4414 = vcmp.lt.f32.partialorder %v4413, 0.0004427343
      %v4415 = vsel %vm4414, %v4412, %v4409
      %v4416 = vadd.f32 %v2720, 1.0
      %v4417 = vlog2.pop %v4416
      %v4418 = vmul.f32 %v4417, 0.6931472
      %v4419 = vmul.f32 -0.5, %v2720
      %v4420 = vadd.f32 %v4419, 1.0
      %v4421 = vmul.f32 %v4420, %v2720
      %v4422 = vand.u32 2147483647, %v2720
      %vm4423 = vcmp.lt.f32.partialorder %v4422, 0.0004427343
      %v4424 = vsel %vm4423, %v4421, %v4418
      %v4425 = vadd.f32 %v2722, 1.0
      %v4426 = vlog2.pop %v4425
      %v4427 = vmul.f32 %v4426, 0.6931472
      %v4428 = vmul.f32 -0.5, %v2722
      %v4429 = vadd.f32 %v4428, 1.0
      %v4430 = vmul.f32 %v4429, %v2722
      %v4431 = vand.u32 2147483647, %v2722
      %vm4432 = vcmp.lt.f32.partialorder %v4431, 0.0004427343
      %v4433 = vsel %vm4432, %v4430, %v4427
      %v4434 = vadd.f32 %v2724, 1.0
      %v4435 = vlog2.pop %v4434
      %v4436 = vmul.f32 %v4435, 0.6931472
      %v4437 = vmul.f32 -0.5, %v2724
      %v4438 = vadd.f32 %v4437, 1.0
      %v4439 = vmul.f32 %v4438, %v2724
      %v4440 = vand.u32 2147483647, %v2724
      %vm4441 = vcmp.lt.f32.partialorder %v4440, 0.0004427343
      %v4442 = vsel %vm4441, %v4439, %v4436
      %v4443 = vadd.f32 %v2726, 1.0
      %v4444 = vlog2.pop %v4443
      %v4445 = vmul.f32 %v4444, 0.6931472
      %v4446 = vmul.f32 -0.5, %v2726
      %v4447 = vadd.f32 %v4446, 1.0
      %v4448 = vmul.f32 %v4447, %v2726
      %v4449 = vand.u32 2147483647, %v2726
      %vm4450 = vcmp.lt.f32.partialorder %v4449, 0.0004427343
      %v4451 = vsel %vm4450, %v4448, %v4445
      %v4452 = vadd.f32 %v2728, 1.0
      %v4453 = vlog2.pop %v4452
      %v4454 = vmul.f32 %v4453, 0.6931472
      %v4455 = vmul.f32 -0.5, %v2728
      %v4456 = vadd.f32 %v4455, 1.0
      %v4457 = vmul.f32 %v4456, %v2728
      %v4458 = vand.u32 2147483647, %v2728
      %vm4459 = vcmp.lt.f32.partialorder %v4458, 0.0004427343
      %v4460 = vsel %vm4459, %v4457, %v4454
      %v4461 = vadd.f32 %v2730, 1.0
      %v4462 = vlog2.pop %v4461
      %v4463 = vmul.f32 %v4462, 0.6931472
      %v4464 = vmul.f32 -0.5, %v2730
      %v4465 = vadd.f32 %v4464, 1.0
      %v4466 = vmul.f32 %v4465, %v2730
      %v4467 = vand.u32 2147483647, %v2730
      %vm4468 = vcmp.lt.f32.partialorder %v4467, 0.0004427343
      %v4469 = vsel %vm4468, %v4466, %v4463
      %v4470 = vadd.f32 %v2732, 1.0
      %v4471 = vlog2.pop %v4470
      %v4472 = vmul.f32 %v4471, 0.6931472
      %v4473 = vmul.f32 -0.5, %v2732
      %v4474 = vadd.f32 %v4473, 1.0
      %v4475 = vmul.f32 %v4474, %v2732
      %v4476 = vand.u32 2147483647, %v2732
      %vm4477 = vcmp.lt.f32.partialorder %v4476, 0.0004427343
      %v4478 = vsel %vm4477, %v4475, %v4472
      %v4479 = vadd.f32 %v2734, 1.0
      %v4480 = vlog2.pop %v4479
      %v4481 = vmul.f32 %v4480, 0.6931472
      %v4482 = vmul.f32 -0.5, %v2734
      %v4483 = vadd.f32 %v4482, 1.0
      %v4484 = vmul.f32 %v4483, %v2734
      %v4485 = vand.u32 2147483647, %v2734
      %vm4486 = vcmp.lt.f32.partialorder %v4485, 0.0004427343
      %v4487 = vsel %vm4486, %v4484, %v4481
      %v4488 = vadd.f32 %v2736, 1.0
      %v4489 = vlog2.pop %v4488
      %v4490 = vmul.f32 %v4489, 0.6931472
      %v4491 = vmul.f32 -0.5, %v2736
      %v4492 = vadd.f32 %v4491, 1.0
      %v4493 = vmul.f32 %v4492, %v2736
      %v4494 = vand.u32 2147483647, %v2736
      %vm4495 = vcmp.lt.f32.partialorder %v4494, 0.0004427343
      %v4496 = vsel %vm4495, %v4493, %v4490
      %v4497 = vadd.f32 %v2738, 1.0
      %v4498 = vlog2.pop %v4497
      %v4499 = vmul.f32 %v4498, 0.6931472
      %v4500 = vmul.f32 -0.5, %v2738
      %v4501 = vadd.f32 %v4500, 1.0
      %v4502 = vmul.f32 %v4501, %v2738
      %v4503 = vand.u32 2147483647, %v2738
      %vm4504 = vcmp.lt.f32.partialorder %v4503, 0.0004427343
      %v4505 = vsel %vm4504, %v4502, %v4499
      %v4506 = vadd.f32 %v2740, 1.0
      %v4507 = vlog2.pop %v4506
      %v4508 = vmul.f32 %v4507, 0.6931472
      %v4509 = vmul.f32 -0.5, %v2740
      %v4510 = vadd.f32 %v4509, 1.0
      %v4511 = vmul.f32 %v4510, %v2740
      %v4512 = vand.u32 2147483647, %v2740
      %vm4513 = vcmp.lt.f32.partialorder %v4512, 0.0004427343
      %v4514 = vsel %vm4513, %v4511, %v4508
      %v4515 = vadd.f32 %v2742, 1.0
      %v4516 = vlog2.pop %v4515
      %v4517 = vmul.f32 %v4516, 0.6931472
      %v4518 = vmul.f32 -0.5, %v2742
      %v4519 = vadd.f32 %v4518, 1.0
      %v4520 = vmul.f32 %v4519, %v2742
      %v4521 = vand.u32 2147483647, %v2742
      %vm4522 = vcmp.lt.f32.partialorder %v4521, 0.0004427343
      %v4523 = vsel %vm4522, %v4520, %v4517
      %v4524 = vadd.f32 %v2744, 1.0
      %v4525 = vlog2.pop %v4524
      %v4526 = vmul.f32 %v4525, 0.6931472
      %v4527 = vmul.f32 -0.5, %v2744
      %v4528 = vadd.f32 %v4527, 1.0
      %v4529 = vmul.f32 %v4528, %v2744
      %v4530 = vand.u32 2147483647, %v2744
      %vm4531 = vcmp.lt.f32.partialorder %v4530, 0.0004427343
      %v4532 = vsel %vm4531, %v4529, %v4526
      %v4533 = vadd.f32 %v2746, 1.0
      %v4534 = vlog2.pop %v4533
      %v4535 = vmul.f32 %v4534, 0.6931472
      %v4536 = vmul.f32 -0.5, %v2746
      %v4537 = vadd.f32 %v4536, 1.0
      %v4538 = vmul.f32 %v4537, %v2746
      %v4539 = vand.u32 2147483647, %v2746
      %vm4540 = vcmp.lt.f32.partialorder %v4539, 0.0004427343
      %v4541 = vsel %vm4540, %v4538, %v4535
      %v4542 = vadd.f32 %v2748, 1.0
      %v4543 = vlog2.pop %v4542
      %v4544 = vmul.f32 %v4543, 0.6931472
      %v4545 = vmul.f32 -0.5, %v2748
      %v4546 = vadd.f32 %v4545, 1.0
      %v4547 = vmul.f32 %v4546, %v2748
      %v4548 = vand.u32 2147483647, %v2748
      %vm4549 = vcmp.lt.f32.partialorder %v4548, 0.0004427343
      %v4550 = vsel %vm4549, %v4547, %v4544
      %v4551 = vadd.f32 %v2750, 1.0
      %v4552 = vlog2.pop %v4551
      %v4553 = vmul.f32 %v4552, 0.6931472
      %v4554 = vmul.f32 -0.5, %v2750
      %v4555 = vadd.f32 %v4554, 1.0
      %v4556 = vmul.f32 %v4555, %v2750
      %v4557 = vand.u32 2147483647, %v2750
      %vm4558 = vcmp.lt.f32.partialorder %v4557, 0.0004427343
      %v4559 = vsel %vm4558, %v4556, %v4553
      %v4560 = vadd.f32 %v2752, 1.0
      %v4561 = vlog2.pop %v4560
      %v4562 = vmul.f32 %v4561, 0.6931472
      %v4563 = vmul.f32 -0.5, %v2752
      %v4564 = vadd.f32 %v4563, 1.0
      %v4565 = vmul.f32 %v4564, %v2752
      %v4566 = vand.u32 2147483647, %v2752
      %vm4567 = vcmp.lt.f32.partialorder %v4566, 0.0004427343
      %v4568 = vsel %vm4567, %v4565, %v4562
      %v4569 = vadd.f32 %v2754, 1.0
      %v4570 = vlog2.pop %v4569
      %v4571 = vmul.f32 %v4570, 0.6931472
      %v4572 = vmul.f32 -0.5, %v2754
      %v4573 = vadd.f32 %v4572, 1.0
      %v4574 = vmul.f32 %v4573, %v2754
      %v4575 = vand.u32 2147483647, %v2754
      %vm4576 = vcmp.lt.f32.partialorder %v4575, 0.0004427343
      %v4577 = vsel %vm4576, %v4574, %v4571
      %v4578 = vadd.f32 %v2756, 1.0
      %v4579 = vlog2.pop %v4578
      %v4580 = vmul.f32 %v4579, 0.6931472
      %v4581 = vmul.f32 -0.5, %v2756
      %v4582 = vadd.f32 %v4581, 1.0
      %v4583 = vmul.f32 %v4582, %v2756
      %v4584 = vand.u32 2147483647, %v2756
      %vm4585 = vcmp.lt.f32.partialorder %v4584, 0.0004427343
      %v4586 = vsel %vm4585, %v4583, %v4580
      %v4587 = vadd.f32 %v2758, 1.0
      %v4588 = vlog2.pop %v4587
      %v4589 = vmul.f32 %v4588, 0.6931472
      %v4590 = vmul.f32 -0.5, %v2758
      %v4591 = vadd.f32 %v4590, 1.0
      %v4592 = vmul.f32 %v4591, %v2758
      %v4593 = vand.u32 2147483647, %v2758
      %vm4594 = vcmp.lt.f32.partialorder %v4593, 0.0004427343
      %v4595 = vsel %vm4594, %v4592, %v4589
      %v4596 = vadd.f32 %v2760, 1.0
      %v4597 = vlog2.pop %v4596
      %v4598 = vmul.f32 %v4597, 0.6931472
      %v4599 = vmul.f32 -0.5, %v2760
      %v4600 = vadd.f32 %v4599, 1.0
      %v4601 = vmul.f32 %v4600, %v2760
      %v4602 = vand.u32 2147483647, %v2760
      %vm4603 = vcmp.lt.f32.partialorder %v4602, 0.0004427343
      %v4604 = vsel %vm4603, %v4601, %v4598
      %v4605 = vadd.f32 %v2762, 1.0
      %v4606 = vlog2.pop %v4605
      %v4607 = vmul.f32 %v4606, 0.6931472
      %v4608 = vmul.f32 -0.5, %v2762
      %v4609 = vadd.f32 %v4608, 1.0
      %v4610 = vmul.f32 %v4609, %v2762
      %v4611 = vand.u32 2147483647, %v2762
      %vm4612 = vcmp.lt.f32.partialorder %v4611, 0.0004427343
      %v4613 = vsel %vm4612, %v4610, %v4607
      %v4614 = vadd.f32 %v2764, 1.0
      %v4615 = vlog2.pop %v4614
      %v4616 = vmul.f32 %v4615, 0.6931472
      %v4617 = vmul.f32 -0.5, %v2764
      %v4618 = vadd.f32 %v4617, 1.0
      %v4619 = vmul.f32 %v4618, %v2764
      %v4620 = vand.u32 2147483647, %v2764
      %vm4621 = vcmp.lt.f32.partialorder %v4620, 0.0004427343
      %v4622 = vsel %vm4621, %v4619, %v4616
      %v4623 = vadd.f32 %v2766, 1.0
      %v4624 = vlog2.pop %v4623
      %v4625 = vmul.f32 %v4624, 0.6931472
      %v4626 = vmul.f32 -0.5, %v2766
      %v4627 = vadd.f32 %v4626, 1.0
      %v4628 = vmul.f32 %v4627, %v2766
      %v4629 = vand.u32 2147483647, %v2766
      %vm4630 = vcmp.lt.f32.partialorder %v4629, 0.0004427343
      %v4631 = vsel %vm4630, %v4628, %v4625
      %v4632 = vadd.f32 %v2768, 1.0
      %v4633 = vlog2.pop %v4632
      %v4634 = vmul.f32 %v4633, 0.6931472
      %v4635 = vmul.f32 -0.5, %v2768
      %v4636 = vadd.f32 %v4635, 1.0
      %v4637 = vmul.f32 %v4636, %v2768
      %v4638 = vand.u32 2147483647, %v2768
      %vm4639 = vcmp.lt.f32.partialorder %v4638, 0.0004427343
      %v4640 = vsel %vm4639, %v4637, %v4634
      %v4641 = vadd.f32 %v2770, 1.0
      %v4642 = vlog2.pop %v4641
      %v4643 = vmul.f32 %v4642, 0.6931472
      %v4644 = vmul.f32 -0.5, %v2770
      %v4645 = vadd.f32 %v4644, 1.0
      %v4646 = vmul.f32 %v4645, %v2770
      %v4647 = vand.u32 2147483647, %v2770
      %vm4648 = vcmp.lt.f32.partialorder %v4647, 0.0004427343
      %v4649 = vsel %vm4648, %v4646, %v4643
      %v4650 = vadd.f32 %v2772, 1.0
      %v4651 = vlog2.pop %v4650
      %v4652 = vmul.f32 %v4651, 0.6931472
      %v4653 = vmul.f32 -0.5, %v2772
      %v4654 = vadd.f32 %v4653, 1.0
      %v4655 = vmul.f32 %v4654, %v2772
      %v4656 = vand.u32 2147483647, %v2772
      %vm4657 = vcmp.lt.f32.partialorder %v4656, 0.0004427343
      %v4658 = vsel %vm4657, %v4655, %v4652
      %v4659 = vadd.f32 %v2774, 1.0
      %v4660 = vlog2.pop %v4659
      %v4661 = vmul.f32 %v4660, 0.6931472
      %v4662 = vmul.f32 -0.5, %v2774
      %v4663 = vadd.f32 %v4662, 1.0
      %v4664 = vmul.f32 %v4663, %v2774
      %v4665 = vand.u32 2147483647, %v2774
      %vm4666 = vcmp.lt.f32.partialorder %v4665, 0.0004427343
      %v4667 = vsel %vm4666, %v4664, %v4661
      %v4668 = vadd.f32 %v2776, 1.0
      %v4669 = vlog2.pop %v4668
      %v4670 = vmul.f32 %v4669, 0.6931472
      %v4671 = vmul.f32 -0.5, %v2776
      %v4672 = vadd.f32 %v4671, 1.0
      %v4673 = vmul.f32 %v4672, %v2776
      %v4674 = vand.u32 2147483647, %v2776
      %vm4675 = vcmp.lt.f32.partialorder %v4674, 0.0004427343
      %v4676 = vsel %vm4675, %v4673, %v4670
      %v4677 = vadd.f32 %v2778, 1.0
      %v4678 = vlog2.pop %v4677
      %v4679 = vmul.f32 %v4678, 0.6931472
      %v4680 = vmul.f32 -0.5, %v2778
      %v4681 = vadd.f32 %v4680, 1.0
      %v4682 = vmul.f32 %v4681, %v2778
      %v4683 = vand.u32 2147483647, %v2778
      %vm4684 = vcmp.lt.f32.partialorder %v4683, 0.0004427343
      %v4685 = vsel %vm4684, %v4682, %v4679
      %v4686 = vadd.f32 %v2780, 1.0
      %v4687 = vlog2.pop %v4686
      %v4688 = vmul.f32 %v4687, 0.6931472
      %v4689 = vmul.f32 -0.5, %v2780
      %v4690 = vadd.f32 %v4689, 1.0
      %v4691 = vmul.f32 %v4690, %v2780
      %v4692 = vand.u32 2147483647, %v2780
      %vm4693 = vcmp.lt.f32.partialorder %v4692, 0.0004427343
      %v4694 = vsel %vm4693, %v4691, %v4688
      %v4695 = vadd.f32 %v2782, 1.0
      %v4696 = vlog2.pop %v4695
      %v4697 = vmul.f32 %v4696, 0.6931472
      %v4698 = vmul.f32 -0.5, %v2782
      %v4699 = vadd.f32 %v4698, 1.0
      %v4700 = vmul.f32 %v4699, %v2782
      %v4701 = vand.u32 2147483647, %v2782
      %vm4702 = vcmp.lt.f32.partialorder %v4701, 0.0004427343
      %v4703 = vsel %vm4702, %v4700, %v4697
      %v4704 = vadd.f32 %v2784, 1.0
      %v4705 = vlog2.pop %v4704
      %v4706 = vmul.f32 %v4705, 0.6931472
      %v4707 = vmul.f32 -0.5, %v2784
      %v4708 = vadd.f32 %v4707, 1.0
      %v4709 = vmul.f32 %v4708, %v2784
      %v4710 = vand.u32 2147483647, %v2784
      %vm4711 = vcmp.lt.f32.partialorder %v4710, 0.0004427343
      %v4712 = vsel %vm4711, %v4709, %v4706
      %v4713 = vadd.f32 %v2786, 1.0
      %v4714 = vlog2.pop %v4713
      %v4715 = vmul.f32 %v4714, 0.6931472
      %v4716 = vmul.f32 -0.5, %v2786
      %v4717 = vadd.f32 %v4716, 1.0
      %v4718 = vmul.f32 %v4717, %v2786
      %v4719 = vand.u32 2147483647, %v2786
      %vm4720 = vcmp.lt.f32.partialorder %v4719, 0.0004427343
      %v4721 = vsel %vm4720, %v4718, %v4715
      %v4722 = vadd.f32 %v2788, 1.0
      %v4723 = vlog2.pop %v4722
      %v4724 = vmul.f32 %v4723, 0.6931472
      %v4725 = vmul.f32 -0.5, %v2788
      %v4726 = vadd.f32 %v4725, 1.0
      %v4727 = vmul.f32 %v4726, %v2788
      %v4728 = vand.u32 2147483647, %v2788
      %vm4729 = vcmp.lt.f32.partialorder %v4728, 0.0004427343
      %v4730 = vsel %vm4729, %v4727, %v4724
      %v4731 = vadd.f32 %v2790, 1.0
      %v4732 = vlog2.pop %v4731
      %v4733 = vmul.f32 %v4732, 0.6931472
      %v4734 = vmul.f32 -0.5, %v2790
      %v4735 = vadd.f32 %v4734, 1.0
      %v4736 = vmul.f32 %v4735, %v2790
      %v4737 = vand.u32 2147483647, %v2790
      %vm4738 = vcmp.lt.f32.partialorder %v4737, 0.0004427343
      %v4739 = vsel %vm4738, %v4736, %v4733
      %v4740 = vadd.f32 %v2792, 1.0
      %v4741 = vlog2.pop %v4740
      %v4742 = vmul.f32 %v4741, 0.6931472
      %v4743 = vmul.f32 -0.5, %v2792
      %v4744 = vadd.f32 %v4743, 1.0
      %v4745 = vmul.f32 %v4744, %v2792
      %v4746 = vand.u32 2147483647, %v2792
      %vm4747 = vcmp.lt.f32.partialorder %v4746, 0.0004427343
      %v4748 = vsel %vm4747, %v4745, %v4742
      %v4749 = vadd.f32 %v2794, 1.0
      %v4750 = vlog2.pop %v4749
      %v4751 = vmul.f32 %v4750, 0.6931472
      %v4752 = vmul.f32 -0.5, %v2794
      %v4753 = vadd.f32 %v4752, 1.0
      %v4754 = vmul.f32 %v4753, %v2794
      %v4755 = vand.u32 2147483647, %v2794
      %vm4756 = vcmp.lt.f32.partialorder %v4755, 0.0004427343
      %v4757 = vsel %vm4756, %v4754, %v4751
      %v4758 = vadd.f32 %v2796, 1.0
      %v4759 = vlog2.pop %v4758
      %v4760 = vmul.f32 %v4759, 0.6931472
      %v4761 = vmul.f32 -0.5, %v2796
      %v4762 = vadd.f32 %v4761, 1.0
      %v4763 = vmul.f32 %v4762, %v2796
      %v4764 = vand.u32 2147483647, %v2796
      %vm4765 = vcmp.lt.f32.partialorder %v4764, 0.0004427343
      %v4766 = vsel %vm4765, %v4763, %v4760
      %v4767 = vadd.f32 %v2798, 1.0
      %v4768 = vlog2.pop %v4767
      %v4769 = vmul.f32 %v4768, 0.6931472
      %v4770 = vmul.f32 -0.5, %v2798
      %v4771 = vadd.f32 %v4770, 1.0
      %v4772 = vmul.f32 %v4771, %v2798
      %v4773 = vand.u32 2147483647, %v2798
      %vm4774 = vcmp.lt.f32.partialorder %v4773, 0.0004427343
      %v4775 = vsel %vm4774, %v4772, %v4769
      %v4776 = vadd.f32 %v2800, 1.0
      %v4777 = vlog2.pop %v4776
      %v4778 = vmul.f32 %v4777, 0.6931472
      %v4779 = vmul.f32 -0.5, %v2800
      %v4780 = vadd.f32 %v4779, 1.0
      %v4781 = vmul.f32 %v4780, %v2800
      %v4782 = vand.u32 2147483647, %v2800
      %vm4783 = vcmp.lt.f32.partialorder %v4782, 0.0004427343
      %v4784 = vsel %vm4783, %v4781, %v4778
      %v4785 = vadd.f32 %v2802, 1.0
      %v4786 = vlog2.pop %v4785
      %v4787 = vmul.f32 %v4786, 0.6931472
      %v4788 = vmul.f32 -0.5, %v2802
      %v4789 = vadd.f32 %v4788, 1.0
      %v4790 = vmul.f32 %v4789, %v2802
      %v4791 = vand.u32 2147483647, %v2802
      %vm4792 = vcmp.lt.f32.partialorder %v4791, 0.0004427343
      %v4793 = vsel %vm4792, %v4790, %v4787
      %v4794 = vadd.f32 %v2804, 1.0
      %v4795 = vlog2.pop %v4794
      %v4796 = vmul.f32 %v4795, 0.6931472
      %v4797 = vmul.f32 -0.5, %v2804
      %v4798 = vadd.f32 %v4797, 1.0
      %v4799 = vmul.f32 %v4798, %v2804
      %v4800 = vand.u32 2147483647, %v2804
      %vm4801 = vcmp.lt.f32.partialorder %v4800, 0.0004427343
      %v4802 = vsel %vm4801, %v4799, %v4796
      %v4803 = vadd.f32 %v2806, 1.0
      %v4804 = vlog2.pop %v4803
      %v4805 = vmul.f32 %v4804, 0.6931472
      %v4806 = vmul.f32 -0.5, %v2806
      %v4807 = vadd.f32 %v4806, 1.0
      %v4808 = vmul.f32 %v4807, %v2806
      %v4809 = vand.u32 2147483647, %v2806
      %vm4810 = vcmp.lt.f32.partialorder %v4809, 0.0004427343
      %v4811 = vsel %vm4810, %v4808, %v4805
      %v4812 = vadd.f32 %v2808, 1.0
      %v4813 = vlog2.pop %v4812
      %v4814 = vmul.f32 %v4813, 0.6931472
      %v4815 = vmul.f32 -0.5, %v2808
      %v4816 = vadd.f32 %v4815, 1.0
      %v4817 = vmul.f32 %v4816, %v2808
      %v4818 = vand.u32 2147483647, %v2808
      %vm4819 = vcmp.lt.f32.partialorder %v4818, 0.0004427343
      %v4820 = vsel %vm4819, %v4817, %v4814
      %v4821 = vadd.f32 %v2810, 1.0
      %v4822 = vlog2.pop %v4821
      %v4823 = vmul.f32 %v4822, 0.6931472
      %v4824 = vmul.f32 -0.5, %v2810
      %v4825 = vadd.f32 %v4824, 1.0
      %v4826 = vmul.f32 %v4825, %v2810
      %v4827 = vand.u32 2147483647, %v2810
      %vm4828 = vcmp.lt.f32.partialorder %v4827, 0.0004427343
      %v4829 = vsel %vm4828, %v4826, %v4823
      %v4830 = vadd.f32 %v2812, 1.0
      %v4831 = vlog2.pop %v4830
      %v4832 = vmul.f32 %v4831, 0.6931472
      %v4833 = vmul.f32 -0.5, %v2812
      %v4834 = vadd.f32 %v4833, 1.0
      %v4835 = vmul.f32 %v4834, %v2812
      %v4836 = vand.u32 2147483647, %v2812
      %vm4837 = vcmp.lt.f32.partialorder %v4836, 0.0004427343
      %v4838 = vsel %vm4837, %v4835, %v4832
      %v4839 = vadd.f32 %v2814, 1.0
      %v4840 = vlog2.pop %v4839
      %v4841 = vmul.f32 %v4840, 0.6931472
      %v4842 = vmul.f32 -0.5, %v2814
      %v4843 = vadd.f32 %v4842, 1.0
      %v4844 = vmul.f32 %v4843, %v2814
      %v4845 = vand.u32 2147483647, %v2814
      %vm4846 = vcmp.lt.f32.partialorder %v4845, 0.0004427343
      %v4847 = vsel %vm4846, %v4844, %v4841
      %v4848 = vadd.f32 %v2816, 1.0
      %v4849 = vlog2.pop %v4848
      %v4850 = vmul.f32 %v4849, 0.6931472
      %v4851 = vmul.f32 -0.5, %v2816
      %v4852 = vadd.f32 %v4851, 1.0
      %v4853 = vmul.f32 %v4852, %v2816
      %v4854 = vand.u32 2147483647, %v2816
      %vm4855 = vcmp.lt.f32.partialorder %v4854, 0.0004427343
      %v4856 = vsel %vm4855, %v4853, %v4850
      %v4857 = vadd.f32 %v2818, 1.0
      %v4858 = vlog2.pop %v4857
      %v4859 = vmul.f32 %v4858, 0.6931472
      %v4860 = vmul.f32 -0.5, %v2818
      %v4861 = vadd.f32 %v4860, 1.0
      %v4862 = vmul.f32 %v4861, %v2818
      %v4863 = vand.u32 2147483647, %v2818
      %vm4864 = vcmp.lt.f32.partialorder %v4863, 0.0004427343
      %v4865 = vsel %vm4864, %v4862, %v4859
      %v4866 = vadd.f32 %v2820, 1.0
      %v4867 = vlog2.pop %v4866
      %v4868 = vmul.f32 %v4867, 0.6931472
      %v4869 = vmul.f32 -0.5, %v2820
      %v4870 = vadd.f32 %v4869, 1.0
      %v4871 = vmul.f32 %v4870, %v2820
      %v4872 = vand.u32 2147483647, %v2820
      %vm4873 = vcmp.lt.f32.partialorder %v4872, 0.0004427343
      %v4874 = vsel %vm4873, %v4871, %v4868
      %v4875 = vadd.f32 %v2822, 1.0
      %v4876 = vlog2.pop %v4875
      %v4877 = vmul.f32 %v4876, 0.6931472
      %v4878 = vmul.f32 -0.5, %v2822
      %v4879 = vadd.f32 %v4878, 1.0
      %v4880 = vmul.f32 %v4879, %v2822
      %v4881 = vand.u32 2147483647, %v2822
      %vm4882 = vcmp.lt.f32.partialorder %v4881, 0.0004427343
      %v4883 = vsel %vm4882, %v4880, %v4877
      %v4884 = vadd.f32 %v2824, 1.0
      %v4885 = vlog2.pop %v4884
      %v4886 = vmul.f32 %v4885, 0.6931472
      %v4887 = vmul.f32 -0.5, %v2824
      %v4888 = vadd.f32 %v4887, 1.0
      %v4889 = vmul.f32 %v4888, %v2824
      %v4890 = vand.u32 2147483647, %v2824
      %vm4891 = vcmp.lt.f32.partialorder %v4890, 0.0004427343
      %v4892 = vsel %vm4891, %v4889, %v4886
      %v4893 = vadd.f32 %v2826, 1.0
      %v4894 = vlog2.pop %v4893
      %v4895 = vmul.f32 %v4894, 0.6931472
      %v4896 = vmul.f32 -0.5, %v2826
      %v4897 = vadd.f32 %v4896, 1.0
      %v4898 = vmul.f32 %v4897, %v2826
      %v4899 = vand.u32 2147483647, %v2826
      %vm4900 = vcmp.lt.f32.partialorder %v4899, 0.0004427343
      %v4901 = vsel %vm4900, %v4898, %v4895
      %v4902 = vadd.f32 %v2828, 1.0
      %v4903 = vlog2.pop %v4902
      %v4904 = vmul.f32 %v4903, 0.6931472
      %v4905 = vmul.f32 -0.5, %v2828
      %v4906 = vadd.f32 %v4905, 1.0
      %v4907 = vmul.f32 %v4906, %v2828
      %v4908 = vand.u32 2147483647, %v2828
      %vm4909 = vcmp.lt.f32.partialorder %v4908, 0.0004427343
      %v4910 = vsel %vm4909, %v4907, %v4904
      %v4911 = vadd.f32 %v2830, 1.0
      %v4912 = vlog2.pop %v4911
      %v4913 = vmul.f32 %v4912, 0.6931472
      %v4914 = vmul.f32 -0.5, %v2830
      %v4915 = vadd.f32 %v4914, 1.0
      %v4916 = vmul.f32 %v4915, %v2830
      %v4917 = vand.u32 2147483647, %v2830
      %vm4918 = vcmp.lt.f32.partialorder %v4917, 0.0004427343
      %v4919 = vsel %vm4918, %v4916, %v4913
      %v4920 = vadd.f32 %v2832, 1.0
      %v4921 = vlog2.pop %v4920
      %v4922 = vmul.f32 %v4921, 0.6931472
      %v4923 = vmul.f32 -0.5, %v2832
      %v4924 = vadd.f32 %v4923, 1.0
      %v4925 = vmul.f32 %v4924, %v2832
      %v4926 = vand.u32 2147483647, %v2832
      %vm4927 = vcmp.lt.f32.partialorder %v4926, 0.0004427343
      %v4928 = vsel %vm4927, %v4925, %v4922
      %v4929 = vadd.f32 %v2834, 1.0
      %v4930 = vlog2.pop %v4929
      %v4931 = vmul.f32 %v4930, 0.6931472
      %v4932 = vmul.f32 -0.5, %v2834
      %v4933 = vadd.f32 %v4932, 1.0
      %v4934 = vmul.f32 %v4933, %v2834
      %v4935 = vand.u32 2147483647, %v2834
      %vm4936 = vcmp.lt.f32.partialorder %v4935, 0.0004427343
      %v4937 = vsel %vm4936, %v4934, %v4931
      %v4938 = vadd.f32 %v2836, 1.0
      %v4939 = vlog2.pop %v4938
      %v4940 = vmul.f32 %v4939, 0.6931472
      %v4941 = vmul.f32 -0.5, %v2836
      %v4942 = vadd.f32 %v4941, 1.0
      %v4943 = vmul.f32 %v4942, %v2836
      %v4944 = vand.u32 2147483647, %v2836
      %vm4945 = vcmp.lt.f32.partialorder %v4944, 0.0004427343
      %v4946 = vsel %vm4945, %v4943, %v4940
      %v4947 = vadd.f32 %v2838, 1.0
      %v4948 = vlog2.pop %v4947
      %v4949 = vmul.f32 %v4948, 0.6931472
      %v4950 = vmul.f32 -0.5, %v2838
      %v4951 = vadd.f32 %v4950, 1.0
      %v4952 = vmul.f32 %v4951, %v2838
      %v4953 = vand.u32 2147483647, %v2838
      %vm4954 = vcmp.lt.f32.partialorder %v4953, 0.0004427343
      %v4955 = vsel %vm4954, %v4952, %v4949
      %v4956 = vadd.f32 %v2840, 1.0
      %v4957 = vlog2.pop %v4956
      %v4958 = vmul.f32 %v4957, 0.6931472
      %v4959 = vmul.f32 -0.5, %v2840
      %v4960 = vadd.f32 %v4959, 1.0
      %v4961 = vmul.f32 %v4960, %v2840
      %v4962 = vand.u32 2147483647, %v2840
      %vm4963 = vcmp.lt.f32.partialorder %v4962, 0.0004427343
      %v4964 = vsel %vm4963, %v4961, %v4958
      %v4965 = vadd.f32 %v2842, 1.0
      %v4966 = vlog2.pop %v4965
      %v4967 = vmul.f32 %v4966, 0.6931472
      %v4968 = vmul.f32 -0.5, %v2842
      %v4969 = vadd.f32 %v4968, 1.0
      %v4970 = vmul.f32 %v4969, %v2842
      %v4971 = vand.u32 2147483647, %v2842
      %vm4972 = vcmp.lt.f32.partialorder %v4971, 0.0004427343
      %v4973 = vsel %vm4972, %v4970, %v4967
      %v4974 = vadd.f32 %v2844, 1.0
      %v4975 = vlog2.pop %v4974
      %v4976 = vmul.f32 %v4975, 0.6931472
      %v4977 = vmul.f32 -0.5, %v2844
      %v4978 = vadd.f32 %v4977, 1.0
      %v4979 = vmul.f32 %v4978, %v2844
      %v4980 = vand.u32 2147483647, %v2844
      %vm4981 = vcmp.lt.f32.partialorder %v4980, 0.0004427343
      %v4982 = vsel %vm4981, %v4979, %v4976
      %v4983 = vadd.f32 %v2846, 1.0
      %v4984 = vlog2.pop %v4983
      %v4985 = vmul.f32 %v4984, 0.6931472
      %v4986 = vmul.f32 -0.5, %v2846
      %v4987 = vadd.f32 %v4986, 1.0
      %v4988 = vmul.f32 %v4987, %v2846
      %v4989 = vand.u32 2147483647, %v2846
      %vm4990 = vcmp.lt.f32.partialorder %v4989, 0.0004427343
      %v4991 = vsel %vm4990, %v4988, %v4985
      %v4992 = vadd.f32 %v2848, 1.0
      %v4993 = vlog2.pop %v4992
      %v4994 = vmul.f32 %v4993, 0.6931472
      %v4995 = vmul.f32 -0.5, %v2848
      %v4996 = vadd.f32 %v4995, 1.0
      %v4997 = vmul.f32 %v4996, %v2848
      %v4998 = vand.u32 2147483647, %v2848
      %vm4999 = vcmp.lt.f32.partialorder %v4998, 0.0004427343
      %v5000 = vsel %vm4999, %v4997, %v4994
      %v5001 = vadd.f32 %v2850, 1.0
      %v5002 = vlog2.pop %v5001
      %v5003 = vmul.f32 %v5002, 0.6931472
      %v5004 = vmul.f32 -0.5, %v2850
      %v5005 = vadd.f32 %v5004, 1.0
      %v5006 = vmul.f32 %v5005, %v2850
      %v5007 = vand.u32 2147483647, %v2850
      %vm5008 = vcmp.lt.f32.partialorder %v5007, 0.0004427343
      %v5009 = vsel %vm5008, %v5006, %v5003
      %v5010 = vadd.f32 %v2852, 1.0
      %v5011 = vlog2.pop %v5010
      %v5012 = vmul.f32 %v5011, 0.6931472
      %v5013 = vmul.f32 -0.5, %v2852
      %v5014 = vadd.f32 %v5013, 1.0
      %v5015 = vmul.f32 %v5014, %v2852
      %v5016 = vand.u32 2147483647, %v2852
      %vm5017 = vcmp.lt.f32.partialorder %v5016, 0.0004427343
      %v5018 = vsel %vm5017, %v5015, %v5012
      %v5019 = vadd.f32 %v2854, 1.0
      %v5020 = vlog2.pop %v5019
      %v5021 = vmul.f32 %v5020, 0.6931472
      %v5022 = vmul.f32 -0.5, %v2854
      %v5023 = vadd.f32 %v5022, 1.0
      %v5024 = vmul.f32 %v5023, %v2854
      %v5025 = vand.u32 2147483647, %v2854
      %vm5026 = vcmp.lt.f32.partialorder %v5025, 0.0004427343
      %v5027 = vsel %vm5026, %v5024, %v5021
      %v5028 = vadd.f32 %v2856, 1.0
      %v5029 = vlog2.pop %v5028
      %v5030 = vmul.f32 %v5029, 0.6931472
      %v5031 = vmul.f32 -0.5, %v2856
      %v5032 = vadd.f32 %v5031, 1.0
      %v5033 = vmul.f32 %v5032, %v2856
      %v5034 = vand.u32 2147483647, %v2856
      %vm5035 = vcmp.lt.f32.partialorder %v5034, 0.0004427343
      %v5036 = vsel %vm5035, %v5033, %v5030
      %v5037 = vadd.f32 %v2858, 1.0
      %v5038 = vlog2.pop %v5037
      %v5039 = vmul.f32 %v5038, 0.6931472
      %v5040 = vmul.f32 -0.5, %v2858
      %v5041 = vadd.f32 %v5040, 1.0
      %v5042 = vmul.f32 %v5041, %v2858
      %v5043 = vand.u32 2147483647, %v2858
      %vm5044 = vcmp.lt.f32.partialorder %v5043, 0.0004427343
      %v5045 = vsel %vm5044, %v5042, %v5039
      %v5046 = vadd.f32 %v2860, 1.0
      %v5047 = vlog2.pop %v5046
      %v5048 = vmul.f32 %v5047, 0.6931472
      %v5049 = vmul.f32 -0.5, %v2860
      %v5050 = vadd.f32 %v5049, 1.0
      %v5051 = vmul.f32 %v5050, %v2860
      %v5052 = vand.u32 2147483647, %v2860
      %vm5053 = vcmp.lt.f32.partialorder %v5052, 0.0004427343
      %v5054 = vsel %vm5053, %v5051, %v5048
      %v5055 = vadd.f32 %v2862, 1.0
      %v5056 = vlog2.pop %v5055
      %v5057 = vmul.f32 %v5056, 0.6931472
      %v5058 = vmul.f32 -0.5, %v2862
      %v5059 = vadd.f32 %v5058, 1.0
      %v5060 = vmul.f32 %v5059, %v2862
      %v5061 = vand.u32 2147483647, %v2862
      %vm5062 = vcmp.lt.f32.partialorder %v5061, 0.0004427343
      %v5063 = vsel %vm5062, %v5060, %v5057
      %v5064 = vadd.f32 %v2864, 1.0
      %v5065 = vlog2.pop %v5064
      %v5066 = vmul.f32 %v5065, 0.6931472
      %v5067 = vmul.f32 -0.5, %v2864
      %v5068 = vadd.f32 %v5067, 1.0
      %v5069 = vmul.f32 %v5068, %v2864
      %v5070 = vand.u32 2147483647, %v2864
      %vm5071 = vcmp.lt.f32.partialorder %v5070, 0.0004427343
      %v5072 = vsel %vm5071, %v5069, %v5066
      %v5073 = vadd.f32 %v2866, 1.0
      %v5074 = vlog2.pop %v5073
      %v5075 = vmul.f32 %v5074, 0.6931472
      %v5076 = vmul.f32 -0.5, %v2866
      %v5077 = vadd.f32 %v5076, 1.0
      %v5078 = vmul.f32 %v5077, %v2866
      %v5079 = vand.u32 2147483647, %v2866
      %vm5080 = vcmp.lt.f32.partialorder %v5079, 0.0004427343
      %v5081 = vsel %vm5080, %v5078, %v5075
      %v5082 = vadd.f32 %v2868, 1.0
      %v5083 = vlog2.pop %v5082
      %v5084 = vmul.f32 %v5083, 0.6931472
      %v5085 = vmul.f32 -0.5, %v2868
      %v5086 = vadd.f32 %v5085, 1.0
      %v5087 = vmul.f32 %v5086, %v2868
      %v5088 = vand.u32 2147483647, %v2868
      %vm5089 = vcmp.lt.f32.partialorder %v5088, 0.0004427343
      %v5090 = vsel %vm5089, %v5087, %v5084
      %v5091 = vadd.f32 %v2870, 1.0
      %v5092 = vlog2.pop %v5091
      %v5093 = vmul.f32 %v5092, 0.6931472
      %v5094 = vmul.f32 -0.5, %v2870
      %v5095 = vadd.f32 %v5094, 1.0
      %v5096 = vmul.f32 %v5095, %v2870
      %v5097 = vand.u32 2147483647, %v2870
      %vm5098 = vcmp.lt.f32.partialorder %v5097, 0.0004427343
      %v5099 = vsel %vm5098, %v5096, %v5093
      %v5100 = vadd.f32 %v2872, 1.0
      %v5101 = vlog2.pop %v5100
      %v5102 = vmul.f32 %v5101, 0.6931472
      %v5103 = vmul.f32 -0.5, %v2872
      %v5104 = vadd.f32 %v5103, 1.0
      %v5105 = vmul.f32 %v5104, %v2872
      %v5106 = vand.u32 2147483647, %v2872
      %vm5107 = vcmp.lt.f32.partialorder %v5106, 0.0004427343
      %v5108 = vsel %vm5107, %v5105, %v5102
      %v5109 = vadd.f32 %v2874, 1.0
      %v5110 = vlog2.pop %v5109
      %v5111 = vmul.f32 %v5110, 0.6931472
      %v5112 = vmul.f32 -0.5, %v2874
      %v5113 = vadd.f32 %v5112, 1.0
      %v5114 = vmul.f32 %v5113, %v2874
      %v5115 = vand.u32 2147483647, %v2874
      %vm5116 = vcmp.lt.f32.partialorder %v5115, 0.0004427343
      %v5117 = vsel %vm5116, %v5114, %v5111
      %v5118 = vadd.f32 %v2876, 1.0
      %v5119 = vlog2.pop %v5118
      %v5120 = vmul.f32 %v5119, 0.6931472
      %v5121 = vmul.f32 -0.5, %v2876
      %v5122 = vadd.f32 %v5121, 1.0
      %v5123 = vmul.f32 %v5122, %v2876
      %v5124 = vand.u32 2147483647, %v2876
      %vm5125 = vcmp.lt.f32.partialorder %v5124, 0.0004427343
      %v5126 = vsel %vm5125, %v5123, %v5120
      %v5127 = vadd.f32 %v2878, 1.0
      %v5128 = vlog2.pop %v5127
      %v5129 = vmul.f32 %v5128, 0.6931472
      %v5130 = vmul.f32 -0.5, %v2878
      %v5131 = vadd.f32 %v5130, 1.0
      %v5132 = vmul.f32 %v5131, %v2878
      %v5133 = vand.u32 2147483647, %v2878
      %vm5134 = vcmp.lt.f32.partialorder %v5133, 0.0004427343
      %v5135 = vsel %vm5134, %v5132, %v5129
      %v5136 = vadd.f32 %v2880, 1.0
      %v5137 = vlog2.pop %v5136
      %v5138 = vmul.f32 %v5137, 0.6931472
      %v5139 = vmul.f32 -0.5, %v2880
      %v5140 = vadd.f32 %v5139, 1.0
      %v5141 = vmul.f32 %v5140, %v2880
      %v5142 = vand.u32 2147483647, %v2880
      %vm5143 = vcmp.lt.f32.partialorder %v5142, 0.0004427343
      %v5144 = vsel %vm5143, %v5141, %v5138
      %v5145 = vadd.f32 %v2882, 1.0
      %v5146 = vlog2.pop %v5145
      %v5147 = vmul.f32 %v5146, 0.6931472
      %v5148 = vmul.f32 -0.5, %v2882
      %v5149 = vadd.f32 %v5148, 1.0
      %v5150 = vmul.f32 %v5149, %v2882
      %v5151 = vand.u32 2147483647, %v2882
      %vm5152 = vcmp.lt.f32.partialorder %v5151, 0.0004427343
      %v5153 = vsel %vm5152, %v5150, %v5147
      %v5154 = vadd.f32 %v2884, 1.0
      %v5155 = vlog2.pop %v5154
      %v5156 = vmul.f32 %v5155, 0.6931472
      %v5157 = vmul.f32 -0.5, %v2884
      %v5158 = vadd.f32 %v5157, 1.0
      %v5159 = vmul.f32 %v5158, %v2884
      %v5160 = vand.u32 2147483647, %v2884
      %vm5161 = vcmp.lt.f32.partialorder %v5160, 0.0004427343
      %v5162 = vsel %vm5161, %v5159, %v5156
      %v5163 = vadd.f32 %v2886, 1.0
      %v5164 = vlog2.pop %v5163
      %v5165 = vmul.f32 %v5164, 0.6931472
      %v5166 = vmul.f32 -0.5, %v2886
      %v5167 = vadd.f32 %v5166, 1.0
      %v5168 = vmul.f32 %v5167, %v2886
      %v5169 = vand.u32 2147483647, %v2886
      %vm5170 = vcmp.lt.f32.partialorder %v5169, 0.0004427343
      %v5171 = vsel %vm5170, %v5168, %v5165
      %v5172 = vadd.f32 %v2888, 1.0
      %v5173 = vlog2.pop %v5172
      %v5174 = vmul.f32 %v5173, 0.6931472
      %v5175 = vmul.f32 -0.5, %v2888
      %v5176 = vadd.f32 %v5175, 1.0
      %v5177 = vmul.f32 %v5176, %v2888
      %v5178 = vand.u32 2147483647, %v2888
      %vm5179 = vcmp.lt.f32.partialorder %v5178, 0.0004427343
      %v5180 = vsel %vm5179, %v5177, %v5174
      %v5181 = vadd.f32 %v2890, 1.0
      %v5182 = vlog2.pop %v5181
      %v5183 = vmul.f32 %v5182, 0.6931472
      %v5184 = vmul.f32 -0.5, %v2890
      %v5185 = vadd.f32 %v5184, 1.0
      %v5186 = vmul.f32 %v5185, %v2890
      %v5187 = vand.u32 2147483647, %v2890
      %vm5188 = vcmp.lt.f32.partialorder %v5187, 0.0004427343
      %v5189 = vsel %vm5188, %v5186, %v5183
      %v5190 = vadd.f32 %v2892, 1.0
      %v5191 = vlog2.pop %v5190
      %v5192 = vmul.f32 %v5191, 0.6931472
      %v5193 = vmul.f32 -0.5, %v2892
      %v5194 = vadd.f32 %v5193, 1.0
      %v5195 = vmul.f32 %v5194, %v2892
      %v5196 = vand.u32 2147483647, %v2892
      %vm5197 = vcmp.lt.f32.partialorder %v5196, 0.0004427343
      %v5198 = vsel %vm5197, %v5195, %v5192
      %v5199 = vadd.f32 %v2894, 1.0
      %v5200 = vlog2.pop %v5199
      %v5201 = vmul.f32 %v5200, 0.6931472
      %v5202 = vmul.f32 -0.5, %v2894
      %v5203 = vadd.f32 %v5202, 1.0
      %v5204 = vmul.f32 %v5203, %v2894
      %v5205 = vand.u32 2147483647, %v2894
      %vm5206 = vcmp.lt.f32.partialorder %v5205, 0.0004427343
      %v5207 = vsel %vm5206, %v5204, %v5201
      %v5208 = vadd.f32 %v2896, 1.0
      %v5209 = vlog2.pop %v5208
      %v5210 = vmul.f32 %v5209, 0.6931472
      %v5211 = vmul.f32 -0.5, %v2896
      %v5212 = vadd.f32 %v5211, 1.0
      %v5213 = vmul.f32 %v5212, %v2896
      %v5214 = vand.u32 2147483647, %v2896
      %vm5215 = vcmp.lt.f32.partialorder %v5214, 0.0004427343
      %v5216 = vsel %vm5215, %v5213, %v5210
      %v5217 = vadd.f32 %v2898, 1.0
      %v5218 = vlog2.pop %v5217
      %v5219 = vmul.f32 %v5218, 0.6931472
      %v5220 = vmul.f32 -0.5, %v2898
      %v5221 = vadd.f32 %v5220, 1.0
      %v5222 = vmul.f32 %v5221, %v2898
      %v5223 = vand.u32 2147483647, %v2898
      %vm5224 = vcmp.lt.f32.partialorder %v5223, 0.0004427343
      %v5225 = vsel %vm5224, %v5222, %v5219
      %v5226 = vadd.f32 %v2900, 1.0
      %v5227 = vlog2.pop %v5226
      %v5228 = vmul.f32 %v5227, 0.6931472
      %v5229 = vmul.f32 -0.5, %v2900
      %v5230 = vadd.f32 %v5229, 1.0
      %v5231 = vmul.f32 %v5230, %v2900
      %v5232 = vand.u32 2147483647, %v2900
      %vm5233 = vcmp.lt.f32.partialorder %v5232, 0.0004427343
      %v5234 = vsel %vm5233, %v5231, %v5228
      %v5235 = vadd.f32 %v2902, 1.0
      %v5236 = vlog2.pop %v5235
      %v5237 = vmul.f32 %v5236, 0.6931472
      %v5238 = vmul.f32 -0.5, %v2902
      %v5239 = vadd.f32 %v5238, 1.0
      %v5240 = vmul.f32 %v5239, %v2902
      %v5241 = vand.u32 2147483647, %v2902
      %vm5242 = vcmp.lt.f32.partialorder %v5241, 0.0004427343
      %v5243 = vsel %vm5242, %v5240, %v5237
      %v5244 = vadd.f32 %v2904, 1.0
      %v5245 = vlog2.pop %v5244
      %v5246 = vmul.f32 %v5245, 0.6931472
      %v5247 = vmul.f32 -0.5, %v2904
      %v5248 = vadd.f32 %v5247, 1.0
      %v5249 = vmul.f32 %v5248, %v2904
      %v5250 = vand.u32 2147483647, %v2904
      %vm5251 = vcmp.lt.f32.partialorder %v5250, 0.0004427343
      %v5252 = vsel %vm5251, %v5249, %v5246
      %v5253 = vadd.f32 %v2906, 1.0
      %v5254 = vlog2.pop %v5253
      %v5255 = vmul.f32 %v5254, 0.6931472
      %v5256 = vmul.f32 -0.5, %v2906
      %v5257 = vadd.f32 %v5256, 1.0
      %v5258 = vmul.f32 %v5257, %v2906
      %v5259 = vand.u32 2147483647, %v2906
      %vm5260 = vcmp.lt.f32.partialorder %v5259, 0.0004427343
      %v5261 = vsel %vm5260, %v5258, %v5255
      %v5262 = vadd.f32 %v2908, 1.0
      %v5263 = vlog2.pop %v5262
      %v5264 = vmul.f32 %v5263, 0.6931472
      %v5265 = vmul.f32 -0.5, %v2908
      %v5266 = vadd.f32 %v5265, 1.0
      %v5267 = vmul.f32 %v5266, %v2908
      %v5268 = vand.u32 2147483647, %v2908
      %vm5269 = vcmp.lt.f32.partialorder %v5268, 0.0004427343
      %v5270 = vsel %vm5269, %v5267, %v5264
      %v5271 = vadd.f32 %v2910, 1.0
      %v5272 = vlog2.pop %v5271
      %v5273 = vmul.f32 %v5272, 0.6931472
      %v5274 = vmul.f32 -0.5, %v2910
      %v5275 = vadd.f32 %v5274, 1.0
      %v5276 = vmul.f32 %v5275, %v2910
      %v5277 = vand.u32 2147483647, %v2910
      %vm5278 = vcmp.lt.f32.partialorder %v5277, 0.0004427343
      %v5279 = vsel %vm5278, %v5276, %v5273
      %v5280 = vadd.f32 %v2912, 1.0
      %v5281 = vlog2.pop %v5280
      %v5282 = vmul.f32 %v5281, 0.6931472
      %v5283 = vmul.f32 -0.5, %v2912
      %v5284 = vadd.f32 %v5283, 1.0
      %v5285 = vmul.f32 %v5284, %v2912
      %v5286 = vand.u32 2147483647, %v2912
      %vm5287 = vcmp.lt.f32.partialorder %v5286, 0.0004427343
      %v5288 = vsel %vm5287, %v5285, %v5282
      %v5289 = vadd.f32 %v2914, 1.0
      %v5290 = vlog2.pop %v5289
      %v5291 = vmul.f32 %v5290, 0.6931472
      %v5292 = vmul.f32 -0.5, %v2914
      %v5293 = vadd.f32 %v5292, 1.0
      %v5294 = vmul.f32 %v5293, %v2914
      %v5295 = vand.u32 2147483647, %v2914
      %vm5296 = vcmp.lt.f32.partialorder %v5295, 0.0004427343
      %v5297 = vsel %vm5296, %v5294, %v5291
      %v5298 = vadd.f32 %v2916, 1.0
      %v5299 = vlog2.pop %v5298
      %v5300 = vmul.f32 %v5299, 0.6931472
      %v5301 = vmul.f32 -0.5, %v2916
      %v5302 = vadd.f32 %v5301, 1.0
      %v5303 = vmul.f32 %v5302, %v2916
      %v5304 = vand.u32 2147483647, %v2916
      %vm5305 = vcmp.lt.f32.partialorder %v5304, 0.0004427343
      %v5306 = vsel %vm5305, %v5303, %v5300
      %v5307 = vadd.f32 %v2918, 1.0
      %v5308 = vlog2.pop %v5307
      %v5309 = vmul.f32 %v5308, 0.6931472
      %v5310 = vmul.f32 -0.5, %v2918
      %v5311 = vadd.f32 %v5310, 1.0
      %v5312 = vmul.f32 %v5311, %v2918
      %v5313 = vand.u32 2147483647, %v2918
      %vm5314 = vcmp.lt.f32.partialorder %v5313, 0.0004427343
      %v5315 = vsel %vm5314, %v5312, %v5309
      %v5316 = vadd.f32 %v2920, 1.0
      %v5317 = vlog2.pop %v5316
      %v5318 = vmul.f32 %v5317, 0.6931472
      %v5319 = vmul.f32 -0.5, %v2920
      %v5320 = vadd.f32 %v5319, 1.0
      %v5321 = vmul.f32 %v5320, %v2920
      %v5322 = vand.u32 2147483647, %v2920
      %vm5323 = vcmp.lt.f32.partialorder %v5322, 0.0004427343
      %v5324 = vsel %vm5323, %v5321, %v5318
      %v5325 = vadd.f32 %v2922, 1.0
      %v5326 = vlog2.pop %v5325
      %v5327 = vmul.f32 %v5326, 0.6931472
      %v5328 = vmul.f32 -0.5, %v2922
      %v5329 = vadd.f32 %v5328, 1.0
      %v5330 = vmul.f32 %v5329, %v2922
      %v5331 = vand.u32 2147483647, %v2922
      %vm5332 = vcmp.lt.f32.partialorder %v5331, 0.0004427343
      %v5333 = vsel %vm5332, %v5330, %v5327
      %v5334 = vadd.f32 %v2924, 1.0
      %v5335 = vlog2.pop %v5334
      %v5336 = vmul.f32 %v5335, 0.6931472
      %v5337 = vmul.f32 -0.5, %v2924
      %v5338 = vadd.f32 %v5337, 1.0
      %v5339 = vmul.f32 %v5338, %v2924
      %v5340 = vand.u32 2147483647, %v2924
      %vm5341 = vcmp.lt.f32.partialorder %v5340, 0.0004427343
      %v5342 = vsel %vm5341, %v5339, %v5336
      %v5343 = vadd.f32 %v2926, 1.0
      %v5344 = vlog2.pop %v5343
      %v5345 = vmul.f32 %v5344, 0.6931472
      %v5346 = vmul.f32 -0.5, %v2926
      %v5347 = vadd.f32 %v5346, 1.0
      %v5348 = vmul.f32 %v5347, %v2926
      %v5349 = vand.u32 2147483647, %v2926
      %vm5350 = vcmp.lt.f32.partialorder %v5349, 0.0004427343
      %v5351 = vsel %vm5350, %v5348, %v5345
      %v5352 = vadd.f32 %v2928, 1.0
      %v5353 = vlog2.pop %v5352
      %v5354 = vmul.f32 %v5353, 0.6931472
      %v5355 = vmul.f32 -0.5, %v2928
      %v5356 = vadd.f32 %v5355, 1.0
      %v5357 = vmul.f32 %v5356, %v2928
      %v5358 = vand.u32 2147483647, %v2928
      %vm5359 = vcmp.lt.f32.partialorder %v5358, 0.0004427343
      %v5360 = vsel %vm5359, %v5357, %v5354
      %v5361 = vadd.f32 %v2930, 1.0
      %v5362 = vlog2.pop %v5361
      %v5363 = vmul.f32 %v5362, 0.6931472
      %v5364 = vmul.f32 -0.5, %v2930
      %v5365 = vadd.f32 %v5364, 1.0
      %v5366 = vmul.f32 %v5365, %v2930
      %v5367 = vand.u32 2147483647, %v2930
      %vm5368 = vcmp.lt.f32.partialorder %v5367, 0.0004427343
      %v5369 = vsel %vm5368, %v5366, %v5363
      %v5370 = vadd.f32 %v2932, 1.0
      %v5371 = vlog2.pop %v5370
      %v5372 = vmul.f32 %v5371, 0.6931472
      %v5373 = vmul.f32 -0.5, %v2932
      %v5374 = vadd.f32 %v5373, 1.0
      %v5375 = vmul.f32 %v5374, %v2932
      %v5376 = vand.u32 2147483647, %v2932
      %vm5377 = vcmp.lt.f32.partialorder %v5376, 0.0004427343
      %v5378 = vsel %vm5377, %v5375, %v5372
      %v5379 = vadd.f32 %v2934, 1.0
      %v5380 = vlog2.pop %v5379
      %v5381 = vmul.f32 %v5380, 0.6931472
      %v5382 = vmul.f32 -0.5, %v2934
      %v5383 = vadd.f32 %v5382, 1.0
      %v5384 = vmul.f32 %v5383, %v2934
      %v5385 = vand.u32 2147483647, %v2934
      %vm5386 = vcmp.lt.f32.partialorder %v5385, 0.0004427343
      %v5387 = vsel %vm5386, %v5384, %v5381
      %v5388 = vadd.f32 %v2936, 1.0
      %v5389 = vlog2.pop %v5388
      %v5390 = vmul.f32 %v5389, 0.6931472
      %v5391 = vmul.f32 -0.5, %v2936
      %v5392 = vadd.f32 %v5391, 1.0
      %v5393 = vmul.f32 %v5392, %v2936
      %v5394 = vand.u32 2147483647, %v2936
      %vm5395 = vcmp.lt.f32.partialorder %v5394, 0.0004427343
      %v5396 = vsel %vm5395, %v5393, %v5390
      %v5397 = vadd.f32 %v2938, 1.0
      %v5398 = vlog2.pop %v5397
      %v5399 = vmul.f32 %v5398, 0.6931472
      %v5400 = vmul.f32 -0.5, %v2938
      %v5401 = vadd.f32 %v5400, 1.0
      %v5402 = vmul.f32 %v5401, %v2938
      %v5403 = vand.u32 2147483647, %v2938
      %vm5404 = vcmp.lt.f32.partialorder %v5403, 0.0004427343
      %v5405 = vsel %vm5404, %v5402, %v5399
      %v5406 = vadd.f32 %v2940, 1.0
      %v5407 = vlog2.pop %v5406
      %v5408 = vmul.f32 %v5407, 0.6931472
      %v5409 = vmul.f32 -0.5, %v2940
      %v5410 = vadd.f32 %v5409, 1.0
      %v5411 = vmul.f32 %v5410, %v2940
      %v5412 = vand.u32 2147483647, %v2940
      %vm5413 = vcmp.lt.f32.partialorder %v5412, 0.0004427343
      %v5414 = vsel %vm5413, %v5411, %v5408
      %v5415 = vadd.f32 %v2942, 1.0
      %v5416 = vlog2.pop %v5415
      %v5417 = vmul.f32 %v5416, 0.6931472
      %v5418 = vmul.f32 -0.5, %v2942
      %v5419 = vadd.f32 %v5418, 1.0
      %v5420 = vmul.f32 %v5419, %v2942
      %v5421 = vand.u32 2147483647, %v2942
      %vm5422 = vcmp.lt.f32.partialorder %v5421, 0.0004427343
      %v5423 = vsel %vm5422, %v5420, %v5417
      %v5424 = vadd.f32 %v2944, 1.0
      %v5425 = vlog2.pop %v5424
      %v5426 = vmul.f32 %v5425, 0.6931472
      %v5427 = vmul.f32 -0.5, %v2944
      %v5428 = vadd.f32 %v5427, 1.0
      %v5429 = vmul.f32 %v5428, %v2944
      %v5430 = vand.u32 2147483647, %v2944
      %vm5431 = vcmp.lt.f32.partialorder %v5430, 0.0004427343
      %v5432 = vsel %vm5431, %v5429, %v5426
      %v5433 = vadd.f32 %v2946, 1.0
      %v5434 = vlog2.pop %v5433
      %v5435 = vmul.f32 %v5434, 0.6931472
      %v5436 = vmul.f32 -0.5, %v2946
      %v5437 = vadd.f32 %v5436, 1.0
      %v5438 = vmul.f32 %v5437, %v2946
      %v5439 = vand.u32 2147483647, %v2946
      %vm5440 = vcmp.lt.f32.partialorder %v5439, 0.0004427343
      %v5441 = vsel %vm5440, %v5438, %v5435
      %v5442 = vadd.f32 %v2948, 1.0
      %v5443 = vlog2.pop %v5442
      %v5444 = vmul.f32 %v5443, 0.6931472
      %v5445 = vmul.f32 -0.5, %v2948
      %v5446 = vadd.f32 %v5445, 1.0
      %v5447 = vmul.f32 %v5446, %v2948
      %v5448 = vand.u32 2147483647, %v2948
      %vm5449 = vcmp.lt.f32.partialorder %v5448, 0.0004427343
      %v5450 = vsel %vm5449, %v5447, %v5444
      %v5451 = vadd.f32 %v2950, 1.0
      %v5452 = vlog2.pop %v5451
      %v5453 = vmul.f32 %v5452, 0.6931472
      %v5454 = vmul.f32 -0.5, %v2950
      %v5455 = vadd.f32 %v5454, 1.0
      %v5456 = vmul.f32 %v5455, %v2950
      %v5457 = vand.u32 2147483647, %v2950
      %vm5458 = vcmp.lt.f32.partialorder %v5457, 0.0004427343
      %v5459 = vsel %vm5458, %v5456, %v5453
      %v5460 = vadd.f32 %v2952, 1.0
      %v5461 = vlog2.pop %v5460
      %v5462 = vmul.f32 %v5461, 0.6931472
      %v5463 = vmul.f32 -0.5, %v2952
      %v5464 = vadd.f32 %v5463, 1.0
      %v5465 = vmul.f32 %v5464, %v2952
      %v5466 = vand.u32 2147483647, %v2952
      %vm5467 = vcmp.lt.f32.partialorder %v5466, 0.0004427343
      %v5468 = vsel %vm5467, %v5465, %v5462
      %v5469 = vadd.f32 %v2954, 1.0
      %v5470 = vlog2.pop %v5469
      %v5471 = vmul.f32 %v5470, 0.6931472
      %v5472 = vmul.f32 -0.5, %v2954
      %v5473 = vadd.f32 %v5472, 1.0
      %v5474 = vmul.f32 %v5473, %v2954
      %v5475 = vand.u32 2147483647, %v2954
      %vm5476 = vcmp.lt.f32.partialorder %v5475, 0.0004427343
      %v5477 = vsel %vm5476, %v5474, %v5471
      %v5478 = vadd.f32 %v2956, 1.0
      %v5479 = vlog2.pop %v5478
      %v5480 = vmul.f32 %v5479, 0.6931472
      %v5481 = vmul.f32 -0.5, %v2956
      %v5482 = vadd.f32 %v5481, 1.0
      %v5483 = vmul.f32 %v5482, %v2956
      %v5484 = vand.u32 2147483647, %v2956
      %vm5485 = vcmp.lt.f32.partialorder %v5484, 0.0004427343
      %v5486 = vsel %vm5485, %v5483, %v5480
      %v5487 = vadd.f32 %v2958, 1.0
      %v5488 = vlog2.pop %v5487
      %v5489 = vmul.f32 %v5488, 0.6931472
      %v5490 = vmul.f32 -0.5, %v2958
      %v5491 = vadd.f32 %v5490, 1.0
      %v5492 = vmul.f32 %v5491, %v2958
      %v5493 = vand.u32 2147483647, %v2958
      %vm5494 = vcmp.lt.f32.partialorder %v5493, 0.0004427343
      %v5495 = vsel %vm5494, %v5492, %v5489
      %v5496 = vadd.f32 %v2960, 1.0
      %v5497 = vlog2.pop %v5496
      %v5498 = vmul.f32 %v5497, 0.6931472
      %v5499 = vmul.f32 -0.5, %v2960
      %v5500 = vadd.f32 %v5499, 1.0
      %v5501 = vmul.f32 %v5500, %v2960
      %v5502 = vand.u32 2147483647, %v2960
      %vm5503 = vcmp.lt.f32.partialorder %v5502, 0.0004427343
      %v5504 = vsel %vm5503, %v5501, %v5498
      %v5505 = vadd.f32 %v2962, 1.0
      %v5506 = vlog2.pop %v5505
      %v5507 = vmul.f32 %v5506, 0.6931472
      %v5508 = vmul.f32 -0.5, %v2962
      %v5509 = vadd.f32 %v5508, 1.0
      %v5510 = vmul.f32 %v5509, %v2962
      %v5511 = vand.u32 2147483647, %v2962
      %vm5512 = vcmp.lt.f32.partialorder %v5511, 0.0004427343
      %v5513 = vsel %vm5512, %v5510, %v5507
      %v5514 = vadd.f32 %v2964, 1.0
      %v5515 = vlog2.pop %v5514
      %v5516 = vmul.f32 %v5515, 0.6931472
      %v5517 = vmul.f32 -0.5, %v2964
      %v5518 = vadd.f32 %v5517, 1.0
      %v5519 = vmul.f32 %v5518, %v2964
      %v5520 = vand.u32 2147483647, %v2964
      %vm5521 = vcmp.lt.f32.partialorder %v5520, 0.0004427343
      %v5522 = vsel %vm5521, %v5519, %v5516
      %v5523 = vadd.f32 %v2966, 1.0
      %v5524 = vlog2.pop %v5523
      %v5525 = vmul.f32 %v5524, 0.6931472
      %v5526 = vmul.f32 -0.5, %v2966
      %v5527 = vadd.f32 %v5526, 1.0
      %v5528 = vmul.f32 %v5527, %v2966
      %v5529 = vand.u32 2147483647, %v2966
      %vm5530 = vcmp.lt.f32.partialorder %v5529, 0.0004427343
      %v5531 = vsel %vm5530, %v5528, %v5525
      %v5532 = vadd.f32 %v2968, 1.0
      %v5533 = vlog2.pop %v5532
      %v5534 = vmul.f32 %v5533, 0.6931472
      %v5535 = vmul.f32 -0.5, %v2968
      %v5536 = vadd.f32 %v5535, 1.0
      %v5537 = vmul.f32 %v5536, %v2968
      %v5538 = vand.u32 2147483647, %v2968
      %vm5539 = vcmp.lt.f32.partialorder %v5538, 0.0004427343
      %v5540 = vsel %vm5539, %v5537, %v5534
      %v5541 = vadd.f32 %v2970, 1.0
      %v5542 = vlog2.pop %v5541
      %v5543 = vmul.f32 %v5542, 0.6931472
      %v5544 = vmul.f32 -0.5, %v2970
      %v5545 = vadd.f32 %v5544, 1.0
      %v5546 = vmul.f32 %v5545, %v2970
      %v5547 = vand.u32 2147483647, %v2970
      %vm5548 = vcmp.lt.f32.partialorder %v5547, 0.0004427343
      %v5549 = vsel %vm5548, %v5546, %v5543
      %v5550 = vadd.f32 %v2972, 1.0
      %v5551 = vlog2.pop %v5550
      %v5552 = vmul.f32 %v5551, 0.6931472
      %v5553 = vmul.f32 -0.5, %v2972
      %v5554 = vadd.f32 %v5553, 1.0
      %v5555 = vmul.f32 %v5554, %v2972
      %v5556 = vand.u32 2147483647, %v2972
      %vm5557 = vcmp.lt.f32.partialorder %v5556, 0.0004427343
      %v5558 = vsel %vm5557, %v5555, %v5552
      %v5559 = vadd.f32 %v2974, 1.0
      %v5560 = vlog2.pop %v5559
      %v5561 = vmul.f32 %v5560, 0.6931472
      %v5562 = vmul.f32 -0.5, %v2974
      %v5563 = vadd.f32 %v5562, 1.0
      %v5564 = vmul.f32 %v5563, %v2974
      %v5565 = vand.u32 2147483647, %v2974
      %vm5566 = vcmp.lt.f32.partialorder %v5565, 0.0004427343
      %v5567 = vsel %vm5566, %v5564, %v5561
      %v5568 = vadd.f32 %v2976, 1.0
      %v5569 = vlog2.pop %v5568
      %v5570 = vmul.f32 %v5569, 0.6931472
      %v5571 = vmul.f32 -0.5, %v2976
      %v5572 = vadd.f32 %v5571, 1.0
      %v5573 = vmul.f32 %v5572, %v2976
      %v5574 = vand.u32 2147483647, %v2976
      %vm5575 = vcmp.lt.f32.partialorder %v5574, 0.0004427343
      %v5576 = vsel %vm5575, %v5573, %v5570
      %v5577 = vadd.f32 %v2978, 1.0
      %v5578 = vlog2.pop %v5577
      %v5579 = vmul.f32 %v5578, 0.6931472
      %v5580 = vmul.f32 -0.5, %v2978
      %v5581 = vadd.f32 %v5580, 1.0
      %v5582 = vmul.f32 %v5581, %v2978
      %v5583 = vand.u32 2147483647, %v2978
      %vm5584 = vcmp.lt.f32.partialorder %v5583, 0.0004427343
      %v5585 = vsel %vm5584, %v5582, %v5579
      %v5586 = vadd.f32 %v2980, 1.0
      %v5587 = vlog2.pop %v5586
      %v5588 = vmul.f32 %v5587, 0.6931472
      %v5589 = vmul.f32 -0.5, %v2980
      %v5590 = vadd.f32 %v5589, 1.0
      %v5591 = vmul.f32 %v5590, %v2980
      %v5592 = vand.u32 2147483647, %v2980
      %vm5593 = vcmp.lt.f32.partialorder %v5592, 0.0004427343
      %v5594 = vsel %vm5593, %v5591, %v5588
      %v5595 = vadd.f32 %v2982, 1.0
      %v5596 = vlog2.pop %v5595
      %v5597 = vmul.f32 %v5596, 0.6931472
      %v5598 = vmul.f32 -0.5, %v2982
      %v5599 = vadd.f32 %v5598, 1.0
      %v5600 = vmul.f32 %v5599, %v2982
      %v5601 = vand.u32 2147483647, %v2982
      %vm5602 = vcmp.lt.f32.partialorder %v5601, 0.0004427343
      %v5603 = vsel %vm5602, %v5600, %v5597
      %v5604 = vadd.f32 %v2984, 1.0
      %v5605 = vlog2.pop %v5604
      %v5606 = vmul.f32 %v5605, 0.6931472
      %v5607 = vmul.f32 -0.5, %v2984
      %v5608 = vadd.f32 %v5607, 1.0
      %v5609 = vmul.f32 %v5608, %v2984
      %v5610 = vand.u32 2147483647, %v2984
      %vm5611 = vcmp.lt.f32.partialorder %v5610, 0.0004427343
      %v5612 = vsel %vm5611, %v5609, %v5606
      %v5613 = vadd.f32 %v2986, 1.0
      %v5614 = vlog2.pop %v5613
      %v5615 = vmul.f32 %v5614, 0.6931472
      %v5616 = vmul.f32 -0.5, %v2986
      %v5617 = vadd.f32 %v5616, 1.0
      %v5618 = vmul.f32 %v5617, %v2986
      %v5619 = vand.u32 2147483647, %v2986
      %vm5620 = vcmp.lt.f32.partialorder %v5619, 0.0004427343
      %v5621 = vsel %vm5620, %v5618, %v5615
      %v5622 = vadd.f32 %v2988, 1.0
      %v5623 = vlog2.pop %v5622
      %v5624 = vmul.f32 %v5623, 0.6931472
      %v5625 = vmul.f32 -0.5, %v2988
      %v5626 = vadd.f32 %v5625, 1.0
      %v5627 = vmul.f32 %v5626, %v2988
      %v5628 = vand.u32 2147483647, %v2988
      %vm5629 = vcmp.lt.f32.partialorder %v5628, 0.0004427343
      %v5630 = vsel %vm5629, %v5627, %v5624
      %v5631 = vadd.f32 %v2990, 1.0
      %v5632 = vlog2.pop %v5631
      %v5633 = vmul.f32 %v5632, 0.6931472
      %v5634 = vmul.f32 -0.5, %v2990
      %v5635 = vadd.f32 %v5634, 1.0
      %v5636 = vmul.f32 %v5635, %v2990
      %v5637 = vand.u32 2147483647, %v2990
      %vm5638 = vcmp.lt.f32.partialorder %v5637, 0.0004427343
      %v5639 = vsel %vm5638, %v5636, %v5633
      %v5640 = vadd.f32 %v2992, 1.0
      %v5641 = vlog2.pop %v5640
      %v5642 = vmul.f32 %v5641, 0.6931472
      %v5643 = vmul.f32 -0.5, %v2992
      %v5644 = vadd.f32 %v5643, 1.0
      %v5645 = vmul.f32 %v5644, %v2992
      %v5646 = vand.u32 2147483647, %v2992
      %vm5647 = vcmp.lt.f32.partialorder %v5646, 0.0004427343
      %v5648 = vsel %vm5647, %v5645, %v5642
      %v5649 = vadd.f32 %v2994, 1.0
      %v5650 = vlog2.pop %v5649
      %v5651 = vmul.f32 %v5650, 0.6931472
      %v5652 = vmul.f32 -0.5, %v2994
      %v5653 = vadd.f32 %v5652, 1.0
      %v5654 = vmul.f32 %v5653, %v2994
      %v5655 = vand.u32 2147483647, %v2994
      %vm5656 = vcmp.lt.f32.partialorder %v5655, 0.0004427343
      %v5657 = vsel %vm5656, %v5654, %v5651
      %v5658 = vadd.f32 %v2996, 1.0
      %v5659 = vlog2.pop %v5658
      %v5660 = vmul.f32 %v5659, 0.6931472
      %v5661 = vmul.f32 -0.5, %v2996
      %v5662 = vadd.f32 %v5661, 1.0
      %v5663 = vmul.f32 %v5662, %v2996
      %v5664 = vand.u32 2147483647, %v2996
      %vm5665 = vcmp.lt.f32.partialorder %v5664, 0.0004427343
      %v5666 = vsel %vm5665, %v5663, %v5660
      %v5667 = vadd.f32 %v2998, 1.0
      %v5668 = vlog2.pop %v5667
      %v5669 = vmul.f32 %v5668, 0.6931472
      %v5670 = vmul.f32 -0.5, %v2998
      %v5671 = vadd.f32 %v5670, 1.0
      %v5672 = vmul.f32 %v5671, %v2998
      %v5673 = vand.u32 2147483647, %v2998
      %vm5674 = vcmp.lt.f32.partialorder %v5673, 0.0004427343
      %v5675 = vsel %vm5674, %v5672, %v5669
      %v5676 = vadd.f32 %v3000, 1.0
      %v5677 = vlog2.pop %v5676
      %v5678 = vmul.f32 %v5677, 0.6931472
      %v5679 = vmul.f32 -0.5, %v3000
      %v5680 = vadd.f32 %v5679, 1.0
      %v5681 = vmul.f32 %v5680, %v3000
      %v5682 = vand.u32 2147483647, %v3000
      %vm5683 = vcmp.lt.f32.partialorder %v5682, 0.0004427343
      %v5684 = vsel %vm5683, %v5681, %v5678
      %v5685 = vadd.f32 %v3002, 1.0
      %v5686 = vlog2.pop %v5685
      %v5687 = vmul.f32 %v5686, 0.6931472
      %v5688 = vmul.f32 -0.5, %v3002
      %v5689 = vadd.f32 %v5688, 1.0
      %v5690 = vmul.f32 %v5689, %v3002
      %v5691 = vand.u32 2147483647, %v3002
      %vm5692 = vcmp.lt.f32.partialorder %v5691, 0.0004427343
      %v5693 = vsel %vm5692, %v5690, %v5687
      %v5694 = vadd.f32 %v3004, 1.0
      %v5695 = vlog2.pop %v5694
      %v5696 = vmul.f32 %v5695, 0.6931472
      %v5697 = vmul.f32 -0.5, %v3004
      %v5698 = vadd.f32 %v5697, 1.0
      %v5699 = vmul.f32 %v5698, %v3004
      %v5700 = vand.u32 2147483647, %v3004
      %vm5701 = vcmp.lt.f32.partialorder %v5700, 0.0004427343
      %v5702 = vsel %vm5701, %v5699, %v5696
      %v5703 = vadd.f32 %v3006, 1.0
      %v5704 = vlog2.pop %v5703
      %v5705 = vmul.f32 %v5704, 0.6931472
      %v5706 = vmul.f32 -0.5, %v3006
      %v5707 = vadd.f32 %v5706, 1.0
      %v5708 = vmul.f32 %v5707, %v3006
      %v5709 = vand.u32 2147483647, %v3006
      %vm5710 = vcmp.lt.f32.partialorder %v5709, 0.0004427343
      %v5711 = vsel %vm5710, %v5708, %v5705
      %v5712 = vadd.f32 %v3008, 1.0
      %v5713 = vlog2.pop %v5712
      %v5714 = vmul.f32 %v5713, 0.6931472
      %v5715 = vmul.f32 -0.5, %v3008
      %v5716 = vadd.f32 %v5715, 1.0
      %v5717 = vmul.f32 %v5716, %v3008
      %v5718 = vand.u32 2147483647, %v3008
      %vm5719 = vcmp.lt.f32.partialorder %v5718, 0.0004427343
      %v5720 = vsel %vm5719, %v5717, %v5714
      %v5721 = vadd.f32 %v3010, 1.0
      %v5722 = vlog2.pop %v5721
      %v5723 = vmul.f32 %v5722, 0.6931472
      %v5724 = vmul.f32 -0.5, %v3010
      %v5725 = vadd.f32 %v5724, 1.0
      %v5726 = vmul.f32 %v5725, %v3010
      %v5727 = vand.u32 2147483647, %v3010
      %vm5728 = vcmp.lt.f32.partialorder %v5727, 0.0004427343
      %v5729 = vsel %vm5728, %v5726, %v5723
      %v5730 = vadd.f32 %v3012, 1.0
      %v5731 = vlog2.pop %v5730
      %v5732 = vmul.f32 %v5731, 0.6931472
      %v5733 = vmul.f32 -0.5, %v3012
      %v5734 = vadd.f32 %v5733, 1.0
      %v5735 = vmul.f32 %v5734, %v3012
      %v5736 = vand.u32 2147483647, %v3012
      %vm5737 = vcmp.lt.f32.partialorder %v5736, 0.0004427343
      %v5738 = vsel %vm5737, %v5735, %v5732
      %v5739 = vadd.f32 %v3014, 1.0
      %v5740 = vlog2.pop %v5739
      %v5741 = vmul.f32 %v5740, 0.6931472
      %v5742 = vmul.f32 -0.5, %v3014
      %v5743 = vadd.f32 %v5742, 1.0
      %v5744 = vmul.f32 %v5743, %v3014
      %v5745 = vand.u32 2147483647, %v3014
      %vm5746 = vcmp.lt.f32.partialorder %v5745, 0.0004427343
      %v5747 = vsel %vm5746, %v5744, %v5741
      %v5748 = vadd.f32 %v3016, 1.0
      %v5749 = vlog2.pop %v5748
      %v5750 = vmul.f32 %v5749, 0.6931472
      %v5751 = vmul.f32 -0.5, %v3016
      %v5752 = vadd.f32 %v5751, 1.0
      %v5753 = vmul.f32 %v5752, %v3016
      %v5754 = vand.u32 2147483647, %v3016
      %vm5755 = vcmp.lt.f32.partialorder %v5754, 0.0004427343
      %v5756 = vsel %vm5755, %v5753, %v5750
      %v5757 = vadd.f32 %v3018, 1.0
      %v5758 = vlog2.pop %v5757
      %v5759 = vmul.f32 %v5758, 0.6931472
      %v5760 = vmul.f32 -0.5, %v3018
      %v5761 = vadd.f32 %v5760, 1.0
      %v5762 = vmul.f32 %v5761, %v3018
      %v5763 = vand.u32 2147483647, %v3018
      %vm5764 = vcmp.lt.f32.partialorder %v5763, 0.0004427343
      %v5765 = vsel %vm5764, %v5762, %v5759
      %v5766 = vadd.f32 %v3020, 1.0
      %v5767 = vlog2.pop %v5766
      %v5768 = vmul.f32 %v5767, 0.6931472
      %v5769 = vmul.f32 -0.5, %v3020
      %v5770 = vadd.f32 %v5769, 1.0
      %v5771 = vmul.f32 %v5770, %v3020
      %v5772 = vand.u32 2147483647, %v3020
      %vm5773 = vcmp.lt.f32.partialorder %v5772, 0.0004427343
      %v5774 = vsel %vm5773, %v5771, %v5768
      %v5775 = vadd.f32 %v3022, 1.0
      %v5776 = vlog2.pop %v5775
      %v5777 = vmul.f32 %v5776, 0.6931472
      %v5778 = vmul.f32 -0.5, %v3022
      %v5779 = vadd.f32 %v5778, 1.0
      %v5780 = vmul.f32 %v5779, %v3022
      %v5781 = vand.u32 2147483647, %v3022
      %vm5782 = vcmp.lt.f32.partialorder %v5781, 0.0004427343
      %v5783 = vsel %vm5782, %v5780, %v5777
      %v5784 = vadd.f32 %v3024, 1.0
      %v5785 = vlog2.pop %v5784
      %v5786 = vmul.f32 %v5785, 0.6931472
      %v5787 = vmul.f32 -0.5, %v3024
      %v5788 = vadd.f32 %v5787, 1.0
      %v5789 = vmul.f32 %v5788, %v3024
      %v5790 = vand.u32 2147483647, %v3024
      %vm5791 = vcmp.lt.f32.partialorder %v5790, 0.0004427343
      %v5792 = vsel %vm5791, %v5789, %v5786
      %v5793 = vadd.f32 %v3026, 1.0
      %v5794 = vlog2.pop %v5793
      %v5795 = vmul.f32 %v5794, 0.6931472
      %v5796 = vmul.f32 -0.5, %v3026
      %v5797 = vadd.f32 %v5796, 1.0
      %v5798 = vmul.f32 %v5797, %v3026
      %v5799 = vand.u32 2147483647, %v3026
      %vm5800 = vcmp.lt.f32.partialorder %v5799, 0.0004427343
      %v5801 = vsel %vm5800, %v5798, %v5795
      %v5802 = vadd.f32 %v3028, 1.0
      %v5803 = vlog2.pop %v5802
      %v5804 = vmul.f32 %v5803, 0.6931472
      %v5805 = vmul.f32 -0.5, %v3028
      %v5806 = vadd.f32 %v5805, 1.0
      %v5807 = vmul.f32 %v5806, %v3028
      %v5808 = vand.u32 2147483647, %v3028
      %vm5809 = vcmp.lt.f32.partialorder %v5808, 0.0004427343
      %v5810 = vsel %vm5809, %v5807, %v5804
      %v5811 = vadd.f32 %v3030, 1.0
      %v5812 = vlog2.pop %v5811
      %v5813 = vmul.f32 %v5812, 0.6931472
      %v5814 = vmul.f32 -0.5, %v3030
      %v5815 = vadd.f32 %v5814, 1.0
      %v5816 = vmul.f32 %v5815, %v3030
      %v5817 = vand.u32 2147483647, %v3030
      %vm5818 = vcmp.lt.f32.partialorder %v5817, 0.0004427343
      %v5819 = vsel %vm5818, %v5816, %v5813
      %v5820 = vadd.f32 %v3032, 1.0
      %v5821 = vlog2.pop %v5820
      %v5822 = vmul.f32 %v5821, 0.6931472
      %v5823 = vmul.f32 -0.5, %v3032
      %v5824 = vadd.f32 %v5823, 1.0
      %v5825 = vmul.f32 %v5824, %v3032
      %v5826 = vand.u32 2147483647, %v3032
      %vm5827 = vcmp.lt.f32.partialorder %v5826, 0.0004427343
      %v5828 = vsel %vm5827, %v5825, %v5822
      %v5829 = vadd.f32 %v3034, 1.0
      %v5830 = vlog2.pop %v5829
      %v5831 = vmul.f32 %v5830, 0.6931472
      %v5832 = vmul.f32 -0.5, %v3034
      %v5833 = vadd.f32 %v5832, 1.0
      %v5834 = vmul.f32 %v5833, %v3034
      %v5835 = vand.u32 2147483647, %v3034
      %vm5836 = vcmp.lt.f32.partialorder %v5835, 0.0004427343
      %v5837 = vsel %vm5836, %v5834, %v5831
      %v5838 = vadd.f32 %v3036, 1.0
      %v5839 = vlog2.pop %v5838
      %v5840 = vmul.f32 %v5839, 0.6931472
      %v5841 = vmul.f32 -0.5, %v3036
      %v5842 = vadd.f32 %v5841, 1.0
      %v5843 = vmul.f32 %v5842, %v3036
      %v5844 = vand.u32 2147483647, %v3036
      %vm5845 = vcmp.lt.f32.partialorder %v5844, 0.0004427343
      %v5846 = vsel %vm5845, %v5843, %v5840
      %v5847 = vadd.f32 %v3038, 1.0
      %v5848 = vlog2.pop %v5847
      %v5849 = vmul.f32 %v5848, 0.6931472
      %v5850 = vmul.f32 -0.5, %v3038
      %v5851 = vadd.f32 %v5850, 1.0
      %v5852 = vmul.f32 %v5851, %v3038
      %v5853 = vand.u32 2147483647, %v3038
      %vm5854 = vcmp.lt.f32.partialorder %v5853, 0.0004427343
      %v5855 = vsel %vm5854, %v5852, %v5849
      %v5856 = vadd.f32 %v3040, 1.0
      %v5857 = vlog2.pop %v5856
      %v5858 = vmul.f32 %v5857, 0.6931472
      %v5859 = vmul.f32 -0.5, %v3040
      %v5860 = vadd.f32 %v5859, 1.0
      %v5861 = vmul.f32 %v5860, %v3040
      %v5862 = vand.u32 2147483647, %v3040
      %vm5863 = vcmp.lt.f32.partialorder %v5862, 0.0004427343
      %v5864 = vsel %vm5863, %v5861, %v5858
      %v5865 = vadd.f32 %v3042, 1.0
      %v5866 = vlog2.pop %v5865
      %v5867 = vmul.f32 %v5866, 0.6931472
      %v5868 = vmul.f32 -0.5, %v3042
      %v5869 = vadd.f32 %v5868, 1.0
      %v5870 = vmul.f32 %v5869, %v3042
      %v5871 = vand.u32 2147483647, %v3042
      %vm5872 = vcmp.lt.f32.partialorder %v5871, 0.0004427343
      %v5873 = vsel %vm5872, %v5870, %v5867
      %v5874 = vadd.f32 %v3044, 1.0
      %v5875 = vlog2.pop %v5874
      %v5876 = vmul.f32 %v5875, 0.6931472
      %v5877 = vmul.f32 -0.5, %v3044
      %v5878 = vadd.f32 %v5877, 1.0
      %v5879 = vmul.f32 %v5878, %v3044
      %v5880 = vand.u32 2147483647, %v3044
      %vm5881 = vcmp.lt.f32.partialorder %v5880, 0.0004427343
      %v5882 = vsel %vm5881, %v5879, %v5876
      %v5883 = vadd.f32 %v3046, 1.0
      %v5884 = vlog2.pop %v5883
      %v5885 = vmul.f32 %v5884, 0.6931472
      %v5886 = vmul.f32 -0.5, %v3046
      %v5887 = vadd.f32 %v5886, 1.0
      %v5888 = vmul.f32 %v5887, %v3046
      %v5889 = vand.u32 2147483647, %v3046
      %vm5890 = vcmp.lt.f32.partialorder %v5889, 0.0004427343
      %v5891 = vsel %vm5890, %v5888, %v5885
      %v5892 = vadd.f32 %v3048, 1.0
      %v5893 = vlog2.pop %v5892
      %v5894 = vmul.f32 %v5893, 0.6931472
      %v5895 = vmul.f32 -0.5, %v3048
      %v5896 = vadd.f32 %v5895, 1.0
      %v5897 = vmul.f32 %v5896, %v3048
      %v5898 = vand.u32 2147483647, %v3048
      %vm5899 = vcmp.lt.f32.partialorder %v5898, 0.0004427343
      %v5900 = vsel %vm5899, %v5897, %v5894
      %v5901 = vadd.f32 %v3050, 1.0
      %v5902 = vlog2.pop %v5901
      %v5903 = vmul.f32 %v5902, 0.6931472
      %v5904 = vmul.f32 -0.5, %v3050
      %v5905 = vadd.f32 %v5904, 1.0
      %v5906 = vmul.f32 %v5905, %v3050
      %v5907 = vand.u32 2147483647, %v3050
      %vm5908 = vcmp.lt.f32.partialorder %v5907, 0.0004427343
      %v5909 = vsel %vm5908, %v5906, %v5903
      %v5910 = vadd.f32 %v3052, 1.0
      %v5911 = vlog2.pop %v5910
      %v5912 = vmul.f32 %v5911, 0.6931472
      %v5913 = vmul.f32 -0.5, %v3052
      %v5914 = vadd.f32 %v5913, 1.0
      %v5915 = vmul.f32 %v5914, %v3052
      %v5916 = vand.u32 2147483647, %v3052
      %vm5917 = vcmp.lt.f32.partialorder %v5916, 0.0004427343
      %v5918 = vsel %vm5917, %v5915, %v5912
      %v5919 = vadd.f32 %v3054, 1.0
      %v5920 = vlog2.pop %v5919
      %v5921 = vmul.f32 %v5920, 0.6931472
      %v5922 = vmul.f32 -0.5, %v3054
      %v5923 = vadd.f32 %v5922, 1.0
      %v5924 = vmul.f32 %v5923, %v3054
      %v5925 = vand.u32 2147483647, %v3054
      %vm5926 = vcmp.lt.f32.partialorder %v5925, 0.0004427343
      %v5927 = vsel %vm5926, %v5924, %v5921
      %v5928 = vadd.f32 %v3056, 1.0
      %v5929 = vlog2.pop %v5928
      %v5930 = vmul.f32 %v5929, 0.6931472
      %v5931 = vmul.f32 -0.5, %v3056
      %v5932 = vadd.f32 %v5931, 1.0
      %v5933 = vmul.f32 %v5932, %v3056
      %v5934 = vand.u32 2147483647, %v3056
      %vm5935 = vcmp.lt.f32.partialorder %v5934, 0.0004427343
      %v5936 = vsel %vm5935, %v5933, %v5930
      %v5937 = vadd.f32 %v1457, %v3065
      %v5938 = vadd.f32 %v1458, %v3074
      %v5939 = vadd.f32 %v1459, %v3083
      %v5940 = vadd.f32 %v1460, %v3092
      %v5941 = vadd.f32 %v1461, %v3101
      %v5942 = vadd.f32 %v1462, %v3110
      %v5943 = vadd.f32 %v1463, %v3119
      %v5944 = vadd.f32 %v1464, %v3128
      %v5945 = vadd.f32 %v1465, %v3137
      %v5946 = vadd.f32 %v1466, %v3146
      %v5947 = vadd.f32 %v1467, %v3155
      %v5948 = vadd.f32 %v1468, %v3164
      %v5949 = vadd.f32 %v1469, %v3173
      %v5950 = vadd.f32 %v1470, %v3182
      %v5951 = vadd.f32 %v1471, %v3191
      %v5952 = vadd.f32 %v1472, %v3200
      %v5953 = vadd.f32 %v1473, %v3209
      %v5954 = vadd.f32 %v1474, %v3218
      %v5955 = vadd.f32 %v1475, %v3227
      %v5956 = vadd.f32 %v1476, %v3236
      %v5957 = vadd.f32 %v1477, %v3245
      %v5958 = vadd.f32 %v1478, %v3254
      %v5959 = vadd.f32 %v1479, %v3263
      %v5960 = vadd.f32 %v1480, %v3272
      %v5961 = vadd.f32 %v1481, %v3281
      %v5962 = vadd.f32 %v1482, %v3290
      %v5963 = vadd.f32 %v1483, %v3299
      %v5964 = vadd.f32 %v1484, %v3308
      %v5965 = vadd.f32 %v1485, %v3317
      %v5966 = vadd.f32 %v1486, %v3326
      %v5967 = vadd.f32 %v1487, %v3335
      %v5968 = vadd.f32 %v1488, %v3344
      %v5969 = vadd.f32 %v1489, %v3353
      %v5970 = vadd.f32 %v1490, %v3362
      %v5971 = vadd.f32 %v1491, %v3371
      %v5972 = vadd.f32 %v1492, %v3380
      %v5973 = vadd.f32 %v1493, %v3389
      %v5974 = vadd.f32 %v1494, %v3398
      %v5975 = vadd.f32 %v1495, %v3407
      %v5976 = vadd.f32 %v1496, %v3416
      %v5977 = vadd.f32 %v1497, %v3425
      %v5978 = vadd.f32 %v1498, %v3434
      %v5979 = vadd.f32 %v1499, %v3443
      %v5980 = vadd.f32 %v1500, %v3452
      %v5981 = vadd.f32 %v1501, %v3461
      %v5982 = vadd.f32 %v1502, %v3470
      %v5983 = vadd.f32 %v1503, %v3479
      %v5984 = vadd.f32 %v1504, %v3488
      %v5985 = vadd.f32 %v1505, %v3497
      %v5986 = vadd.f32 %v1506, %v3506
      %v5987 = vadd.f32 %v1507, %v3515
      %v5988 = vadd.f32 %v1508, %v3524
      %v5989 = vadd.f32 %v1509, %v3533
      %v5990 = vadd.f32 %v1510, %v3542
      %v5991 = vadd.f32 %v1511, %v3551
      %v5992 = vadd.f32 %v1512, %v3560
      %v5993 = vadd.f32 %v1513, %v3569
      %v5994 = vadd.f32 %v1514, %v3578
      %v5995 = vadd.f32 %v1515, %v3587
      %v5996 = vadd.f32 %v1516, %v3596
      %v5997 = vadd.f32 %v1517, %v3605
      %v5998 = vadd.f32 %v1518, %v3614
      %v5999 = vadd.f32 %v1519, %v3623
      %v6000 = vadd.f32 %v1520, %v3632
      %v6001 = vadd.f32 %v1521, %v3641
      %v6002 = vadd.f32 %v1522, %v3650
      %v6003 = vadd.f32 %v1523, %v3659
      %v6004 = vadd.f32 %v1524, %v3668
      %v6005 = vadd.f32 %v1525, %v3677
      %v6006 = vadd.f32 %v1526, %v3686
      %v6007 = vadd.f32 %v1527, %v3695
      %v6008 = vadd.f32 %v1528, %v3704
      %v6009 = vadd.f32 %v1529, %v3713
      %v6010 = vadd.f32 %v1530, %v3722
      %v6011 = vadd.f32 %v1531, %v3731
      %v6012 = vadd.f32 %v1532, %v3740
      %v6013 = vadd.f32 %v1533, %v3749
      %v6014 = vadd.f32 %v1534, %v3758
      %v6015 = vadd.f32 %v1535, %v3767
      %v6016 = vadd.f32 %v1536, %v3776
      %v6017 = vadd.f32 %v1537, %v3785
      %v6018 = vadd.f32 %v1538, %v3794
      %v6019 = vadd.f32 %v1539, %v3803
      %v6020 = vadd.f32 %v1540, %v3812
      %v6021 = vadd.f32 %v1541, %v3821
      %v6022 = vadd.f32 %v1542, %v3830
      %v6023 = vadd.f32 %v1543, %v3839
      %v6024 = vadd.f32 %v1544, %v3848
      %v6025 = vadd.f32 %v1545, %v3857
      %v6026 = vadd.f32 %v1546, %v3866
      %v6027 = vadd.f32 %v1547, %v3875
      %v6028 = vadd.f32 %v1548, %v3884
      %v6029 = vadd.f32 %v1549, %v3893
      %v6030 = vadd.f32 %v1550, %v3902
      %v6031 = vadd.f32 %v1551, %v3911
      %v6032 = vadd.f32 %v1552, %v3920
      %v6033 = vadd.f32 %v1553, %v3929
      %v6034 = vadd.f32 %v1554, %v3938
      %v6035 = vadd.f32 %v1555, %v3947
      %v6036 = vadd.f32 %v1556, %v3956
      %v6037 = vadd.f32 %v1557, %v3965
      %v6038 = vadd.f32 %v1558, %v3974
      %v6039 = vadd.f32 %v1559, %v3983
      %v6040 = vadd.f32 %v1560, %v3992
      %v6041 = vadd.f32 %v1561, %v4001
      %v6042 = vadd.f32 %v1562, %v4010
      %v6043 = vadd.f32 %v1563, %v4019
      %v6044 = vadd.f32 %v1564, %v4028
      %v6045 = vadd.f32 %v1565, %v4037
      %v6046 = vadd.f32 %v1566, %v4046
      %v6047 = vadd.f32 %v1567, %v4055
      %v6048 = vadd.f32 %v1568, %v4064
      %v6049 = vadd.f32 %v1569, %v4073
      %v6050 = vadd.f32 %v1570, %v4082
      %v6051 = vadd.f32 %v1571, %v4091
      %v6052 = vadd.f32 %v1572, %v4100
      %v6053 = vadd.f32 %v1573, %v4109
      %v6054 = vadd.f32 %v1574, %v4118
      %v6055 = vadd.f32 %v1575, %v4127
      %v6056 = vadd.f32 %v1576, %v4136
      %v6057 = vadd.f32 %v1577, %v4145
      %v6058 = vadd.f32 %v1578, %v4154
      %v6059 = vadd.f32 %v1579, %v4163
      %v6060 = vadd.f32 %v1580, %v4172
      %v6061 = vadd.f32 %v1581, %v4181
      %v6062 = vadd.f32 %v1582, %v4190
      %v6063 = vadd.f32 %v1583, %v4199
      %v6064 = vadd.f32 %v1584, %v4208
      %v6065 = vadd.f32 %v1585, %v4217
      %v6066 = vadd.f32 %v1586, %v4226
      %v6067 = vadd.f32 %v1587, %v4235
      %v6068 = vadd.f32 %v1588, %v4244
      %v6069 = vadd.f32 %v1589, %v4253
      %v6070 = vadd.f32 %v1590, %v4262
      %v6071 = vadd.f32 %v1591, %v4271
      %v6072 = vadd.f32 %v1592, %v4280
      %v6073 = vadd.f32 %v1593, %v4289
      %v6074 = vadd.f32 %v1594, %v4298
      %v6075 = vadd.f32 %v1595, %v4307
      %v6076 = vadd.f32 %v1596, %v4316
      %v6077 = vadd.f32 %v1597, %v4325
      %v6078 = vadd.f32 %v1598, %v4334
      %v6079 = vadd.f32 %v1599, %v4343
      %v6080 = vadd.f32 %v1600, %v4352
      %v6081 = vadd.f32 %v1601, %v4361
      %v6082 = vadd.f32 %v1602, %v4370
      %v6083 = vadd.f32 %v1603, %v4379
      %v6084 = vadd.f32 %v1604, %v4388
      %v6085 = vadd.f32 %v1605, %v4397
      %v6086 = vadd.f32 %v1606, %v4406
      %v6087 = vadd.f32 %v1607, %v4415
      %v6088 = vadd.f32 %v1608, %v4424
      %v6089 = vadd.f32 %v1609, %v4433
      %v6090 = vadd.f32 %v1610, %v4442
      %v6091 = vadd.f32 %v1611, %v4451
      %v6092 = vadd.f32 %v1612, %v4460
      %v6093 = vadd.f32 %v1613, %v4469
      %v6094 = vadd.f32 %v1614, %v4478
      %v6095 = vadd.f32 %v1615, %v4487
      %v6096 = vadd.f32 %v1616, %v4496
      %v6097 = vadd.f32 %v1617, %v4505
      %v6098 = vadd.f32 %v1618, %v4514
      %v6099 = vadd.f32 %v1619, %v4523
      %v6100 = vadd.f32 %v1620, %v4532
      %v6101 = vadd.f32 %v1621, %v4541
      %v6102 = vadd.f32 %v1622, %v4550
      %v6103 = vadd.f32 %v1623, %v4559
      %v6104 = vadd.f32 %v1624, %v4568
      %v6105 = vadd.f32 %v1625, %v4577
      %v6106 = vadd.f32 %v1626, %v4586
      %v6107 = vadd.f32 %v1627, %v4595
      %v6108 = vadd.f32 %v1628, %v4604
      %v6109 = vadd.f32 %v1629, %v4613
      %v6110 = vadd.f32 %v1630, %v4622
      %v6111 = vadd.f32 %v1631, %v4631
      %v6112 = vadd.f32 %v1632, %v4640
      %v6113 = vadd.f32 %v1633, %v4649
      %v6114 = vadd.f32 %v1634, %v4658
      %v6115 = vadd.f32 %v1635, %v4667
      %v6116 = vadd.f32 %v1636, %v4676
      %v6117 = vadd.f32 %v1637, %v4685
      %v6118 = vadd.f32 %v1638, %v4694
      %v6119 = vadd.f32 %v1639, %v4703
      %v6120 = vadd.f32 %v1640, %v4712
      %v6121 = vadd.f32 %v1641, %v4721
      %v6122 = vadd.f32 %v1642, %v4730
      %v6123 = vadd.f32 %v1643, %v4739
      %v6124 = vadd.f32 %v1644, %v4748
      %v6125 = vadd.f32 %v1645, %v4757
      %v6126 = vadd.f32 %v1646, %v4766
      %v6127 = vadd.f32 %v1647, %v4775
      %v6128 = vadd.f32 %v1648, %v4784
      %v6129 = vadd.f32 %v1649, %v4793
      %v6130 = vadd.f32 %v1650, %v4802
      %v6131 = vadd.f32 %v1651, %v4811
      %v6132 = vadd.f32 %v1652, %v4820
      %v6133 = vadd.f32 %v1653, %v4829
      %v6134 = vadd.f32 %v1654, %v4838
      %v6135 = vadd.f32 %v1655, %v4847
      %v6136 = vadd.f32 %v1656, %v4856
      %v6137 = vadd.f32 %v1657, %v4865
      %v6138 = vadd.f32 %v1658, %v4874
      %v6139 = vadd.f32 %v1659, %v4883
      %v6140 = vadd.f32 %v1660, %v4892
      %v6141 = vadd.f32 %v1661, %v4901
      %v6142 = vadd.f32 %v1662, %v4910
      %v6143 = vadd.f32 %v1663, %v4919
      %v6144 = vadd.f32 %v1664, %v4928
      %v6145 = vadd.f32 %v1665, %v4937
      %v6146 = vadd.f32 %v1666, %v4946
      %v6147 = vadd.f32 %v1667, %v4955
      %v6148 = vadd.f32 %v1668, %v4964
      %v6149 = vadd.f32 %v1669, %v4973
      %v6150 = vadd.f32 %v1670, %v4982
      %v6151 = vadd.f32 %v1671, %v4991
      %v6152 = vadd.f32 %v1672, %v5000
      %v6153 = vadd.f32 %v1673, %v5009
      %v6154 = vadd.f32 %v1674, %v5018
      %v6155 = vadd.f32 %v1675, %v5027
      %v6156 = vadd.f32 %v1676, %v5036
      %v6157 = vadd.f32 %v1677, %v5045
      %v6158 = vadd.f32 %v1678, %v5054
      %v6159 = vadd.f32 %v1679, %v5063
      %v6160 = vadd.f32 %v1680, %v5072
      %v6161 = vadd.f32 %v1681, %v5081
      %v6162 = vadd.f32 %v1682, %v5090
      %v6163 = vadd.f32 %v1683, %v5099
      %v6164 = vadd.f32 %v1684, %v5108
      %v6165 = vadd.f32 %v1685, %v5117
      %v6166 = vadd.f32 %v1686, %v5126
      %v6167 = vadd.f32 %v1687, %v5135
      %v6168 = vadd.f32 %v1688, %v5144
      %v6169 = vadd.f32 %v1689, %v5153
      %v6170 = vadd.f32 %v1690, %v5162
      %v6171 = vadd.f32 %v1691, %v5171
      %v6172 = vadd.f32 %v1692, %v5180
      %v6173 = vadd.f32 %v1693, %v5189
      %v6174 = vadd.f32 %v1694, %v5198
      %v6175 = vadd.f32 %v1695, %v5207
      %v6176 = vadd.f32 %v1696, %v5216
      %v6177 = vadd.f32 %v1697, %v5225
      %v6178 = vadd.f32 %v1698, %v5234
      %v6179 = vadd.f32 %v1699, %v5243
      %v6180 = vadd.f32 %v1700, %v5252
      %v6181 = vadd.f32 %v1701, %v5261
      %v6182 = vadd.f32 %v1702, %v5270
      %v6183 = vadd.f32 %v1703, %v5279
      %v6184 = vadd.f32 %v1704, %v5288
      %v6185 = vadd.f32 %v1705, %v5297
      %v6186 = vadd.f32 %v1706, %v5306
      %v6187 = vadd.f32 %v1707, %v5315
      %v6188 = vadd.f32 %v1708, %v5324
      %v6189 = vadd.f32 %v1709, %v5333
      %v6190 = vadd.f32 %v1710, %v5342
      %v6191 = vadd.f32 %v1711, %v5351
      %v6192 = vadd.f32 %v1712, %v5360
      %v6193 = vadd.f32 %v1713, %v5369
      %v6194 = vadd.f32 %v1714, %v5378
      %v6195 = vadd.f32 %v1715, %v5387
      %v6196 = vadd.f32 %v1716, %v5396
      %v6197 = vadd.f32 %v1717, %v5405
      %v6198 = vadd.f32 %v1718, %v5414
      %v6199 = vadd.f32 %v1719, %v5423
      %v6200 = vadd.f32 %v1720, %v5432
      %v6201 = vadd.f32 %v1721, %v5441
      %v6202 = vadd.f32 %v1722, %v5450
      %v6203 = vadd.f32 %v1723, %v5459
      %v6204 = vadd.f32 %v1724, %v5468
      %v6205 = vadd.f32 %v1725, %v5477
      %v6206 = vadd.f32 %v1726, %v5486
      %v6207 = vadd.f32 %v1727, %v5495
      %v6208 = vadd.f32 %v1728, %v5504
      %v6209 = vadd.f32 %v1729, %v5513
      %v6210 = vadd.f32 %v1730, %v5522
      %v6211 = vadd.f32 %v1731, %v5531
      %v6212 = vadd.f32 %v1732, %v5540
      %v6213 = vadd.f32 %v1733, %v5549
      %v6214 = vadd.f32 %v1734, %v5558
      %v6215 = vadd.f32 %v1735, %v5567
      %v6216 = vadd.f32 %v1736, %v5576
      %v6217 = vadd.f32 %v1737, %v5585
      %v6218 = vadd.f32 %v1738, %v5594
      %v6219 = vadd.f32 %v1739, %v5603
      %v6220 = vadd.f32 %v1740, %v5612
      %v6221 = vadd.f32 %v1741, %v5621
      %v6222 = vadd.f32 %v1742, %v5630
      %v6223 = vadd.f32 %v1743, %v5639
      %v6224 = vadd.f32 %v1744, %v5648
      %v6225 = vadd.f32 %v1745, %v5657
      %v6226 = vadd.f32 %v1746, %v5666
      %v6227 = vadd.f32 %v1747, %v5675
      %v6228 = vadd.f32 %v1748, %v5684
      %v6229 = vadd.f32 %v1749, %v5693
      %v6230 = vadd.f32 %v1750, %v5702
      %v6231 = vadd.f32 %v1751, %v5711
      %v6232 = vadd.f32 %v1752, %v5720
      %v6233 = vadd.f32 %v1753, %v5729
      %v6234 = vadd.f32 %v1754, %v5738
      %v6235 = vadd.f32 %v1755, %v5747
      %v6236 = vadd.f32 %v1756, %v5756
      %v6237 = vadd.f32 %v1757, %v5765
      %v6238 = vadd.f32 %v1758, %v5774
      %v6239 = vadd.f32 %v1759, %v5783
      %v6240 = vadd.f32 %v1760, %v5792
      %v6241 = vadd.f32 %v1761, %v5801
      %v6242 = vadd.f32 %v1762, %v5810
      %v6243 = vadd.f32 %v1763, %v5819
      %v6244 = vadd.f32 %v1764, %v5828
      %v6245 = vadd.f32 %v1765, %v5837
      %v6246 = vadd.f32 %v1766, %v5846
      %v6247 = vadd.f32 %v1767, %v5855
      %v6248 = vadd.f32 %v1768, %v5864
      %v6249 = vadd.f32 %v1769, %v5873
      %v6250 = vadd.f32 %v1770, %v5882
      %v6251 = vadd.f32 %v1771, %v5891
      %v6252 = vadd.f32 %v1772, %v5900
      %v6253 = vadd.f32 %v1773, %v5909
      %v6254 = vadd.f32 %v1774, %v5918
      %v6255 = vadd.f32 %v1775, %v5927
      %v6256 = vadd.f32 %v1776, %v5936
      %v6257 = vsub.f32 0.0, %v5937
      %v6258 = vsub.f32 0.0, %v5938
      %v6259 = vsub.f32 0.0, %v5939
      %v6260 = vsub.f32 0.0, %v5940
      %v6261 = vsub.f32 0.0, %v5941
      %v6262 = vsub.f32 0.0, %v5942
      %v6263 = vsub.f32 0.0, %v5943
      %v6264 = vsub.f32 0.0, %v5944
      %v6265 = vsub.f32 0.0, %v5945
      %v6266 = vsub.f32 0.0, %v5946
      %v6267 = vsub.f32 0.0, %v5947
      %v6268 = vsub.f32 0.0, %v5948
      %v6269 = vsub.f32 0.0, %v5949
      %v6270 = vsub.f32 0.0, %v5950
      %v6271 = vsub.f32 0.0, %v5951
      %v6272 = vsub.f32 0.0, %v5952
      %v6273 = vsub.f32 0.0, %v5953
      %v6274 = vsub.f32 0.0, %v5954
      %v6275 = vsub.f32 0.0, %v5955
      %v6276 = vsub.f32 0.0, %v5956
      %v6277 = vsub.f32 0.0, %v5957
      %v6278 = vsub.f32 0.0, %v5958
      %v6279 = vsub.f32 0.0, %v5959
      %v6280 = vsub.f32 0.0, %v5960
      %v6281 = vsub.f32 0.0, %v5961
      %v6282 = vsub.f32 0.0, %v5962
      %v6283 = vsub.f32 0.0, %v5963
      %v6284 = vsub.f32 0.0, %v5964
      %v6285 = vsub.f32 0.0, %v5965
      %v6286 = vsub.f32 0.0, %v5966
      %v6287 = vsub.f32 0.0, %v5967
      %v6288 = vsub.f32 0.0, %v5968
      %v6289 = vsub.f32 0.0, %v5969
      %v6290 = vsub.f32 0.0, %v5970
      %v6291 = vsub.f32 0.0, %v5971
      %v6292 = vsub.f32 0.0, %v5972
      %v6293 = vsub.f32 0.0, %v5973
      %v6294 = vsub.f32 0.0, %v5974
      %v6295 = vsub.f32 0.0, %v5975
      %v6296 = vsub.f32 0.0, %v5976
      %v6297 = vsub.f32 0.0, %v5977
      %v6298 = vsub.f32 0.0, %v5978
      %v6299 = vsub.f32 0.0, %v5979
      %v6300 = vsub.f32 0.0, %v5980
      %v6301 = vsub.f32 0.0, %v5981
      %v6302 = vsub.f32 0.0, %v5982
      %v6303 = vsub.f32 0.0, %v5983
      %v6304 = vsub.f32 0.0, %v5984
      %v6305 = vsub.f32 0.0, %v5985
      %v6306 = vsub.f32 0.0, %v5986
      %v6307 = vsub.f32 0.0, %v5987
      %v6308 = vsub.f32 0.0, %v5988
      %v6309 = vsub.f32 0.0, %v5989
      %v6310 = vsub.f32 0.0, %v5990
      %v6311 = vsub.f32 0.0, %v5991
      %v6312 = vsub.f32 0.0, %v5992
      %v6313 = vsub.f32 0.0, %v5993
      %v6314 = vsub.f32 0.0, %v5994
      %v6315 = vsub.f32 0.0, %v5995
      %v6316 = vsub.f32 0.0, %v5996
      %v6317 = vsub.f32 0.0, %v5997
      %v6318 = vsub.f32 0.0, %v5998
      %v6319 = vsub.f32 0.0, %v5999
      %v6320 = vsub.f32 0.0, %v6000
      %v6321 = vsub.f32 0.0, %v6001
      %v6322 = vsub.f32 0.0, %v6002
      %v6323 = vsub.f32 0.0, %v6003
      %v6324 = vsub.f32 0.0, %v6004
      %v6325 = vsub.f32 0.0, %v6005
      %v6326 = vsub.f32 0.0, %v6006
      %v6327 = vsub.f32 0.0, %v6007
      %v6328 = vsub.f32 0.0, %v6008
      %v6329 = vsub.f32 0.0, %v6009
      %v6330 = vsub.f32 0.0, %v6010
      %v6331 = vsub.f32 0.0, %v6011
      %v6332 = vsub.f32 0.0, %v6012
      %v6333 = vsub.f32 0.0, %v6013
      %v6334 = vsub.f32 0.0, %v6014
      %v6335 = vsub.f32 0.0, %v6015
      %v6336 = vsub.f32 0.0, %v6016
      %v6337 = vsub.f32 0.0, %v6017
      %v6338 = vsub.f32 0.0, %v6018
      %v6339 = vsub.f32 0.0, %v6019
      %v6340 = vsub.f32 0.0, %v6020
      %v6341 = vsub.f32 0.0, %v6021
      %v6342 = vsub.f32 0.0, %v6022
      %v6343 = vsub.f32 0.0, %v6023
      %v6344 = vsub.f32 0.0, %v6024
      %v6345 = vsub.f32 0.0, %v6025
      %v6346 = vsub.f32 0.0, %v6026
      %v6347 = vsub.f32 0.0, %v6027
      %v6348 = vsub.f32 0.0, %v6028
      %v6349 = vsub.f32 0.0, %v6029
      %v6350 = vsub.f32 0.0, %v6030
      %v6351 = vsub.f32 0.0, %v6031
      %v6352 = vsub.f32 0.0, %v6032
      %v6353 = vsub.f32 0.0, %v6033
      %v6354 = vsub.f32 0.0, %v6034
      %v6355 = vsub.f32 0.0, %v6035
      %v6356 = vsub.f32 0.0, %v6036
      %v6357 = vsub.f32 0.0, %v6037
      %v6358 = vsub.f32 0.0, %v6038
      %v6359 = vsub.f32 0.0, %v6039
      %v6360 = vsub.f32 0.0, %v6040
      %v6361 = vsub.f32 0.0, %v6041
      %v6362 = vsub.f32 0.0, %v6042
      %v6363 = vsub.f32 0.0, %v6043
      %v6364 = vsub.f32 0.0, %v6044
      %v6365 = vsub.f32 0.0, %v6045
      %v6366 = vsub.f32 0.0, %v6046
      %v6367 = vsub.f32 0.0, %v6047
      %v6368 = vsub.f32 0.0, %v6048
      %v6369 = vsub.f32 0.0, %v6049
      %v6370 = vsub.f32 0.0, %v6050
      %v6371 = vsub.f32 0.0, %v6051
      %v6372 = vsub.f32 0.0, %v6052
      %v6373 = vsub.f32 0.0, %v6053
      %v6374 = vsub.f32 0.0, %v6054
      %v6375 = vsub.f32 0.0, %v6055
      %v6376 = vsub.f32 0.0, %v6056
      %v6377 = vsub.f32 0.0, %v6057
      %v6378 = vsub.f32 0.0, %v6058
      %v6379 = vsub.f32 0.0, %v6059
      %v6380 = vsub.f32 0.0, %v6060
      %v6381 = vsub.f32 0.0, %v6061
      %v6382 = vsub.f32 0.0, %v6062
      %v6383 = vsub.f32 0.0, %v6063
      %v6384 = vsub.f32 0.0, %v6064
      %v6385 = vsub.f32 0.0, %v6065
      %v6386 = vsub.f32 0.0, %v6066
      %v6387 = vsub.f32 0.0, %v6067
      %v6388 = vsub.f32 0.0, %v6068
      %v6389 = vsub.f32 0.0, %v6069
      %v6390 = vsub.f32 0.0, %v6070
      %v6391 = vsub.f32 0.0, %v6071
      %v6392 = vsub.f32 0.0, %v6072
      %v6393 = vsub.f32 0.0, %v6073
      %v6394 = vsub.f32 0.0, %v6074
      %v6395 = vsub.f32 0.0, %v6075
      %v6396 = vsub.f32 0.0, %v6076
      %v6397 = vsub.f32 0.0, %v6077
      %v6398 = vsub.f32 0.0, %v6078
      %v6399 = vsub.f32 0.0, %v6079
      %v6400 = vsub.f32 0.0, %v6080
      %v6401 = vsub.f32 0.0, %v6081
      %v6402 = vsub.f32 0.0, %v6082
      %v6403 = vsub.f32 0.0, %v6083
      %v6404 = vsub.f32 0.0, %v6084
      %v6405 = vsub.f32 0.0, %v6085
      %v6406 = vsub.f32 0.0, %v6086
      %v6407 = vsub.f32 0.0, %v6087
      %v6408 = vsub.f32 0.0, %v6088
      %v6409 = vsub.f32 0.0, %v6089
      %v6410 = vsub.f32 0.0, %v6090
      %v6411 = vsub.f32 0.0, %v6091
      %v6412 = vsub.f32 0.0, %v6092
      %v6413 = vsub.f32 0.0, %v6093
      %v6414 = vsub.f32 0.0, %v6094
      %v6415 = vsub.f32 0.0, %v6095
      %v6416 = vsub.f32 0.0, %v6096
      %v6417 = vsub.f32 0.0, %v6097
      %v6418 = vsub.f32 0.0, %v6098
      %v6419 = vsub.f32 0.0, %v6099
      %v6420 = vsub.f32 0.0, %v6100
      %v6421 = vsub.f32 0.0, %v6101
      %v6422 = vsub.f32 0.0, %v6102
      %v6423 = vsub.f32 0.0, %v6103
      %v6424 = vsub.f32 0.0, %v6104
      %v6425 = vsub.f32 0.0, %v6105
      %v6426 = vsub.f32 0.0, %v6106
      %v6427 = vsub.f32 0.0, %v6107
      %v6428 = vsub.f32 0.0, %v6108
      %v6429 = vsub.f32 0.0, %v6109
      %v6430 = vsub.f32 0.0, %v6110
      %v6431 = vsub.f32 0.0, %v6111
      %v6432 = vsub.f32 0.0, %v6112
      %v6433 = vsub.f32 0.0, %v6113
      %v6434 = vsub.f32 0.0, %v6114
      %v6435 = vsub.f32 0.0, %v6115
      %v6436 = vsub.f32 0.0, %v6116
      %v6437 = vsub.f32 0.0, %v6117
      %v6438 = vsub.f32 0.0, %v6118
      %v6439 = vsub.f32 0.0, %v6119
      %v6440 = vsub.f32 0.0, %v6120
      %v6441 = vsub.f32 0.0, %v6121
      %v6442 = vsub.f32 0.0, %v6122
      %v6443 = vsub.f32 0.0, %v6123
      %v6444 = vsub.f32 0.0, %v6124
      %v6445 = vsub.f32 0.0, %v6125
      %v6446 = vsub.f32 0.0, %v6126
      %v6447 = vsub.f32 0.0, %v6127
      %v6448 = vsub.f32 0.0, %v6128
      %v6449 = vsub.f32 0.0, %v6129
      %v6450 = vsub.f32 0.0, %v6130
      %v6451 = vsub.f32 0.0, %v6131
      %v6452 = vsub.f32 0.0, %v6132
      %v6453 = vsub.f32 0.0, %v6133
      %v6454 = vsub.f32 0.0, %v6134
      %v6455 = vsub.f32 0.0, %v6135
      %v6456 = vsub.f32 0.0, %v6136
      %v6457 = vsub.f32 0.0, %v6137
      %v6458 = vsub.f32 0.0, %v6138
      %v6459 = vsub.f32 0.0, %v6139
      %v6460 = vsub.f32 0.0, %v6140
      %v6461 = vsub.f32 0.0, %v6141
      %v6462 = vsub.f32 0.0, %v6142
      %v6463 = vsub.f32 0.0, %v6143
      %v6464 = vsub.f32 0.0, %v6144
      %v6465 = vsub.f32 0.0, %v6145
      %v6466 = vsub.f32 0.0, %v6146
      %v6467 = vsub.f32 0.0, %v6147
      %v6468 = vsub.f32 0.0, %v6148
      %v6469 = vsub.f32 0.0, %v6149
      %v6470 = vsub.f32 0.0, %v6150
      %v6471 = vsub.f32 0.0, %v6151
      %v6472 = vsub.f32 0.0, %v6152
      %v6473 = vsub.f32 0.0, %v6153
      %v6474 = vsub.f32 0.0, %v6154
      %v6475 = vsub.f32 0.0, %v6155
      %v6476 = vsub.f32 0.0, %v6156
      %v6477 = vsub.f32 0.0, %v6157
      %v6478 = vsub.f32 0.0, %v6158
      %v6479 = vsub.f32 0.0, %v6159
      %v6480 = vsub.f32 0.0, %v6160
      %v6481 = vsub.f32 0.0, %v6161
      %v6482 = vsub.f32 0.0, %v6162
      %v6483 = vsub.f32 0.0, %v6163
      %v6484 = vsub.f32 0.0, %v6164
      %v6485 = vsub.f32 0.0, %v6165
      %v6486 = vsub.f32 0.0, %v6166
      %v6487 = vsub.f32 0.0, %v6167
      %v6488 = vsub.f32 0.0, %v6168
      %v6489 = vsub.f32 0.0, %v6169
      %v6490 = vsub.f32 0.0, %v6170
      %v6491 = vsub.f32 0.0, %v6171
      %v6492 = vsub.f32 0.0, %v6172
      %v6493 = vsub.f32 0.0, %v6173
      %v6494 = vsub.f32 0.0, %v6174
      %v6495 = vsub.f32 0.0, %v6175
      %v6496 = vsub.f32 0.0, %v6176
      %v6497 = vsub.f32 0.0, %v6177
      %v6498 = vsub.f32 0.0, %v6178
      %v6499 = vsub.f32 0.0, %v6179
      %v6500 = vsub.f32 0.0, %v6180
      %v6501 = vsub.f32 0.0, %v6181
      %v6502 = vsub.f32 0.0, %v6182
      %v6503 = vsub.f32 0.0, %v6183
      %v6504 = vsub.f32 0.0, %v6184
      %v6505 = vsub.f32 0.0, %v6185
      %v6506 = vsub.f32 0.0, %v6186
      %v6507 = vsub.f32 0.0, %v6187
      %v6508 = vsub.f32 0.0, %v6188
      %v6509 = vsub.f32 0.0, %v6189
      %v6510 = vsub.f32 0.0, %v6190
      %v6511 = vsub.f32 0.0, %v6191
      %v6512 = vsub.f32 0.0, %v6192
      %v6513 = vsub.f32 0.0, %v6193
      %v6514 = vsub.f32 0.0, %v6194
      %v6515 = vsub.f32 0.0, %v6195
      %v6516 = vsub.f32 0.0, %v6196
      %v6517 = vsub.f32 0.0, %v6197
      %v6518 = vsub.f32 0.0, %v6198
      %v6519 = vsub.f32 0.0, %v6199
      %v6520 = vsub.f32 0.0, %v6200
      %v6521 = vsub.f32 0.0, %v6201
      %v6522 = vsub.f32 0.0, %v6202
      %v6523 = vsub.f32 0.0, %v6203
      %v6524 = vsub.f32 0.0, %v6204
      %v6525 = vsub.f32 0.0, %v6205
      %v6526 = vsub.f32 0.0, %v6206
      %v6527 = vsub.f32 0.0, %v6207
      %v6528 = vsub.f32 0.0, %v6208
      %v6529 = vsub.f32 0.0, %v6209
      %v6530 = vsub.f32 0.0, %v6210
      %v6531 = vsub.f32 0.0, %v6211
      %v6532 = vsub.f32 0.0, %v6212
      %v6533 = vsub.f32 0.0, %v6213
      %v6534 = vsub.f32 0.0, %v6214
      %v6535 = vsub.f32 0.0, %v6215
      %v6536 = vsub.f32 0.0, %v6216
      %v6537 = vsub.f32 0.0, %v6217
      %v6538 = vsub.f32 0.0, %v6218
      %v6539 = vsub.f32 0.0, %v6219
      %v6540 = vsub.f32 0.0, %v6220
      %v6541 = vsub.f32 0.0, %v6221
      %v6542 = vsub.f32 0.0, %v6222
      %v6543 = vsub.f32 0.0, %v6223
      %v6544 = vsub.f32 0.0, %v6224
      %v6545 = vsub.f32 0.0, %v6225
      %v6546 = vsub.f32 0.0, %v6226
      %v6547 = vsub.f32 0.0, %v6227
      %v6548 = vsub.f32 0.0, %v6228
      %v6549 = vsub.f32 0.0, %v6229
      %v6550 = vsub.f32 0.0, %v6230
      %v6551 = vsub.f32 0.0, %v6231
      %v6552 = vsub.f32 0.0, %v6232
      %v6553 = vsub.f32 0.0, %v6233
      %v6554 = vsub.f32 0.0, %v6234
      %v6555 = vsub.f32 0.0, %v6235
      %v6556 = vsub.f32 0.0, %v6236
      %v6557 = vsub.f32 0.0, %v6237
      %v6558 = vsub.f32 0.0, %v6238
      %v6559 = vsub.f32 0.0, %v6239
      %v6560 = vsub.f32 0.0, %v6240
      %v6561 = vsub.f32 0.0, %v6241
      %v6562 = vsub.f32 0.0, %v6242
      %v6563 = vsub.f32 0.0, %v6243
      %v6564 = vsub.f32 0.0, %v6244
      %v6565 = vsub.f32 0.0, %v6245
      %v6566 = vsub.f32 0.0, %v6246
      %v6567 = vsub.f32 0.0, %v6247
      %v6568 = vsub.f32 0.0, %v6248
      %v6569 = vsub.f32 0.0, %v6249
      %v6570 = vsub.f32 0.0, %v6250
      %v6571 = vsub.f32 0.0, %v6251
      %v6572 = vsub.f32 0.0, %v6252
      %v6573 = vsub.f32 0.0, %v6253
      %v6574 = vsub.f32 0.0, %v6254
      %v6575 = vsub.f32 0.0, %v6255
      %v6576 = vsub.f32 0.0, %v6256
      %v6577 = vmul.f32 %v6257, 1.442695
      %v6578 = vpow.pop %v6577
      %v6579 = vmul.f32 %v6258, 1.442695
      %v6580 = vpow.pop %v6579
      %v6581 = vmul.f32 %v6259, 1.442695
      %v6582 = vpow.pop %v6581
      %v6583 = vmul.f32 %v6260, 1.442695
      %v6584 = vpow.pop %v6583
      %v6585 = vmul.f32 %v6261, 1.442695
      %v6586 = vpow.pop %v6585
      %v6587 = vmul.f32 %v6262, 1.442695
      %v6588 = vpow.pop %v6587
      %v6589 = vmul.f32 %v6263, 1.442695
      %v6590 = vpow.pop %v6589
      %v6591 = vmul.f32 %v6264, 1.442695
      %v6592 = vpow.pop %v6591
      %v6593 = vmul.f32 %v6265, 1.442695
      %v6594 = vpow.pop %v6593
      %v6595 = vmul.f32 %v6266, 1.442695
      %v6596 = vpow.pop %v6595
      %v6597 = vmul.f32 %v6267, 1.442695
      %v6598 = vpow.pop %v6597
      %v6599 = vmul.f32 %v6268, 1.442695
      %v6600 = vpow.pop %v6599
      %v6601 = vmul.f32 %v6269, 1.442695
      %v6602 = vpow.pop %v6601
      %v6603 = vmul.f32 %v6270, 1.442695
      %v6604 = vpow.pop %v6603
      %v6605 = vmul.f32 %v6271, 1.442695
      %v6606 = vpow.pop %v6605
      %v6607 = vmul.f32 %v6272, 1.442695
      %v6608 = vpow.pop %v6607
      %v6609 = vmul.f32 %v6273, 1.442695
      %v6610 = vpow.pop %v6609
      %v6611 = vmul.f32 %v6274, 1.442695
      %v6612 = vpow.pop %v6611
      %v6613 = vmul.f32 %v6275, 1.442695
      %v6614 = vpow.pop %v6613
      %v6615 = vmul.f32 %v6276, 1.442695
      %v6616 = vpow.pop %v6615
      %v6617 = vmul.f32 %v6277, 1.442695
      %v6618 = vpow.pop %v6617
      %v6619 = vmul.f32 %v6278, 1.442695
      %v6620 = vpow.pop %v6619
      %v6621 = vmul.f32 %v6279, 1.442695
      %v6622 = vpow.pop %v6621
      %v6623 = vmul.f32 %v6280, 1.442695
      %v6624 = vpow.pop %v6623
      %v6625 = vmul.f32 %v6281, 1.442695
      %v6626 = vpow.pop %v6625
      %v6627 = vmul.f32 %v6282, 1.442695
      %v6628 = vpow.pop %v6627
      %v6629 = vmul.f32 %v6283, 1.442695
      %v6630 = vpow.pop %v6629
      %v6631 = vmul.f32 %v6284, 1.442695
      %v6632 = vpow.pop %v6631
      %v6633 = vmul.f32 %v6285, 1.442695
      %v6634 = vpow.pop %v6633
      %v6635 = vmul.f32 %v6286, 1.442695
      %v6636 = vpow.pop %v6635
      %v6637 = vmul.f32 %v6287, 1.442695
      %v6638 = vpow.pop %v6637
      %v6639 = vmul.f32 %v6288, 1.442695
      %v6640 = vpow.pop %v6639
      %v6641 = vmul.f32 %v6289, 1.442695
      %v6642 = vpow.pop %v6641
      %v6643 = vmul.f32 %v6290, 1.442695
      %v6644 = vpow.pop %v6643
      %v6645 = vmul.f32 %v6291, 1.442695
      %v6646 = vpow.pop %v6645
      %v6647 = vmul.f32 %v6292, 1.442695
      %v6648 = vpow.pop %v6647
      %v6649 = vmul.f32 %v6293, 1.442695
      %v6650 = vpow.pop %v6649
      %v6651 = vmul.f32 %v6294, 1.442695
      %v6652 = vpow.pop %v6651
      %v6653 = vmul.f32 %v6295, 1.442695
      %v6654 = vpow.pop %v6653
      %v6655 = vmul.f32 %v6296, 1.442695
      %v6656 = vpow.pop %v6655
      %v6657 = vmul.f32 %v6297, 1.442695
      %v6658 = vpow.pop %v6657
      %v6659 = vmul.f32 %v6298, 1.442695
      %v6660 = vpow.pop %v6659
      %v6661 = vmul.f32 %v6299, 1.442695
      %v6662 = vpow.pop %v6661
      %v6663 = vmul.f32 %v6300, 1.442695
      %v6664 = vpow.pop %v6663
      %v6665 = vmul.f32 %v6301, 1.442695
      %v6666 = vpow.pop %v6665
      %v6667 = vmul.f32 %v6302, 1.442695
      %v6668 = vpow.pop %v6667
      %v6669 = vmul.f32 %v6303, 1.442695
      %v6670 = vpow.pop %v6669
      %v6671 = vmul.f32 %v6304, 1.442695
      %v6672 = vpow.pop %v6671
      %v6673 = vmul.f32 %v6305, 1.442695
      %v6674 = vpow.pop %v6673
      %v6675 = vmul.f32 %v6306, 1.442695
      %v6676 = vpow.pop %v6675
      %v6677 = vmul.f32 %v6307, 1.442695
      %v6678 = vpow.pop %v6677
      %v6679 = vmul.f32 %v6308, 1.442695
      %v6680 = vpow.pop %v6679
      %v6681 = vmul.f32 %v6309, 1.442695
      %v6682 = vpow.pop %v6681
      %v6683 = vmul.f32 %v6310, 1.442695
      %v6684 = vpow.pop %v6683
      %v6685 = vmul.f32 %v6311, 1.442695
      %v6686 = vpow.pop %v6685
      %v6687 = vmul.f32 %v6312, 1.442695
      %v6688 = vpow.pop %v6687
      %v6689 = vmul.f32 %v6313, 1.442695
      %v6690 = vpow.pop %v6689
      %v6691 = vmul.f32 %v6314, 1.442695
      %v6692 = vpow.pop %v6691
      %v6693 = vmul.f32 %v6315, 1.442695
      %v6694 = vpow.pop %v6693
      %v6695 = vmul.f32 %v6316, 1.442695
      %v6696 = vpow.pop %v6695
      %v6697 = vmul.f32 %v6317, 1.442695
      %v6698 = vpow.pop %v6697
      %v6699 = vmul.f32 %v6318, 1.442695
      %v6700 = vpow.pop %v6699
      %v6701 = vmul.f32 %v6319, 1.442695
      %v6702 = vpow.pop %v6701
      %v6703 = vmul.f32 %v6320, 1.442695
      %v6704 = vpow.pop %v6703
      %v6705 = vmul.f32 %v6321, 1.442695
      %v6706 = vpow.pop %v6705
      %v6707 = vmul.f32 %v6322, 1.442695
      %v6708 = vpow.pop %v6707
      %v6709 = vmul.f32 %v6323, 1.442695
      %v6710 = vpow.pop %v6709
      %v6711 = vmul.f32 %v6324, 1.442695
      %v6712 = vpow.pop %v6711
      %v6713 = vmul.f32 %v6325, 1.442695
      %v6714 = vpow.pop %v6713
      %v6715 = vmul.f32 %v6326, 1.442695
      %v6716 = vpow.pop %v6715
      %v6717 = vmul.f32 %v6327, 1.442695
      %v6718 = vpow.pop %v6717
      %v6719 = vmul.f32 %v6328, 1.442695
      %v6720 = vpow.pop %v6719
      %v6721 = vmul.f32 %v6329, 1.442695
      %v6722 = vpow.pop %v6721
      %v6723 = vmul.f32 %v6330, 1.442695
      %v6724 = vpow.pop %v6723
      %v6725 = vmul.f32 %v6331, 1.442695
      %v6726 = vpow.pop %v6725
      %v6727 = vmul.f32 %v6332, 1.442695
      %v6728 = vpow.pop %v6727
      %v6729 = vmul.f32 %v6333, 1.442695
      %v6730 = vpow.pop %v6729
      %v6731 = vmul.f32 %v6334, 1.442695
      %v6732 = vpow.pop %v6731
      %v6733 = vmul.f32 %v6335, 1.442695
      %v6734 = vpow.pop %v6733
      %v6735 = vmul.f32 %v6336, 1.442695
      %v6736 = vpow.pop %v6735
      %v6737 = vmul.f32 %v6337, 1.442695
      %v6738 = vpow.pop %v6737
      %v6739 = vmul.f32 %v6338, 1.442695
      %v6740 = vpow.pop %v6739
      %v6741 = vmul.f32 %v6339, 1.442695
      %v6742 = vpow.pop %v6741
      %v6743 = vmul.f32 %v6340, 1.442695
      %v6744 = vpow.pop %v6743
      %v6745 = vmul.f32 %v6341, 1.442695
      %v6746 = vpow.pop %v6745
      %v6747 = vmul.f32 %v6342, 1.442695
      %v6748 = vpow.pop %v6747
      %v6749 = vmul.f32 %v6343, 1.442695
      %v6750 = vpow.pop %v6749
      %v6751 = vmul.f32 %v6344, 1.442695
      %v6752 = vpow.pop %v6751
      %v6753 = vmul.f32 %v6345, 1.442695
      %v6754 = vpow.pop %v6753
      %v6755 = vmul.f32 %v6346, 1.442695
      %v6756 = vpow.pop %v6755
      %v6757 = vmul.f32 %v6347, 1.442695
      %v6758 = vpow.pop %v6757
      %v6759 = vmul.f32 %v6348, 1.442695
      %v6760 = vpow.pop %v6759
      %v6761 = vmul.f32 %v6349, 1.442695
      %v6762 = vpow.pop %v6761
      %v6763 = vmul.f32 %v6350, 1.442695
      %v6764 = vpow.pop %v6763
      %v6765 = vmul.f32 %v6351, 1.442695
      %v6766 = vpow.pop %v6765
      %v6767 = vmul.f32 %v6352, 1.442695
      %v6768 = vpow.pop %v6767
      %v6769 = vmul.f32 %v6353, 1.442695
      %v6770 = vpow.pop %v6769
      %v6771 = vmul.f32 %v6354, 1.442695
      %v6772 = vpow.pop %v6771
      %v6773 = vmul.f32 %v6355, 1.442695
      %v6774 = vpow.pop %v6773
      %v6775 = vmul.f32 %v6356, 1.442695
      %v6776 = vpow.pop %v6775
      %v6777 = vmul.f32 %v6357, 1.442695
      %v6778 = vpow.pop %v6777
      %v6779 = vmul.f32 %v6358, 1.442695
      %v6780 = vpow.pop %v6779
      %v6781 = vmul.f32 %v6359, 1.442695
      %v6782 = vpow.pop %v6781
      %v6783 = vmul.f32 %v6360, 1.442695
      %v6784 = vpow.pop %v6783
      %v6785 = vmul.f32 %v6361, 1.442695
      %v6786 = vpow.pop %v6785
      %v6787 = vmul.f32 %v6362, 1.442695
      %v6788 = vpow.pop %v6787
      %v6789 = vmul.f32 %v6363, 1.442695
      %v6790 = vpow.pop %v6789
      %v6791 = vmul.f32 %v6364, 1.442695
      %v6792 = vpow.pop %v6791
      %v6793 = vmul.f32 %v6365, 1.442695
      %v6794 = vpow.pop %v6793
      %v6795 = vmul.f32 %v6366, 1.442695
      %v6796 = vpow.pop %v6795
      %v6797 = vmul.f32 %v6367, 1.442695
      %v6798 = vpow.pop %v6797
      %v6799 = vmul.f32 %v6368, 1.442695
      %v6800 = vpow.pop %v6799
      %v6801 = vmul.f32 %v6369, 1.442695
      %v6802 = vpow.pop %v6801
      %v6803 = vmul.f32 %v6370, 1.442695
      %v6804 = vpow.pop %v6803
      %v6805 = vmul.f32 %v6371, 1.442695
      %v6806 = vpow.pop %v6805
      %v6807 = vmul.f32 %v6372, 1.442695
      %v6808 = vpow.pop %v6807
      %v6809 = vmul.f32 %v6373, 1.442695
      %v6810 = vpow.pop %v6809
      %v6811 = vmul.f32 %v6374, 1.442695
      %v6812 = vpow.pop %v6811
      %v6813 = vmul.f32 %v6375, 1.442695
      %v6814 = vpow.pop %v6813
      %v6815 = vmul.f32 %v6376, 1.442695
      %v6816 = vpow.pop %v6815
      %v6817 = vmul.f32 %v6377, 1.442695
      %v6818 = vpow.pop %v6817
      %v6819 = vmul.f32 %v6378, 1.442695
      %v6820 = vpow.pop %v6819
      %v6821 = vmul.f32 %v6379, 1.442695
      %v6822 = vpow.pop %v6821
      %v6823 = vmul.f32 %v6380, 1.442695
      %v6824 = vpow.pop %v6823
      %v6825 = vmul.f32 %v6381, 1.442695
      %v6826 = vpow.pop %v6825
      %v6827 = vmul.f32 %v6382, 1.442695
      %v6828 = vpow.pop %v6827
      %v6829 = vmul.f32 %v6383, 1.442695
      %v6830 = vpow.pop %v6829
      %v6831 = vmul.f32 %v6384, 1.442695
      %v6832 = vpow.pop %v6831
      %v6833 = vmul.f32 %v6385, 1.442695
      %v6834 = vpow.pop %v6833
      %v6835 = vmul.f32 %v6386, 1.442695
      %v6836 = vpow.pop %v6835
      %v6837 = vmul.f32 %v6387, 1.442695
      %v6838 = vpow.pop %v6837
      %v6839 = vmul.f32 %v6388, 1.442695
      %v6840 = vpow.pop %v6839
      %v6841 = vmul.f32 %v6389, 1.442695
      %v6842 = vpow.pop %v6841
      %v6843 = vmul.f32 %v6390, 1.442695
      %v6844 = vpow.pop %v6843
      %v6845 = vmul.f32 %v6391, 1.442695
      %v6846 = vpow.pop %v6845
      %v6847 = vmul.f32 %v6392, 1.442695
      %v6848 = vpow.pop %v6847
      %v6849 = vmul.f32 %v6393, 1.442695
      %v6850 = vpow.pop %v6849
      %v6851 = vmul.f32 %v6394, 1.442695
      %v6852 = vpow.pop %v6851
      %v6853 = vmul.f32 %v6395, 1.442695
      %v6854 = vpow.pop %v6853
      %v6855 = vmul.f32 %v6396, 1.442695
      %v6856 = vpow.pop %v6855
      %v6857 = vmul.f32 %v6397, 1.442695
      %v6858 = vpow.pop %v6857
      %v6859 = vmul.f32 %v6398, 1.442695
      %v6860 = vpow.pop %v6859
      %v6861 = vmul.f32 %v6399, 1.442695
      %v6862 = vpow.pop %v6861
      %v6863 = vmul.f32 %v6400, 1.442695
      %v6864 = vpow.pop %v6863
      %v6865 = vmul.f32 %v6401, 1.442695
      %v6866 = vpow.pop %v6865
      %v6867 = vmul.f32 %v6402, 1.442695
      %v6868 = vpow.pop %v6867
      %v6869 = vmul.f32 %v6403, 1.442695
      %v6870 = vpow.pop %v6869
      %v6871 = vmul.f32 %v6404, 1.442695
      %v6872 = vpow.pop %v6871
      %v6873 = vmul.f32 %v6405, 1.442695
      %v6874 = vpow.pop %v6873
      %v6875 = vmul.f32 %v6406, 1.442695
      %v6876 = vpow.pop %v6875
      %v6877 = vmul.f32 %v6407, 1.442695
      %v6878 = vpow.pop %v6877
      %v6879 = vmul.f32 %v6408, 1.442695
      %v6880 = vpow.pop %v6879
      %v6881 = vmul.f32 %v6409, 1.442695
      %v6882 = vpow.pop %v6881
      %v6883 = vmul.f32 %v6410, 1.442695
      %v6884 = vpow.pop %v6883
      %v6885 = vmul.f32 %v6411, 1.442695
      %v6886 = vpow.pop %v6885
      %v6887 = vmul.f32 %v6412, 1.442695
      %v6888 = vpow.pop %v6887
      %v6889 = vmul.f32 %v6413, 1.442695
      %v6890 = vpow.pop %v6889
      %v6891 = vmul.f32 %v6414, 1.442695
      %v6892 = vpow.pop %v6891
      %v6893 = vmul.f32 %v6415, 1.442695
      %v6894 = vpow.pop %v6893
      %v6895 = vmul.f32 %v6416, 1.442695
      %v6896 = vpow.pop %v6895
      %v6897 = vmul.f32 %v6417, 1.442695
      %v6898 = vpow.pop %v6897
      %v6899 = vmul.f32 %v6418, 1.442695
      %v6900 = vpow.pop %v6899
      %v6901 = vmul.f32 %v6419, 1.442695
      %v6902 = vpow.pop %v6901
      %v6903 = vmul.f32 %v6420, 1.442695
      %v6904 = vpow.pop %v6903
      %v6905 = vmul.f32 %v6421, 1.442695
      %v6906 = vpow.pop %v6905
      %v6907 = vmul.f32 %v6422, 1.442695
      %v6908 = vpow.pop %v6907
      %v6909 = vmul.f32 %v6423, 1.442695
      %v6910 = vpow.pop %v6909
      %v6911 = vmul.f32 %v6424, 1.442695
      %v6912 = vpow.pop %v6911
      %v6913 = vmul.f32 %v6425, 1.442695
      %v6914 = vpow.pop %v6913
      %v6915 = vmul.f32 %v6426, 1.442695
      %v6916 = vpow.pop %v6915
      %v6917 = vmul.f32 %v6427, 1.442695
      %v6918 = vpow.pop %v6917
      %v6919 = vmul.f32 %v6428, 1.442695
      %v6920 = vpow.pop %v6919
      %v6921 = vmul.f32 %v6429, 1.442695
      %v6922 = vpow.pop %v6921
      %v6923 = vmul.f32 %v6430, 1.442695
      %v6924 = vpow.pop %v6923
      %v6925 = vmul.f32 %v6431, 1.442695
      %v6926 = vpow.pop %v6925
      %v6927 = vmul.f32 %v6432, 1.442695
      %v6928 = vpow.pop %v6927
      %v6929 = vmul.f32 %v6433, 1.442695
      %v6930 = vpow.pop %v6929
      %v6931 = vmul.f32 %v6434, 1.442695
      %v6932 = vpow.pop %v6931
      %v6933 = vmul.f32 %v6435, 1.442695
      %v6934 = vpow.pop %v6933
      %v6935 = vmul.f32 %v6436, 1.442695
      %v6936 = vpow.pop %v6935
      %v6937 = vmul.f32 %v6437, 1.442695
      %v6938 = vpow.pop %v6937
      %v6939 = vmul.f32 %v6438, 1.442695
      %v6940 = vpow.pop %v6939
      %v6941 = vmul.f32 %v6439, 1.442695
      %v6942 = vpow.pop %v6941
      %v6943 = vmul.f32 %v6440, 1.442695
      %v6944 = vpow.pop %v6943
      %v6945 = vmul.f32 %v6441, 1.442695
      %v6946 = vpow.pop %v6945
      %v6947 = vmul.f32 %v6442, 1.442695
      %v6948 = vpow.pop %v6947
      %v6949 = vmul.f32 %v6443, 1.442695
      %v6950 = vpow.pop %v6949
      %v6951 = vmul.f32 %v6444, 1.442695
      %v6952 = vpow.pop %v6951
      %v6953 = vmul.f32 %v6445, 1.442695
      %v6954 = vpow.pop %v6953
      %v6955 = vmul.f32 %v6446, 1.442695
      %v6956 = vpow.pop %v6955
      %v6957 = vmul.f32 %v6447, 1.442695
      %v6958 = vpow.pop %v6957
      %v6959 = vmul.f32 %v6448, 1.442695
      %v6960 = vpow.pop %v6959
      %v6961 = vmul.f32 %v6449, 1.442695
      %v6962 = vpow.pop %v6961
      %v6963 = vmul.f32 %v6450, 1.442695
      %v6964 = vpow.pop %v6963
      %v6965 = vmul.f32 %v6451, 1.442695
      %v6966 = vpow.pop %v6965
      %v6967 = vmul.f32 %v6452, 1.442695
      %v6968 = vpow.pop %v6967
      %v6969 = vmul.f32 %v6453, 1.442695
      %v6970 = vpow.pop %v6969
      %v6971 = vmul.f32 %v6454, 1.442695
      %v6972 = vpow.pop %v6971
      %v6973 = vmul.f32 %v6455, 1.442695
      %v6974 = vpow.pop %v6973
      %v6975 = vmul.f32 %v6456, 1.442695
      %v6976 = vpow.pop %v6975
      %v6977 = vmul.f32 %v6457, 1.442695
      %v6978 = vpow.pop %v6977
      %v6979 = vmul.f32 %v6458, 1.442695
      %v6980 = vpow.pop %v6979
      %v6981 = vmul.f32 %v6459, 1.442695
      %v6982 = vpow.pop %v6981
      %v6983 = vmul.f32 %v6460, 1.442695
      %v6984 = vpow.pop %v6983
      %v6985 = vmul.f32 %v6461, 1.442695
      %v6986 = vpow.pop %v6985
      %v6987 = vmul.f32 %v6462, 1.442695
      %v6988 = vpow.pop %v6987
      %v6989 = vmul.f32 %v6463, 1.442695
      %v6990 = vpow.pop %v6989
      %v6991 = vmul.f32 %v6464, 1.442695
      %v6992 = vpow.pop %v6991
      %v6993 = vmul.f32 %v6465, 1.442695
      %v6994 = vpow.pop %v6993
      %v6995 = vmul.f32 %v6466, 1.442695
      %v6996 = vpow.pop %v6995
      %v6997 = vmul.f32 %v6467, 1.442695
      %v6998 = vpow.pop %v6997
      %v6999 = vmul.f32 %v6468, 1.442695
      %v7000 = vpow.pop %v6999
      %v7001 = vmul.f32 %v6469, 1.442695
      %v7002 = vpow.pop %v7001
      %v7003 = vmul.f32 %v6470, 1.442695
      %v7004 = vpow.pop %v7003
      %v7005 = vmul.f32 %v6471, 1.442695
      %v7006 = vpow.pop %v7005
      %v7007 = vmul.f32 %v6472, 1.442695
      %v7008 = vpow.pop %v7007
      %v7009 = vmul.f32 %v6473, 1.442695
      %v7010 = vpow.pop %v7009
      %v7011 = vmul.f32 %v6474, 1.442695
      %v7012 = vpow.pop %v7011
      %v7013 = vmul.f32 %v6475, 1.442695
      %v7014 = vpow.pop %v7013
      %v7015 = vmul.f32 %v6476, 1.442695
      %v7016 = vpow.pop %v7015
      %v7017 = vmul.f32 %v6477, 1.442695
      %v7018 = vpow.pop %v7017
      %v7019 = vmul.f32 %v6478, 1.442695
      %v7020 = vpow.pop %v7019
      %v7021 = vmul.f32 %v6479, 1.442695
      %v7022 = vpow.pop %v7021
      %v7023 = vmul.f32 %v6480, 1.442695
      %v7024 = vpow.pop %v7023
      %v7025 = vmul.f32 %v6481, 1.442695
      %v7026 = vpow.pop %v7025
      %v7027 = vmul.f32 %v6482, 1.442695
      %v7028 = vpow.pop %v7027
      %v7029 = vmul.f32 %v6483, 1.442695
      %v7030 = vpow.pop %v7029
      %v7031 = vmul.f32 %v6484, 1.442695
      %v7032 = vpow.pop %v7031
      %v7033 = vmul.f32 %v6485, 1.442695
      %v7034 = vpow.pop %v7033
      %v7035 = vmul.f32 %v6486, 1.442695
      %v7036 = vpow.pop %v7035
      %v7037 = vmul.f32 %v6487, 1.442695
      %v7038 = vpow.pop %v7037
      %v7039 = vmul.f32 %v6488, 1.442695
      %v7040 = vpow.pop %v7039
      %v7041 = vmul.f32 %v6489, 1.442695
      %v7042 = vpow.pop %v7041
      %v7043 = vmul.f32 %v6490, 1.442695
      %v7044 = vpow.pop %v7043
      %v7045 = vmul.f32 %v6491, 1.442695
      %v7046 = vpow.pop %v7045
      %v7047 = vmul.f32 %v6492, 1.442695
      %v7048 = vpow.pop %v7047
      %v7049 = vmul.f32 %v6493, 1.442695
      %v7050 = vpow.pop %v7049
      %v7051 = vmul.f32 %v6494, 1.442695
      %v7052 = vpow.pop %v7051
      %v7053 = vmul.f32 %v6495, 1.442695
      %v7054 = vpow.pop %v7053
      %v7055 = vmul.f32 %v6496, 1.442695
      %v7056 = vpow.pop %v7055
      %v7057 = vmul.f32 %v6497, 1.442695
      %v7058 = vpow.pop %v7057
      %v7059 = vmul.f32 %v6498, 1.442695
      %v7060 = vpow.pop %v7059
      %v7061 = vmul.f32 %v6499, 1.442695
      %v7062 = vpow.pop %v7061
      %v7063 = vmul.f32 %v6500, 1.442695
      %v7064 = vpow.pop %v7063
      %v7065 = vmul.f32 %v6501, 1.442695
      %v7066 = vpow.pop %v7065
      %v7067 = vmul.f32 %v6502, 1.442695
      %v7068 = vpow.pop %v7067
      %v7069 = vmul.f32 %v6503, 1.442695
      %v7070 = vpow.pop %v7069
      %v7071 = vmul.f32 %v6504, 1.442695
      %v7072 = vpow.pop %v7071
      %v7073 = vmul.f32 %v6505, 1.442695
      %v7074 = vpow.pop %v7073
      %v7075 = vmul.f32 %v6506, 1.442695
      %v7076 = vpow.pop %v7075
      %v7077 = vmul.f32 %v6507, 1.442695
      %v7078 = vpow.pop %v7077
      %v7079 = vmul.f32 %v6508, 1.442695
      %v7080 = vpow.pop %v7079
      %v7081 = vmul.f32 %v6509, 1.442695
      %v7082 = vpow.pop %v7081
      %v7083 = vmul.f32 %v6510, 1.442695
      %v7084 = vpow.pop %v7083
      %v7085 = vmul.f32 %v6511, 1.442695
      %v7086 = vpow.pop %v7085
      %v7087 = vmul.f32 %v6512, 1.442695
      %v7088 = vpow.pop %v7087
      %v7089 = vmul.f32 %v6513, 1.442695
      %v7090 = vpow.pop %v7089
      %v7091 = vmul.f32 %v6514, 1.442695
      %v7092 = vpow.pop %v7091
      %v7093 = vmul.f32 %v6515, 1.442695
      %v7094 = vpow.pop %v7093
      %v7095 = vmul.f32 %v6516, 1.442695
      %v7096 = vpow.pop %v7095
      %v7097 = vmul.f32 %v6517, 1.442695
      %v7098 = vpow.pop %v7097
      %v7099 = vmul.f32 %v6518, 1.442695
      %v7100 = vpow.pop %v7099
      %v7101 = vmul.f32 %v6519, 1.442695
      %v7102 = vpow.pop %v7101
      %v7103 = vmul.f32 %v6520, 1.442695
      %v7104 = vpow.pop %v7103
      %v7105 = vmul.f32 %v6521, 1.442695
      %v7106 = vpow.pop %v7105
      %v7107 = vmul.f32 %v6522, 1.442695
      %v7108 = vpow.pop %v7107
      %v7109 = vmul.f32 %v6523, 1.442695
      %v7110 = vpow.pop %v7109
      %v7111 = vmul.f32 %v6524, 1.442695
      %v7112 = vpow.pop %v7111
      %v7113 = vmul.f32 %v6525, 1.442695
      %v7114 = vpow.pop %v7113
      %v7115 = vmul.f32 %v6526, 1.442695
      %v7116 = vpow.pop %v7115
      %v7117 = vmul.f32 %v6527, 1.442695
      %v7118 = vpow.pop %v7117
      %v7119 = vmul.f32 %v6528, 1.442695
      %v7120 = vpow.pop %v7119
      %v7121 = vmul.f32 %v6529, 1.442695
      %v7122 = vpow.pop %v7121
      %v7123 = vmul.f32 %v6530, 1.442695
      %v7124 = vpow.pop %v7123
      %v7125 = vmul.f32 %v6531, 1.442695
      %v7126 = vpow.pop %v7125
      %v7127 = vmul.f32 %v6532, 1.442695
      %v7128 = vpow.pop %v7127
      %v7129 = vmul.f32 %v6533, 1.442695
      %v7130 = vpow.pop %v7129
      %v7131 = vmul.f32 %v6534, 1.442695
      %v7132 = vpow.pop %v7131
      %v7133 = vmul.f32 %v6535, 1.442695
      %v7134 = vpow.pop %v7133
      %v7135 = vmul.f32 %v6536, 1.442695
      %v7136 = vpow.pop %v7135
      %v7137 = vmul.f32 %v6537, 1.442695
      %v7138 = vpow.pop %v7137
      %v7139 = vmul.f32 %v6538, 1.442695
      %v7140 = vpow.pop %v7139
      %v7141 = vmul.f32 %v6539, 1.442695
      %v7142 = vpow.pop %v7141
      %v7143 = vmul.f32 %v6540, 1.442695
      %v7144 = vpow.pop %v7143
      %v7145 = vmul.f32 %v6541, 1.442695
      %v7146 = vpow.pop %v7145
      %v7147 = vmul.f32 %v6542, 1.442695
      %v7148 = vpow.pop %v7147
      %v7149 = vmul.f32 %v6543, 1.442695
      %v7150 = vpow.pop %v7149
      %v7151 = vmul.f32 %v6544, 1.442695
      %v7152 = vpow.pop %v7151
      %v7153 = vmul.f32 %v6545, 1.442695
      %v7154 = vpow.pop %v7153
      %v7155 = vmul.f32 %v6546, 1.442695
      %v7156 = vpow.pop %v7155
      %v7157 = vmul.f32 %v6547, 1.442695
      %v7158 = vpow.pop %v7157
      %v7159 = vmul.f32 %v6548, 1.442695
      %v7160 = vpow.pop %v7159
      %v7161 = vmul.f32 %v6549, 1.442695
      %v7162 = vpow.pop %v7161
      %v7163 = vmul.f32 %v6550, 1.442695
      %v7164 = vpow.pop %v7163
      %v7165 = vmul.f32 %v6551, 1.442695
      %v7166 = vpow.pop %v7165
      %v7167 = vmul.f32 %v6552, 1.442695
      %v7168 = vpow.pop %v7167
      %v7169 = vmul.f32 %v6553, 1.442695
      %v7170 = vpow.pop %v7169
      %v7171 = vmul.f32 %v6554, 1.442695
      %v7172 = vpow.pop %v7171
      %v7173 = vmul.f32 %v6555, 1.442695
      %v7174 = vpow.pop %v7173
      %v7175 = vmul.f32 %v6556, 1.442695
      %v7176 = vpow.pop %v7175
      %v7177 = vmul.f32 %v6557, 1.442695
      %v7178 = vpow.pop %v7177
      %v7179 = vmul.f32 %v6558, 1.442695
      %v7180 = vpow.pop %v7179
      %v7181 = vmul.f32 %v6559, 1.442695
      %v7182 = vpow.pop %v7181
      %v7183 = vmul.f32 %v6560, 1.442695
      %v7184 = vpow.pop %v7183
      %v7185 = vmul.f32 %v6561, 1.442695
      %v7186 = vpow.pop %v7185
      %v7187 = vmul.f32 %v6562, 1.442695
      %v7188 = vpow.pop %v7187
      %v7189 = vmul.f32 %v6563, 1.442695
      %v7190 = vpow.pop %v7189
      %v7191 = vmul.f32 %v6564, 1.442695
      %v7192 = vpow.pop %v7191
      %v7193 = vmul.f32 %v6565, 1.442695
      %v7194 = vpow.pop %v7193
      %v7195 = vmul.f32 %v6566, 1.442695
      %v7196 = vpow.pop %v7195
      %v7197 = vmul.f32 %v6567, 1.442695
      %v7198 = vpow.pop %v7197
      %v7199 = vmul.f32 %v6568, 1.442695
      %v7200 = vpow.pop %v7199
      %v7201 = vmul.f32 %v6569, 1.442695
      %v7202 = vpow.pop %v7201
      %v7203 = vmul.f32 %v6570, 1.442695
      %v7204 = vpow.pop %v7203
      %v7205 = vmul.f32 %v6571, 1.442695
      %v7206 = vpow.pop %v7205
      %v7207 = vmul.f32 %v6572, 1.442695
      %v7208 = vpow.pop %v7207
      %v7209 = vmul.f32 %v6573, 1.442695
      %v7210 = vpow.pop %v7209
      %v7211 = vmul.f32 %v6574, 1.442695
      %v7212 = vpow.pop %v7211
      %v7213 = vmul.f32 %v6575, 1.442695
      %v7214 = vpow.pop %v7213
      %v7215 = vmul.f32 %v6576, 1.442695
      %v7216 = vpow.pop %v7215
      %v7217 = vsub.f32 1.0, %v6578
      %v7218 = vsub.f32 1.0, %v6580
      %v7219 = vsub.f32 1.0, %v6582
      %v7220 = vsub.f32 1.0, %v6584
      %v7221 = vsub.f32 1.0, %v6586
      %v7222 = vsub.f32 1.0, %v6588
      %v7223 = vsub.f32 1.0, %v6590
      %v7224 = vsub.f32 1.0, %v6592
      %v7225 = vsub.f32 1.0, %v6594
      %v7226 = vsub.f32 1.0, %v6596
      %v7227 = vsub.f32 1.0, %v6598
      %v7228 = vsub.f32 1.0, %v6600
      %v7229 = vsub.f32 1.0, %v6602
      %v7230 = vsub.f32 1.0, %v6604
      %v7231 = vsub.f32 1.0, %v6606
      %v7232 = vsub.f32 1.0, %v6608
      %v7233 = vsub.f32 1.0, %v6610
      %v7234 = vsub.f32 1.0, %v6612
      %v7235 = vsub.f32 1.0, %v6614
      %v7236 = vsub.f32 1.0, %v6616
      %v7237 = vsub.f32 1.0, %v6618
      %v7238 = vsub.f32 1.0, %v6620
      %v7239 = vsub.f32 1.0, %v6622
      %v7240 = vsub.f32 1.0, %v6624
      %v7241 = vsub.f32 1.0, %v6626
      %v7242 = vsub.f32 1.0, %v6628
      %v7243 = vsub.f32 1.0, %v6630
      %v7244 = vsub.f32 1.0, %v6632
      %v7245 = vsub.f32 1.0, %v6634
      %v7246 = vsub.f32 1.0, %v6636
      %v7247 = vsub.f32 1.0, %v6638
      %v7248 = vsub.f32 1.0, %v6640
      %v7249 = vsub.f32 1.0, %v6642
      %v7250 = vsub.f32 1.0, %v6644
      %v7251 = vsub.f32 1.0, %v6646
      %v7252 = vsub.f32 1.0, %v6648
      %v7253 = vsub.f32 1.0, %v6650
      %v7254 = vsub.f32 1.0, %v6652
      %v7255 = vsub.f32 1.0, %v6654
      %v7256 = vsub.f32 1.0, %v6656
      %v7257 = vsub.f32 1.0, %v6658
      %v7258 = vsub.f32 1.0, %v6660
      %v7259 = vsub.f32 1.0, %v6662
      %v7260 = vsub.f32 1.0, %v6664
      %v7261 = vsub.f32 1.0, %v6666
      %v7262 = vsub.f32 1.0, %v6668
      %v7263 = vsub.f32 1.0, %v6670
      %v7264 = vsub.f32 1.0, %v6672
      %v7265 = vsub.f32 1.0, %v6674
      %v7266 = vsub.f32 1.0, %v6676
      %v7267 = vsub.f32 1.0, %v6678
      %v7268 = vsub.f32 1.0, %v6680
      %v7269 = vsub.f32 1.0, %v6682
      %v7270 = vsub.f32 1.0, %v6684
      %v7271 = vsub.f32 1.0, %v6686
      %v7272 = vsub.f32 1.0, %v6688
      %v7273 = vsub.f32 1.0, %v6690
      %v7274 = vsub.f32 1.0, %v6692
      %v7275 = vsub.f32 1.0, %v6694
      %v7276 = vsub.f32 1.0, %v6696
      %v7277 = vsub.f32 1.0, %v6698
      %v7278 = vsub.f32 1.0, %v6700
      %v7279 = vsub.f32 1.0, %v6702
      %v7280 = vsub.f32 1.0, %v6704
      %v7281 = vsub.f32 1.0, %v6706
      %v7282 = vsub.f32 1.0, %v6708
      %v7283 = vsub.f32 1.0, %v6710
      %v7284 = vsub.f32 1.0, %v6712
      %v7285 = vsub.f32 1.0, %v6714
      %v7286 = vsub.f32 1.0, %v6716
      %v7287 = vsub.f32 1.0, %v6718
      %v7288 = vsub.f32 1.0, %v6720
      %v7289 = vsub.f32 1.0, %v6722
      %v7290 = vsub.f32 1.0, %v6724
      %v7291 = vsub.f32 1.0, %v6726
      %v7292 = vsub.f32 1.0, %v6728
      %v7293 = vsub.f32 1.0, %v6730
      %v7294 = vsub.f32 1.0, %v6732
      %v7295 = vsub.f32 1.0, %v6734
      %v7296 = vsub.f32 1.0, %v6736
      %v7297 = vsub.f32 1.0, %v6738
      %v7298 = vsub.f32 1.0, %v6740
      %v7299 = vsub.f32 1.0, %v6742
      %v7300 = vsub.f32 1.0, %v6744
      %v7301 = vsub.f32 1.0, %v6746
      %v7302 = vsub.f32 1.0, %v6748
      %v7303 = vsub.f32 1.0, %v6750
      %v7304 = vsub.f32 1.0, %v6752
      %v7305 = vsub.f32 1.0, %v6754
      %v7306 = vsub.f32 1.0, %v6756
      %v7307 = vsub.f32 1.0, %v6758
      %v7308 = vsub.f32 1.0, %v6760
      %v7309 = vsub.f32 1.0, %v6762
      %v7310 = vsub.f32 1.0, %v6764
      %v7311 = vsub.f32 1.0, %v6766
      %v7312 = vsub.f32 1.0, %v6768
      %v7313 = vsub.f32 1.0, %v6770
      %v7314 = vsub.f32 1.0, %v6772
      %v7315 = vsub.f32 1.0, %v6774
      %v7316 = vsub.f32 1.0, %v6776
      %v7317 = vsub.f32 1.0, %v6778
      %v7318 = vsub.f32 1.0, %v6780
      %v7319 = vsub.f32 1.0, %v6782
      %v7320 = vsub.f32 1.0, %v6784
      %v7321 = vsub.f32 1.0, %v6786
      %v7322 = vsub.f32 1.0, %v6788
      %v7323 = vsub.f32 1.0, %v6790
      %v7324 = vsub.f32 1.0, %v6792
      %v7325 = vsub.f32 1.0, %v6794
      %v7326 = vsub.f32 1.0, %v6796
      %v7327 = vsub.f32 1.0, %v6798
      %v7328 = vsub.f32 1.0, %v6800
      %v7329 = vsub.f32 1.0, %v6802
      %v7330 = vsub.f32 1.0, %v6804
      %v7331 = vsub.f32 1.0, %v6806
      %v7332 = vsub.f32 1.0, %v6808
      %v7333 = vsub.f32 1.0, %v6810
      %v7334 = vsub.f32 1.0, %v6812
      %v7335 = vsub.f32 1.0, %v6814
      %v7336 = vsub.f32 1.0, %v6816
      %v7337 = vsub.f32 1.0, %v6818
      %v7338 = vsub.f32 1.0, %v6820
      %v7339 = vsub.f32 1.0, %v6822
      %v7340 = vsub.f32 1.0, %v6824
      %v7341 = vsub.f32 1.0, %v6826
      %v7342 = vsub.f32 1.0, %v6828
      %v7343 = vsub.f32 1.0, %v6830
      %v7344 = vsub.f32 1.0, %v6832
      %v7345 = vsub.f32 1.0, %v6834
      %v7346 = vsub.f32 1.0, %v6836
      %v7347 = vsub.f32 1.0, %v6838
      %v7348 = vsub.f32 1.0, %v6840
      %v7349 = vsub.f32 1.0, %v6842
      %v7350 = vsub.f32 1.0, %v6844
      %v7351 = vsub.f32 1.0, %v6846
      %v7352 = vsub.f32 1.0, %v6848
      %v7353 = vsub.f32 1.0, %v6850
      %v7354 = vsub.f32 1.0, %v6852
      %v7355 = vsub.f32 1.0, %v6854
      %v7356 = vsub.f32 1.0, %v6856
      %v7357 = vsub.f32 1.0, %v6858
      %v7358 = vsub.f32 1.0, %v6860
      %v7359 = vsub.f32 1.0, %v6862
      %v7360 = vsub.f32 1.0, %v6864
      %v7361 = vsub.f32 1.0, %v6866
      %v7362 = vsub.f32 1.0, %v6868
      %v7363 = vsub.f32 1.0, %v6870
      %v7364 = vsub.f32 1.0, %v6872
      %v7365 = vsub.f32 1.0, %v6874
      %v7366 = vsub.f32 1.0, %v6876
      %v7367 = vsub.f32 1.0, %v6878
      %v7368 = vsub.f32 1.0, %v6880
      %v7369 = vsub.f32 1.0, %v6882
      %v7370 = vsub.f32 1.0, %v6884
      %v7371 = vsub.f32 1.0, %v6886
      %v7372 = vsub.f32 1.0, %v6888
      %v7373 = vsub.f32 1.0, %v6890
      %v7374 = vsub.f32 1.0, %v6892
      %v7375 = vsub.f32 1.0, %v6894
      %v7376 = vsub.f32 1.0, %v6896
      %v7377 = vsub.f32 1.0, %v6898
      %v7378 = vsub.f32 1.0, %v6900
      %v7379 = vsub.f32 1.0, %v6902
      %v7380 = vsub.f32 1.0, %v6904
      %v7381 = vsub.f32 1.0, %v6906
      %v7382 = vsub.f32 1.0, %v6908
      %v7383 = vsub.f32 1.0, %v6910
      %v7384 = vsub.f32 1.0, %v6912
      %v7385 = vsub.f32 1.0, %v6914
      %v7386 = vsub.f32 1.0, %v6916
      %v7387 = vsub.f32 1.0, %v6918
      %v7388 = vsub.f32 1.0, %v6920
      %v7389 = vsub.f32 1.0, %v6922
      %v7390 = vsub.f32 1.0, %v6924
      %v7391 = vsub.f32 1.0, %v6926
      %v7392 = vsub.f32 1.0, %v6928
      %v7393 = vsub.f32 1.0, %v6930
      %v7394 = vsub.f32 1.0, %v6932
      %v7395 = vsub.f32 1.0, %v6934
      %v7396 = vsub.f32 1.0, %v6936
      %v7397 = vsub.f32 1.0, %v6938
      %v7398 = vsub.f32 1.0, %v6940
      %v7399 = vsub.f32 1.0, %v6942
      %v7400 = vsub.f32 1.0, %v6944
      %v7401 = vsub.f32 1.0, %v6946
      %v7402 = vsub.f32 1.0, %v6948
      %v7403 = vsub.f32 1.0, %v6950
      %v7404 = vsub.f32 1.0, %v6952
      %v7405 = vsub.f32 1.0, %v6954
      %v7406 = vsub.f32 1.0, %v6956
      %v7407 = vsub.f32 1.0, %v6958
      %v7408 = vsub.f32 1.0, %v6960
      %v7409 = vsub.f32 1.0, %v6962
      %v7410 = vsub.f32 1.0, %v6964
      %v7411 = vsub.f32 1.0, %v6966
      %v7412 = vsub.f32 1.0, %v6968
      %v7413 = vsub.f32 1.0, %v6970
      %v7414 = vsub.f32 1.0, %v6972
      %v7415 = vsub.f32 1.0, %v6974
      %v7416 = vsub.f32 1.0, %v6976
      %v7417 = vsub.f32 1.0, %v6978
      %v7418 = vsub.f32 1.0, %v6980
      %v7419 = vsub.f32 1.0, %v6982
      %v7420 = vsub.f32 1.0, %v6984
      %v7421 = vsub.f32 1.0, %v6986
      %v7422 = vsub.f32 1.0, %v6988
      %v7423 = vsub.f32 1.0, %v6990
      %v7424 = vsub.f32 1.0, %v6992
      %v7425 = vsub.f32 1.0, %v6994
      %v7426 = vsub.f32 1.0, %v6996
      %v7427 = vsub.f32 1.0, %v6998
      %v7428 = vsub.f32 1.0, %v7000
      %v7429 = vsub.f32 1.0, %v7002
      %v7430 = vsub.f32 1.0, %v7004
      %v7431 = vsub.f32 1.0, %v7006
      %v7432 = vsub.f32 1.0, %v7008
      %v7433 = vsub.f32 1.0, %v7010
      %v7434 = vsub.f32 1.0, %v7012
      %v7435 = vsub.f32 1.0, %v7014
      %v7436 = vsub.f32 1.0, %v7016
      %v7437 = vsub.f32 1.0, %v7018
      %v7438 = vsub.f32 1.0, %v7020
      %v7439 = vsub.f32 1.0, %v7022
      %v7440 = vsub.f32 1.0, %v7024
      %v7441 = vsub.f32 1.0, %v7026
      %v7442 = vsub.f32 1.0, %v7028
      %v7443 = vsub.f32 1.0, %v7030
      %v7444 = vsub.f32 1.0, %v7032
      %v7445 = vsub.f32 1.0, %v7034
      %v7446 = vsub.f32 1.0, %v7036
      %v7447 = vsub.f32 1.0, %v7038
      %v7448 = vsub.f32 1.0, %v7040
      %v7449 = vsub.f32 1.0, %v7042
      %v7450 = vsub.f32 1.0, %v7044
      %v7451 = vsub.f32 1.0, %v7046
      %v7452 = vsub.f32 1.0, %v7048
      %v7453 = vsub.f32 1.0, %v7050
      %v7454 = vsub.f32 1.0, %v7052
      %v7455 = vsub.f32 1.0, %v7054
      %v7456 = vsub.f32 1.0, %v7056
      %v7457 = vsub.f32 1.0, %v7058
      %v7458 = vsub.f32 1.0, %v7060
      %v7459 = vsub.f32 1.0, %v7062
      %v7460 = vsub.f32 1.0, %v7064
      %v7461 = vsub.f32 1.0, %v7066
      %v7462 = vsub.f32 1.0, %v7068
      %v7463 = vsub.f32 1.0, %v7070
      %v7464 = vsub.f32 1.0, %v7072
      %v7465 = vsub.f32 1.0, %v7074
      %v7466 = vsub.f32 1.0, %v7076
      %v7467 = vsub.f32 1.0, %v7078
      %v7468 = vsub.f32 1.0, %v7080
      %v7469 = vsub.f32 1.0, %v7082
      %v7470 = vsub.f32 1.0, %v7084
      %v7471 = vsub.f32 1.0, %v7086
      %v7472 = vsub.f32 1.0, %v7088
      %v7473 = vsub.f32 1.0, %v7090
      %v7474 = vsub.f32 1.0, %v7092
      %v7475 = vsub.f32 1.0, %v7094
      %v7476 = vsub.f32 1.0, %v7096
      %v7477 = vsub.f32 1.0, %v7098
      %v7478 = vsub.f32 1.0, %v7100
      %v7479 = vsub.f32 1.0, %v7102
      %v7480 = vsub.f32 1.0, %v7104
      %v7481 = vsub.f32 1.0, %v7106
      %v7482 = vsub.f32 1.0, %v7108
      %v7483 = vsub.f32 1.0, %v7110
      %v7484 = vsub.f32 1.0, %v7112
      %v7485 = vsub.f32 1.0, %v7114
      %v7486 = vsub.f32 1.0, %v7116
      %v7487 = vsub.f32 1.0, %v7118
      %v7488 = vsub.f32 1.0, %v7120
      %v7489 = vsub.f32 1.0, %v7122
      %v7490 = vsub.f32 1.0, %v7124
      %v7491 = vsub.f32 1.0, %v7126
      %v7492 = vsub.f32 1.0, %v7128
      %v7493 = vsub.f32 1.0, %v7130
      %v7494 = vsub.f32 1.0, %v7132
      %v7495 = vsub.f32 1.0, %v7134
      %v7496 = vsub.f32 1.0, %v7136
      %v7497 = vsub.f32 1.0, %v7138
      %v7498 = vsub.f32 1.0, %v7140
      %v7499 = vsub.f32 1.0, %v7142
      %v7500 = vsub.f32 1.0, %v7144
      %v7501 = vsub.f32 1.0, %v7146
      %v7502 = vsub.f32 1.0, %v7148
      %v7503 = vsub.f32 1.0, %v7150
      %v7504 = vsub.f32 1.0, %v7152
      %v7505 = vsub.f32 1.0, %v7154
      %v7506 = vsub.f32 1.0, %v7156
      %v7507 = vsub.f32 1.0, %v7158
      %v7508 = vsub.f32 1.0, %v7160
      %v7509 = vsub.f32 1.0, %v7162
      %v7510 = vsub.f32 1.0, %v7164
      %v7511 = vsub.f32 1.0, %v7166
      %v7512 = vsub.f32 1.0, %v7168
      %v7513 = vsub.f32 1.0, %v7170
      %v7514 = vsub.f32 1.0, %v7172
      %v7515 = vsub.f32 1.0, %v7174
      %v7516 = vsub.f32 1.0, %v7176
      %v7517 = vsub.f32 1.0, %v7178
      %v7518 = vsub.f32 1.0, %v7180
      %v7519 = vsub.f32 1.0, %v7182
      %v7520 = vsub.f32 1.0, %v7184
      %v7521 = vsub.f32 1.0, %v7186
      %v7522 = vsub.f32 1.0, %v7188
      %v7523 = vsub.f32 1.0, %v7190
      %v7524 = vsub.f32 1.0, %v7192
      %v7525 = vsub.f32 1.0, %v7194
      %v7526 = vsub.f32 1.0, %v7196
      %v7527 = vsub.f32 1.0, %v7198
      %v7528 = vsub.f32 1.0, %v7200
      %v7529 = vsub.f32 1.0, %v7202
      %v7530 = vsub.f32 1.0, %v7204
      %v7531 = vsub.f32 1.0, %v7206
      %v7532 = vsub.f32 1.0, %v7208
      %v7533 = vsub.f32 1.0, %v7210
      %v7534 = vsub.f32 1.0, %v7212
      %v7535 = vsub.f32 1.0, %v7214
      %v7536 = vsub.f32 1.0, %v7216
      %v7537 = vmul.f32 %v7217, %v7217
      %v7538 = vmul.f32 %v7218, %v7218
      %v7539 = vmul.f32 %v7219, %v7219
      %v7540 = vmul.f32 %v7220, %v7220
      %v7541 = vmul.f32 %v7221, %v7221
      %v7542 = vmul.f32 %v7222, %v7222
      %v7543 = vmul.f32 %v7223, %v7223
      %v7544 = vmul.f32 %v7224, %v7224
      %v7545 = vmul.f32 %v7225, %v7225
      %v7546 = vmul.f32 %v7226, %v7226
      %v7547 = vmul.f32 %v7227, %v7227
      %v7548 = vmul.f32 %v7228, %v7228
      %v7549 = vmul.f32 %v7229, %v7229
      %v7550 = vmul.f32 %v7230, %v7230
      %v7551 = vmul.f32 %v7231, %v7231
      %v7552 = vmul.f32 %v7232, %v7232
      %v7553 = vmul.f32 %v7233, %v7233
      %v7554 = vmul.f32 %v7234, %v7234
      %v7555 = vmul.f32 %v7235, %v7235
      %v7556 = vmul.f32 %v7236, %v7236
      %v7557 = vmul.f32 %v7237, %v7237
      %v7558 = vmul.f32 %v7238, %v7238
      %v7559 = vmul.f32 %v7239, %v7239
      %v7560 = vmul.f32 %v7240, %v7240
      %v7561 = vmul.f32 %v7241, %v7241
      %v7562 = vmul.f32 %v7242, %v7242
      %v7563 = vmul.f32 %v7243, %v7243
      %v7564 = vmul.f32 %v7244, %v7244
      %v7565 = vmul.f32 %v7245, %v7245
      %v7566 = vmul.f32 %v7246, %v7246
      %v7567 = vmul.f32 %v7247, %v7247
      %v7568 = vmul.f32 %v7248, %v7248
      %v7569 = vmul.f32 %v7249, %v7249
      %v7570 = vmul.f32 %v7250, %v7250
      %v7571 = vmul.f32 %v7251, %v7251
      %v7572 = vmul.f32 %v7252, %v7252
      %v7573 = vmul.f32 %v7253, %v7253
      %v7574 = vmul.f32 %v7254, %v7254
      %v7575 = vmul.f32 %v7255, %v7255
      %v7576 = vmul.f32 %v7256, %v7256
      %v7577 = vmul.f32 %v7257, %v7257
      %v7578 = vmul.f32 %v7258, %v7258
      %v7579 = vmul.f32 %v7259, %v7259
      %v7580 = vmul.f32 %v7260, %v7260
      %v7581 = vmul.f32 %v7261, %v7261
      %v7582 = vmul.f32 %v7262, %v7262
      %v7583 = vmul.f32 %v7263, %v7263
      %v7584 = vmul.f32 %v7264, %v7264
      %v7585 = vmul.f32 %v7265, %v7265
      %v7586 = vmul.f32 %v7266, %v7266
      %v7587 = vmul.f32 %v7267, %v7267
      %v7588 = vmul.f32 %v7268, %v7268
      %v7589 = vmul.f32 %v7269, %v7269
      %v7590 = vmul.f32 %v7270, %v7270
      %v7591 = vmul.f32 %v7271, %v7271
      %v7592 = vmul.f32 %v7272, %v7272
      %v7593 = vmul.f32 %v7273, %v7273
      %v7594 = vmul.f32 %v7274, %v7274
      %v7595 = vmul.f32 %v7275, %v7275
      %v7596 = vmul.f32 %v7276, %v7276
      %v7597 = vmul.f32 %v7277, %v7277
      %v7598 = vmul.f32 %v7278, %v7278
      %v7599 = vmul.f32 %v7279, %v7279
      %v7600 = vmul.f32 %v7280, %v7280
      %v7601 = vmul.f32 %v7281, %v7281
      %v7602 = vmul.f32 %v7282, %v7282
      %v7603 = vmul.f32 %v7283, %v7283
      %v7604 = vmul.f32 %v7284, %v7284
      %v7605 = vmul.f32 %v7285, %v7285
      %v7606 = vmul.f32 %v7286, %v7286
      %v7607 = vmul.f32 %v7287, %v7287
      %v7608 = vmul.f32 %v7288, %v7288
      %v7609 = vmul.f32 %v7289, %v7289
      %v7610 = vmul.f32 %v7290, %v7290
      %v7611 = vmul.f32 %v7291, %v7291
      %v7612 = vmul.f32 %v7292, %v7292
      %v7613 = vmul.f32 %v7293, %v7293
      %v7614 = vmul.f32 %v7294, %v7294
      %v7615 = vmul.f32 %v7295, %v7295
      %v7616 = vmul.f32 %v7296, %v7296
      %v7617 = vmul.f32 %v7297, %v7297
      %v7618 = vmul.f32 %v7298, %v7298
      %v7619 = vmul.f32 %v7299, %v7299
      %v7620 = vmul.f32 %v7300, %v7300
      %v7621 = vmul.f32 %v7301, %v7301
      %v7622 = vmul.f32 %v7302, %v7302
      %v7623 = vmul.f32 %v7303, %v7303
      %v7624 = vmul.f32 %v7304, %v7304
      %v7625 = vmul.f32 %v7305, %v7305
      %v7626 = vmul.f32 %v7306, %v7306
      %v7627 = vmul.f32 %v7307, %v7307
      %v7628 = vmul.f32 %v7308, %v7308
      %v7629 = vmul.f32 %v7309, %v7309
      %v7630 = vmul.f32 %v7310, %v7310
      %v7631 = vmul.f32 %v7311, %v7311
      %v7632 = vmul.f32 %v7312, %v7312
      %v7633 = vmul.f32 %v7313, %v7313
      %v7634 = vmul.f32 %v7314, %v7314
      %v7635 = vmul.f32 %v7315, %v7315
      %v7636 = vmul.f32 %v7316, %v7316
      %v7637 = vmul.f32 %v7317, %v7317
      %v7638 = vmul.f32 %v7318, %v7318
      %v7639 = vmul.f32 %v7319, %v7319
      %v7640 = vmul.f32 %v7320, %v7320
      %v7641 = vmul.f32 %v7321, %v7321
      %v7642 = vmul.f32 %v7322, %v7322
      %v7643 = vmul.f32 %v7323, %v7323
      %v7644 = vmul.f32 %v7324, %v7324
      %v7645 = vmul.f32 %v7325, %v7325
      %v7646 = vmul.f32 %v7326, %v7326
      %v7647 = vmul.f32 %v7327, %v7327
      %v7648 = vmul.f32 %v7328, %v7328
      %v7649 = vmul.f32 %v7329, %v7329
      %v7650 = vmul.f32 %v7330, %v7330
      %v7651 = vmul.f32 %v7331, %v7331
      %v7652 = vmul.f32 %v7332, %v7332
      %v7653 = vmul.f32 %v7333, %v7333
      %v7654 = vmul.f32 %v7334, %v7334
      %v7655 = vmul.f32 %v7335, %v7335
      %v7656 = vmul.f32 %v7336, %v7336
      %v7657 = vmul.f32 %v7337, %v7337
      %v7658 = vmul.f32 %v7338, %v7338
      %v7659 = vmul.f32 %v7339, %v7339
      %v7660 = vmul.f32 %v7340, %v7340
      %v7661 = vmul.f32 %v7341, %v7341
      %v7662 = vmul.f32 %v7342, %v7342
      %v7663 = vmul.f32 %v7343, %v7343
      %v7664 = vmul.f32 %v7344, %v7344
      %v7665 = vmul.f32 %v7345, %v7345
      %v7666 = vmul.f32 %v7346, %v7346
      %v7667 = vmul.f32 %v7347, %v7347
      %v7668 = vmul.f32 %v7348, %v7348
      %v7669 = vmul.f32 %v7349, %v7349
      %v7670 = vmul.f32 %v7350, %v7350
      %v7671 = vmul.f32 %v7351, %v7351
      %v7672 = vmul.f32 %v7352, %v7352
      %v7673 = vmul.f32 %v7353, %v7353
      %v7674 = vmul.f32 %v7354, %v7354
      %v7675 = vmul.f32 %v7355, %v7355
      %v7676 = vmul.f32 %v7356, %v7356
      %v7677 = vmul.f32 %v7357, %v7357
      %v7678 = vmul.f32 %v7358, %v7358
      %v7679 = vmul.f32 %v7359, %v7359
      %v7680 = vmul.f32 %v7360, %v7360
      %v7681 = vmul.f32 %v7361, %v7361
      %v7682 = vmul.f32 %v7362, %v7362
      %v7683 = vmul.f32 %v7363, %v7363
      %v7684 = vmul.f32 %v7364, %v7364
      %v7685 = vmul.f32 %v7365, %v7365
      %v7686 = vmul.f32 %v7366, %v7366
      %v7687 = vmul.f32 %v7367, %v7367
      %v7688 = vmul.f32 %v7368, %v7368
      %v7689 = vmul.f32 %v7369, %v7369
      %v7690 = vmul.f32 %v7370, %v7370
      %v7691 = vmul.f32 %v7371, %v7371
      %v7692 = vmul.f32 %v7372, %v7372
      %v7693 = vmul.f32 %v7373, %v7373
      %v7694 = vmul.f32 %v7374, %v7374
      %v7695 = vmul.f32 %v7375, %v7375
      %v7696 = vmul.f32 %v7376, %v7376
      %v7697 = vmul.f32 %v7377, %v7377
      %v7698 = vmul.f32 %v7378, %v7378
      %v7699 = vmul.f32 %v7379, %v7379
      %v7700 = vmul.f32 %v7380, %v7380
      %v7701 = vmul.f32 %v7381, %v7381
      %v7702 = vmul.f32 %v7382, %v7382
      %v7703 = vmul.f32 %v7383, %v7383
      %v7704 = vmul.f32 %v7384, %v7384
      %v7705 = vmul.f32 %v7385, %v7385
      %v7706 = vmul.f32 %v7386, %v7386
      %v7707 = vmul.f32 %v7387, %v7387
      %v7708 = vmul.f32 %v7388, %v7388
      %v7709 = vmul.f32 %v7389, %v7389
      %v7710 = vmul.f32 %v7390, %v7390
      %v7711 = vmul.f32 %v7391, %v7391
      %v7712 = vmul.f32 %v7392, %v7392
      %v7713 = vmul.f32 %v7393, %v7393
      %v7714 = vmul.f32 %v7394, %v7394
      %v7715 = vmul.f32 %v7395, %v7395
      %v7716 = vmul.f32 %v7396, %v7396
      %v7717 = vmul.f32 %v7397, %v7397
      %v7718 = vmul.f32 %v7398, %v7398
      %v7719 = vmul.f32 %v7399, %v7399
      %v7720 = vmul.f32 %v7400, %v7400
      %v7721 = vmul.f32 %v7401, %v7401
      %v7722 = vmul.f32 %v7402, %v7402
      %v7723 = vmul.f32 %v7403, %v7403
      %v7724 = vmul.f32 %v7404, %v7404
      %v7725 = vmul.f32 %v7405, %v7405
      %v7726 = vmul.f32 %v7406, %v7406
      %v7727 = vmul.f32 %v7407, %v7407
      %v7728 = vmul.f32 %v7408, %v7408
      %v7729 = vmul.f32 %v7409, %v7409
      %v7730 = vmul.f32 %v7410, %v7410
      %v7731 = vmul.f32 %v7411, %v7411
      %v7732 = vmul.f32 %v7412, %v7412
      %v7733 = vmul.f32 %v7413, %v7413
      %v7734 = vmul.f32 %v7414, %v7414
      %v7735 = vmul.f32 %v7415, %v7415
      %v7736 = vmul.f32 %v7416, %v7416
      %v7737 = vmul.f32 %v7417, %v7417
      %v7738 = vmul.f32 %v7418, %v7418
      %v7739 = vmul.f32 %v7419, %v7419
      %v7740 = vmul.f32 %v7420, %v7420
      %v7741 = vmul.f32 %v7421, %v7421
      %v7742 = vmul.f32 %v7422, %v7422
      %v7743 = vmul.f32 %v7423, %v7423
      %v7744 = vmul.f32 %v7424, %v7424
      %v7745 = vmul.f32 %v7425, %v7425
      %v7746 = vmul.f32 %v7426, %v7426
      %v7747 = vmul.f32 %v7427, %v7427
      %v7748 = vmul.f32 %v7428, %v7428
      %v7749 = vmul.f32 %v7429, %v7429
      %v7750 = vmul.f32 %v7430, %v7430
      %v7751 = vmul.f32 %v7431, %v7431
      %v7752 = vmul.f32 %v7432, %v7432
      %v7753 = vmul.f32 %v7433, %v7433
      %v7754 = vmul.f32 %v7434, %v7434
      %v7755 = vmul.f32 %v7435, %v7435
      %v7756 = vmul.f32 %v7436, %v7436
      %v7757 = vmul.f32 %v7437, %v7437
      %v7758 = vmul.f32 %v7438, %v7438
      %v7759 = vmul.f32 %v7439, %v7439
      %v7760 = vmul.f32 %v7440, %v7440
      %v7761 = vmul.f32 %v7441, %v7441
      %v7762 = vmul.f32 %v7442, %v7442
      %v7763 = vmul.f32 %v7443, %v7443
      %v7764 = vmul.f32 %v7444, %v7444
      %v7765 = vmul.f32 %v7445, %v7445
      %v7766 = vmul.f32 %v7446, %v7446
      %v7767 = vmul.f32 %v7447, %v7447
      %v7768 = vmul.f32 %v7448, %v7448
      %v7769 = vmul.f32 %v7449, %v7449
      %v7770 = vmul.f32 %v7450, %v7450
      %v7771 = vmul.f32 %v7451, %v7451
      %v7772 = vmul.f32 %v7452, %v7452
      %v7773 = vmul.f32 %v7453, %v7453
      %v7774 = vmul.f32 %v7454, %v7454
      %v7775 = vmul.f32 %v7455, %v7455
      %v7776 = vmul.f32 %v7456, %v7456
      %v7777 = vmul.f32 %v7457, %v7457
      %v7778 = vmul.f32 %v7458, %v7458
      %v7779 = vmul.f32 %v7459, %v7459
      %v7780 = vmul.f32 %v7460, %v7460
      %v7781 = vmul.f32 %v7461, %v7461
      %v7782 = vmul.f32 %v7462, %v7462
      %v7783 = vmul.f32 %v7463, %v7463
      %v7784 = vmul.f32 %v7464, %v7464
      %v7785 = vmul.f32 %v7465, %v7465
      %v7786 = vmul.f32 %v7466, %v7466
      %v7787 = vmul.f32 %v7467, %v7467
      %v7788 = vmul.f32 %v7468, %v7468
      %v7789 = vmul.f32 %v7469, %v7469
      %v7790 = vmul.f32 %v7470, %v7470
      %v7791 = vmul.f32 %v7471, %v7471
      %v7792 = vmul.f32 %v7472, %v7472
      %v7793 = vmul.f32 %v7473, %v7473
      %v7794 = vmul.f32 %v7474, %v7474
      %v7795 = vmul.f32 %v7475, %v7475
      %v7796 = vmul.f32 %v7476, %v7476
      %v7797 = vmul.f32 %v7477, %v7477
      %v7798 = vmul.f32 %v7478, %v7478
      %v7799 = vmul.f32 %v7479, %v7479
      %v7800 = vmul.f32 %v7480, %v7480
      %v7801 = vmul.f32 %v7481, %v7481
      %v7802 = vmul.f32 %v7482, %v7482
      %v7803 = vmul.f32 %v7483, %v7483
      %v7804 = vmul.f32 %v7484, %v7484
      %v7805 = vmul.f32 %v7485, %v7485
      %v7806 = vmul.f32 %v7486, %v7486
      %v7807 = vmul.f32 %v7487, %v7487
      %v7808 = vmul.f32 %v7488, %v7488
      %v7809 = vmul.f32 %v7489, %v7489
      %v7810 = vmul.f32 %v7490, %v7490
      %v7811 = vmul.f32 %v7491, %v7491
      %v7812 = vmul.f32 %v7492, %v7492
      %v7813 = vmul.f32 %v7493, %v7493
      %v7814 = vmul.f32 %v7494, %v7494
      %v7815 = vmul.f32 %v7495, %v7495
      %v7816 = vmul.f32 %v7496, %v7496
      %v7817 = vmul.f32 %v7497, %v7497
      %v7818 = vmul.f32 %v7498, %v7498
      %v7819 = vmul.f32 %v7499, %v7499
      %v7820 = vmul.f32 %v7500, %v7500
      %v7821 = vmul.f32 %v7501, %v7501
      %v7822 = vmul.f32 %v7502, %v7502
      %v7823 = vmul.f32 %v7503, %v7503
      %v7824 = vmul.f32 %v7504, %v7504
      %v7825 = vmul.f32 %v7505, %v7505
      %v7826 = vmul.f32 %v7506, %v7506
      %v7827 = vmul.f32 %v7507, %v7507
      %v7828 = vmul.f32 %v7508, %v7508
      %v7829 = vmul.f32 %v7509, %v7509
      %v7830 = vmul.f32 %v7510, %v7510
      %v7831 = vmul.f32 %v7511, %v7511
      %v7832 = vmul.f32 %v7512, %v7512
      %v7833 = vmul.f32 %v7513, %v7513
      %v7834 = vmul.f32 %v7514, %v7514
      %v7835 = vmul.f32 %v7515, %v7515
      %v7836 = vmul.f32 %v7516, %v7516
      %v7837 = vmul.f32 %v7517, %v7517
      %v7838 = vmul.f32 %v7518, %v7518
      %v7839 = vmul.f32 %v7519, %v7519
      %v7840 = vmul.f32 %v7520, %v7520
      %v7841 = vmul.f32 %v7521, %v7521
      %v7842 = vmul.f32 %v7522, %v7522
      %v7843 = vmul.f32 %v7523, %v7523
      %v7844 = vmul.f32 %v7524, %v7524
      %v7845 = vmul.f32 %v7525, %v7525
      %v7846 = vmul.f32 %v7526, %v7526
      %v7847 = vmul.f32 %v7527, %v7527
      %v7848 = vmul.f32 %v7528, %v7528
      %v7849 = vmul.f32 %v7529, %v7529
      %v7850 = vmul.f32 %v7530, %v7530
      %v7851 = vmul.f32 %v7531, %v7531
      %v7852 = vmul.f32 %v7532, %v7532
      %v7853 = vmul.f32 %v7533, %v7533
      %v7854 = vmul.f32 %v7534, %v7534
      %v7855 = vmul.f32 %v7535, %v7535
      %v7856 = vmul.f32 %v7536, %v7536
      %v7857 = vmul.f32 %v7537, %v5937
      %v7858 = vmul.f32 %v7538, %v5938
      %v7859 = vmul.f32 %v7539, %v5939
      %v7860 = vmul.f32 %v7540, %v5940
      %v7861 = vmul.f32 %v7541, %v5941
      %v7862 = vmul.f32 %v7542, %v5942
      %v7863 = vmul.f32 %v7543, %v5943
      %v7864 = vmul.f32 %v7544, %v5944
      %v7865 = vmul.f32 %v7545, %v5945
      %v7866 = vmul.f32 %v7546, %v5946
      %v7867 = vmul.f32 %v7547, %v5947
      %v7868 = vmul.f32 %v7548, %v5948
      %v7869 = vmul.f32 %v7549, %v5949
      %v7870 = vmul.f32 %v7550, %v5950
      %v7871 = vmul.f32 %v7551, %v5951
      %v7872 = vmul.f32 %v7552, %v5952
      %v7873 = vmul.f32 %v7553, %v5953
      %v7874 = vmul.f32 %v7554, %v5954
      %v7875 = vmul.f32 %v7555, %v5955
      %v7876 = vmul.f32 %v7556, %v5956
      %v7877 = vmul.f32 %v7557, %v5957
      %v7878 = vmul.f32 %v7558, %v5958
      %v7879 = vmul.f32 %v7559, %v5959
      %v7880 = vmul.f32 %v7560, %v5960
      %v7881 = vmul.f32 %v7561, %v5961
      %v7882 = vmul.f32 %v7562, %v5962
      %v7883 = vmul.f32 %v7563, %v5963
      %v7884 = vmul.f32 %v7564, %v5964
      %v7885 = vmul.f32 %v7565, %v5965
      %v7886 = vmul.f32 %v7566, %v5966
      %v7887 = vmul.f32 %v7567, %v5967
      %v7888 = vmul.f32 %v7568, %v5968
      %v7889 = vmul.f32 %v7569, %v5969
      %v7890 = vmul.f32 %v7570, %v5970
      %v7891 = vmul.f32 %v7571, %v5971
      %v7892 = vmul.f32 %v7572, %v5972
      %v7893 = vmul.f32 %v7573, %v5973
      %v7894 = vmul.f32 %v7574, %v5974
      %v7895 = vmul.f32 %v7575, %v5975
      %v7896 = vmul.f32 %v7576, %v5976
      %v7897 = vmul.f32 %v7577, %v5977
      %v7898 = vmul.f32 %v7578, %v5978
      %v7899 = vmul.f32 %v7579, %v5979
      %v7900 = vmul.f32 %v7580, %v5980
      %v7901 = vmul.f32 %v7581, %v5981
      %v7902 = vmul.f32 %v7582, %v5982
      %v7903 = vmul.f32 %v7583, %v5983
      %v7904 = vmul.f32 %v7584, %v5984
      %v7905 = vmul.f32 %v7585, %v5985
      %v7906 = vmul.f32 %v7586, %v5986
      %v7907 = vmul.f32 %v7587, %v5987
      %v7908 = vmul.f32 %v7588, %v5988
      %v7909 = vmul.f32 %v7589, %v5989
      %v7910 = vmul.f32 %v7590, %v5990
      %v7911 = vmul.f32 %v7591, %v5991
      %v7912 = vmul.f32 %v7592, %v5992
      %v7913 = vmul.f32 %v7593, %v5993
      %v7914 = vmul.f32 %v7594, %v5994
      %v7915 = vmul.f32 %v7595, %v5995
      %v7916 = vmul.f32 %v7596, %v5996
      %v7917 = vmul.f32 %v7597, %v5997
      %v7918 = vmul.f32 %v7598, %v5998
      %v7919 = vmul.f32 %v7599, %v5999
      %v7920 = vmul.f32 %v7600, %v6000
      %v7921 = vmul.f32 %v7601, %v6001
      %v7922 = vmul.f32 %v7602, %v6002
      %v7923 = vmul.f32 %v7603, %v6003
      %v7924 = vmul.f32 %v7604, %v6004
      %v7925 = vmul.f32 %v7605, %v6005
      %v7926 = vmul.f32 %v7606, %v6006
      %v7927 = vmul.f32 %v7607, %v6007
      %v7928 = vmul.f32 %v7608, %v6008
      %v7929 = vmul.f32 %v7609, %v6009
      %v7930 = vmul.f32 %v7610, %v6010
      %v7931 = vmul.f32 %v7611, %v6011
      %v7932 = vmul.f32 %v7612, %v6012
      %v7933 = vmul.f32 %v7613, %v6013
      %v7934 = vmul.f32 %v7614, %v6014
      %v7935 = vmul.f32 %v7615, %v6015
      %v7936 = vmul.f32 %v7616, %v6016
      %v7937 = vmul.f32 %v7617, %v6017
      %v7938 = vmul.f32 %v7618, %v6018
      %v7939 = vmul.f32 %v7619, %v6019
      %v7940 = vmul.f32 %v7620, %v6020
      %v7941 = vmul.f32 %v7621, %v6021
      %v7942 = vmul.f32 %v7622, %v6022
      %v7943 = vmul.f32 %v7623, %v6023
      %v7944 = vmul.f32 %v7624, %v6024
      %v7945 = vmul.f32 %v7625, %v6025
      %v7946 = vmul.f32 %v7626, %v6026
      %v7947 = vmul.f32 %v7627, %v6027
      %v7948 = vmul.f32 %v7628, %v6028
      %v7949 = vmul.f32 %v7629, %v6029
      %v7950 = vmul.f32 %v7630, %v6030
      %v7951 = vmul.f32 %v7631, %v6031
      %v7952 = vmul.f32 %v7632, %v6032
      %v7953 = vmul.f32 %v7633, %v6033
      %v7954 = vmul.f32 %v7634, %v6034
      %v7955 = vmul.f32 %v7635, %v6035
      %v7956 = vmul.f32 %v7636, %v6036
      %v7957 = vmul.f32 %v7637, %v6037
      %v7958 = vmul.f32 %v7638, %v6038
      %v7959 = vmul.f32 %v7639, %v6039
      %v7960 = vmul.f32 %v7640, %v6040
      %v7961 = vmul.f32 %v7641, %v6041
      %v7962 = vmul.f32 %v7642, %v6042
      %v7963 = vmul.f32 %v7643, %v6043
      %v7964 = vmul.f32 %v7644, %v6044
      %v7965 = vmul.f32 %v7645, %v6045
      %v7966 = vmul.f32 %v7646, %v6046
      %v7967 = vmul.f32 %v7647, %v6047
      %v7968 = vmul.f32 %v7648, %v6048
      %v7969 = vmul.f32 %v7649, %v6049
      %v7970 = vmul.f32 %v7650, %v6050
      %v7971 = vmul.f32 %v7651, %v6051
      %v7972 = vmul.f32 %v7652, %v6052
      %v7973 = vmul.f32 %v7653, %v6053
      %v7974 = vmul.f32 %v7654, %v6054
      %v7975 = vmul.f32 %v7655, %v6055
      %v7976 = vmul.f32 %v7656, %v6056
      %v7977 = vmul.f32 %v7657, %v6057
      %v7978 = vmul.f32 %v7658, %v6058
      %v7979 = vmul.f32 %v7659, %v6059
      %v7980 = vmul.f32 %v7660, %v6060
      %v7981 = vmul.f32 %v7661, %v6061
      %v7982 = vmul.f32 %v7662, %v6062
      %v7983 = vmul.f32 %v7663, %v6063
      %v7984 = vmul.f32 %v7664, %v6064
      %v7985 = vmul.f32 %v7665, %v6065
      %v7986 = vmul.f32 %v7666, %v6066
      %v7987 = vmul.f32 %v7667, %v6067
      %v7988 = vmul.f32 %v7668, %v6068
      %v7989 = vmul.f32 %v7669, %v6069
      %v7990 = vmul.f32 %v7670, %v6070
      %v7991 = vmul.f32 %v7671, %v6071
      %v7992 = vmul.f32 %v7672, %v6072
      %v7993 = vmul.f32 %v7673, %v6073
      %v7994 = vmul.f32 %v7674, %v6074
      %v7995 = vmul.f32 %v7675, %v6075
      %v7996 = vmul.f32 %v7676, %v6076
      %v7997 = vmul.f32 %v7677, %v6077
      %v7998 = vmul.f32 %v7678, %v6078
      %v7999 = vmul.f32 %v7679, %v6079
      %v8000 = vmul.f32 %v7680, %v6080
      %v8001 = vmul.f32 %v7681, %v6081
      %v8002 = vmul.f32 %v7682, %v6082
      %v8003 = vmul.f32 %v7683, %v6083
      %v8004 = vmul.f32 %v7684, %v6084
      %v8005 = vmul.f32 %v7685, %v6085
      %v8006 = vmul.f32 %v7686, %v6086
      %v8007 = vmul.f32 %v7687, %v6087
      %v8008 = vmul.f32 %v7688, %v6088
      %v8009 = vmul.f32 %v7689, %v6089
      %v8010 = vmul.f32 %v7690, %v6090
      %v8011 = vmul.f32 %v7691, %v6091
      %v8012 = vmul.f32 %v7692, %v6092
      %v8013 = vmul.f32 %v7693, %v6093
      %v8014 = vmul.f32 %v7694, %v6094
      %v8015 = vmul.f32 %v7695, %v6095
      %v8016 = vmul.f32 %v7696, %v6096
      %v8017 = vmul.f32 %v7697, %v6097
      %v8018 = vmul.f32 %v7698, %v6098
      %v8019 = vmul.f32 %v7699, %v6099
      %v8020 = vmul.f32 %v7700, %v6100
      %v8021 = vmul.f32 %v7701, %v6101
      %v8022 = vmul.f32 %v7702, %v6102
      %v8023 = vmul.f32 %v7703, %v6103
      %v8024 = vmul.f32 %v7704, %v6104
      %v8025 = vmul.f32 %v7705, %v6105
      %v8026 = vmul.f32 %v7706, %v6106
      %v8027 = vmul.f32 %v7707, %v6107
      %v8028 = vmul.f32 %v7708, %v6108
      %v8029 = vmul.f32 %v7709, %v6109
      %v8030 = vmul.f32 %v7710, %v6110
      %v8031 = vmul.f32 %v7711, %v6111
      %v8032 = vmul.f32 %v7712, %v6112
      %v8033 = vmul.f32 %v7713, %v6113
      %v8034 = vmul.f32 %v7714, %v6114
      %v8035 = vmul.f32 %v7715, %v6115
      %v8036 = vmul.f32 %v7716, %v6116
      %v8037 = vmul.f32 %v7717, %v6117
      %v8038 = vmul.f32 %v7718, %v6118
      %v8039 = vmul.f32 %v7719, %v6119
      %v8040 = vmul.f32 %v7720, %v6120
      %v8041 = vmul.f32 %v7721, %v6121
      %v8042 = vmul.f32 %v7722, %v6122
      %v8043 = vmul.f32 %v7723, %v6123
      %v8044 = vmul.f32 %v7724, %v6124
      %v8045 = vmul.f32 %v7725, %v6125
      %v8046 = vmul.f32 %v7726, %v6126
      %v8047 = vmul.f32 %v7727, %v6127
      %v8048 = vmul.f32 %v7728, %v6128
      %v8049 = vmul.f32 %v7729, %v6129
      %v8050 = vmul.f32 %v7730, %v6130
      %v8051 = vmul.f32 %v7731, %v6131
      %v8052 = vmul.f32 %v7732, %v6132
      %v8053 = vmul.f32 %v7733, %v6133
      %v8054 = vmul.f32 %v7734, %v6134
      %v8055 = vmul.f32 %v7735, %v6135
      %v8056 = vmul.f32 %v7736, %v6136
      %v8057 = vmul.f32 %v7737, %v6137
      %v8058 = vmul.f32 %v7738, %v6138
      %v8059 = vmul.f32 %v7739, %v6139
      %v8060 = vmul.f32 %v7740, %v6140
      %v8061 = vmul.f32 %v7741, %v6141
      %v8062 = vmul.f32 %v7742, %v6142
      %v8063 = vmul.f32 %v7743, %v6143
      %v8064 = vmul.f32 %v7744, %v6144
      %v8065 = vmul.f32 %v7745, %v6145
      %v8066 = vmul.f32 %v7746, %v6146
      %v8067 = vmul.f32 %v7747, %v6147
      %v8068 = vmul.f32 %v7748, %v6148
      %v8069 = vmul.f32 %v7749, %v6149
      %v8070 = vmul.f32 %v7750, %v6150
      %v8071 = vmul.f32 %v7751, %v6151
      %v8072 = vmul.f32 %v7752, %v6152
      %v8073 = vmul.f32 %v7753, %v6153
      %v8074 = vmul.f32 %v7754, %v6154
      %v8075 = vmul.f32 %v7755, %v6155
      %v8076 = vmul.f32 %v7756, %v6156
      %v8077 = vmul.f32 %v7757, %v6157
      %v8078 = vmul.f32 %v7758, %v6158
      %v8079 = vmul.f32 %v7759, %v6159
      %v8080 = vmul.f32 %v7760, %v6160
      %v8081 = vmul.f32 %v7761, %v6161
      %v8082 = vmul.f32 %v7762, %v6162
      %v8083 = vmul.f32 %v7763, %v6163
      %v8084 = vmul.f32 %v7764, %v6164
      %v8085 = vmul.f32 %v7765, %v6165
      %v8086 = vmul.f32 %v7766, %v6166
      %v8087 = vmul.f32 %v7767, %v6167
      %v8088 = vmul.f32 %v7768, %v6168
      %v8089 = vmul.f32 %v7769, %v6169
      %v8090 = vmul.f32 %v7770, %v6170
      %v8091 = vmul.f32 %v7771, %v6171
      %v8092 = vmul.f32 %v7772, %v6172
      %v8093 = vmul.f32 %v7773, %v6173
      %v8094 = vmul.f32 %v7774, %v6174
      %v8095 = vmul.f32 %v7775, %v6175
      %v8096 = vmul.f32 %v7776, %v6176
      %v8097 = vmul.f32 %v7777, %v6177
      %v8098 = vmul.f32 %v7778, %v6178
      %v8099 = vmul.f32 %v7779, %v6179
      %v8100 = vmul.f32 %v7780, %v6180
      %v8101 = vmul.f32 %v7781, %v6181
      %v8102 = vmul.f32 %v7782, %v6182
      %v8103 = vmul.f32 %v7783, %v6183
      %v8104 = vmul.f32 %v7784, %v6184
      %v8105 = vmul.f32 %v7785, %v6185
      %v8106 = vmul.f32 %v7786, %v6186
      %v8107 = vmul.f32 %v7787, %v6187
      %v8108 = vmul.f32 %v7788, %v6188
      %v8109 = vmul.f32 %v7789, %v6189
      %v8110 = vmul.f32 %v7790, %v6190
      %v8111 = vmul.f32 %v7791, %v6191
      %v8112 = vmul.f32 %v7792, %v6192
      %v8113 = vmul.f32 %v7793, %v6193
      %v8114 = vmul.f32 %v7794, %v6194
      %v8115 = vmul.f32 %v7795, %v6195
      %v8116 = vmul.f32 %v7796, %v6196
      %v8117 = vmul.f32 %v7797, %v6197
      %v8118 = vmul.f32 %v7798, %v6198
      %v8119 = vmul.f32 %v7799, %v6199
      %v8120 = vmul.f32 %v7800, %v6200
      %v8121 = vmul.f32 %v7801, %v6201
      %v8122 = vmul.f32 %v7802, %v6202
      %v8123 = vmul.f32 %v7803, %v6203
      %v8124 = vmul.f32 %v7804, %v6204
      %v8125 = vmul.f32 %v7805, %v6205
      %v8126 = vmul.f32 %v7806, %v6206
      %v8127 = vmul.f32 %v7807, %v6207
      %v8128 = vmul.f32 %v7808, %v6208
      %v8129 = vmul.f32 %v7809, %v6209
      %v8130 = vmul.f32 %v7810, %v6210
      %v8131 = vmul.f32 %v7811, %v6211
      %v8132 = vmul.f32 %v7812, %v6212
      %v8133 = vmul.f32 %v7813, %v6213
      %v8134 = vmul.f32 %v7814, %v6214
      %v8135 = vmul.f32 %v7815, %v6215
      %v8136 = vmul.f32 %v7816, %v6216
      %v8137 = vmul.f32 %v7817, %v6217
      %v8138 = vmul.f32 %v7818, %v6218
      %v8139 = vmul.f32 %v7819, %v6219
      %v8140 = vmul.f32 %v7820, %v6220
      %v8141 = vmul.f32 %v7821, %v6221
      %v8142 = vmul.f32 %v7822, %v6222
      %v8143 = vmul.f32 %v7823, %v6223
      %v8144 = vmul.f32 %v7824, %v6224
      %v8145 = vmul.f32 %v7825, %v6225
      %v8146 = vmul.f32 %v7826, %v6226
      %v8147 = vmul.f32 %v7827, %v6227
      %v8148 = vmul.f32 %v7828, %v6228
      %v8149 = vmul.f32 %v7829, %v6229
      %v8150 = vmul.f32 %v7830, %v6230
      %v8151 = vmul.f32 %v7831, %v6231
      %v8152 = vmul.f32 %v7832, %v6232
      %v8153 = vmul.f32 %v7833, %v6233
      %v8154 = vmul.f32 %v7834, %v6234
      %v8155 = vmul.f32 %v7835, %v6235
      %v8156 = vmul.f32 %v7836, %v6236
      %v8157 = vmul.f32 %v7837, %v6237
      %v8158 = vmul.f32 %v7838, %v6238
      %v8159 = vmul.f32 %v7839, %v6239
      %v8160 = vmul.f32 %v7840, %v6240
      %v8161 = vmul.f32 %v7841, %v6241
      %v8162 = vmul.f32 %v7842, %v6242
      %v8163 = vmul.f32 %v7843, %v6243
      %v8164 = vmul.f32 %v7844, %v6244
      %v8165 = vmul.f32 %v7845, %v6245
      %v8166 = vmul.f32 %v7846, %v6246
      %v8167 = vmul.f32 %v7847, %v6247
      %v8168 = vmul.f32 %v7848, %v6248
      %v8169 = vmul.f32 %v7849, %v6249
      %v8170 = vmul.f32 %v7850, %v6250
      %v8171 = vmul.f32 %v7851, %v6251
      %v8172 = vmul.f32 %v7852, %v6252
      %v8173 = vmul.f32 %v7853, %v6253
      %v8174 = vmul.f32 %v7854, %v6254
      %v8175 = vmul.f32 %v7855, %v6255
      %v8176 = vmul.f32 %v7856, %v6256
      %8177 = vst [vmem:[%s175] sm:$0xff] %v7857
      %8178 = vst [vmem:[%s175 + $0x8] sm:$0xff] %v7858
      %8179 = vst [vmem:[%s175 + $0x10] sm:$0xff] %v7859
      %8180 = vst [vmem:[%s175 + $0x18] sm:$0xff] %v7860
      %vm8181 = vcmask 719872
      %8182 = vst.msk [vmem:[%s175 + $0x20] sm:$0xff] %vm8181, %v7861
      %8183 = vst [vmem:[%s175 + $0x28] sm:$0xff] %v7862
      %8184 = vst [vmem:[%s175 + $0x30] sm:$0xff] %v7863
      %8185 = vst [vmem:[%s175 + $0x38] sm:$0xff] %v7864
      %8186 = vst [vmem:[%s175 + $0x40] sm:$0xff] %v7865
      %8187 = vst.msk [vmem:[%s175 + $0x48] sm:$0xff] %vm8181, %v7866
      %8188 = vst [vmem:[%s175 + $0x50] sm:$0xff] %v7867
      %8189 = vst [vmem:[%s175 + $0x58] sm:$0xff] %v7868
      %8190 = vst [vmem:[%s175 + $0x60] sm:$0xff] %v7869
      %8191 = vst [vmem:[%s175 + $0x68] sm:$0xff] %v7870
      %8192 = vst.msk [vmem:[%s175 + $0x70] sm:$0xff] %vm8181, %v7871
      %8193 = vst [vmem:[%s175 + $0x78] sm:$0xff] %v7872
      %8194 = vst [vmem:[%s175 + $0x80] sm:$0xff] %v7873
      %8195 = vst [vmem:[%s175 + $0x88] sm:$0xff] %v7874
      %8196 = vst [vmem:[%s175 + $0x90] sm:$0xff] %v7875
      %8197 = vst.msk [vmem:[%s175 + $0x98] sm:$0xff] %vm8181, %v7876
      %8198 = vst [vmem:[%s175 + $0xa0] sm:$0xff] %v7877
      %8199 = vst [vmem:[%s175 + $0xa8] sm:$0xff] %v7878
      %8200 = vst [vmem:[%s175 + $0xb0] sm:$0xff] %v7879
      %8201 = vst [vmem:[%s175 + $0xb8] sm:$0xff] %v7880
      %8202 = vst.msk [vmem:[%s175 + $0xc0] sm:$0xff] %vm8181, %v7881
      %8203 = vst [vmem:[%s175 + $0xc8] sm:$0xff] %v7882
      %8204 = vst [vmem:[%s175 + $0xd0] sm:$0xff] %v7883
      %8205 = vst [vmem:[%s175 + $0xd8] sm:$0xff] %v7884
      %8206 = vst [vmem:[%s175 + $0xe0] sm:$0xff] %v7885
      %8207 = vst.msk [vmem:[%s175 + $0xe8] sm:$0xff] %vm8181, %v7886
      %8208 = vst [vmem:[%s175 + $0xf0] sm:$0xff] %v7887
      %8209 = vst [vmem:[%s175 + $0xf8] sm:$0xff] %v7888
      %8210 = vst [vmem:[%s175 + $0x100] sm:$0xff] %v7889
      %8211 = vst [vmem:[%s175 + $0x108] sm:$0xff] %v7890
      %8212 = vst.msk [vmem:[%s175 + $0x110] sm:$0xff] %vm8181, %v7891
      %8213 = vst [vmem:[%s175 + $0x118] sm:$0xff] %v7892
      %8214 = vst [vmem:[%s175 + $0x120] sm:$0xff] %v7893
      %8215 = vst [vmem:[%s175 + $0x128] sm:$0xff] %v7894
      %8216 = vst [vmem:[%s175 + $0x130] sm:$0xff] %v7895
      %8217 = vst.msk [vmem:[%s175 + $0x138] sm:$0xff] %vm8181, %v7896
      %8218 = vst [vmem:[%s175 + $0x140] sm:$0xff] %v7897
      %8219 = vst [vmem:[%s175 + $0x148] sm:$0xff] %v7898
      %8220 = vst [vmem:[%s175 + $0x150] sm:$0xff] %v7899
      %8221 = vst [vmem:[%s175 + $0x158] sm:$0xff] %v7900
      %8222 = vst.msk [vmem:[%s175 + $0x160] sm:$0xff] %vm8181, %v7901
      %8223 = vst [vmem:[%s175 + $0x168] sm:$0xff] %v7902
      %8224 = vst [vmem:[%s175 + $0x170] sm:$0xff] %v7903
      %8225 = vst [vmem:[%s175 + $0x178] sm:$0xff] %v7904
      %8226 = vst [vmem:[%s175 + $0x180] sm:$0xff] %v7905
      %8227 = vst.msk [vmem:[%s175 + $0x188] sm:$0xff] %vm8181, %v7906
      %8228 = vst [vmem:[%s175 + $0x190] sm:$0xff] %v7907
      %8229 = vst [vmem:[%s175 + $0x198] sm:$0xff] %v7908
      %8230 = vst [vmem:[%s175 + $0x1a0] sm:$0xff] %v7909
      %8231 = vst [vmem:[%s175 + $0x1a8] sm:$0xff] %v7910
      %8232 = vst.msk [vmem:[%s175 + $0x1b0] sm:$0xff] %vm8181, %v7911
      %8233 = vst [vmem:[%s175 + $0x1b8] sm:$0xff] %v7912
      %8234 = vst [vmem:[%s175 + $0x1c0] sm:$0xff] %v7913
      %8235 = vst [vmem:[%s175 + $0x1c8] sm:$0xff] %v7914
      %8236 = vst [vmem:[%s175 + $0x1d0] sm:$0xff] %v7915
      %8237 = vst.msk [vmem:[%s175 + $0x1d8] sm:$0xff] %vm8181, %v7916
      %8238 = vst [vmem:[%s175 + $0x1e0] sm:$0xff] %v7917
      %8239 = vst [vmem:[%s175 + $0x1e8] sm:$0xff] %v7918
      %8240 = vst [vmem:[%s175 + $0x1f0] sm:$0xff] %v7919
      %8241 = vst [vmem:[%s175 + $0x1f8] sm:$0xff] %v7920
      %8242 = vst.msk [vmem:[%s175 + $0x200] sm:$0xff] %vm8181, %v7921
      %8243 = vst [vmem:[%s175 + $0x208] sm:$0xff] %v7922
      %8244 = vst [vmem:[%s175 + $0x210] sm:$0xff] %v7923
      %8245 = vst [vmem:[%s175 + $0x218] sm:$0xff] %v7924
      %8246 = vst [vmem:[%s175 + $0x220] sm:$0xff] %v7925
      %8247 = vst.msk [vmem:[%s175 + $0x228] sm:$0xff] %vm8181, %v7926
      %8248 = vst [vmem:[%s175 + $0x230] sm:$0xff] %v7927
      %8249 = vst [vmem:[%s175 + $0x238] sm:$0xff] %v7928
      %8250 = vst [vmem:[%s175 + $0x240] sm:$0xff] %v7929
      %8251 = vst [vmem:[%s175 + $0x248] sm:$0xff] %v7930
      %8252 = vst.msk [vmem:[%s175 + $0x250] sm:$0xff] %vm8181, %v7931
      %8253 = vst [vmem:[%s175 + $0x258] sm:$0xff] %v7932
      %8254 = vst [vmem:[%s175 + $0x260] sm:$0xff] %v7933
      %8255 = vst [vmem:[%s175 + $0x268] sm:$0xff] %v7934
      %8256 = vst [vmem:[%s175 + $0x270] sm:$0xff] %v7935
      %8257 = vst.msk [vmem:[%s175 + $0x278] sm:$0xff] %vm8181, %v7936
      %8258 = vst [vmem:[%s175 + $0x280] sm:$0xff] %v7937
      %8259 = vst [vmem:[%s175 + $0x288] sm:$0xff] %v7938
      %8260 = vst [vmem:[%s175 + $0x290] sm:$0xff] %v7939
      %8261 = vst [vmem:[%s175 + $0x298] sm:$0xff] %v7940
      %8262 = vst.msk [vmem:[%s175 + $0x2a0] sm:$0xff] %vm8181, %v7941
      %8263 = vst [vmem:[%s175 + $0x2a8] sm:$0xff] %v7942
      %8264 = vst [vmem:[%s175 + $0x2b0] sm:$0xff] %v7943
      %8265 = vst [vmem:[%s175 + $0x2b8] sm:$0xff] %v7944
      %8266 = vst [vmem:[%s175 + $0x2c0] sm:$0xff] %v7945
      %8267 = vst.msk [vmem:[%s175 + $0x2c8] sm:$0xff] %vm8181, %v7946
      %8268 = vst [vmem:[%s175 + $0x2d0] sm:$0xff] %v7947
      %8269 = vst [vmem:[%s175 + $0x2d8] sm:$0xff] %v7948
      %8270 = vst [vmem:[%s175 + $0x2e0] sm:$0xff] %v7949
      %8271 = vst [vmem:[%s175 + $0x2e8] sm:$0xff] %v7950
      %8272 = vst.msk [vmem:[%s175 + $0x2f0] sm:$0xff] %vm8181, %v7951
      %8273 = vst [vmem:[%s175 + $0x2f8] sm:$0xff] %v7952
      %8274 = vst [vmem:[%s175 + $0x300] sm:$0xff] %v7953
      %8275 = vst [vmem:[%s175 + $0x308] sm:$0xff] %v7954
      %8276 = vst [vmem:[%s175 + $0x310] sm:$0xff] %v7955
      %8277 = vst.msk [vmem:[%s175 + $0x318] sm:$0xff] %vm8181, %v7956
      %8278 = vst [vmem:[%s175 + $0x320] sm:$0xff] %v7957
      %8279 = vst [vmem:[%s175 + $0x328] sm:$0xff] %v7958
      %8280 = vst [vmem:[%s175 + $0x330] sm:$0xff] %v7959
      %8281 = vst [vmem:[%s175 + $0x338] sm:$0xff] %v7960
      %8282 = vst.msk [vmem:[%s175 + $0x340] sm:$0xff] %vm8181, %v7961
      %8283 = vst [vmem:[%s175 + $0x348] sm:$0xff] %v7962
      %8284 = vst [vmem:[%s175 + $0x350] sm:$0xff] %v7963
      %8285 = vst [vmem:[%s175 + $0x358] sm:$0xff] %v7964
      %8286 = vst [vmem:[%s175 + $0x360] sm:$0xff] %v7965
      %8287 = vst.msk [vmem:[%s175 + $0x368] sm:$0xff] %vm8181, %v7966
      %8288 = vst [vmem:[%s175 + $0x370] sm:$0xff] %v7967
      %8289 = vst [vmem:[%s175 + $0x378] sm:$0xff] %v7968
      %8290 = vst [vmem:[%s175 + $0x380] sm:$0xff] %v7969
      %8291 = vst [vmem:[%s175 + $0x388] sm:$0xff] %v7970
      %8292 = vst.msk [vmem:[%s175 + $0x390] sm:$0xff] %vm8181, %v7971
      %8293 = vst [vmem:[%s175 + $0x398] sm:$0xff] %v7972
      %8294 = vst [vmem:[%s175 + $0x3a0] sm:$0xff] %v7973
      %8295 = vst [vmem:[%s175 + $0x3a8] sm:$0xff] %v7974
      %8296 = vst [vmem:[%s175 + $0x3b0] sm:$0xff] %v7975
      %8297 = vst.msk [vmem:[%s175 + $0x3b8] sm:$0xff] %vm8181, %v7976
      %8298 = vst [vmem:[%s175 + $0x3c0] sm:$0xff] %v7977
      %8299 = vst [vmem:[%s175 + $0x3c8] sm:$0xff] %v7978
      %8300 = vst [vmem:[%s175 + $0x3d0] sm:$0xff] %v7979
      %8301 = vst [vmem:[%s175 + $0x3d8] sm:$0xff] %v7980
      %8302 = vst.msk [vmem:[%s175 + $0x3e0] sm:$0xff] %vm8181, %v7981
      %8303 = vst [vmem:[%s175 + $0x3e8] sm:$0xff] %v7982
      %8304 = vst [vmem:[%s175 + $0x3f0] sm:$0xff] %v7983
      %8305 = vst [vmem:[%s175 + $0x3f8] sm:$0xff] %v7984
      %8306 = vst [vmem:[%s175 + $0x400] sm:$0xff] %v7985
      %8307 = vst.msk [vmem:[%s175 + $0x408] sm:$0xff] %vm8181, %v7986
      %8308 = vst [vmem:[%s175 + $0x410] sm:$0xff] %v7987
      %8309 = vst [vmem:[%s175 + $0x418] sm:$0xff] %v7988
      %8310 = vst [vmem:[%s175 + $0x420] sm:$0xff] %v7989
      %8311 = vst [vmem:[%s175 + $0x428] sm:$0xff] %v7990
      %8312 = vst.msk [vmem:[%s175 + $0x430] sm:$0xff] %vm8181, %v7991
      %8313 = vst [vmem:[%s175 + $0x438] sm:$0xff] %v7992
      %8314 = vst [vmem:[%s175 + $0x440] sm:$0xff] %v7993
      %8315 = vst [vmem:[%s175 + $0x448] sm:$0xff] %v7994
      %8316 = vst [vmem:[%s175 + $0x450] sm:$0xff] %v7995
      %8317 = vst.msk [vmem:[%s175 + $0x458] sm:$0xff] %vm8181, %v7996
      %8318 = vst [vmem:[%s175 + $0x460] sm:$0xff] %v7997
      %8319 = vst [vmem:[%s175 + $0x468] sm:$0xff] %v7998
      %8320 = vst [vmem:[%s175 + $0x470] sm:$0xff] %v7999
      %8321 = vst [vmem:[%s175 + $0x478] sm:$0xff] %v8000
      %8322 = vst.msk [vmem:[%s175 + $0x480] sm:$0xff] %vm8181, %v8001
      %8323 = vst [vmem:[%s175 + $0x488] sm:$0xff] %v8002
      %8324 = vst [vmem:[%s175 + $0x490] sm:$0xff] %v8003
      %8325 = vst [vmem:[%s175 + $0x498] sm:$0xff] %v8004
      %8326 = vst [vmem:[%s175 + $0x4a0] sm:$0xff] %v8005
      %8327 = vst.msk [vmem:[%s175 + $0x4a8] sm:$0xff] %vm8181, %v8006
      %8328 = vst [vmem:[%s175 + $0x4b0] sm:$0xff] %v8007
      %8329 = vst [vmem:[%s175 + $0x4b8] sm:$0xff] %v8008
      %8330 = vst [vmem:[%s175 + $0x4c0] sm:$0xff] %v8009
      %8331 = vst [vmem:[%s175 + $0x4c8] sm:$0xff] %v8010
      %8332 = vst.msk [vmem:[%s175 + $0x4d0] sm:$0xff] %vm8181, %v8011
      %8333 = vst [vmem:[%s175 + $0x4d8] sm:$0xff] %v8012
      %8334 = vst [vmem:[%s175 + $0x4e0] sm:$0xff] %v8013
      %8335 = vst [vmem:[%s175 + $0x4e8] sm:$0xff] %v8014
      %8336 = vst [vmem:[%s175 + $0x4f0] sm:$0xff] %v8015
      %8337 = vst.msk [vmem:[%s175 + $0x4f8] sm:$0xff] %vm8181, %v8016
      %8338 = vst [vmem:[%s175 + $0x500] sm:$0xff] %v8017
      %8339 = vst [vmem:[%s175 + $0x508] sm:$0xff] %v8018
      %8340 = vst [vmem:[%s175 + $0x510] sm:$0xff] %v8019
      %8341 = vst [vmem:[%s175 + $0x518] sm:$0xff] %v8020
      %8342 = vst.msk [vmem:[%s175 + $0x520] sm:$0xff] %vm8181, %v8021
      %8343 = vst [vmem:[%s175 + $0x528] sm:$0xff] %v8022
      %8344 = vst [vmem:[%s175 + $0x530] sm:$0xff] %v8023
      %8345 = vst [vmem:[%s175 + $0x538] sm:$0xff] %v8024
      %8346 = vst [vmem:[%s175 + $0x540] sm:$0xff] %v8025
      %8347 = vst.msk [vmem:[%s175 + $0x548] sm:$0xff] %vm8181, %v8026
      %8348 = vst [vmem:[%s175 + $0x550] sm:$0xff] %v8027
      %8349 = vst [vmem:[%s175 + $0x558] sm:$0xff] %v8028
      %8350 = vst [vmem:[%s175 + $0x560] sm:$0xff] %v8029
      %8351 = vst [vmem:[%s175 + $0x568] sm:$0xff] %v8030
      %8352 = vst.msk [vmem:[%s175 + $0x570] sm:$0xff] %vm8181, %v8031
      %8353 = vst [vmem:[%s175 + $0x578] sm:$0xff] %v8032
      %8354 = vst [vmem:[%s175 + $0x580] sm:$0xff] %v8033
      %8355 = vst [vmem:[%s175 + $0x588] sm:$0xff] %v8034
      %8356 = vst [vmem:[%s175 + $0x590] sm:$0xff] %v8035
      %8357 = vst.msk [vmem:[%s175 + $0x598] sm:$0xff] %vm8181, %v8036
      %8358 = vst [vmem:[%s175 + $0x5a0] sm:$0xff] %v8037
      %8359 = vst [vmem:[%s175 + $0x5a8] sm:$0xff] %v8038
      %8360 = vst [vmem:[%s175 + $0x5b0] sm:$0xff] %v8039
      %8361 = vst [vmem:[%s175 + $0x5b8] sm:$0xff] %v8040
      %8362 = vst.msk [vmem:[%s175 + $0x5c0] sm:$0xff] %vm8181, %v8041
      %8363 = vst [vmem:[%s175 + $0x5c8] sm:$0xff] %v8042
      %8364 = vst [vmem:[%s175 + $0x5d0] sm:$0xff] %v8043
      %8365 = vst [vmem:[%s175 + $0x5d8] sm:$0xff] %v8044
      %8366 = vst [vmem:[%s175 + $0x5e0] sm:$0xff] %v8045
      %8367 = vst.msk [vmem:[%s175 + $0x5e8] sm:$0xff] %vm8181, %v8046
      %8368 = vst [vmem:[%s175 + $0x5f0] sm:$0xff] %v8047
      %8369 = vst [vmem:[%s175 + $0x5f8] sm:$0xff] %v8048
      %8370 = vst [vmem:[%s175 + $0x600] sm:$0xff] %v8049
      %8371 = vst [vmem:[%s175 + $0x608] sm:$0xff] %v8050
      %8372 = vst.msk [vmem:[%s175 + $0x610] sm:$0xff] %vm8181, %v8051
      %8373 = vst [vmem:[%s175 + $0x618] sm:$0xff] %v8052
      %8374 = vst [vmem:[%s175 + $0x620] sm:$0xff] %v8053
      %8375 = vst [vmem:[%s175 + $0x628] sm:$0xff] %v8054
      %8376 = vst [vmem:[%s175 + $0x630] sm:$0xff] %v8055
      %8377 = vst.msk [vmem:[%s175 + $0x638] sm:$0xff] %vm8181, %v8056
      %8378 = vst [vmem:[%s175 + $0x640] sm:$0xff] %v8057
      %8379 = vst [vmem:[%s175 + $0x648] sm:$0xff] %v8058
      %8380 = vst [vmem:[%s175 + $0x650] sm:$0xff] %v8059
      %8381 = vst [vmem:[%s175 + $0x658] sm:$0xff] %v8060
      %8382 = vst.msk [vmem:[%s175 + $0x660] sm:$0xff] %vm8181, %v8061
      %8383 = vst [vmem:[%s175 + $0x668] sm:$0xff] %v8062
      %8384 = vst [vmem:[%s175 + $0x670] sm:$0xff] %v8063
      %8385 = vst [vmem:[%s175 + $0x678] sm:$0xff] %v8064
      %8386 = vst [vmem:[%s175 + $0x680] sm:$0xff] %v8065
      %8387 = vst.msk [vmem:[%s175 + $0x688] sm:$0xff] %vm8181, %v8066
      %8388 = vst [vmem:[%s175 + $0x690] sm:$0xff] %v8067
      %8389 = vst [vmem:[%s175 + $0x698] sm:$0xff] %v8068
      %8390 = vst [vmem:[%s175 + $0x6a0] sm:$0xff] %v8069
      %8391 = vst [vmem:[%s175 + $0x6a8] sm:$0xff] %v8070
      %8392 = vst.msk [vmem:[%s175 + $0x6b0] sm:$0xff] %vm8181, %v8071
      %8393 = vst [vmem:[%s175 + $0x6b8] sm:$0xff] %v8072
      %8394 = vst [vmem:[%s175 + $0x6c0] sm:$0xff] %v8073
      %8395 = vst [vmem:[%s175 + $0x6c8] sm:$0xff] %v8074
      %8396 = vst [vmem:[%s175 + $0x6d0] sm:$0xff] %v8075
      %8397 = vst.msk [vmem:[%s175 + $0x6d8] sm:$0xff] %vm8181, %v8076
      %8398 = vst [vmem:[%s175 + $0x6e0] sm:$0xff] %v8077
      %8399 = vst [vmem:[%s175 + $0x6e8] sm:$0xff] %v8078
      %8400 = vst [vmem:[%s175 + $0x6f0] sm:$0xff] %v8079
      %8401 = vst [vmem:[%s175 + $0x6f8] sm:$0xff] %v8080
      %8402 = vst.msk [vmem:[%s175 + $0x700] sm:$0xff] %vm8181, %v8081
      %8403 = vst [vmem:[%s175 + $0x708] sm:$0xff] %v8082
      %8404 = vst [vmem:[%s175 + $0x710] sm:$0xff] %v8083
      %8405 = vst [vmem:[%s175 + $0x718] sm:$0xff] %v8084
      %8406 = vst [vmem:[%s175 + $0x720] sm:$0xff] %v8085
      %8407 = vst.msk [vmem:[%s175 + $0x728] sm:$0xff] %vm8181, %v8086
      %8408 = vst [vmem:[%s175 + $0x730] sm:$0xff] %v8087
      %8409 = vst [vmem:[%s175 + $0x738] sm:$0xff] %v8088
      %8410 = vst [vmem:[%s175 + $0x740] sm:$0xff] %v8089
      %8411 = vst [vmem:[%s175 + $0x748] sm:$0xff] %v8090
      %8412 = vst.msk [vmem:[%s175 + $0x750] sm:$0xff] %vm8181, %v8091
      %8413 = vst [vmem:[%s175 + $0x758] sm:$0xff] %v8092
      %8414 = vst [vmem:[%s175 + $0x760] sm:$0xff] %v8093
      %8415 = vst [vmem:[%s175 + $0x768] sm:$0xff] %v8094
      %8416 = vst [vmem:[%s175 + $0x770] sm:$0xff] %v8095
      %8417 = vst.msk [vmem:[%s175 + $0x778] sm:$0xff] %vm8181, %v8096
      %8418 = vst [vmem:[%s175 + $0x780] sm:$0xff] %v8097
      %8419 = vst [vmem:[%s175 + $0x788] sm:$0xff] %v8098
      %8420 = vst [vmem:[%s175 + $0x790] sm:$0xff] %v8099
      %8421 = vst [vmem:[%s175 + $0x798] sm:$0xff] %v8100
      %8422 = vst.msk [vmem:[%s175 + $0x7a0] sm:$0xff] %vm8181, %v8101
      %8423 = vst [vmem:[%s175 + $0x7a8] sm:$0xff] %v8102
      %8424 = vst [vmem:[%s175 + $0x7b0] sm:$0xff] %v8103
      %8425 = vst [vmem:[%s175 + $0x7b8] sm:$0xff] %v8104
      %8426 = vst [vmem:[%s175 + $0x7c0] sm:$0xff] %v8105
      %8427 = vst.msk [vmem:[%s175 + $0x7c8] sm:$0xff] %vm8181, %v8106
      %8428 = vst [vmem:[%s175 + $0x7d0] sm:$0xff] %v8107
      %8429 = vst [vmem:[%s175 + $0x7d8] sm:$0xff] %v8108
      %8430 = vst [vmem:[%s175 + $0x7e0] sm:$0xff] %v8109
      %8431 = vst [vmem:[%s175 + $0x7e8] sm:$0xff] %v8110
      %8432 = vst.msk [vmem:[%s175 + $0x7f0] sm:$0xff] %vm8181, %v8111
      %8433 = vst [vmem:[%s175 + $0x7f8] sm:$0xff] %v8112
      %8434 = vst [vmem:[%s175 + $0x800] sm:$0xff] %v8113
      %8435 = vst [vmem:[%s175 + $0x808] sm:$0xff] %v8114
      %8436 = vst [vmem:[%s175 + $0x810] sm:$0xff] %v8115
      %8437 = vst.msk [vmem:[%s175 + $0x818] sm:$0xff] %vm8181, %v8116
      %8438 = vst [vmem:[%s175 + $0x820] sm:$0xff] %v8117
      %8439 = vst [vmem:[%s175 + $0x828] sm:$0xff] %v8118
      %8440 = vst [vmem:[%s175 + $0x830] sm:$0xff] %v8119
      %8441 = vst [vmem:[%s175 + $0x838] sm:$0xff] %v8120
      %8442 = vst.msk [vmem:[%s175 + $0x840] sm:$0xff] %vm8181, %v8121
      %8443 = vst [vmem:[%s175 + $0x848] sm:$0xff] %v8122
      %8444 = vst [vmem:[%s175 + $0x850] sm:$0xff] %v8123
      %8445 = vst [vmem:[%s175 + $0x858] sm:$0xff] %v8124
      %8446 = vst [vmem:[%s175 + $0x860] sm:$0xff] %v8125
      %8447 = vst.msk [vmem:[%s175 + $0x868] sm:$0xff] %vm8181, %v8126
      %8448 = vst [vmem:[%s175 + $0x870] sm:$0xff] %v8127
      %8449 = vst [vmem:[%s175 + $0x878] sm:$0xff] %v8128
      %8450 = vst [vmem:[%s175 + $0x880] sm:$0xff] %v8129
      %8451 = vst [vmem:[%s175 + $0x888] sm:$0xff] %v8130
      %8452 = vst.msk [vmem:[%s175 + $0x890] sm:$0xff] %vm8181, %v8131
      %8453 = vst [vmem:[%s175 + $0x898] sm:$0xff] %v8132
      %8454 = vst [vmem:[%s175 + $0x8a0] sm:$0xff] %v8133
      %8455 = vst [vmem:[%s175 + $0x8a8] sm:$0xff] %v8134
      %8456 = vst [vmem:[%s175 + $0x8b0] sm:$0xff] %v8135
      %8457 = vst.msk [vmem:[%s175 + $0x8b8] sm:$0xff] %vm8181, %v8136
      %8458 = vst [vmem:[%s175 + $0x8c0] sm:$0xff] %v8137
      %8459 = vst [vmem:[%s175 + $0x8c8] sm:$0xff] %v8138
      %8460 = vst [vmem:[%s175 + $0x8d0] sm:$0xff] %v8139
      %8461 = vst [vmem:[%s175 + $0x8d8] sm:$0xff] %v8140
      %8462 = vst.msk [vmem:[%s175 + $0x8e0] sm:$0xff] %vm8181, %v8141
      %8463 = vst [vmem:[%s175 + $0x8e8] sm:$0xff] %v8142
      %8464 = vst [vmem:[%s175 + $0x8f0] sm:$0xff] %v8143
      %8465 = vst [vmem:[%s175 + $0x8f8] sm:$0xff] %v8144
      %8466 = vst [vmem:[%s175 + $0x900] sm:$0xff] %v8145
      %8467 = vst.msk [vmem:[%s175 + $0x908] sm:$0xff] %vm8181, %v8146
      %8468 = vst [vmem:[%s175 + $0x910] sm:$0xff] %v8147
      %8469 = vst [vmem:[%s175 + $0x918] sm:$0xff] %v8148
      %8470 = vst [vmem:[%s175 + $0x920] sm:$0xff] %v8149
      %8471 = vst [vmem:[%s175 + $0x928] sm:$0xff] %v8150
      %8472 = vst.msk [vmem:[%s175 + $0x930] sm:$0xff] %vm8181, %v8151
      %8473 = vst [vmem:[%s175 + $0x938] sm:$0xff] %v8152
      %8474 = vst [vmem:[%s175 + $0x940] sm:$0xff] %v8153
      %8475 = vst [vmem:[%s175 + $0x948] sm:$0xff] %v8154
      %8476 = vst [vmem:[%s175 + $0x950] sm:$0xff] %v8155
      %8477 = vst.msk [vmem:[%s175 + $0x958] sm:$0xff] %vm8181, %v8156
      %8478 = vst [vmem:[%s175 + $0x960] sm:$0xff] %v8157
      %8479 = vst [vmem:[%s175 + $0x968] sm:$0xff] %v8158
      %8480 = vst [vmem:[%s175 + $0x970] sm:$0xff] %v8159
      %8481 = vst [vmem:[%s175 + $0x978] sm:$0xff] %v8160
      %8482 = vst.msk [vmem:[%s175 + $0x980] sm:$0xff] %vm8181, %v8161
      %8483 = vst [vmem:[%s175 + $0x988] sm:$0xff] %v8162
      %8484 = vst [vmem:[%s175 + $0x990] sm:$0xff] %v8163
      %8485 = vst [vmem:[%s175 + $0x998] sm:$0xff] %v8164
      %8486 = vst [vmem:[%s175 + $0x9a0] sm:$0xff] %v8165
      %8487 = vst.msk [vmem:[%s175 + $0x9a8] sm:$0xff] %vm8181, %v8166
      %8488 = vst [vmem:[%s175 + $0x9b0] sm:$0xff] %v8167
      %8489 = vst [vmem:[%s175 + $0x9b8] sm:$0xff] %v8168
      %8490 = vst [vmem:[%s175 + $0x9c0] sm:$0xff] %v8169
      %8491 = vst [vmem:[%s175 + $0x9c8] sm:$0xff] %v8170
      %8492 = vst.msk [vmem:[%s175 + $0x9d0] sm:$0xff] %vm8181, %v8171
      %8493 = vst [vmem:[%s175 + $0x9d8] sm:$0xff] %v8172
      %8494 = vst [vmem:[%s175 + $0x9e0] sm:$0xff] %v8173
      %8495 = vst [vmem:[%s175 + $0x9e8] sm:$0xff] %v8174
      %8496 = vst [vmem:[%s175 + $0x9f0] sm:$0xff] %v8175
      %8497 = vst.msk [vmem:[%s175 + $0x9f8] sm:$0xff] %vm8181, %v8176
      %s8498 = smul.u32 64, %s13
      %p8499 = scmp.lt.s32.totalorder %s8498, 127
      %s8500 = scalar_select %p8499, %s8498, 127
      %s8501 = smul.addr %s8500, 5
      %s8502 = smul.addr %s8501, 8
      %s8503 = scalar_lea.vmem %s2, %s8502
      // Predicated region
      $region29: #{tpu_custom_call.1} parent=27 // pred_check
        %p8504 = pneg %p83
      $region30: #{tpu_custom_call.1} parent=27 // pred_check_branch
        %8506 = sbr.rel (%p8504) target = $region32
      $region31: #{tpu_custom_call.1} parent=27 // pred_region
        %s8507 = smul.u32 64, %s13
      $region32: #{tpu_custom_call.1} parent=27 // pred_fallthru
        _
    $region28: #{tpu_custom_call.1} parent=5 // pred_fallthru
      _
    %p8508 = scmp.le.s32.totalorder 2, %s8
    // Predicated region
    $region33: #{tpu_custom_call.1} parent=5 // pred_check
      %p8509 = pneg %p8508
    $region34: #{tpu_custom_call.1} parent=5 // pred_check_branch
      %8511 = sbr.rel (%p8509) target = $region36
    $region35: #{tpu_custom_call.1} parent=5 // pred_region
      %s8512 = ssub.s32 %s8, 2
      // Predicated region
      $region37: #{tpu_custom_call.1} parent=35 // pred_check
        %p8513 = pneg %p89
      $region38: #{tpu_custom_call.1} parent=35 // pred_check_branch
        %8515 = sbr.rel (%p8513) target = $region40
      $region39: #{tpu_custom_call.1} parent=35 // pred_region
        %s8516 = smul.u32 64, %s14
        %p8517 = scmp.lt.s32.totalorder %s8516, 127
        %s8518 = scalar_select %p8517, %s8516, 127
        %s8519 = smul.addr %s8518, 5
        %s8520 = smul.addr %s8519, 8
        %s8521 = scalar_lea.vmem %s2, %s8520
      $region40: #{tpu_custom_call.1} parent=35 // pred_fallthru
        _
    $region36: #{tpu_custom_call.1} parent=5 // pred_fallthru
      _
  $region6: #{tpu_custom_call.1} parent=0 // loop_footer
    %s12 = sadd.s32 1, %s8
  $region7: #{tpu_custom_call.1} parent=0 // loop_footer_branch
    %7 = sbr.rel target = $region3
  $region8: #{tpu_custom_call.1} parent=0 // loop_exit
    _

</llo_original>
